<compile_context>
chip_gen: v5e
topology: v5e:2x2
jax: 0.10.0
libtpu: 0.0.40
codegen_flags: <defaults>
</compile_context>

<pallas_src>
import functools

import jax
import jax.numpy as jnp
from jax.experimental import pallas as pl
from jax.experimental.pallas import tpu as pltpu

LN_EPS = 1e-5


def _layernorm(x, gamma, beta):
    mu = jnp.mean(x, axis=-1, keepdims=True)
    var = jnp.mean((x - mu) ** 2, axis=-1, keepdims=True)
    return (x - mu) * jax.lax.rsqrt(var + LN_EPS) * gamma + beta


def _encoder_block_kernel(
    x_ref,          # (bb, T, C) f32
    wqkv_ref,       # (C, 3C)    bf16  (wq | wk | wv, lane-concatenated)
    wproj_ref,      # (C, C)     bf16
    w1_ref,         # (C, 4C)    bf16
    w2_ref,         # (4C, C)    bf16
    vec_ref,        # (8, 4C)    f32   packed small vectors (see prepare_params)
    out_ref,        # (bb, T, C) f32
    *, n_head,
):
    bb, T, C = x_ref.shape
    H = n_head
    hs = C // H
    M = bb * T
    N = bb * H

    # Unpack the small per-channel vectors (static, lane-aligned slices).
    b1 = vec_ref[0, :]            # (4C,)
    bproj = vec_ref[1, :C]        # (C,)
    b2 = vec_ref[2, :C]
    ln1_g = vec_ref[3, :C]
    ln1_b = vec_ref[4, :C]
    ln2_g = vec_ref[5, :C]
    ln2_b = vec_ref[6, :C]

    # Residual stream, batch folded into the matmul M (row) dimension.
    x = x_ref[...].reshape(M, C)                                    # f32

    # ---------------- attention branch: sa(ln1(x)) ----------------
    x1 = _layernorm(x, ln1_g, ln1_b)

    # Fused QKV projection: one (M, C) @ (C, 3C) MXU op, bf16 in / f32 accumulate.
    qkv = jnp.dot(x1.astype(jnp.bfloat16), wqkv_ref[...],
                  preferred_element_type=jnp.float32)               # (M, 3C) f32

    scale = float(C) ** -0.5        # reference scales by n_embd, not head_size
    q = qkv[:, :C] * scale          # scale folded into q once
    k = qkv[:, C:2 * C]
    v = qkv[:, 2 * C:]

    def to_heads(t):
        # (M, C) -> (bb, T, H, hs) -> (bb, H, T, hs) -> (N, T, hs)
        # One lane-splitting reshape + one transpose per operand for the whole
        # block (hoisted out of any loop).
        t = t.reshape(bb, T, H, hs)
        t = pltpu.einshape("bthd->bhtd", t)
        return t.reshape(N, T, hs)

    qh, kh, vh = to_heads(q), to_heads(k), to_heads(v)

    # Single pair of batched einsums over all (batch, head) pairs, f32 operands
    # (attention FLOPs are negligible; avoids extra casts).
    s = jnp.einsum("nqd,nkd->nqk", qh, kh,
                   preferred_element_type=jnp.float32)              # (N, T, T)
    m = jnp.max(s, axis=-1, keepdims=True)
    p = jnp.exp(s - m)
    denom = jnp.sum(p, axis=-1, keepdims=True)
    p = p * pl.reciprocal(denom, approx=True)                       # divide on EUP

    ctx = jnp.einsum("nqk,nkd->nqd", p, vh,
                     preferred_element_type=jnp.float32)            # (N, T, hs)

    # Merge heads back to (M, C): one whole-block transpose, then the output
    # projection as a single dense MXU matmul.
    ctx = pltpu.einshape("bhtd->bthd", ctx.reshape(bb, H, T, hs)).reshape(M, C)
    sa = jnp.dot(ctx.astype(jnp.bfloat16), wproj_ref[...],
                 preferred_element_type=jnp.float32) + bproj
    x = x + sa

    # ---------------- feed-forward branch: ffwd(ln2(x)) ----------------
    x2 = _layernorm(x, ln2_g, ln2_b)
    h1 = jnp.dot(x2.astype(jnp.bfloat16), w1_ref[...],
                 preferred_element_type=jnp.float32) + b1
    h1 = jnp.maximum(h1, 0.0)
    ff = jnp.dot(h1.astype(jnp.bfloat16), w2_ref[...],
                 preferred_element_type=jnp.float32) + b2

    out_ref[...] = (x + ff).reshape(bb, T, C).astype(out_ref.dtype)


def _pick_block_b(B, T, target_rows=256, min_grid=2):
    """Pick batch rows per grid step.

    Targets M = block_b*T close to 256 (full MXU rows on v6e/v7x, 2x128 on v5e)
    while keeping at least `min_grid` parallel grid steps when B allows, so both
    v7x TensorCores get work under dimension_semantics=("parallel",).
    """
    divs = [d for d in range(1, B + 1) if B % d == 0]
    cands = [d for d in divs if d * T <= target_rows] or [1]
    multi = [d for d in cands if B // d >= min_grid]
    return max(multi) if multi else max(cands)


def prepare_params(params, n_embd):
    """One-time packing/casting of parameters (done OUTSIDE the per-call path).

    * wq|wk|wv concatenated to a single (C, 3C) bf16 matrix; wproj/w1/w2 cast bf16.
    * The seven small f32 vectors are packed into one padded (8, 4C) f32 array so
      they travel as a single DMA per grid step.
    """
    C = n_embd
    wqkv = jnp.concatenate(
        [params["wq"], params["wk"], params["wv"]], axis=1).astype(jnp.bfloat16)
    vecs = jnp.zeros((8, 4 * C), jnp.float32)
    vecs = vecs.at[0, :].set(params["b1"][0])
    vecs = vecs.at[1, :C].set(params["bproj"][0])
    vecs = vecs.at[2, :C].set(params["b2"][0])
    vecs = vecs.at[3, :C].set(params["ln1_g"][0])
    vecs = vecs.at[4, :C].set(params["ln1_b"][0])
    vecs = vecs.at[5, :C].set(params["ln2_g"][0])
    vecs = vecs.at[6, :C].set(params["ln2_b"][0])
    return {
        "wqkv": wqkv,
        "wproj": params["wproj"].astype(jnp.bfloat16),
        "w1": params["w1"].astype(jnp.bfloat16),
        "w2": params["w2"].astype(jnp.bfloat16),
        "vecs": vecs,
    }


def encoder_block(x, prep, n_head):
    B, T, C = x.shape
    block_b = _pick_block_b(B, T)

    weights = (prep["wqkv"], prep["wproj"], prep["w1"], prep["w2"], prep["vecs"])

    def full_spec(arr):
        # Full-array weight block, identical (constant) block index every step.
        nd = arr.ndim
        return pl.BlockSpec(arr.shape, lambda i, _nd=nd: (0,) * _nd)

    kernel = functools.partial(_encoder_block_kernel, n_head=n_head)

    return pl.pallas_call(
        kernel,
        out_shape=jax.ShapeDtypeStruct((B, T, C), x.dtype),
        grid=(B // block_b,),
        in_specs=[pl.BlockSpec((block_b, T, C), lambda i: (i, 0, 0))]
                 + [full_spec(w) for w in weights],
        out_specs=pl.BlockSpec((block_b, T, C), lambda i: (i, 0, 0)),
        compiler_params=pltpu.CompilerParams(
            dimension_semantics=("parallel",),
            # ~3.6 MB bf16 weights (double-buffered -> ~7.2 MB) + small f32
            # activations: comfortably under 32 MiB on v5e/v6e/v7x (v7x has
            # 64 MiB physical VMEM per TC, so this leaves ample headroom).
            vmem_limit_bytes=32 * 1024 * 1024,
        ),
    )(x, *weights)


def init_params(key, n_embd):
    ks = jax.random.split(key, 8)

    def lin(k, fan_in, fan_out):
        bound = 1.0 / (fan_in ** 0.5)
        return jax.random.uniform(k, (fan_in, fan_out), jnp.float32, -bound, bound)

    return {
        # attention projections (heads stacked along the output dim)
        "wq": lin(ks[0], n_embd, n_embd),
        "wk": lin(ks[1], n_embd, n_embd),
        "wv": lin(ks[2], n_embd, n_embd),
        "wproj": lin(ks[3], n_embd, n_embd),
        "bproj": jax.random.uniform(ks[4], (1, n_embd), jnp.float32, -0.05, 0.05),
        # layer norms
        "ln1_g": jnp.ones((1, n_embd), jnp.float32),
        "ln1_b": jnp.zeros((1, n_embd), jnp.float32),
        "ln2_g": jnp.ones((1, n_embd), jnp.float32),
        "ln2_b": jnp.zeros((1, n_embd), jnp.float32),
        # feed-forward
        "w1": lin(ks[5], n_embd, 4 * n_embd),
        "b1": jax.random.uniform(ks[6], (1, 4 * n_embd), jnp.float32, -0.05, 0.05),
        "w2": lin(ks[7], 4 * n_embd, n_embd),
        "b2": jnp.zeros((1, n_embd), jnp.float32),
    }


def encoder_block_ref(x, params, n_head):
    """Pure-JAX f32 reference mirroring the PyTorch forward (eval mode)."""
    B, T, C = x.shape
    hs = C // n_head

    def ln(v, g, b):
        mu = jnp.mean(v, axis=-1, keepdims=True)
        var = jnp.mean((v - mu) ** 2, axis=-1, keepdims=True)
        return (v - mu) / jnp.sqrt(var + LN_EPS) * g + b

    x1 = ln(x, params["ln1_g"], params["ln1_b"])
    q = x1 @ params["wq"]
    k = x1 @ params["wk"]
    v = x1 @ params["wv"]
    outs = []
    for h in range(n_head):
        qh = q[..., h * hs:(h + 1) * hs]
        kh = k[..., h * hs:(h + 1) * hs]
        vh = v[..., h * hs:(h + 1) * hs]
        wei = jnp.einsum("btd,bsd->bts", qh, kh) * (C ** -0.5)
        wei = jax.nn.softmax(wei, axis=-1)
        outs.append(jnp.einsum("bts,bsd->btd", wei, vh))
    sa = jnp.concatenate(outs, axis=-1) @ params["wproj"] + params["bproj"]
    x = x + sa
    x2 = ln(x, params["ln2_g"], params["ln2_b"])
    ff = jnp.maximum(x2 @ params["w1"] + params["b1"], 0.0) @ params["w2"] + params["b2"]
    return x + ff


if __name__ == "__main__":
    B, T = 2, 16
    N_EMBD, N_HEAD = 384, 6   # module globals

    key = jax.random.PRNGKey(0)
    kx, kp = jax.random.split(key)
    x = jax.random.normal(kx, (B, T, N_EMBD), jnp.float32)
    params = init_params(kp, N_EMBD)

    # One-time weight packing / bf16 casting (kept out of the per-call path).
    prep = prepare_params(params, N_EMBD)
    prep = jax.tree_util.tree_map(jax.block_until_ready, prep)

    out = encoder_block(x, prep, N_HEAD)
    out = jax.block_until_ready(out)

    ref = encoder_block_ref(x, params, N_HEAD)
    assert out.shape == (B, T, N_EMBD)
    # bf16 matmul operands (f32 accumulation) -> relaxed tolerance vs. the f32 reference.
    err = jnp.max(jnp.abs(out - ref))
    assert jnp.allclose(out, ref, atol=3e-2, rtol=3e-2), (
        f"mismatch vs JAX reference (max abs err={err})")

    print("KERNEL_OK")
</pallas_src>

<mosaic_0001>
module attributes {stable_mosaic.version = 11 : i64} {
  func.func @_encoder_block_kernel(%arg0: i32, %arg1: memref<1x16x384xf32, #tpu.memory_space<vmem>>, %arg2: memref<384x1152xbf16, #tpu.memory_space<vmem>>, %arg3: memref<384x384xbf16, #tpu.memory_space<vmem>>, %arg4: memref<384x1536xbf16, #tpu.memory_space<vmem>>, %arg5: memref<1536x384xbf16, #tpu.memory_space<vmem>>, %arg6: memref<8x1536xf32, #tpu.memory_space<vmem>>, %arg7: memref<1x16x384xf32, #tpu.memory_space<vmem>>) attributes {dimension_semantics = [#tpu.dimension_semantics<parallel>], iteration_bounds = array<i64: 2>, scalar_prefetch = 0 : i64, scratch_operands = 0 : i64, tpu.core_type = #tpu.core_type<tc>, window_params = [{transform_indices = @transform_0, window_bounds = array<i64: 1, 16, 384>}, {pipeline_mode = #tpu.pipeline_mode<synchronous>, transform_indices = @transform_1, window_bounds = array<i64: 384, 1152>}, {pipeline_mode = #tpu.pipeline_mode<synchronous>, transform_indices = @transform_2, window_bounds = array<i64: 384, 384>}, {pipeline_mode = #tpu.pipeline_mode<synchronous>, transform_indices = @transform_3, window_bounds = array<i64: 384, 1536>}, {pipeline_mode = #tpu.pipeline_mode<synchronous>, transform_indices = @transform_4, window_bounds = array<i64: 1536, 384>}, {pipeline_mode = #tpu.pipeline_mode<synchronous>, transform_indices = @transform_5, window_bounds = array<i64: 8, 1536>}, {transform_indices = @transform_6, window_bounds = array<i64: 1, 16, 384>}]} {
    %c0 = arith.constant 0 : index
    %c0_0 = arith.constant 0 : index
    %0 = vector.load %arg6[%c0, %c0_0] : memref<8x1536xf32, #tpu.memory_space<vmem>>, vector<1x1536xf32>
    %1 = vector.shape_cast %0 : vector<1x1536xf32> to vector<1536xf32>
    %c1 = arith.constant 1 : index
    %c0_1 = arith.constant 0 : index
    %2 = vector.load %arg6[%c1, %c0_1] : memref<8x1536xf32, #tpu.memory_space<vmem>>, vector<1x384xf32>
    %3 = vector.shape_cast %2 : vector<1x384xf32> to vector<384xf32>
    %c2 = arith.constant 2 : index
    %c0_2 = arith.constant 0 : index
    %4 = vector.load %arg6[%c2, %c0_2] : memref<8x1536xf32, #tpu.memory_space<vmem>>, vector<1x384xf32>
    %5 = vector.shape_cast %4 : vector<1x384xf32> to vector<384xf32>
    %c3 = arith.constant 3 : index
    %c0_3 = arith.constant 0 : index
    %6 = vector.load %arg6[%c3, %c0_3] : memref<8x1536xf32, #tpu.memory_space<vmem>>, vector<1x384xf32>
    %7 = vector.shape_cast %6 : vector<1x384xf32> to vector<384xf32>
    %c4 = arith.constant 4 : index
    %c0_4 = arith.constant 0 : index
    %8 = vector.load %arg6[%c4, %c0_4] : memref<8x1536xf32, #tpu.memory_space<vmem>>, vector<1x384xf32>
    %9 = vector.shape_cast %8 : vector<1x384xf32> to vector<384xf32>
    %c5 = arith.constant 5 : index
    %c0_5 = arith.constant 0 : index
    %10 = vector.load %arg6[%c5, %c0_5] : memref<8x1536xf32, #tpu.memory_space<vmem>>, vector<1x384xf32>
    %11 = vector.shape_cast %10 : vector<1x384xf32> to vector<384xf32>
    %c6 = arith.constant 6 : index
    %c0_6 = arith.constant 0 : index
    %12 = vector.load %arg6[%c6, %c0_6] : memref<8x1536xf32, #tpu.memory_space<vmem>>, vector<1x384xf32>
    %13 = vector.shape_cast %12 : vector<1x384xf32> to vector<384xf32>
    %c0_7 = arith.constant 0 : index
    %c0_8 = arith.constant 0 : index
    %c0_9 = arith.constant 0 : index
    %14 = vector.load %arg1[%c0_7, %c0_8, %c0_9] : memref<1x16x384xf32, #tpu.memory_space<vmem>>, vector<1x16x384xf32>
    %15 = vector.shape_cast %14 : vector<1x16x384xf32> to vector<16x384xf32>
    %cst = arith.constant dense<0.000000e+00> : vector<16xf32>
    %16 = vector.multi_reduction <add>, %15, %cst [1] : vector<16x384xf32> to vector<16xf32>
    %17 = vector.shape_cast %16 : vector<16xf32> to vector<16x1xf32>
    %cst_10 = arith.constant 3.840000e+02 : f32
    %18 = vector.broadcast %cst_10 : f32 to vector<16x1xf32>
    %19 = arith.divf %17, %18 : vector<16x1xf32>
    %20 = vector.broadcast %19 : vector<16x1xf32> to vector<16x384xf32>
    %21 = arith.subf %15, %20 : vector<16x384xf32>
    %22 = arith.mulf %21, %21 : vector<16x384xf32>
    %cst_11 = arith.constant dense<0.000000e+00> : vector<16xf32>
    %23 = vector.multi_reduction <add>, %22, %cst_11 [1] : vector<16x384xf32> to vector<16xf32>
    %24 = vector.shape_cast %23 : vector<16xf32> to vector<16x1xf32>
    %cst_12 = arith.constant 3.840000e+02 : f32
    %25 = vector.broadcast %cst_12 : f32 to vector<16x1xf32>
    %26 = arith.divf %24, %25 : vector<16x1xf32>
    %27 = vector.broadcast %19 : vector<16x1xf32> to vector<16x384xf32>
    %28 = arith.subf %15, %27 : vector<16x384xf32>
    %cst_13 = arith.constant 9.99999974E-6 : f32
    %29 = vector.broadcast %cst_13 : f32 to vector<16x1xf32>
    %30 = arith.addf %26, %29 : vector<16x1xf32>
    %31 = math.rsqrt %30 : vector<16x1xf32>
    %32 = vector.broadcast %31 : vector<16x1xf32> to vector<16x384xf32>
    %33 = arith.mulf %28, %32 : vector<16x384xf32>
    %34 = vector.shape_cast %7 : vector<384xf32> to vector<1x384xf32>
    %35 = vector.broadcast %34 : vector<1x384xf32> to vector<16x384xf32>
    %36 = arith.mulf %33, %35 : vector<16x384xf32>
    %37 = vector.shape_cast %9 : vector<384xf32> to vector<1x384xf32>
    %38 = vector.broadcast %37 : vector<1x384xf32> to vector<16x384xf32>
    %39 = arith.addf %36, %38 : vector<16x384xf32>
    %40 = arith.truncf %39 : vector<16x384xf32> to vector<16x384xbf16>
    %c0_14 = arith.constant 0 : index
    %c0_15 = arith.constant 0 : index
    %41 = vector.load %arg2[%c0_14, %c0_15] : memref<384x1152xbf16, #tpu.memory_space<vmem>>, vector<384x1152xbf16>
    %cst_16 = arith.constant dense<0.000000e+00> : vector<16x1152xf32>
    %42 = tpu.matmul %40, %41, %cst_16 {dimension_numbers = #tpu.dot_dimension_numbers<[1], [0], [0], [1], [0, 0, 1, 1], [], []>} : vector<16x384xbf16>, vector<384x1152xbf16>, vector<16x1152xf32> -> vector<16x1152xf32>
    %43 = vector.extract_strided_slice %42 {offsets = [0, 0], sizes = [16, 384], strides = [1, 1]} : vector<16x1152xf32> to vector<16x384xf32>
    %cst_17 = arith.constant 0.0510310382 : f32
    %44 = vector.broadcast %cst_17 : f32 to vector<16x384xf32>
    %45 = arith.mulf %43, %44 : vector<16x384xf32>
    %46 = vector.extract_strided_slice %42 {offsets = [0, 384], sizes = [16, 384], strides = [1, 1]} : vector<16x1152xf32> to vector<16x384xf32>
    %47 = vector.extract_strided_slice %42 {offsets = [0, 768], sizes = [16, 384], strides = [1, 1]} : vector<16x1152xf32> to vector<16x384xf32>
    %48 = vector.shape_cast %45 : vector<16x384xf32> to vector<1x16x6x64xf32>
    %49 = tpu.transpose %48, [0, 2, 1, 3] : vector<1x16x6x64xf32> -> vector<1x6x16x64xf32>
    %50 = vector.shape_cast %49 : vector<1x6x16x64xf32> to vector<6x16x64xf32>
    %51 = vector.shape_cast %46 : vector<16x384xf32> to vector<1x16x6x64xf32>
    %52 = tpu.transpose %51, [0, 2, 1, 3] : vector<1x16x6x64xf32> -> vector<1x6x16x64xf32>
    %53 = vector.shape_cast %52 : vector<1x6x16x64xf32> to vector<6x16x64xf32>
    %54 = vector.shape_cast %47 : vector<16x384xf32> to vector<1x16x6x64xf32>
    %55 = tpu.transpose %54, [0, 2, 1, 3] : vector<1x16x6x64xf32> -> vector<1x6x16x64xf32>
    %56 = vector.shape_cast %55 : vector<1x6x16x64xf32> to vector<6x16x64xf32>
    "tpu.trace_start"() <{level = 10 : i32, message = "nqd,nkd->nqk"}> : () -> ()
    %cst_18 = arith.constant dense<0.000000e+00> : vector<6x16x16xf32>
    %57 = tpu.matmul %50, %53, %cst_18 {dimension_numbers = #tpu.dot_dimension_numbers<[2], [2], [1], [1], [0, 0, 0, 1, 1, 1], [0], [0]>} : vector<6x16x64xf32>, vector<6x16x64xf32>, vector<6x16x16xf32> -> vector<6x16x16xf32>
    "tpu.trace_stop"() : () -> ()
    %cst_19 = arith.constant dense<0xFF800000> : vector<6x16xf32>
    %58 = vector.multi_reduction <maximumf>, %57, %cst_19 [2] : vector<6x16x16xf32> to vector<6x16xf32>
    %59 = vector.shape_cast %58 : vector<6x16xf32> to vector<6x16x1xf32>
    %60 = vector.broadcast %59 : vector<6x16x1xf32> to vector<6x16x16xf32>
    %61 = arith.subf %57, %60 : vector<6x16x16xf32>
    %62 = math.exp %61 : vector<6x16x16xf32>
    %cst_20 = arith.constant dense<0.000000e+00> : vector<6x16xf32>
    %63 = vector.multi_reduction <add>, %62, %cst_20 [2] : vector<6x16x16xf32> to vector<6x16xf32>
    %64 = vector.shape_cast %63 : vector<6x16xf32> to vector<6x16x1xf32>
    %65 = tpu.reciprocal %64 {approx = true} : vector<6x16x1xf32> -> vector<6x16x1xf32>
    %66 = vector.broadcast %65 : vector<6x16x1xf32> to vector<6x16x16xf32>
    %67 = arith.mulf %62, %66 : vector<6x16x16xf32>
    "tpu.trace_start"() <{level = 10 : i32, message = "nqk,nkd->nqd"}> : () -> ()
    %cst_21 = arith.constant dense<0.000000e+00> : vector<6x16x64xf32>
    %68 = tpu.matmul %67, %56, %cst_21 {dimension_numbers = #tpu.dot_dimension_numbers<[2], [1], [1], [2], [0, 0, 0, 1, 1, 2], [0], [0]>} : vector<6x16x16xf32>, vector<6x16x64xf32>, vector<6x16x64xf32> -> vector<6x16x64xf32>
    "tpu.trace_stop"() : () -> ()
    %69 = vector.shape_cast %68 : vector<6x16x64xf32> to vector<1x6x16x64xf32>
    %70 = tpu.transpose %69, [0, 2, 1, 3] : vector<1x6x16x64xf32> -> vector<1x16x6x64xf32>
    %71 = vector.shape_cast %70 : vector<1x16x6x64xf32> to vector<16x384xf32>
    %72 = arith.truncf %71 : vector<16x384xf32> to vector<16x384xbf16>
    %c0_22 = arith.constant 0 : index
    %c0_23 = arith.constant 0 : index
    %73 = vector.load %arg3[%c0_22, %c0_23] : memref<384x384xbf16, #tpu.memory_space<vmem>>, vector<384x384xbf16>
    %cst_24 = arith.constant dense<0.000000e+00> : vector<16x384xf32>
    %74 = tpu.matmul %72, %73, %cst_24 {dimension_numbers = #tpu.dot_dimension_numbers<[1], [0], [0], [1], [0, 0, 1, 1], [], []>} : vector<16x384xbf16>, vector<384x384xbf16>, vector<16x384xf32> -> vector<16x384xf32>
    %75 = vector.shape_cast %3 : vector<384xf32> to vector<1x384xf32>
    %76 = vector.broadcast %75 : vector<1x384xf32> to vector<16x384xf32>
    %77 = arith.addf %74, %76 : vector<16x384xf32>
    %78 = arith.addf %15, %77 : vector<16x384xf32>
    %cst_25 = arith.constant dense<0.000000e+00> : vector<16xf32>
    %79 = vector.multi_reduction <add>, %78, %cst_25 [1] : vector<16x384xf32> to vector<16xf32>
    %80 = vector.shape_cast %79 : vector<16xf32> to vector<16x1xf32>
    %cst_26 = arith.constant 3.840000e+02 : f32
    %81 = vector.broadcast %cst_26 : f32 to vector<16x1xf32>
    %82 = arith.divf %80, %81 : vector<16x1xf32>
    %83 = vector.broadcast %82 : vector<16x1xf32> to vector<16x384xf32>
    %84 = arith.subf %78, %83 : vector<16x384xf32>
    %85 = arith.mulf %84, %84 : vector<16x384xf32>
    %cst_27 = arith.constant dense<0.000000e+00> : vector<16xf32>
    %86 = vector.multi_reduction <add>, %85, %cst_27 [1] : vector<16x384xf32> to vector<16xf32>
    %87 = vector.shape_cast %86 : vector<16xf32> to vector<16x1xf32>
    %cst_28 = arith.constant 3.840000e+02 : f32
    %88 = vector.broadcast %cst_28 : f32 to vector<16x1xf32>
    %89 = arith.divf %87, %88 : vector<16x1xf32>
    %90 = vector.broadcast %82 : vector<16x1xf32> to vector<16x384xf32>
    %91 = arith.subf %78, %90 : vector<16x384xf32>
    %cst_29 = arith.constant 9.99999974E-6 : f32
    %92 = vector.broadcast %cst_29 : f32 to vector<16x1xf32>
    %93 = arith.addf %89, %92 : vector<16x1xf32>
    %94 = math.rsqrt %93 : vector<16x1xf32>
    %95 = vector.broadcast %94 : vector<16x1xf32> to vector<16x384xf32>
    %96 = arith.mulf %91, %95 : vector<16x384xf32>
    %97 = vector.shape_cast %11 : vector<384xf32> to vector<1x384xf32>
    %98 = vector.broadcast %97 : vector<1x384xf32> to vector<16x384xf32>
    %99 = arith.mulf %96, %98 : vector<16x384xf32>
    %100 = vector.shape_cast %13 : vector<384xf32> to vector<1x384xf32>
    %101 = vector.broadcast %100 : vector<1x384xf32> to vector<16x384xf32>
    %102 = arith.addf %99, %101 : vector<16x384xf32>
    %103 = arith.truncf %102 : vector<16x384xf32> to vector<16x384xbf16>
    %c0_30 = arith.constant 0 : index
    %c0_31 = arith.constant 0 : index
    %104 = vector.load %arg4[%c0_30, %c0_31] : memref<384x1536xbf16, #tpu.memory_space<vmem>>, vector<384x1536xbf16>
    %cst_32 = arith.constant dense<0.000000e+00> : vector<16x1536xf32>
    %105 = tpu.matmul %103, %104, %cst_32 {dimension_numbers = #tpu.dot_dimension_numbers<[1], [0], [0], [1], [0, 0, 1, 1], [], []>} : vector<16x384xbf16>, vector<384x1536xbf16>, vector<16x1536xf32> -> vector<16x1536xf32>
    %106 = vector.shape_cast %1 : vector<1536xf32> to vector<1x1536xf32>
    %107 = vector.broadcast %106 : vector<1x1536xf32> to vector<16x1536xf32>
    %108 = arith.addf %105, %107 : vector<16x1536xf32>
    %cst_33 = arith.constant 0.000000e+00 : f32
    %109 = vector.broadcast %cst_33 : f32 to vector<16x1536xf32>
    %110 = arith.maximumf %108, %109 : vector<16x1536xf32>
    %111 = arith.truncf %110 : vector<16x1536xf32> to vector<16x1536xbf16>
    %c0_34 = arith.constant 0 : index
    %c0_35 = arith.constant 0 : index
    %112 = vector.load %arg5[%c0_34, %c0_35] : memref<1536x384xbf16, #tpu.memory_space<vmem>>, vector<1536x384xbf16>
    %cst_36 = arith.constant dense<0.000000e+00> : vector<16x384xf32>
    %113 = tpu.matmul %111, %112, %cst_36 {dimension_numbers = #tpu.dot_dimension_numbers<[1], [0], [0], [1], [0, 0, 1, 1], [], []>} : vector<16x1536xbf16>, vector<1536x384xbf16>, vector<16x384xf32> -> vector<16x384xf32>
    %114 = vector.shape_cast %5 : vector<384xf32> to vector<1x384xf32>
    %115 = vector.broadcast %114 : vector<1x384xf32> to vector<16x384xf32>
    %116 = arith.addf %113, %115 : vector<16x384xf32>
    %117 = arith.addf %78, %116 : vector<16x384xf32>
    %118 = vector.shape_cast %117 : vector<16x384xf32> to vector<1x16x384xf32>
    %c0_37 = arith.constant 0 : index
    %c0_38 = arith.constant 0 : index
    %c0_39 = arith.constant 0 : index
    %119 = vector.load %arg7[%c0_37, %c0_38, %c0_39] : memref<1x16x384xf32, #tpu.memory_space<vmem>>, vector<1x16x384xf32>
    tpu.vector_store %arg7[%c0_37, %c0_38, %c0_39], %118 {strides = array<i32>} : memref<1x16x384xf32, #tpu.memory_space<vmem>>, vector<1x16x384xf32>,
    return
  }
  func.func @transform_0(%arg0: i32) -> (i32, i32, i32) {
    %c0_i32 = arith.constant 0 : i32
    %c0_i32_0 = arith.constant 0 : i32
    %c0_i32_1 = arith.constant 0 : i32
    return %arg0, %c0_i32, %c0_i32_0 : i32, i32, i32
  }
  func.func @transform_1(%arg0: i32) -> (i32, i32) {
    %c0_i32 = arith.constant 0 : i32
    %c0_i32_0 = arith.constant 0 : i32
    %c0_i32_1 = arith.constant 0 : i32
    return %c0_i32, %c0_i32_0 : i32, i32
  }
  func.func @transform_2(%arg0: i32) -> (i32, i32) {
    %c0_i32 = arith.constant 0 : i32
    %c0_i32_0 = arith.constant 0 : i32
    %c0_i32_1 = arith.constant 0 : i32
    return %c0_i32, %c0_i32_0 : i32, i32
  }
  func.func @transform_3(%arg0: i32) -> (i32, i32) {
    %c0_i32 = arith.constant 0 : i32
    %c0_i32_0 = arith.constant 0 : i32
    %c0_i32_1 = arith.constant 0 : i32
    return %c0_i32, %c0_i32_0 : i32, i32
  }
  func.func @transform_4(%arg0: i32) -> (i32, i32) {
    %c0_i32 = arith.constant 0 : i32
    %c0_i32_0 = arith.constant 0 : i32
    %c0_i32_1 = arith.constant 0 : i32
    return %c0_i32, %c0_i32_0 : i32, i32
  }
  func.func @transform_5(%arg0: i32) -> (i32, i32) {
    %c0_i32 = arith.constant 0 : i32
    %c0_i32_0 = arith.constant 0 : i32
    %c0_i32_1 = arith.constant 0 : i32
    return %c0_i32, %c0_i32_0 : i32, i32
  }
  func.func @transform_6(%arg0: i32) -> (i32, i32, i32) {
    %c0_i32 = arith.constant 0 : i32
    %c0_i32_0 = arith.constant 0 : i32
    %c0_i32_1 = arith.constant 0 : i32
    return %arg0, %c0_i32, %c0_i32_0 : i32, i32, i32
  }
}

</mosaic_0001>

<llo_original>
// kernel: tpu_custom_call.1
$region0: #{tpu_custom_call.1}
  #allocation0 [shape = 'u32[]', space=smem, size = 0x4, offset = 0x4, fixed_abs, tag = 'smem constant byte address 0x4 - core index']
  #allocation1 [shape = 'u32[72,128]{1,0:T(1,128)}', space=vmem, size = 0x9000, scoped, tag = 'internal scratch']
  %s0 = inlined_call_operand.hbm [shape: f32[2,16,384], index: 0, kind: input, shape index: {}]
  %s1 = inlined_call_operand.hbm [shape: bf16[384,1152], index: 1, kind: input, shape index: {}]
  %s2 = inlined_call_operand.hbm [shape: bf16[384,384], index: 2, kind: input, shape index: {}]
  %s3 = inlined_call_operand.hbm [shape: bf16[384,1536], index: 3, kind: input, shape index: {}]
  %s4 = inlined_call_operand.hbm [shape: bf16[1536,384], index: 4, kind: input, shape index: {}]
  %s5 = inlined_call_operand.hbm [shape: f32[8,1536], index: 5, kind: input, shape index: {}]
  %s6 = inlined_call_operand.hbm [shape: f32[2,16,384], index: 6, kind: output, shape index: {}]
  %s7 = sld [smem:[#allocation0]]
  $region81: #{tpu_custom_call.1} parent=0
    _
  %s9 = ssub.s32 1, %s7
  %s10 = scalar_select 0, %s9, %s7
  $region1: #{tpu_custom_call.1} parent=0
    #allocation2 [shape = 'u8[49152]{0}', space=vmem, size = 0xc000, scoped, tag = 'input window, operand 0']
    #allocation3 [shape = 's32[2]{0}', space=sflag, size = 0x8, scoped, tag = 'scoped memory for tpu_custom_call.1']
    #allocation4 [shape = 's32[2]{0}', space=sflag, size = 0x8, scoped, tag = 'scoped memory for tpu_custom_call.1']
    #allocation5 [shape = 'u8[884736]{0}', space=vmem, size = 0xd8000, scoped, tag = 'input window, operand 1, single buffered']
    #allocation6 [shape = 's32[1]{0}', space=sflag, size = 0x4, scoped, tag = 'scoped memory for tpu_custom_call.1']
    #allocation7 [shape = 'u8[294912]{0}', space=vmem, size = 0x48000, scoped, tag = 'input window, operand 2, single buffered']
    #allocation8 [shape = 'u8[1179648]{0}', space=vmem, size = 0x120000, scoped, tag = 'input window, operand 3, single buffered']
    #allocation9 [shape = 's32[1]{0}', space=sflag, size = 0x4, scoped, tag = 'scoped memory for tpu_custom_call.1']
    #allocation10 [shape = 'u8[1179648]{0}', space=vmem, size = 0x120000, scoped, tag = 'input window, operand 4, single buffered']
    #allocation11 [shape = 'u8[49152]{0}', space=vmem, size = 0xc000, scoped, tag = 'input window, operand 5, single buffered']
    #allocation12 [shape = 's32[1]{0}', space=sflag, size = 0x4, scoped, tag = 'scoped memory for tpu_custom_call.1']
    #allocation13 [shape = 'u8[49152]{0}', space=vmem, size = 0xc000, scoped, tag = 'output window, operand 0']
    %11 = vsyncpa [#allocation3], 0
    %s12 = scalar_lea.sflag [#allocation3], 1
    %13 = vsyncpa %s12, 0
    %14 = vsyncpa [#allocation6], 0
    %15 = vsyncpa [#allocation9], 0
    %16 = vsyncpa [#allocation12], 0
    %17 = vsyncpa [#allocation4], 0
    %s18 = scalar_lea.sflag [#allocation4], 1
    %19 = vsyncpa %s18, 0
    loop: start=0, step=1, limit=4
    $region2: #{tpu_custom_call.1} parent=1 // loop_pre_header
      _
    $region3: #{tpu_custom_call.1} parent=1 // loop_header
      %s21 = sphi 0, %s25
      %p22 = scmp.ge.s32.totalorder %s21, 4
      %s31 = sphi 0, %s33
      %s34 = sphi 0, %s31
      %s35 = sphi 0, %s34
      %s51 = sphi 0, %s35
      %s55 = sphi 0, %s55
      %s57 = sphi 0, %s55
      %s58 = sphi 0, %s57
      %s72 = sphi 0, %s58
      %s76 = sphi 0, %s76
      %s78 = sphi 0, %s76
      %s79 = sphi 0, %s78
      %s93 = sphi 0, %s79
      %s97 = sphi 0, %s97
      %s99 = sphi 0, %s97
      %s100 = sphi 0, %s99
      %s114 = sphi 0, %s100
      %s118 = sphi 0, %s118
      %s120 = sphi 0, %s118
      %s121 = sphi 0, %s120
      %s135 = sphi 0, %s121
      %s139 = sphi 0, %s139
      %s141 = sphi 0, %s139
      %s142 = sphi 0, %s141
      %s156 = sphi 0, %s142
      %s162 = sphi 0, %s164
      %s165 = sphi 0, %s162
      %s166 = sphi 0, %s165
      %s182 = sphi 0, %s166
    $region4: #{tpu_custom_call.1} parent=1 // loop_header_branch
      %24 = sbr.rel (%p22) target = $region8
    $region5: #{tpu_custom_call.1} parent=1 // loop_body
      %s26 = ssub.s32 %s21, 1
      %s27 = ssub.s32 %s21, 2
      %s28 = sadd.s32 %s21, 1
      %s29 = ssub.s32 %s21, %s28
      %p30 = scmp.eq.s32.totalorder %s29, 0
      %s32 = sadd.s32 %s31, 1
      %s33 = scalar_select %p30, %s31, %s32
      %p36 = pneg %p30
      %p37 = scmp.eq.s32.totalorder %s21, 1
      %p38 = por %p36, %p37
      %p39 = scmp.ne.s32.totalorder %s31, %s34
      %p40 = scmp.eq.s32.totalorder %s21, 0
      %p41 = por %p39, %p40
      %p42 = scmp.ne.s32.totalorder %s31, %s34
      %p43 = scmp.eq.s32.totalorder %s26, 1
      %p44 = por %p42, %p43
      %p45 = scmp.ne.s32.totalorder %s34, %s35
      %p46 = scmp.eq.s32.totalorder %s26, 0
      %p47 = por %p45, %p46
      %p48 = scmp.ne.s32.totalorder %s34, %s35
      %p49 = scmp.eq.s32.totalorder %s27, 1
      %p50 = por %p48, %p49
      %p52 = scmp.ne.s32.totalorder %s35, %s51
      %p53 = scmp.eq.s32.totalorder %s27, 0
      %p54 = por %p52, %p53
      %s56 = sadd.s32 %s55, 1
      %p59 = scmp.eq.s32.totalorder %s21, 1
      %p60 = scmp.ne.s32.totalorder %s55, %s57
      %p61 = scmp.eq.s32.totalorder %s21, 0
      %p62 = por %p60, %p61
      %p63 = scmp.ne.s32.totalorder %s55, %s57
      %p64 = scmp.eq.s32.totalorder %s26, 1
      %p65 = por %p63, %p64
      %p66 = scmp.ne.s32.totalorder %s57, %s58
      %p67 = scmp.eq.s32.totalorder %s26, 0
      %p68 = por %p66, %p67
      %p69 = scmp.ne.s32.totalorder %s57, %s58
      %p70 = scmp.eq.s32.totalorder %s27, 1
      %p71 = por %p69, %p70
      %p73 = scmp.ne.s32.totalorder %s58, %s72
      %p74 = scmp.eq.s32.totalorder %s27, 0
      %p75 = por %p73, %p74
      %s77 = sadd.s32 %s76, 1
      %p80 = scmp.eq.s32.totalorder %s21, 1
      %p81 = scmp.ne.s32.totalorder %s76, %s78
      %p82 = scmp.eq.s32.totalorder %s21, 0
      %p83 = por %p81, %p82
      %p84 = scmp.ne.s32.totalorder %s76, %s78
      %p85 = scmp.eq.s32.totalorder %s26, 1
      %p86 = por %p84, %p85
      %p87 = scmp.ne.s32.totalorder %s78, %s79
      %p88 = scmp.eq.s32.totalorder %s26, 0
      %p89 = por %p87, %p88
      %p90 = scmp.ne.s32.totalorder %s78, %s79
      %p91 = scmp.eq.s32.totalorder %s27, 1
      %p92 = por %p90, %p91
      %p94 = scmp.ne.s32.totalorder %s79, %s93
      %p95 = scmp.eq.s32.totalorder %s27, 0
      %p96 = por %p94, %p95
      %s98 = sadd.s32 %s97, 1
      %p101 = scmp.eq.s32.totalorder %s21, 1
      %p102 = scmp.ne.s32.totalorder %s97, %s99
      %p103 = scmp.eq.s32.totalorder %s21, 0
      %p104 = por %p102, %p103
      %p105 = scmp.ne.s32.totalorder %s97, %s99
      %p106 = scmp.eq.s32.totalorder %s26, 1
      %p107 = por %p105, %p106
      %p108 = scmp.ne.s32.totalorder %s99, %s100
      %p109 = scmp.eq.s32.totalorder %s26, 0
      %p110 = por %p108, %p109
      %p111 = scmp.ne.s32.totalorder %s99, %s100
      %p112 = scmp.eq.s32.totalorder %s27, 1
      %p113 = por %p111, %p112
      %p115 = scmp.ne.s32.totalorder %s100, %s114
      %p116 = scmp.eq.s32.totalorder %s27, 0
      %p117 = por %p115, %p116
      %s119 = sadd.s32 %s118, 1
      %p122 = scmp.eq.s32.totalorder %s21, 1
      %p123 = scmp.ne.s32.totalorder %s118, %s120
      %p124 = scmp.eq.s32.totalorder %s21, 0
      %p125 = por %p123, %p124
      %p126 = scmp.ne.s32.totalorder %s118, %s120
      %p127 = scmp.eq.s32.totalorder %s26, 1
      %p128 = por %p126, %p127
      %p129 = scmp.ne.s32.totalorder %s120, %s121
      %p130 = scmp.eq.s32.totalorder %s26, 0
      %p131 = por %p129, %p130
      %p132 = scmp.ne.s32.totalorder %s120, %s121
      %p133 = scmp.eq.s32.totalorder %s27, 1
      %p134 = por %p132, %p133
      %p136 = scmp.ne.s32.totalorder %s121, %s135
      %p137 = scmp.eq.s32.totalorder %s27, 0
      %p138 = por %p136, %p137
      %s140 = sadd.s32 %s139, 1
      %p143 = scmp.eq.s32.totalorder %s21, 1
      %p144 = scmp.ne.s32.totalorder %s139, %s141
      %p145 = scmp.eq.s32.totalorder %s21, 0
      %p146 = por %p144, %p145
      %p147 = scmp.ne.s32.totalorder %s139, %s141
      %p148 = scmp.eq.s32.totalorder %s26, 1
      %p149 = por %p147, %p148
      %p150 = scmp.ne.s32.totalorder %s141, %s142
      %p151 = scmp.eq.s32.totalorder %s26, 0
      %p152 = por %p150, %p151
      %p153 = scmp.ne.s32.totalorder %s141, %s142
      %p154 = scmp.eq.s32.totalorder %s27, 1
      %p155 = por %p153, %p154
      %p157 = scmp.ne.s32.totalorder %s142, %s156
      %p158 = scmp.eq.s32.totalorder %s27, 0
      %p159 = por %p157, %p158
      %s160 = ssub.s32 %s21, %s28
      %p161 = scmp.eq.s32.totalorder %s160, 0
      %s163 = sadd.s32 %s162, 1
      %s164 = scalar_select %p161, %s162, %s163
      %p167 = pneg %p161
      %p168 = scmp.eq.s32.totalorder %s21, 1
      %p169 = por %p167, %p168
      %p170 = scmp.ne.s32.totalorder %s162, %s165
      %p171 = scmp.eq.s32.totalorder %s21, 0
      %p172 = por %p170, %p171
      %p173 = scmp.ne.s32.totalorder %s162, %s165
      %p174 = scmp.eq.s32.totalorder %s26, 1
      %p175 = por %p173, %p174
      %p176 = scmp.ne.s32.totalorder %s165, %s166
      %p177 = scmp.eq.s32.totalorder %s26, 0
      %p178 = por %p176, %p177
      %p179 = scmp.ne.s32.totalorder %s165, %s166
      %p180 = scmp.eq.s32.totalorder %s27, 1
      %p181 = por %p179, %p180
      %p183 = scmp.ne.s32.totalorder %s166, %s182
      %p184 = scmp.eq.s32.totalorder %s27, 0
      %p185 = por %p183, %p184
      %p186 = scmp.le.s32.totalorder 1, %s21
      %p187 = scmp.lt.s32.totalorder %s21, 3
      %p188 = pnand %p186, %p187
      %p189 = pneg %p188
      // Predicated region
      $region9: #{tpu_custom_call.1} parent=5 // pred_check
        _
      $region10: #{tpu_custom_call.1} parent=5 // pred_check_branch
        %191 = sbr.rel (%p188) target = $region12
      $region11: #{tpu_custom_call.1} parent=5 // pred_region
        %s192 = ssub.s32 %s21, 1
        // Predicated region
        $region13: #{tpu_custom_call.1} parent=11 // pred_check
          %p193 = pneg %p68
        $region14: #{tpu_custom_call.1} parent=11 // pred_check_branch
          %195 = sbr.rel (%p193) target = $region16
        $region15: #{tpu_custom_call.1} parent=11 // pred_region
          %197 = vsyncadd [#allocation6], 0
          %s198 = sshll.u32 %s1, 4
          %s199 = int_to_ptr.hbm [resolvable:$true] %s198
          %s200 = sshll.u32 [#allocation5], 4
          %s201 = int_to_ptr.vmem [resolvable:$true] %s200
          %206 = dma.hbm_to_vmem [thread:$0]  %s199, 27648, %s201, [#allocation6], 576, 576, 36
        $region16: #{tpu_custom_call.1} parent=11 // pred_fallthru
          _
        // Predicated region
        $region17: #{tpu_custom_call.1} parent=11 // pred_check
          %p207 = pneg %p89
        $region18: #{tpu_custom_call.1} parent=11 // pred_check_branch
          %209 = sbr.rel (%p207) target = $region20
        $region19: #{tpu_custom_call.1} parent=11 // pred_region
          %211 = vsyncadd [#allocation6], 0
          %s212 = sshll.u32 %s2, 4
          %s213 = int_to_ptr.hbm [resolvable:$true] %s212
          %s214 = sshll.u32 [#allocation7], 4
          %s215 = int_to_ptr.vmem [resolvable:$true] %s214
          %220 = dma.hbm_to_vmem [thread:$0]  %s213, 9216, %s215, [#allocation6], 192, 192, 12
        $region20: #{tpu_custom_call.1} parent=11 // pred_fallthru
          _
        // Predicated region
        $region21: #{tpu_custom_call.1} parent=11 // pred_check
          %p221 = pneg %p110
        $region22: #{tpu_custom_call.1} parent=11 // pred_check_branch
          %223 = sbr.rel (%p221) target = $region24
        $region23: #{tpu_custom_call.1} parent=11 // pred_region
          %225 = vsyncadd [#allocation9], 0
          %s226 = sshll.u32 %s3, 4
          %s227 = int_to_ptr.hbm [resolvable:$true] %s226
          %s228 = sshll.u32 [#allocation8], 4
          %s229 = int_to_ptr.vmem [resolvable:$true] %s228
          %234 = dma.hbm_to_vmem [thread:$0]  %s227, 36864, %s229, [#allocation9], 768, 768, 48
        $region24: #{tpu_custom_call.1} parent=11 // pred_fallthru
          _
        // Predicated region
        $region25: #{tpu_custom_call.1} parent=11 // pred_check
          %p235 = pneg %p131
        $region26: #{tpu_custom_call.1} parent=11 // pred_check_branch
          %237 = sbr.rel (%p235) target = $region28
        $region27: #{tpu_custom_call.1} parent=11 // pred_region
          %239 = vsyncadd [#allocation9], 0
          %s240 = sshll.u32 %s4, 4
          %s241 = int_to_ptr.hbm [resolvable:$true] %s240
          %s242 = sshll.u32 [#allocation10], 4
          %s243 = int_to_ptr.vmem [resolvable:$true] %s242
          %248 = dma.hbm_to_vmem [thread:$0]  %s241, 36864, %s243, [#allocation9], 192, 192, 12
        $region28: #{tpu_custom_call.1} parent=11 // pred_fallthru
          _
        // Predicated region
        $region29: #{tpu_custom_call.1} parent=11 // pred_check
          %p249 = pneg %p152
        $region30: #{tpu_custom_call.1} parent=11 // pred_check_branch
          %251 = sbr.rel (%p249) target = $region32
        $region31: #{tpu_custom_call.1} parent=11 // pred_region
          %253 = vsyncadd [#allocation12], 0
          %s255 = sshll.u32 %s5, 4
          %s256 = int_to_ptr.hbm [resolvable:$true] %s255
          %s257 = sshll.u32 [#allocation11], 4
          %s258 = int_to_ptr.vmem [resolvable:$true] %s257
          %260 = dma.hbm_to_vmem [thread:$0]  %s256, 1536, %s258, [#allocation12]
        $region32: #{tpu_custom_call.1} parent=11 // pred_fallthru
          _
      $region12: #{tpu_custom_call.1} parent=5 // pred_fallthru
        _
      %p261 = scmp.lt.s32.totalorder %s21, 2
      // Predicated region
      $region33: #{tpu_custom_call.1} parent=5 // pred_check
        %p262 = pneg %p261
      $region34: #{tpu_custom_call.1} parent=5 // pred_check_branch
        %264 = sbr.rel (%p262) target = $region36
      $region35: #{tpu_custom_call.1} parent=5 // pred_region
        // Predicated region
        $region37: #{tpu_custom_call.1} parent=35 // pred_check
          %p265 = pneg %p41
        $region38: #{tpu_custom_call.1} parent=35 // pred_check_branch
          %267 = sbr.rel (%p265) target = $region40
        $region39: #{tpu_custom_call.1} parent=35 // pred_region
          %s268 = sand.u32 %s31, 1
          %s269 = scalar_lea.sflag [#allocation3], %s268
          %s270 = sand.u32 %s31, 1
          %s271 = smul.addr %s270, 48
          %s272 = scalar_lea.vmem [#allocation2], %s271
          %274 = vsyncadd %s269, 0
          %s275 = smul.addr %s21, 6
          %s276 = smul.addr %s275, 8
          %s277 = scalar_lea.hbm %s0, %s276
          %s278 = sshll.u32 %s277, 4
          %s279 = int_to_ptr.hbm [resolvable:$true] %s278
          %s280 = sshll.u32 %s272, 4
          %s281 = int_to_ptr.vmem [resolvable:$true] %s280
          %286 = dma.hbm_to_vmem [thread:$0]  %s279, 768, %s281, %s269, 384, 384, 24
        $region40: #{tpu_custom_call.1} parent=35 // pred_fallthru
          _
      $region36: #{tpu_custom_call.1} parent=5 // pred_fallthru
        _
      %p287 = scmp.le.s32.totalorder 1, %s21
      %p288 = scmp.lt.s32.totalorder %s21, 3
      %p289 = pnand %p287, %p288
      %p290 = pneg %p289
      // Predicated region
      $region41: #{tpu_custom_call.1} parent=5 // pred_check
        _
      $region42: #{tpu_custom_call.1} parent=5 // pred_check_branch
        %292 = sbr.rel (%p289) target = $region44
      $region43: #{tpu_custom_call.1} parent=5 // pred_region
        %s293 = ssub.s32 %s21, 1
        %s294 = sand.u32 %s34, 1
        %s295 = scalar_lea.sflag [#allocation3], %s294
        %s296 = sand.u32 %s34, 1
        %s297 = smul.addr %s296, 48
        %s298 = scalar_lea.vmem [#allocation2], %s297
        // Predicated region
        $region45: #{tpu_custom_call.1} parent=43 // pred_check
          %p299 = pneg %p47
        $region46: #{tpu_custom_call.1} parent=43 // pred_check_branch
          %301 = sbr.rel (%p299) target = $region48
        $region47: #{tpu_custom_call.1} parent=43 // pred_region
          %303 = dma.done %s295, 768
        $region48: #{tpu_custom_call.1} parent=43 // pred_fallthru
          _
        // Predicated region
        $region49: #{tpu_custom_call.1} parent=43 // pred_check
          %p304 = pneg %p68
        $region50: #{tpu_custom_call.1} parent=43 // pred_check_branch
          %306 = sbr.rel (%p304) target = $region52
        $region51: #{tpu_custom_call.1} parent=43 // pred_region
          %308 = dma.done [#allocation6], 27648
        $region52: #{tpu_custom_call.1} parent=43 // pred_fallthru
          _
        // Predicated region
        $region53: #{tpu_custom_call.1} parent=43 // pred_check
          %p309 = pneg %p89
        $region54: #{tpu_custom_call.1} parent=43 // pred_check_branch
          %311 = sbr.rel (%p309) target = $region56
        $region55: #{tpu_custom_call.1} parent=43 // pred_region
          %313 = dma.done [#allocation6], 9216
        $region56: #{tpu_custom_call.1} parent=43 // pred_fallthru
          _
        // Predicated region
        $region57: #{tpu_custom_call.1} parent=43 // pred_check
          %p314 = pneg %p110
        $region58: #{tpu_custom_call.1} parent=43 // pred_check_branch
          %316 = sbr.rel (%p314) target = $region60
        $region59: #{tpu_custom_call.1} parent=43 // pred_region
          %318 = dma.done [#allocation9], 36864
        $region60: #{tpu_custom_call.1} parent=43 // pred_fallthru
          _
        // Predicated region
        $region61: #{tpu_custom_call.1} parent=43 // pred_check
          %p319 = pneg %p131
        $region62: #{tpu_custom_call.1} parent=43 // pred_check_branch
          %321 = sbr.rel (%p319) target = $region64
        $region63: #{tpu_custom_call.1} parent=43 // pred_region
          %323 = dma.done [#allocation9], 36864
        $region64: #{tpu_custom_call.1} parent=43 // pred_fallthru
          _
        // Predicated region
        $region65: #{tpu_custom_call.1} parent=43 // pred_check
          %p324 = pneg %p152
        $region66: #{tpu_custom_call.1} parent=43 // pred_check_branch
          %326 = sbr.rel (%p324) target = $region68
        $region67: #{tpu_custom_call.1} parent=43 // pred_region
          %328 = dma.done [#allocation12], 1536
        $region68: #{tpu_custom_call.1} parent=43 // pred_fallthru
          _
        %s329 = sand.u32 %s34, 1
        %s330 = scalar_lea.sflag [#allocation3], %s329
        %s331 = sand.u32 %s34, 1
        %s332 = smul.addr %s331, 48
        %s333 = scalar_lea.vmem [#allocation2], %s332
        %p334 = pneg %p47
        %p335 = pneg %p44
        %p336 = pneg %p68
        %p337 = pneg %p65
        %p338 = pneg %p89
        %p339 = pneg %p86
        %p340 = pneg %p110
        %p341 = pneg %p107
        %p342 = pneg %p131
        %p343 = pneg %p128
        %p344 = pneg %p152
        %p345 = pneg %p149
        %p346 = pneg %p178
        %p347 = pneg %p175
        %s348 = sand.u32 %s165, 1
        %s349 = scalar_lea.sflag [#allocation4], %s348
        %s350 = sand.u32 %s165, 1
        %s351 = smul.addr %s350, 48
        %s352 = scalar_lea.vmem [#allocation13], %s351
        %v353 = vld [vmem:[#allocation11] ss:$8 sm:$0xf]
        %v354 = vld [vmem:[#allocation11] ss:$8 sm:$0xf0]
        %v355 = vor.u32 %v353, %v354
        %s356 = scalar_lea.vmem [#allocation11], 64
        %v357 = vld [vmem:[%s356] ss:$8 sm:$0xf]
        %s358 = scalar_lea.vmem [#allocation11], 1
        %v359 = vld [vmem:[%s358] ss:$8 sm:$0x7]
        %s360 = scalar_lea.vmem [#allocation11], 2
        %v361 = vld [vmem:[%s360] ss:$8 sm:$0x7]
        %s362 = scalar_lea.vmem [#allocation11], 3
        %v363 = vld [vmem:[%s362] ss:$8 sm:$0x7]
        %s364 = scalar_lea.vmem [#allocation11], 4
        %v365 = vld [vmem:[%s364] ss:$8 sm:$0x7]
        %s366 = scalar_lea.vmem [#allocation11], 5
        %v367 = vld [vmem:[%s366] ss:$8 sm:$0x7]
        %s368 = scalar_lea.vmem [#allocation11], 6
        %v369 = vld [vmem:[%s368] ss:$8 sm:$0x7]
        %v370 = vld [vmem:[%s298] sm:$0xff]
        %v371 = vld [vmem:[%s298 + $0x8] sm:$0xff]
        %v372 = vld [vmem:[%s298 + $0x10] sm:$0xff]
        %v373 = vld [vmem:[%s298 + $0x18] sm:$0xff]
        %v374 = vld [vmem:[%s298 + $0x20] sm:$0xff]
        %v375 = vld [vmem:[%s298 + $0x28] sm:$0xff]
        %v376 = vadd.f32 %v370, %v371
        %v377 = vadd.f32 %v376, %v372
        %378 = vadd.xlane.f32.xlu0 %v377
        %v379 = vpop.xlane.xlu0 %378
        %v380 = vadd.f32 %v373, %v374
        %v381 = vadd.f32 %v380, %v375
        %382 = vadd.xlane.f32.xlu0 %v381
        %v383 = vpop.xlane.xlu0 %382
        %v384 = vrcp.pop 384.0
        %v385 = vmul.f32 384.0, %v384
        %v386 = vsub.f32 1.0, %v385
        %v387 = vmul.f32 %v384, %v386
        %v388 = vadd.f32 %v384, %v387
        %vm389 = vweird.f32 %v384
        %v390 = vsel %vm389, %v384, %v388
        %v391 = vmul.f32 %v379, %v390
        %v392 = vmul.f32 %v383, %v390
        %v393 = vsub.f32 %v370, %v391
        %v394 = vsub.f32 %v371, %v391
        %v395 = vsub.f32 %v372, %v391
        %v396 = vsub.f32 %v373, %v392
        %v397 = vsub.f32 %v374, %v392
        %v398 = vsub.f32 %v375, %v392
        %v399 = vmul.f32 %v393, %v393
        %v400 = vmul.f32 %v394, %v394
        %v401 = vmul.f32 %v395, %v395
        %v402 = vmul.f32 %v396, %v396
        %v403 = vmul.f32 %v397, %v397
        %v404 = vmul.f32 %v398, %v398
        %v405 = vadd.f32 %v399, %v400
        %v406 = vadd.f32 %v405, %v401
        %407 = vadd.xlane.f32.xlu0 %v406
        %v408 = vpop.xlane.xlu0 %407
        %v409 = vadd.f32 %v402, %v403
        %v410 = vadd.f32 %v409, %v404
        %411 = vadd.xlane.f32.xlu0 %v410
        %v412 = vpop.xlane.xlu0 %411
        %v413 = vmul.f32 %v408, %v390
        %v414 = vmul.f32 %v412, %v390
        %v415 = vadd.f32 %v413, 1e-05
        %v416 = vadd.f32 %v414, 1e-05
        %v417 = vrsqrt.pop %v415
        %v418 = vmul.f32 %v417, %v415
        %v419 = vmul.f32 %v418, %v417
        %v420 = vmul.f32 0.5, %v419
        %v421 = vsub.f32 1.5, %v420
        %v422 = vmul.f32 %v417, %v421
        %vm423 = vweird.f32 %v415
        %vm424 = vweird.f32 %v417
        %vm425 = vmor %vm423, %vm424
        %v426 = vsel %vm425, %v417, %v422
        %v427 = vrsqrt.pop %v416
        %v428 = vmul.f32 %v427, %v416
        %v429 = vmul.f32 %v428, %v427
        %v430 = vmul.f32 0.5, %v429
        %v431 = vsub.f32 1.5, %v430
        %v432 = vmul.f32 %v427, %v431
        %vm433 = vweird.f32 %v416
        %vm434 = vweird.f32 %v427
        %vm435 = vmor %vm433, %vm434
        %v436 = vsel %vm435, %v427, %v432
        %v437 = vmul.f32 %v393, %v426
        %v438 = vmul.f32 %v394, %v426
        %v439 = vmul.f32 %v395, %v426
        %v440 = vmul.f32 %v396, %v436
        %v441 = vmul.f32 %v397, %v436
        %v442 = vmul.f32 %v398, %v436
        %v444 = vperm.slane %v363, 0
        %v445 = vperm.slane %v363, 1
        %v446 = vperm.slane %v363, 2
        %v450 = vmul.f32 %v437, %v444
        %v451 = vmul.f32 %v438, %v445
        %v452 = vmul.f32 %v439, %v446
        %v453 = vmul.f32 %v440, %v444
        %v454 = vmul.f32 %v441, %v445
        %v455 = vmul.f32 %v442, %v446
        %v457 = vperm.slane %v365, 0
        %v458 = vperm.slane %v365, 1
        %v459 = vperm.slane %v365, 2
        %v463 = vadd.f32 %v450, %v457
        %v464 = vadd.f32 %v451, %v458
        %v465 = vadd.f32 %v452, %v459
        %v466 = vadd.f32 %v453, %v457
        %v467 = vadd.f32 %v454, %v458
        %v468 = vadd.f32 %v455, %v459
        %v469 = vpack.c.bf16 %v466, %v463
        %v470 = vpack.c.bf16 %v467, %v464
        %v471 = vpack.c.bf16 %v468, %v465
        %v472 = vld [vmem:[#allocation5] sm:$0xff]
        %v473 = vld [vmem:[#allocation5 + $0x8] sm:$0xff]
        %v474 = vld [vmem:[#allocation5 + $0x10] sm:$0xff]
        %v475 = vld [vmem:[#allocation5 + $0x18] sm:$0xff]
        %v476 = vld [vmem:[#allocation5 + $0x20] sm:$0xf]
        %v477 = vld [vmem:[#allocation5 + $0x24] sm:$0xff]
        %v478 = vld [vmem:[#allocation5 + $0x2c] sm:$0xff]
        %v479 = vld [vmem:[#allocation5 + $0x34] sm:$0xff]
        %v480 = vld [vmem:[#allocation5 + $0x3c] sm:$0xff]
        %v481 = vld [vmem:[#allocation5 + $0x44] sm:$0xf]
        %v482 = vld [vmem:[#allocation5 + $0x48] sm:$0xff]
        %v483 = vld [vmem:[#allocation5 + $0x50] sm:$0xff]
        %v484 = vld [vmem:[#allocation5 + $0x58] sm:$0xff]
        %v485 = vld [vmem:[#allocation5 + $0x60] sm:$0xff]
        %v486 = vld [vmem:[#allocation5 + $0x68] sm:$0xf]
        %v487 = vld [vmem:[#allocation5 + $0x6c] sm:$0xff]
        %v488 = vld [vmem:[#allocation5 + $0x74] sm:$0xff]
        %v489 = vld [vmem:[#allocation5 + $0x7c] sm:$0xff]
        %v490 = vld [vmem:[#allocation5 + $0x84] sm:$0xff]
        %v491 = vld [vmem:[#allocation5 + $0x8c] sm:$0xf]
        %v492 = vld [vmem:[#allocation5 + $0x90] sm:$0xff]
        %v493 = vld [vmem:[#allocation5 + $0x98] sm:$0xff]
        %v494 = vld [vmem:[#allocation5 + $0xa0] sm:$0xff]
        %v495 = vld [vmem:[#allocation5 + $0xa8] sm:$0xff]
        %v496 = vld [vmem:[#allocation5 + $0xb0] sm:$0xf]
        %v497 = vld [vmem:[#allocation5 + $0xb4] sm:$0xff]
        %v498 = vld [vmem:[#allocation5 + $0xbc] sm:$0xff]
        %v499 = vld [vmem:[#allocation5 + $0xc4] sm:$0xff]
        %v500 = vld [vmem:[#allocation5 + $0xcc] sm:$0xff]
        %v501 = vld [vmem:[#allocation5 + $0xd4] sm:$0xf]
        %v502 = vld [vmem:[#allocation5 + $0xd8] sm:$0xff]
        %v503 = vld [vmem:[#allocation5 + $0xe0] sm:$0xff]
        %v504 = vld [vmem:[#allocation5 + $0xe8] sm:$0xff]
        %v505 = vld [vmem:[#allocation5 + $0xf0] sm:$0xff]
        %v506 = vld [vmem:[#allocation5 + $0xf8] sm:$0xf]
        %v507 = vld [vmem:[#allocation5 + $0xfc] sm:$0xff]
        %v508 = vld [vmem:[#allocation5 + $0x104] sm:$0xff]
        %v509 = vld [vmem:[#allocation5 + $0x10c] sm:$0xff]
        %v510 = vld [vmem:[#allocation5 + $0x114] sm:$0xff]
        %v511 = vld [vmem:[#allocation5 + $0x11c] sm:$0xf]
        %v512 = vld [vmem:[#allocation5 + $0x120] sm:$0xff]
        %v513 = vld [vmem:[#allocation5 + $0x128] sm:$0xff]
        %v514 = vld [vmem:[#allocation5 + $0x130] sm:$0xff]
        %v515 = vld [vmem:[#allocation5 + $0x138] sm:$0xff]
        %v516 = vld [vmem:[#allocation5 + $0x140] sm:$0xf]
        %v517 = vld [vmem:[#allocation5 + $0x144] sm:$0xff]
        %v518 = vld [vmem:[#allocation5 + $0x14c] sm:$0xff]
        %v519 = vld [vmem:[#allocation5 + $0x154] sm:$0xff]
        %v520 = vld [vmem:[#allocation5 + $0x15c] sm:$0xff]
        %v521 = vld [vmem:[#allocation5 + $0x164] sm:$0xf]
        %v522 = vld [vmem:[#allocation5 + $0x168] sm:$0xff]
        %v523 = vld [vmem:[#allocation5 + $0x170] sm:$0xff]
        %v524 = vld [vmem:[#allocation5 + $0x178] sm:$0xff]
        %v525 = vld [vmem:[#allocation5 + $0x180] sm:$0xff]
        %v526 = vld [vmem:[#allocation5 + $0x188] sm:$0xf]
        %v527 = vld [vmem:[#allocation5 + $0x18c] sm:$0xff]
        %v528 = vld [vmem:[#allocation5 + $0x194] sm:$0xff]
        %v529 = vld [vmem:[#allocation5 + $0x19c] sm:$0xff]
        %v530 = vld [vmem:[#allocation5 + $0x1a4] sm:$0xff]
        %v531 = vld [vmem:[#allocation5 + $0x1ac] sm:$0xf]
        %v532 = vld [vmem:[#allocation5 + $0x1b0] sm:$0xff]
        %v533 = vld [vmem:[#allocation5 + $0x1b8] sm:$0xff]
        %v534 = vld [vmem:[#allocation5 + $0x1c0] sm:$0xff]
        %v535 = vld [vmem:[#allocation5 + $0x1c8] sm:$0xff]
        %v536 = vld [vmem:[#allocation5 + $0x1d0] sm:$0xf]
        %v537 = vld [vmem:[#allocation5 + $0x1d4] sm:$0xff]
        %v538 = vld [vmem:[#allocation5 + $0x1dc] sm:$0xff]
        %v539 = vld [vmem:[#allocation5 + $0x1e4] sm:$0xff]
        %v540 = vld [vmem:[#allocation5 + $0x1ec] sm:$0xff]
        %v541 = vld [vmem:[#allocation5 + $0x1f4] sm:$0xf]
        %v542 = vld [vmem:[#allocation5 + $0x1f8] sm:$0xff]
        %v543 = vld [vmem:[#allocation5 + $0x200] sm:$0xff]
        %v544 = vld [vmem:[#allocation5 + $0x208] sm:$0xff]
        %v545 = vld [vmem:[#allocation5 + $0x210] sm:$0xff]
        %v546 = vld [vmem:[#allocation5 + $0x218] sm:$0xf]
        %v547 = vld [vmem:[#allocation5 + $0x21c] sm:$0xff]
        %v548 = vld [vmem:[#allocation5 + $0x224] sm:$0xff]
        %v549 = vld [vmem:[#allocation5 + $0x22c] sm:$0xff]
        %v550 = vld [vmem:[#allocation5 + $0x234] sm:$0xff]
        %v551 = vld [vmem:[#allocation5 + $0x23c] sm:$0xf]
        %v552 = vld [vmem:[#allocation5 + $0x240] sm:$0xff]
        %v553 = vld [vmem:[#allocation5 + $0x248] sm:$0xff]
        %v554 = vld [vmem:[#allocation5 + $0x250] sm:$0xff]
        %v555 = vld [vmem:[#allocation5 + $0x258] sm:$0xff]
        %v556 = vld [vmem:[#allocation5 + $0x260] sm:$0xf]
        %v557 = vld [vmem:[#allocation5 + $0x264] sm:$0xff]
        %v558 = vld [vmem:[#allocation5 + $0x26c] sm:$0xff]
        %v559 = vld [vmem:[#allocation5 + $0x274] sm:$0xff]
        %v560 = vld [vmem:[#allocation5 + $0x27c] sm:$0xff]
        %v561 = vld [vmem:[#allocation5 + $0x284] sm:$0xf]
        %v562 = vld [vmem:[#allocation5 + $0x288] sm:$0xff]
        %v563 = vld [vmem:[#allocation5 + $0x290] sm:$0xff]
        %v564 = vld [vmem:[#allocation5 + $0x298] sm:$0xff]
        %v565 = vld [vmem:[#allocation5 + $0x2a0] sm:$0xff]
        %v566 = vld [vmem:[#allocation5 + $0x2a8] sm:$0xf]
        %v567 = vld [vmem:[#allocation5 + $0x2ac] sm:$0xff]
        %v568 = vld [vmem:[#allocation5 + $0x2b4] sm:$0xff]
        %v569 = vld [vmem:[#allocation5 + $0x2bc] sm:$0xff]
        %v570 = vld [vmem:[#allocation5 + $0x2c4] sm:$0xff]
        %v571 = vld [vmem:[#allocation5 + $0x2cc] sm:$0xf]
        %v572 = vld [vmem:[#allocation5 + $0x2d0] sm:$0xff]
        %v573 = vld [vmem:[#allocation5 + $0x2d8] sm:$0xff]
        %v574 = vld [vmem:[#allocation5 + $0x2e0] sm:$0xff]
        %v575 = vld [vmem:[#allocation5 + $0x2e8] sm:$0xff]
        %v576 = vld [vmem:[#allocation5 + $0x2f0] sm:$0xf]
        %v577 = vld [vmem:[#allocation5 + $0x2f4] sm:$0xff]
        %v578 = vld [vmem:[#allocation5 + $0x2fc] sm:$0xff]
        %v579 = vld [vmem:[#allocation5 + $0x304] sm:$0xff]
        %v580 = vld [vmem:[#allocation5 + $0x30c] sm:$0xff]
        %v581 = vld [vmem:[#allocation5 + $0x314] sm:$0xf]
        %v582 = vld [vmem:[#allocation5 + $0x318] sm:$0xff]
        %v583 = vld [vmem:[#allocation5 + $0x320] sm:$0xff]
        %v584 = vld [vmem:[#allocation5 + $0x328] sm:$0xff]
        %v585 = vld [vmem:[#allocation5 + $0x330] sm:$0xff]
        %v586 = vld [vmem:[#allocation5 + $0x338] sm:$0xf]
        %v587 = vld [vmem:[#allocation5 + $0x33c] sm:$0xff]
        %v588 = vld [vmem:[#allocation5 + $0x344] sm:$0xff]
        %v589 = vld [vmem:[#allocation5 + $0x34c] sm:$0xff]
        %v590 = vld [vmem:[#allocation5 + $0x354] sm:$0xff]
        %v591 = vld [vmem:[#allocation5 + $0x35c] sm:$0xf]
        %v592 = vld [vmem:[#allocation5 + $0x360] sm:$0xff]
        %v593 = vld [vmem:[#allocation5 + $0x368] sm:$0xff]
        %v594 = vld [vmem:[#allocation5 + $0x370] sm:$0xff]
        %v595 = vld [vmem:[#allocation5 + $0x378] sm:$0xff]
        %v596 = vld [vmem:[#allocation5 + $0x380] sm:$0xf]
        %v597 = vld [vmem:[#allocation5 + $0x384] sm:$0xff]
        %v598 = vld [vmem:[#allocation5 + $0x38c] sm:$0xff]
        %v599 = vld [vmem:[#allocation5 + $0x394] sm:$0xff]
        %v600 = vld [vmem:[#allocation5 + $0x39c] sm:$0xff]
        %v601 = vld [vmem:[#allocation5 + $0x3a4] sm:$0xf]
        %v602 = vld [vmem:[#allocation5 + $0x3a8] sm:$0xff]
        %v603 = vld [vmem:[#allocation5 + $0x3b0] sm:$0xff]
        %v604 = vld [vmem:[#allocation5 + $0x3b8] sm:$0xff]
        %v605 = vld [vmem:[#allocation5 + $0x3c0] sm:$0xff]
        %v606 = vld [vmem:[#allocation5 + $0x3c8] sm:$0xf]
        %v607 = vld [vmem:[#allocation5 + $0x3cc] sm:$0xff]
        %v608 = vld [vmem:[#allocation5 + $0x3d4] sm:$0xff]
        %v609 = vld [vmem:[#allocation5 + $0x3dc] sm:$0xff]
        %v610 = vld [vmem:[#allocation5 + $0x3e4] sm:$0xff]
        %v611 = vld [vmem:[#allocation5 + $0x3ec] sm:$0xf]
        %v612 = vld [vmem:[#allocation5 + $0x3f0] sm:$0xff]
        %v613 = vld [vmem:[#allocation5 + $0x3f8] sm:$0xff]
        %v614 = vld [vmem:[#allocation5 + $0x400] sm:$0xff]
        %v615 = vld [vmem:[#allocation5 + $0x408] sm:$0xff]
        %v616 = vld [vmem:[#allocation5 + $0x410] sm:$0xf]
        %v617 = vld [vmem:[#allocation5 + $0x414] sm:$0xff]
        %v618 = vld [vmem:[#allocation5 + $0x41c] sm:$0xff]
        %v619 = vld [vmem:[#allocation5 + $0x424] sm:$0xff]
        %v620 = vld [vmem:[#allocation5 + $0x42c] sm:$0xff]
        %v621 = vld [vmem:[#allocation5 + $0x434] sm:$0xf]
        %v622 = vld [vmem:[#allocation5 + $0x438] sm:$0xff]
        %v623 = vld [vmem:[#allocation5 + $0x440] sm:$0xff]
        %v624 = vld [vmem:[#allocation5 + $0x448] sm:$0xff]
        %v625 = vld [vmem:[#allocation5 + $0x450] sm:$0xff]
        %v626 = vld [vmem:[#allocation5 + $0x458] sm:$0xf]
        %v627 = vld [vmem:[#allocation5 + $0x45c] sm:$0xff]
        %v628 = vld [vmem:[#allocation5 + $0x464] sm:$0xff]
        %v629 = vld [vmem:[#allocation5 + $0x46c] sm:$0xff]
        %v630 = vld [vmem:[#allocation5 + $0x474] sm:$0xff]
        %v631 = vld [vmem:[#allocation5 + $0x47c] sm:$0xf]
        %v632 = vld [vmem:[#allocation5 + $0x480] sm:$0xff]
        %v633 = vld [vmem:[#allocation5 + $0x488] sm:$0xff]
        %v634 = vld [vmem:[#allocation5 + $0x490] sm:$0xff]
        %v635 = vld [vmem:[#allocation5 + $0x498] sm:$0xff]
        %v636 = vld [vmem:[#allocation5 + $0x4a0] sm:$0xf]
        %v637 = vld [vmem:[#allocation5 + $0x4a4] sm:$0xff]
        %v638 = vld [vmem:[#allocation5 + $0x4ac] sm:$0xff]
        %v639 = vld [vmem:[#allocation5 + $0x4b4] sm:$0xff]
        %v640 = vld [vmem:[#allocation5 + $0x4bc] sm:$0xff]
        %v641 = vld [vmem:[#allocation5 + $0x4c4] sm:$0xf]
        %v642 = vld [vmem:[#allocation5 + $0x4c8] sm:$0xff]
        %v643 = vld [vmem:[#allocation5 + $0x4d0] sm:$0xff]
        %v644 = vld [vmem:[#allocation5 + $0x4d8] sm:$0xff]
        %v645 = vld [vmem:[#allocation5 + $0x4e0] sm:$0xff]
        %v646 = vld [vmem:[#allocation5 + $0x4e8] sm:$0xf]
        %v647 = vld [vmem:[#allocation5 + $0x4ec] sm:$0xff]
        %v648 = vld [vmem:[#allocation5 + $0x4f4] sm:$0xff]
        %v649 = vld [vmem:[#allocation5 + $0x4fc] sm:$0xff]
        %v650 = vld [vmem:[#allocation5 + $0x504] sm:$0xff]
        %v651 = vld [vmem:[#allocation5 + $0x50c] sm:$0xf]
        %v652 = vld [vmem:[#allocation5 + $0x510] sm:$0xff]
        %v653 = vld [vmem:[#allocation5 + $0x518] sm:$0xff]
        %v654 = vld [vmem:[#allocation5 + $0x520] sm:$0xff]
        %v655 = vld [vmem:[#allocation5 + $0x528] sm:$0xff]
        %v656 = vld [vmem:[#allocation5 + $0x530] sm:$0xf]
        %v657 = vld [vmem:[#allocation5 + $0x534] sm:$0xff]
        %v658 = vld [vmem:[#allocation5 + $0x53c] sm:$0xff]
        %v659 = vld [vmem:[#allocation5 + $0x544] sm:$0xff]
        %v660 = vld [vmem:[#allocation5 + $0x54c] sm:$0xff]
        %v661 = vld [vmem:[#allocation5 + $0x554] sm:$0xf]
        %v662 = vld [vmem:[#allocation5 + $0x558] sm:$0xff]
        %v663 = vld [vmem:[#allocation5 + $0x560] sm:$0xff]
        %v664 = vld [vmem:[#allocation5 + $0x568] sm:$0xff]
        %v665 = vld [vmem:[#allocation5 + $0x570] sm:$0xff]
        %v666 = vld [vmem:[#allocation5 + $0x578] sm:$0xf]
        %v667 = vld [vmem:[#allocation5 + $0x57c] sm:$0xff]
        %v668 = vld [vmem:[#allocation5 + $0x584] sm:$0xff]
        %v669 = vld [vmem:[#allocation5 + $0x58c] sm:$0xff]
        %v670 = vld [vmem:[#allocation5 + $0x594] sm:$0xff]
        %v671 = vld [vmem:[#allocation5 + $0x59c] sm:$0xf]
        %v672 = vld [vmem:[#allocation5 + $0x5a0] sm:$0xff]
        %v673 = vld [vmem:[#allocation5 + $0x5a8] sm:$0xff]
        %v674 = vld [vmem:[#allocation5 + $0x5b0] sm:$0xff]
        %v675 = vld [vmem:[#allocation5 + $0x5b8] sm:$0xff]
        %v676 = vld [vmem:[#allocation5 + $0x5c0] sm:$0xf]
        %v677 = vld [vmem:[#allocation5 + $0x5c4] sm:$0xff]
        %v678 = vld [vmem:[#allocation5 + $0x5cc] sm:$0xff]
        %v679 = vld [vmem:[#allocation5 + $0x5d4] sm:$0xff]
        %v680 = vld [vmem:[#allocation5 + $0x5dc] sm:$0xff]
        %v681 = vld [vmem:[#allocation5 + $0x5e4] sm:$0xf]
        %v682 = vld [vmem:[#allocation5 + $0x5e8] sm:$0xff]
        %v683 = vld [vmem:[#allocation5 + $0x5f0] sm:$0xff]
        %v684 = vld [vmem:[#allocation5 + $0x5f8] sm:$0xff]
        %v685 = vld [vmem:[#allocation5 + $0x600] sm:$0xff]
        %v686 = vld [vmem:[#allocation5 + $0x608] sm:$0xf]
        %v687 = vld [vmem:[#allocation5 + $0x60c] sm:$0xff]
        %v688 = vld [vmem:[#allocation5 + $0x614] sm:$0xff]
        %v689 = vld [vmem:[#allocation5 + $0x61c] sm:$0xff]
        %v690 = vld [vmem:[#allocation5 + $0x624] sm:$0xff]
        %v691 = vld [vmem:[#allocation5 + $0x62c] sm:$0xf]
        %v692 = vld [vmem:[#allocation5 + $0x630] sm:$0xff]
        %v693 = vld [vmem:[#allocation5 + $0x638] sm:$0xff]
        %v694 = vld [vmem:[#allocation5 + $0x640] sm:$0xff]
        %v695 = vld [vmem:[#allocation5 + $0x648] sm:$0xff]
        %v696 = vld [vmem:[#allocation5 + $0x650] sm:$0xf]
        %v697 = vld [vmem:[#allocation5 + $0x654] sm:$0xff]
        %v698 = vld [vmem:[#allocation5 + $0x65c] sm:$0xff]
        %v699 = vld [vmem:[#allocation5 + $0x664] sm:$0xff]
        %v700 = vld [vmem:[#allocation5 + $0x66c] sm:$0xff]
        %v701 = vld [vmem:[#allocation5 + $0x674] sm:$0xf]
        %v702 = vld [vmem:[#allocation5 + $0x678] sm:$0xff]
        %v703 = vld [vmem:[#allocation5 + $0x680] sm:$0xff]
        %v704 = vld [vmem:[#allocation5 + $0x688] sm:$0xff]
        %v705 = vld [vmem:[#allocation5 + $0x690] sm:$0xff]
        %v706 = vld [vmem:[#allocation5 + $0x698] sm:$0xf]
        %v707 = vld [vmem:[#allocation5 + $0x69c] sm:$0xff]
        %v708 = vld [vmem:[#allocation5 + $0x6a4] sm:$0xff]
        %v709 = vld [vmem:[#allocation5 + $0x6ac] sm:$0xff]
        %v710 = vld [vmem:[#allocation5 + $0x6b4] sm:$0xff]
        %v711 = vld [vmem:[#allocation5 + $0x6bc] sm:$0xf]
        %v952 = vunpack.c.l.b16 %v472
        %v953 = vunpack.c.h.b16 %v472
        %v954 = vunpack.c.l.b16 %v473
        %v955 = vunpack.c.h.b16 %v473
        %v956 = vunpack.c.l.b16 %v474
        %v957 = vunpack.c.h.b16 %v474
        %v958 = vunpack.c.l.b16 %v475
        %v959 = vunpack.c.h.b16 %v475
        %v960 = vunpack.c.l.b16 %v476
        %v961 = vunpack.c.l.b16 %v477
        %v962 = vunpack.c.h.b16 %v477
        %v963 = vunpack.c.l.b16 %v478
        %v964 = vunpack.c.h.b16 %v478
        %v965 = vunpack.c.l.b16 %v479
        %v966 = vunpack.c.h.b16 %v479
        %v967 = vunpack.c.l.b16 %v480
        %v968 = vunpack.c.h.b16 %v480
        %v969 = vunpack.c.l.b16 %v481
        %v970 = vunpack.c.l.b16 %v482
        %v971 = vunpack.c.h.b16 %v482
        %v972 = vunpack.c.l.b16 %v483
        %v973 = vunpack.c.h.b16 %v483
        %v974 = vunpack.c.l.b16 %v484
        %v975 = vunpack.c.h.b16 %v484
        %v976 = vunpack.c.l.b16 %v485
        %v977 = vunpack.c.h.b16 %v485
        %v978 = vunpack.c.l.b16 %v486
        %v979 = vunpack.c.l.b16 %v487
        %v980 = vunpack.c.h.b16 %v487
        %v981 = vunpack.c.l.b16 %v488
        %v982 = vunpack.c.h.b16 %v488
        %v983 = vunpack.c.l.b16 %v489
        %v984 = vunpack.c.h.b16 %v489
        %v985 = vunpack.c.l.b16 %v490
        %v986 = vunpack.c.h.b16 %v490
        %v987 = vunpack.c.l.b16 %v491
        %v988 = vunpack.c.l.b16 %v492
        %v989 = vunpack.c.h.b16 %v492
        %v990 = vunpack.c.l.b16 %v493
        %v991 = vunpack.c.h.b16 %v493
        %v992 = vunpack.c.l.b16 %v494
        %v993 = vunpack.c.h.b16 %v494
        %v994 = vunpack.c.l.b16 %v495
        %v995 = vunpack.c.h.b16 %v495
        %v996 = vunpack.c.l.b16 %v496
        %v997 = vunpack.c.l.b16 %v497
        %v998 = vunpack.c.h.b16 %v497
        %v999 = vunpack.c.l.b16 %v498
        %v1000 = vunpack.c.h.b16 %v498
        %v1001 = vunpack.c.l.b16 %v499
        %v1002 = vunpack.c.h.b16 %v499
        %v1003 = vunpack.c.l.b16 %v500
        %v1004 = vunpack.c.h.b16 %v500
        %v1005 = vunpack.c.l.b16 %v501
        %v1006 = vunpack.c.l.b16 %v502
        %v1007 = vunpack.c.h.b16 %v502
        %v1008 = vunpack.c.l.b16 %v503
        %v1009 = vunpack.c.h.b16 %v503
        %v1010 = vunpack.c.l.b16 %v504
        %v1011 = vunpack.c.h.b16 %v504
        %v1012 = vunpack.c.l.b16 %v505
        %v1013 = vunpack.c.h.b16 %v505
        %v1014 = vunpack.c.l.b16 %v506
        %v1015 = vunpack.c.l.b16 %v507
        %v1016 = vunpack.c.h.b16 %v507
        %v1017 = vunpack.c.l.b16 %v508
        %v1018 = vunpack.c.h.b16 %v508
        %v1019 = vunpack.c.l.b16 %v509
        %v1020 = vunpack.c.h.b16 %v509
        %v1021 = vunpack.c.l.b16 %v510
        %v1022 = vunpack.c.h.b16 %v510
        %v1023 = vunpack.c.l.b16 %v511
        %v1024 = vunpack.c.l.b16 %v512
        %v1025 = vunpack.c.h.b16 %v512
        %v1026 = vunpack.c.l.b16 %v513
        %v1027 = vunpack.c.h.b16 %v513
        %v1028 = vunpack.c.l.b16 %v514
        %v1029 = vunpack.c.h.b16 %v514
        %v1030 = vunpack.c.l.b16 %v515
        %v1031 = vunpack.c.h.b16 %v515
        %v1032 = vunpack.c.l.b16 %v516
        %v1033 = vunpack.c.l.b16 %v517
        %v1034 = vunpack.c.h.b16 %v517
        %v1035 = vunpack.c.l.b16 %v518
        %v1036 = vunpack.c.h.b16 %v518
        %v1037 = vunpack.c.l.b16 %v519
        %v1038 = vunpack.c.h.b16 %v519
        %v1039 = vunpack.c.l.b16 %v520
        %v1040 = vunpack.c.h.b16 %v520
        %v1041 = vunpack.c.l.b16 %v521
        %v1042 = vunpack.c.l.b16 %v522
        %v1043 = vunpack.c.h.b16 %v522
        %v1044 = vunpack.c.l.b16 %v523
        %v1045 = vunpack.c.h.b16 %v523
        %v1046 = vunpack.c.l.b16 %v524
        %v1047 = vunpack.c.h.b16 %v524
        %v1048 = vunpack.c.l.b16 %v525
        %v1049 = vunpack.c.h.b16 %v525
        %v1050 = vunpack.c.l.b16 %v526
        %v1051 = vunpack.c.l.b16 %v527
        %v1052 = vunpack.c.h.b16 %v527
        %v1053 = vunpack.c.l.b16 %v528
        %v1054 = vunpack.c.h.b16 %v528
        %v1055 = vunpack.c.l.b16 %v529
        %v1056 = vunpack.c.h.b16 %v529
        %v1057 = vunpack.c.l.b16 %v530
        %v1058 = vunpack.c.h.b16 %v530
        %v1059 = vunpack.c.l.b16 %v531
        %v1060 = vunpack.c.l.b16 %v532
        %v1061 = vunpack.c.h.b16 %v532
        %v1062 = vunpack.c.l.b16 %v533
        %v1063 = vunpack.c.h.b16 %v533
        %v1064 = vunpack.c.l.b16 %v534
        %v1065 = vunpack.c.h.b16 %v534
        %v1066 = vunpack.c.l.b16 %v535
        %v1067 = vunpack.c.h.b16 %v535
        %v1068 = vunpack.c.l.b16 %v536
        %v1069 = vunpack.c.l.b16 %v537
        %v1070 = vunpack.c.h.b16 %v537
        %v1071 = vunpack.c.l.b16 %v538
        %v1072 = vunpack.c.h.b16 %v538
        %v1073 = vunpack.c.l.b16 %v539
        %v1074 = vunpack.c.h.b16 %v539
        %v1075 = vunpack.c.l.b16 %v540
        %v1076 = vunpack.c.h.b16 %v540
        %v1077 = vunpack.c.l.b16 %v541
        %v1078 = vunpack.c.l.b16 %v542
        %v1079 = vunpack.c.h.b16 %v542
        %v1080 = vunpack.c.l.b16 %v543
        %v1081 = vunpack.c.h.b16 %v543
        %v1082 = vunpack.c.l.b16 %v544
        %v1083 = vunpack.c.h.b16 %v544
        %v1084 = vunpack.c.l.b16 %v545
        %v1085 = vunpack.c.h.b16 %v545
        %v1086 = vunpack.c.l.b16 %v546
        %v1087 = vunpack.c.l.b16 %v547
        %v1088 = vunpack.c.h.b16 %v547
        %v1089 = vunpack.c.l.b16 %v548
        %v1090 = vunpack.c.h.b16 %v548
        %v1091 = vunpack.c.l.b16 %v549
        %v1092 = vunpack.c.h.b16 %v549
        %v1093 = vunpack.c.l.b16 %v550
        %v1094 = vunpack.c.h.b16 %v550
        %v1095 = vunpack.c.l.b16 %v551
        %v1096 = vunpack.c.l.b16 %v552
        %v1097 = vunpack.c.h.b16 %v552
        %v1098 = vunpack.c.l.b16 %v553
        %v1099 = vunpack.c.h.b16 %v553
        %v1100 = vunpack.c.l.b16 %v554
        %v1101 = vunpack.c.h.b16 %v554
        %v1102 = vunpack.c.l.b16 %v555
        %v1103 = vunpack.c.h.b16 %v555
        %v1104 = vunpack.c.l.b16 %v556
        %v1105 = vunpack.c.l.b16 %v557
        %v1106 = vunpack.c.h.b16 %v557
        %v1107 = vunpack.c.l.b16 %v558
        %v1108 = vunpack.c.h.b16 %v558
        %v1109 = vunpack.c.l.b16 %v559
        %v1110 = vunpack.c.h.b16 %v559
        %v1111 = vunpack.c.l.b16 %v560
        %v1112 = vunpack.c.h.b16 %v560
        %v1113 = vunpack.c.l.b16 %v561
        %v1114 = vunpack.c.l.b16 %v562
        %v1115 = vunpack.c.h.b16 %v562
        %v1116 = vunpack.c.l.b16 %v563
        %v1117 = vunpack.c.h.b16 %v563
        %v1118 = vunpack.c.l.b16 %v564
        %v1119 = vunpack.c.h.b16 %v564
        %v1120 = vunpack.c.l.b16 %v565
        %v1121 = vunpack.c.h.b16 %v565
        %v1122 = vunpack.c.l.b16 %v566
        %v1123 = vunpack.c.l.b16 %v567
        %v1124 = vunpack.c.h.b16 %v567
        %v1125 = vunpack.c.l.b16 %v568
        %v1126 = vunpack.c.h.b16 %v568
        %v1127 = vunpack.c.l.b16 %v569
        %v1128 = vunpack.c.h.b16 %v569
        %v1129 = vunpack.c.l.b16 %v570
        %v1130 = vunpack.c.h.b16 %v570
        %v1131 = vunpack.c.l.b16 %v571
        %v1132 = vunpack.c.l.b16 %v572
        %v1133 = vunpack.c.h.b16 %v572
        %v1134 = vunpack.c.l.b16 %v573
        %v1135 = vunpack.c.h.b16 %v573
        %v1136 = vunpack.c.l.b16 %v574
        %v1137 = vunpack.c.h.b16 %v574
        %v1138 = vunpack.c.l.b16 %v575
        %v1139 = vunpack.c.h.b16 %v575
        %v1140 = vunpack.c.l.b16 %v576
        %v1141 = vunpack.c.l.b16 %v577
        %v1142 = vunpack.c.h.b16 %v577
        %v1143 = vunpack.c.l.b16 %v578
        %v1144 = vunpack.c.h.b16 %v578
        %v1145 = vunpack.c.l.b16 %v579
        %v1146 = vunpack.c.h.b16 %v579
        %v1147 = vunpack.c.l.b16 %v580
        %v1148 = vunpack.c.h.b16 %v580
        %v1149 = vunpack.c.l.b16 %v581
        %v1150 = vunpack.c.l.b16 %v582
        %v1151 = vunpack.c.h.b16 %v582
        %v1152 = vunpack.c.l.b16 %v583
        %v1153 = vunpack.c.h.b16 %v583
        %v1154 = vunpack.c.l.b16 %v584
        %v1155 = vunpack.c.h.b16 %v584
        %v1156 = vunpack.c.l.b16 %v585
        %v1157 = vunpack.c.h.b16 %v585
        %v1158 = vunpack.c.l.b16 %v586
        %v1159 = vunpack.c.l.b16 %v587
        %v1160 = vunpack.c.h.b16 %v587
        %v1161 = vunpack.c.l.b16 %v588
        %v1162 = vunpack.c.h.b16 %v588
        %v1163 = vunpack.c.l.b16 %v589
        %v1164 = vunpack.c.h.b16 %v589
        %v1165 = vunpack.c.l.b16 %v590
        %v1166 = vunpack.c.h.b16 %v590
        %v1167 = vunpack.c.l.b16 %v591
        %v1168 = vunpack.c.l.b16 %v592
        %v1169 = vunpack.c.h.b16 %v592
        %v1170 = vunpack.c.l.b16 %v593
        %v1171 = vunpack.c.h.b16 %v593
        %v1172 = vunpack.c.l.b16 %v594
        %v1173 = vunpack.c.h.b16 %v594
        %v1174 = vunpack.c.l.b16 %v595
        %v1175 = vunpack.c.h.b16 %v595
        %v1176 = vunpack.c.l.b16 %v596
        %v1177 = vunpack.c.l.b16 %v597
        %v1178 = vunpack.c.h.b16 %v597
        %v1179 = vunpack.c.l.b16 %v598
        %v1180 = vunpack.c.h.b16 %v598
        %v1181 = vunpack.c.l.b16 %v599
        %v1182 = vunpack.c.h.b16 %v599
        %v1183 = vunpack.c.l.b16 %v600
        %v1184 = vunpack.c.h.b16 %v600
        %v1185 = vunpack.c.l.b16 %v601
        %v1186 = vunpack.c.l.b16 %v602
        %v1187 = vunpack.c.h.b16 %v602
        %v1188 = vunpack.c.l.b16 %v603
        %v1189 = vunpack.c.h.b16 %v603
        %v1190 = vunpack.c.l.b16 %v604
        %v1191 = vunpack.c.h.b16 %v604
        %v1192 = vunpack.c.l.b16 %v605
        %v1193 = vunpack.c.h.b16 %v605
        %v1194 = vunpack.c.l.b16 %v606
        %v1195 = vunpack.c.l.b16 %v607
        %v1196 = vunpack.c.h.b16 %v607
        %v1197 = vunpack.c.l.b16 %v608
        %v1198 = vunpack.c.h.b16 %v608
        %v1199 = vunpack.c.l.b16 %v609
        %v1200 = vunpack.c.h.b16 %v609
        %v1201 = vunpack.c.l.b16 %v610
        %v1202 = vunpack.c.h.b16 %v610
        %v1203 = vunpack.c.l.b16 %v611
        %v1204 = vunpack.c.l.b16 %v612
        %v1205 = vunpack.c.h.b16 %v612
        %v1206 = vunpack.c.l.b16 %v613
        %v1207 = vunpack.c.h.b16 %v613
        %v1208 = vunpack.c.l.b16 %v614
        %v1209 = vunpack.c.h.b16 %v614
        %v1210 = vunpack.c.l.b16 %v615
        %v1211 = vunpack.c.h.b16 %v615
        %v1212 = vunpack.c.l.b16 %v616
        %v1213 = vunpack.c.l.b16 %v617
        %v1214 = vunpack.c.h.b16 %v617
        %v1215 = vunpack.c.l.b16 %v618
        %v1216 = vunpack.c.h.b16 %v618
        %v1217 = vunpack.c.l.b16 %v619
        %v1218 = vunpack.c.h.b16 %v619
        %v1219 = vunpack.c.l.b16 %v620
        %v1220 = vunpack.c.h.b16 %v620
        %v1221 = vunpack.c.l.b16 %v621
        %v1222 = vunpack.c.l.b16 %v622
        %v1223 = vunpack.c.h.b16 %v622
        %v1224 = vunpack.c.l.b16 %v623
        %v1225 = vunpack.c.h.b16 %v623
        %v1226 = vunpack.c.l.b16 %v624
        %v1227 = vunpack.c.h.b16 %v624
        %v1228 = vunpack.c.l.b16 %v625
        %v1229 = vunpack.c.h.b16 %v625
        %v1230 = vunpack.c.l.b16 %v626
        %v1231 = vunpack.c.l.b16 %v627
        %v1232 = vunpack.c.h.b16 %v627
        %v1233 = vunpack.c.l.b16 %v628
        %v1234 = vunpack.c.h.b16 %v628
        %v1235 = vunpack.c.l.b16 %v629
        %v1236 = vunpack.c.h.b16 %v629
        %v1237 = vunpack.c.l.b16 %v630
        %v1238 = vunpack.c.h.b16 %v630
        %v1239 = vunpack.c.l.b16 %v631
        %v1240 = vunpack.c.l.b16 %v632
        %v1241 = vunpack.c.h.b16 %v632
        %v1242 = vunpack.c.l.b16 %v633
        %v1243 = vunpack.c.h.b16 %v633
        %v1244 = vunpack.c.l.b16 %v634
        %v1245 = vunpack.c.h.b16 %v634
        %v1246 = vunpack.c.l.b16 %v635
        %v1247 = vunpack.c.h.b16 %v635
        %v1248 = vunpack.c.l.b16 %v636
        %v1249 = vunpack.c.l.b16 %v637
        %v1250 = vunpack.c.h.b16 %v637
        %v1251 = vunpack.c.l.b16 %v638
        %v1252 = vunpack.c.h.b16 %v638
        %v1253 = vunpack.c.l.b16 %v639
        %v1254 = vunpack.c.h.b16 %v639
        %v1255 = vunpack.c.l.b16 %v640
        %v1256 = vunpack.c.h.b16 %v640
        %v1257 = vunpack.c.l.b16 %v641
        %v1258 = vunpack.c.l.b16 %v642
        %v1259 = vunpack.c.h.b16 %v642
        %v1260 = vunpack.c.l.b16 %v643
        %v1261 = vunpack.c.h.b16 %v643
        %v1262 = vunpack.c.l.b16 %v644
        %v1263 = vunpack.c.h.b16 %v644
        %v1264 = vunpack.c.l.b16 %v645
        %v1265 = vunpack.c.h.b16 %v645
        %v1266 = vunpack.c.l.b16 %v646
        %v1267 = vunpack.c.l.b16 %v647
        %v1268 = vunpack.c.h.b16 %v647
        %v1269 = vunpack.c.l.b16 %v648
        %v1270 = vunpack.c.h.b16 %v648
        %v1271 = vunpack.c.l.b16 %v649
        %v1272 = vunpack.c.h.b16 %v649
        %v1273 = vunpack.c.l.b16 %v650
        %v1274 = vunpack.c.h.b16 %v650
        %v1275 = vunpack.c.l.b16 %v651
        %v1276 = vunpack.c.l.b16 %v652
        %v1277 = vunpack.c.h.b16 %v652
        %v1278 = vunpack.c.l.b16 %v653
        %v1279 = vunpack.c.h.b16 %v653
        %v1280 = vunpack.c.l.b16 %v654
        %v1281 = vunpack.c.h.b16 %v654
        %v1282 = vunpack.c.l.b16 %v655
        %v1283 = vunpack.c.h.b16 %v655
        %v1284 = vunpack.c.l.b16 %v656
        %v1285 = vunpack.c.l.b16 %v657
        %v1286 = vunpack.c.h.b16 %v657
        %v1287 = vunpack.c.l.b16 %v658
        %v1288 = vunpack.c.h.b16 %v658
        %v1289 = vunpack.c.l.b16 %v659
        %v1290 = vunpack.c.h.b16 %v659
        %v1291 = vunpack.c.l.b16 %v660
        %v1292 = vunpack.c.h.b16 %v660
        %v1293 = vunpack.c.l.b16 %v661
        %v1294 = vunpack.c.l.b16 %v662
        %v1295 = vunpack.c.h.b16 %v662
        %v1296 = vunpack.c.l.b16 %v663
        %v1297 = vunpack.c.h.b16 %v663
        %v1298 = vunpack.c.l.b16 %v664
        %v1299 = vunpack.c.h.b16 %v664
        %v1300 = vunpack.c.l.b16 %v665
        %v1301 = vunpack.c.h.b16 %v665
        %v1302 = vunpack.c.l.b16 %v666
        %v1303 = vunpack.c.l.b16 %v667
        %v1304 = vunpack.c.h.b16 %v667
        %v1305 = vunpack.c.l.b16 %v668
        %v1306 = vunpack.c.h.b16 %v668
        %v1307 = vunpack.c.l.b16 %v669
        %v1308 = vunpack.c.h.b16 %v669
        %v1309 = vunpack.c.l.b16 %v670
        %v1310 = vunpack.c.h.b16 %v670
        %v1311 = vunpack.c.l.b16 %v671
        %v1312 = vunpack.c.l.b16 %v672
        %v1313 = vunpack.c.h.b16 %v672
        %v1314 = vunpack.c.l.b16 %v673
        %v1315 = vunpack.c.h.b16 %v673
        %v1316 = vunpack.c.l.b16 %v674
        %v1317 = vunpack.c.h.b16 %v674
        %v1318 = vunpack.c.l.b16 %v675
        %v1319 = vunpack.c.h.b16 %v675
        %v1320 = vunpack.c.l.b16 %v676
        %v1321 = vunpack.c.l.b16 %v677
        %v1322 = vunpack.c.h.b16 %v677
        %v1323 = vunpack.c.l.b16 %v678
        %v1324 = vunpack.c.h.b16 %v678
        %v1325 = vunpack.c.l.b16 %v679
        %v1326 = vunpack.c.h.b16 %v679
        %v1327 = vunpack.c.l.b16 %v680
        %v1328 = vunpack.c.h.b16 %v680
        %v1329 = vunpack.c.l.b16 %v681
        %v1330 = vunpack.c.l.b16 %v682
        %v1331 = vunpack.c.h.b16 %v682
        %v1332 = vunpack.c.l.b16 %v683
        %v1333 = vunpack.c.h.b16 %v683
        %v1334 = vunpack.c.l.b16 %v684
        %v1335 = vunpack.c.h.b16 %v684
        %v1336 = vunpack.c.l.b16 %v685
        %v1337 = vunpack.c.h.b16 %v685
        %v1338 = vunpack.c.l.b16 %v686
        %v1339 = vunpack.c.l.b16 %v687
        %v1340 = vunpack.c.h.b16 %v687
        %v1341 = vunpack.c.l.b16 %v688
        %v1342 = vunpack.c.h.b16 %v688
        %v1343 = vunpack.c.l.b16 %v689
        %v1344 = vunpack.c.h.b16 %v689
        %v1345 = vunpack.c.l.b16 %v690
        %v1346 = vunpack.c.h.b16 %v690
        %v1347 = vunpack.c.l.b16 %v691
        %v1348 = vunpack.c.l.b16 %v692
        %v1349 = vunpack.c.h.b16 %v692
        %v1350 = vunpack.c.l.b16 %v693
        %v1351 = vunpack.c.h.b16 %v693
        %v1352 = vunpack.c.l.b16 %v694
        %v1353 = vunpack.c.h.b16 %v694
        %v1354 = vunpack.c.l.b16 %v695
        %v1355 = vunpack.c.h.b16 %v695
        %v1356 = vunpack.c.l.b16 %v696
        %v1357 = vunpack.c.l.b16 %v697
        %v1358 = vunpack.c.h.b16 %v697
        %v1359 = vunpack.c.l.b16 %v698
        %v1360 = vunpack.c.h.b16 %v698
        %v1361 = vunpack.c.l.b16 %v699
        %v1362 = vunpack.c.h.b16 %v699
        %v1363 = vunpack.c.l.b16 %v700
        %v1364 = vunpack.c.h.b16 %v700
        %v1365 = vunpack.c.l.b16 %v701
        %v1366 = vunpack.c.l.b16 %v702
        %v1367 = vunpack.c.h.b16 %v702
        %v1368 = vunpack.c.l.b16 %v703
        %v1369 = vunpack.c.h.b16 %v703
        %v1370 = vunpack.c.l.b16 %v704
        %v1371 = vunpack.c.h.b16 %v704
        %v1372 = vunpack.c.l.b16 %v705
        %v1373 = vunpack.c.h.b16 %v705
        %v1374 = vunpack.c.l.b16 %v706
        %v1375 = vunpack.c.l.b16 %v707
        %v1376 = vunpack.c.h.b16 %v707
        %v1377 = vunpack.c.l.b16 %v708
        %v1378 = vunpack.c.h.b16 %v708
        %v1379 = vunpack.c.l.b16 %v709
        %v1380 = vunpack.c.h.b16 %v709
        %v1381 = vunpack.c.l.b16 %v710
        %v1382 = vunpack.c.h.b16 %v710
        %v1383 = vunpack.c.l.b16 %v711
        %v1384 = vpack.c.b16 %v961, %v952
        %v1385 = vpack.c.b16 %v962, %v953
        %v1386 = vpack.c.b16 %v963, %v954
        %v1387 = vpack.c.b16 %v964, %v955
        %v1388 = vpack.c.b16 %v965, %v956
        %v1389 = vpack.c.b16 %v966, %v957
        %v1390 = vpack.c.b16 %v967, %v958
        %v1391 = vpack.c.b16 %v968, %v959
        %v1392 = vpack.c.b16 %v969, %v960
        %v1393 = vpack.c.b16 %v979, %v970
        %v1394 = vpack.c.b16 %v980, %v971
        %v1395 = vpack.c.b16 %v981, %v972
        %v1396 = vpack.c.b16 %v982, %v973
        %v1397 = vpack.c.b16 %v983, %v974
        %v1398 = vpack.c.b16 %v984, %v975
        %v1399 = vpack.c.b16 %v985, %v976
        %v1400 = vpack.c.b16 %v986, %v977
        %v1401 = vpack.c.b16 %v987, %v978
        %v1402 = vpack.c.b16 %v997, %v988
        %v1403 = vpack.c.b16 %v998, %v989
        %v1404 = vpack.c.b16 %v999, %v990
        %v1405 = vpack.c.b16 %v1000, %v991
        %v1406 = vpack.c.b16 %v1001, %v992
        %v1407 = vpack.c.b16 %v1002, %v993
        %v1408 = vpack.c.b16 %v1003, %v994
        %v1409 = vpack.c.b16 %v1004, %v995
        %v1410 = vpack.c.b16 %v1005, %v996
        %v1411 = vpack.c.b16 %v1015, %v1006
        %v1412 = vpack.c.b16 %v1016, %v1007
        %v1413 = vpack.c.b16 %v1017, %v1008
        %v1414 = vpack.c.b16 %v1018, %v1009
        %v1415 = vpack.c.b16 %v1019, %v1010
        %v1416 = vpack.c.b16 %v1020, %v1011
        %v1417 = vpack.c.b16 %v1021, %v1012
        %v1418 = vpack.c.b16 %v1022, %v1013
        %v1419 = vpack.c.b16 %v1023, %v1014
        %v1420 = vpack.c.b16 %v1033, %v1024
        %v1421 = vpack.c.b16 %v1034, %v1025
        %v1422 = vpack.c.b16 %v1035, %v1026
        %v1423 = vpack.c.b16 %v1036, %v1027
        %v1424 = vpack.c.b16 %v1037, %v1028
        %v1425 = vpack.c.b16 %v1038, %v1029
        %v1426 = vpack.c.b16 %v1039, %v1030
        %v1427 = vpack.c.b16 %v1040, %v1031
        %v1428 = vpack.c.b16 %v1041, %v1032
        %v1429 = vpack.c.b16 %v1051, %v1042
        %v1430 = vpack.c.b16 %v1052, %v1043
        %v1431 = vpack.c.b16 %v1053, %v1044
        %v1432 = vpack.c.b16 %v1054, %v1045
        %v1433 = vpack.c.b16 %v1055, %v1046
        %v1434 = vpack.c.b16 %v1056, %v1047
        %v1435 = vpack.c.b16 %v1057, %v1048
        %v1436 = vpack.c.b16 %v1058, %v1049
        %v1437 = vpack.c.b16 %v1059, %v1050
        %v1438 = vpack.c.b16 %v1069, %v1060
        %v1439 = vpack.c.b16 %v1070, %v1061
        %v1440 = vpack.c.b16 %v1071, %v1062
        %v1441 = vpack.c.b16 %v1072, %v1063
        %v1442 = vpack.c.b16 %v1073, %v1064
        %v1443 = vpack.c.b16 %v1074, %v1065
        %v1444 = vpack.c.b16 %v1075, %v1066
        %v1445 = vpack.c.b16 %v1076, %v1067
        %v1446 = vpack.c.b16 %v1077, %v1068
        %v1447 = vpack.c.b16 %v1087, %v1078
        %v1448 = vpack.c.b16 %v1088, %v1079
        %v1449 = vpack.c.b16 %v1089, %v1080
        %v1450 = vpack.c.b16 %v1090, %v1081
        %v1451 = vpack.c.b16 %v1091, %v1082
        %v1452 = vpack.c.b16 %v1092, %v1083
        %v1453 = vpack.c.b16 %v1093, %v1084
        %v1454 = vpack.c.b16 %v1094, %v1085
        %v1455 = vpack.c.b16 %v1095, %v1086
        %v1456 = vpack.c.b16 %v1105, %v1096
        %v1457 = vpack.c.b16 %v1106, %v1097
        %v1458 = vpack.c.b16 %v1107, %v1098
        %v1459 = vpack.c.b16 %v1108, %v1099
        %v1460 = vpack.c.b16 %v1109, %v1100
        %v1461 = vpack.c.b16 %v1110, %v1101
        %v1462 = vpack.c.b16 %v1111, %v1102
        %v1463 = vpack.c.b16 %v1112, %v1103
        %v1464 = vpack.c.b16 %v1113, %v1104
        %v1465 = vpack.c.b16 %v1123, %v1114
        %v1466 = vpack.c.b16 %v1124, %v1115
        %v1467 = vpack.c.b16 %v1125, %v1116
        %v1468 = vpack.c.b16 %v1126, %v1117
        %v1469 = vpack.c.b16 %v1127, %v1118
        %v1470 = vpack.c.b16 %v1128, %v1119
        %v1471 = vpack.c.b16 %v1129, %v1120
        %v1472 = vpack.c.b16 %v1130, %v1121
        %v1473 = vpack.c.b16 %v1131, %v1122
        %v1474 = vpack.c.b16 %v1141, %v1132
        %v1475 = vpack.c.b16 %v1142, %v1133
        %v1476 = vpack.c.b16 %v1143, %v1134
        %v1477 = vpack.c.b16 %v1144, %v1135
        %v1478 = vpack.c.b16 %v1145, %v1136
        %v1479 = vpack.c.b16 %v1146, %v1137
        %v1480 = vpack.c.b16 %v1147, %v1138
        %v1481 = vpack.c.b16 %v1148, %v1139
        %v1482 = vpack.c.b16 %v1149, %v1140
        %v1483 = vpack.c.b16 %v1159, %v1150
        %v1484 = vpack.c.b16 %v1160, %v1151
        %v1485 = vpack.c.b16 %v1161, %v1152
        %v1486 = vpack.c.b16 %v1162, %v1153
        %v1487 = vpack.c.b16 %v1163, %v1154
        %v1488 = vpack.c.b16 %v1164, %v1155
        %v1489 = vpack.c.b16 %v1165, %v1156
        %v1490 = vpack.c.b16 %v1166, %v1157
        %v1491 = vpack.c.b16 %v1167, %v1158
        %v1492 = vpack.c.b16 %v1177, %v1168
        %v1493 = vpack.c.b16 %v1178, %v1169
        %v1494 = vpack.c.b16 %v1179, %v1170
        %v1495 = vpack.c.b16 %v1180, %v1171
        %v1496 = vpack.c.b16 %v1181, %v1172
        %v1497 = vpack.c.b16 %v1182, %v1173
        %v1498 = vpack.c.b16 %v1183, %v1174
        %v1499 = vpack.c.b16 %v1184, %v1175
        %v1500 = vpack.c.b16 %v1185, %v1176
        %v1501 = vpack.c.b16 %v1195, %v1186
        %v1502 = vpack.c.b16 %v1196, %v1187
        %v1503 = vpack.c.b16 %v1197, %v1188
        %v1504 = vpack.c.b16 %v1198, %v1189
        %v1505 = vpack.c.b16 %v1199, %v1190
        %v1506 = vpack.c.b16 %v1200, %v1191
        %v1507 = vpack.c.b16 %v1201, %v1192
        %v1508 = vpack.c.b16 %v1202, %v1193
        %v1509 = vpack.c.b16 %v1203, %v1194
        %v1510 = vpack.c.b16 %v1213, %v1204
        %v1511 = vpack.c.b16 %v1214, %v1205
        %v1512 = vpack.c.b16 %v1215, %v1206
        %v1513 = vpack.c.b16 %v1216, %v1207
        %v1514 = vpack.c.b16 %v1217, %v1208
        %v1515 = vpack.c.b16 %v1218, %v1209
        %v1516 = vpack.c.b16 %v1219, %v1210
        %v1517 = vpack.c.b16 %v1220, %v1211
        %v1518 = vpack.c.b16 %v1221, %v1212
        %v1519 = vpack.c.b16 %v1231, %v1222
        %v1520 = vpack.c.b16 %v1232, %v1223
        %v1521 = vpack.c.b16 %v1233, %v1224
        %v1522 = vpack.c.b16 %v1234, %v1225
        %v1523 = vpack.c.b16 %v1235, %v1226
        %v1524 = vpack.c.b16 %v1236, %v1227
        %v1525 = vpack.c.b16 %v1237, %v1228
        %v1526 = vpack.c.b16 %v1238, %v1229
        %v1527 = vpack.c.b16 %v1239, %v1230
        %v1528 = vpack.c.b16 %v1249, %v1240
        %v1529 = vpack.c.b16 %v1250, %v1241
        %v1530 = vpack.c.b16 %v1251, %v1242
        %v1531 = vpack.c.b16 %v1252, %v1243
        %v1532 = vpack.c.b16 %v1253, %v1244
        %v1533 = vpack.c.b16 %v1254, %v1245
        %v1534 = vpack.c.b16 %v1255, %v1246
        %v1535 = vpack.c.b16 %v1256, %v1247
        %v1536 = vpack.c.b16 %v1257, %v1248
        %v1537 = vpack.c.b16 %v1267, %v1258
        %v1538 = vpack.c.b16 %v1268, %v1259
        %v1539 = vpack.c.b16 %v1269, %v1260
        %v1540 = vpack.c.b16 %v1270, %v1261
        %v1541 = vpack.c.b16 %v1271, %v1262
        %v1542 = vpack.c.b16 %v1272, %v1263
        %v1543 = vpack.c.b16 %v1273, %v1264
        %v1544 = vpack.c.b16 %v1274, %v1265
        %v1545 = vpack.c.b16 %v1275, %v1266
        %v1546 = vpack.c.b16 %v1285, %v1276
        %v1547 = vpack.c.b16 %v1286, %v1277
        %v1548 = vpack.c.b16 %v1287, %v1278
        %v1549 = vpack.c.b16 %v1288, %v1279
        %v1550 = vpack.c.b16 %v1289, %v1280
        %v1551 = vpack.c.b16 %v1290, %v1281
        %v1552 = vpack.c.b16 %v1291, %v1282
        %v1553 = vpack.c.b16 %v1292, %v1283
        %v1554 = vpack.c.b16 %v1293, %v1284
        %v1555 = vpack.c.b16 %v1303, %v1294
        %v1556 = vpack.c.b16 %v1304, %v1295
        %v1557 = vpack.c.b16 %v1305, %v1296
        %v1558 = vpack.c.b16 %v1306, %v1297
        %v1559 = vpack.c.b16 %v1307, %v1298
        %v1560 = vpack.c.b16 %v1308, %v1299
        %v1561 = vpack.c.b16 %v1309, %v1300
        %v1562 = vpack.c.b16 %v1310, %v1301
        %v1563 = vpack.c.b16 %v1311, %v1302
        %v1564 = vpack.c.b16 %v1321, %v1312
        %v1565 = vpack.c.b16 %v1322, %v1313
        %v1566 = vpack.c.b16 %v1323, %v1314
        %v1567 = vpack.c.b16 %v1324, %v1315
        %v1568 = vpack.c.b16 %v1325, %v1316
        %v1569 = vpack.c.b16 %v1326, %v1317
        %v1570 = vpack.c.b16 %v1327, %v1318
        %v1571 = vpack.c.b16 %v1328, %v1319
        %v1572 = vpack.c.b16 %v1329, %v1320
        %v1573 = vpack.c.b16 %v1339, %v1330
        %v1574 = vpack.c.b16 %v1340, %v1331
        %v1575 = vpack.c.b16 %v1341, %v1332
        %v1576 = vpack.c.b16 %v1342, %v1333
        %v1577 = vpack.c.b16 %v1343, %v1334
        %v1578 = vpack.c.b16 %v1344, %v1335
        %v1579 = vpack.c.b16 %v1345, %v1336
        %v1580 = vpack.c.b16 %v1346, %v1337
        %v1581 = vpack.c.b16 %v1347, %v1338
        %v1582 = vpack.c.b16 %v1357, %v1348
        %v1583 = vpack.c.b16 %v1358, %v1349
        %v1584 = vpack.c.b16 %v1359, %v1350
        %v1585 = vpack.c.b16 %v1360, %v1351
        %v1586 = vpack.c.b16 %v1361, %v1352
        %v1587 = vpack.c.b16 %v1362, %v1353
        %v1588 = vpack.c.b16 %v1363, %v1354
        %v1589 = vpack.c.b16 %v1364, %v1355
        %v1590 = vpack.c.b16 %v1365, %v1356
        %v1591 = vpack.c.b16 %v1375, %v1366
        %v1592 = vpack.c.b16 %v1376, %v1367
        %v1593 = vpack.c.b16 %v1377, %v1368
        %v1594 = vpack.c.b16 %v1378, %v1369
        %v1595 = vpack.c.b16 %v1379, %v1370
        %v1596 = vpack.c.b16 %v1380, %v1371
        %v1597 = vpack.c.b16 %v1381, %v1372
        %v1598 = vpack.c.b16 %v1382, %v1373
        %v1599 = vpack.c.b16 %v1383, %v1374
        %1816 = vmatpush.bf16.msra.mxu0 %v1447
        %1817 = vmatpush.bf16.msra.mxu0 %v1438
        %1818 = vmatpush.bf16.msra.mxu0 %v1429
        %1819 = vmatpush.bf16.msra.mxu0 %v1420
        %1820 = vmatpush.bf16.msra.mxu0 %v1411
        %1821 = vmatpush.bf16.msra.mxu0 %v1402
        %1822 = vmatpush.bf16.msra.mxu0 %v1393
        %1823 = vmatpush.bf16.msra.mxu0 %v1384
        %1824 = vmatmul.bf16.gmra.mxu0 %v469
        %v1825 = vpop.f32.mrf.mxu0
        %v1826 = vadd.f32 0.0, %v1825
        %v1827 = vpop.f32.mrf.mxu0
        %v1828 = vadd.f32 0.0, %v1827
        %1829 = vdwg.mxu0
        %1830 = vmatpush.bf16.msra.mxu0 %v1519
        %1831 = vmatpush.bf16.msra.mxu0 %v1510
        %1832 = vmatpush.bf16.msra.mxu0 %v1501
        %1833 = vmatpush.bf16.msra.mxu0 %v1492
        %1834 = vmatpush.bf16.msra.mxu0 %v1483
        %1835 = vmatpush.bf16.msra.mxu0 %v1474
        %1836 = vmatpush.bf16.msra.mxu0 %v1465
        %1837 = vmatpush.bf16.msra.mxu0 %v1456
        %1838 = vmatmul.bf16.gmra.mxu0 %v470
        %v1839 = vpop.f32.mrf.mxu0
        %v1840 = vadd.f32 %v1826, %v1839
        %v1841 = vpop.f32.mrf.mxu0
        %v1842 = vadd.f32 %v1828, %v1841
        %1843 = vdwg.mxu0
        %1844 = vmatpush.bf16.msra.mxu0 %v1591
        %1845 = vmatpush.bf16.msra.mxu0 %v1582
        %1846 = vmatpush.bf16.msra.mxu0 %v1573
        %1847 = vmatpush.bf16.msra.mxu0 %v1564
        %1848 = vmatpush.bf16.msra.mxu0 %v1555
        %1849 = vmatpush.bf16.msra.mxu0 %v1546
        %1850 = vmatpush.bf16.msra.mxu0 %v1537
        %1851 = vmatpush.bf16.msra.mxu0 %v1528
        %1852 = vmatmul.bf16.gmra.mxu0 %v471
        %v1853 = vpop.f32.mrf.mxu0
        %v1854 = vadd.f32 %v1840, %v1853
        %v1855 = vpop.f32.mrf.mxu0
        %v1856 = vadd.f32 %v1842, %v1855
        %1857 = vdwg.mxu0
        %1858 = vmatpush.bf16.msra.mxu0 %v1448
        %1859 = vmatpush.bf16.msra.mxu0 %v1439
        %1860 = vmatpush.bf16.msra.mxu0 %v1430
        %1861 = vmatpush.bf16.msra.mxu0 %v1421
        %1862 = vmatpush.bf16.msra.mxu0 %v1412
        %1863 = vmatpush.bf16.msra.mxu0 %v1403
        %1864 = vmatpush.bf16.msra.mxu0 %v1394
        %1865 = vmatpush.bf16.msra.mxu0 %v1385
        %1866 = vmatmul.bf16.gmra.mxu0 %v469
        %v1867 = vpop.f32.mrf.mxu0
        %v1868 = vadd.f32 0.0, %v1867
        %v1869 = vpop.f32.mrf.mxu0
        %v1870 = vadd.f32 0.0, %v1869
        %1871 = vdwg.mxu0
        %1872 = vmatpush.bf16.msra.mxu0 %v1520
        %1873 = vmatpush.bf16.msra.mxu0 %v1511
        %1874 = vmatpush.bf16.msra.mxu0 %v1502
        %1875 = vmatpush.bf16.msra.mxu0 %v1493
        %1876 = vmatpush.bf16.msra.mxu0 %v1484
        %1877 = vmatpush.bf16.msra.mxu0 %v1475
        %1878 = vmatpush.bf16.msra.mxu0 %v1466
        %1879 = vmatpush.bf16.msra.mxu0 %v1457
        %1880 = vmatmul.bf16.gmra.mxu0 %v470
        %v1881 = vpop.f32.mrf.mxu0
        %v1882 = vadd.f32 %v1868, %v1881
        %v1883 = vpop.f32.mrf.mxu0
        %v1884 = vadd.f32 %v1870, %v1883
        %1885 = vdwg.mxu0
        %1886 = vmatpush.bf16.msra.mxu0 %v1592
        %1887 = vmatpush.bf16.msra.mxu0 %v1583
        %1888 = vmatpush.bf16.msra.mxu0 %v1574
        %1889 = vmatpush.bf16.msra.mxu0 %v1565
        %1890 = vmatpush.bf16.msra.mxu0 %v1556
        %1891 = vmatpush.bf16.msra.mxu0 %v1547
        %1892 = vmatpush.bf16.msra.mxu0 %v1538
        %1893 = vmatpush.bf16.msra.mxu0 %v1529
        %1894 = vmatmul.bf16.gmra.mxu0 %v471
        %v1895 = vpop.f32.mrf.mxu0
        %v1896 = vadd.f32 %v1882, %v1895
        %v1897 = vpop.f32.mrf.mxu0
        %v1898 = vadd.f32 %v1884, %v1897
        %1899 = vdwg.mxu0
        %1900 = vmatpush.bf16.msra.mxu0 %v1449
        %1901 = vmatpush.bf16.msra.mxu0 %v1440
        %1902 = vmatpush.bf16.msra.mxu0 %v1431
        %1903 = vmatpush.bf16.msra.mxu0 %v1422
        %1904 = vmatpush.bf16.msra.mxu0 %v1413
        %1905 = vmatpush.bf16.msra.mxu0 %v1404
        %1906 = vmatpush.bf16.msra.mxu0 %v1395
        %1907 = vmatpush.bf16.msra.mxu0 %v1386
        %1908 = vmatmul.bf16.gmra.mxu0 %v469
        %v1909 = vpop.f32.mrf.mxu0
        %v1910 = vadd.f32 0.0, %v1909
        %v1911 = vpop.f32.mrf.mxu0
        %v1912 = vadd.f32 0.0, %v1911
        %1913 = vdwg.mxu0
        %1914 = vmatpush.bf16.msra.mxu0 %v1521
        %1915 = vmatpush.bf16.msra.mxu0 %v1512
        %1916 = vmatpush.bf16.msra.mxu0 %v1503
        %1917 = vmatpush.bf16.msra.mxu0 %v1494
        %1918 = vmatpush.bf16.msra.mxu0 %v1485
        %1919 = vmatpush.bf16.msra.mxu0 %v1476
        %1920 = vmatpush.bf16.msra.mxu0 %v1467
        %1921 = vmatpush.bf16.msra.mxu0 %v1458
        %1922 = vmatmul.bf16.gmra.mxu0 %v470
        %v1923 = vpop.f32.mrf.mxu0
        %v1924 = vadd.f32 %v1910, %v1923
        %v1925 = vpop.f32.mrf.mxu0
        %v1926 = vadd.f32 %v1912, %v1925
        %1927 = vdwg.mxu0
        %1928 = vmatpush.bf16.msra.mxu0 %v1593
        %1929 = vmatpush.bf16.msra.mxu0 %v1584
        %1930 = vmatpush.bf16.msra.mxu0 %v1575
        %1931 = vmatpush.bf16.msra.mxu0 %v1566
        %1932 = vmatpush.bf16.msra.mxu0 %v1557
        %1933 = vmatpush.bf16.msra.mxu0 %v1548
        %1934 = vmatpush.bf16.msra.mxu0 %v1539
        %1935 = vmatpush.bf16.msra.mxu0 %v1530
        %1936 = vmatmul.bf16.gmra.mxu0 %v471
        %v1937 = vpop.f32.mrf.mxu0
        %v1938 = vadd.f32 %v1924, %v1937
        %v1939 = vpop.f32.mrf.mxu0
        %v1940 = vadd.f32 %v1926, %v1939
        %1941 = vdwg.mxu0
        %1942 = vmatpush.bf16.msra.mxu0 %v1450
        %1943 = vmatpush.bf16.msra.mxu0 %v1441
        %1944 = vmatpush.bf16.msra.mxu0 %v1432
        %1945 = vmatpush.bf16.msra.mxu0 %v1423
        %1946 = vmatpush.bf16.msra.mxu0 %v1414
        %1947 = vmatpush.bf16.msra.mxu0 %v1405
        %1948 = vmatpush.bf16.msra.mxu0 %v1396
        %1949 = vmatpush.bf16.msra.mxu0 %v1387
        %1950 = vmatmul.bf16.gmra.mxu0 %v469
        %v1951 = vpop.f32.mrf.mxu0
        %v1952 = vadd.f32 0.0, %v1951
        %v1953 = vpop.f32.mrf.mxu0
        %v1954 = vadd.f32 0.0, %v1953
        %1955 = vdwg.mxu0
        %1956 = vmatpush.bf16.msra.mxu0 %v1522
        %1957 = vmatpush.bf16.msra.mxu0 %v1513
        %1958 = vmatpush.bf16.msra.mxu0 %v1504
        %1959 = vmatpush.bf16.msra.mxu0 %v1495
        %1960 = vmatpush.bf16.msra.mxu0 %v1486
        %1961 = vmatpush.bf16.msra.mxu0 %v1477
        %1962 = vmatpush.bf16.msra.mxu0 %v1468
        %1963 = vmatpush.bf16.msra.mxu0 %v1459
        %1964 = vmatmul.bf16.gmra.mxu0 %v470
        %v1965 = vpop.f32.mrf.mxu0
        %v1966 = vadd.f32 %v1952, %v1965
        %v1967 = vpop.f32.mrf.mxu0
        %v1968 = vadd.f32 %v1954, %v1967
        %1969 = vdwg.mxu0
        %1970 = vmatpush.bf16.msra.mxu0 %v1594
        %1971 = vmatpush.bf16.msra.mxu0 %v1585
        %1972 = vmatpush.bf16.msra.mxu0 %v1576
        %1973 = vmatpush.bf16.msra.mxu0 %v1567
        %1974 = vmatpush.bf16.msra.mxu0 %v1558
        %1975 = vmatpush.bf16.msra.mxu0 %v1549
        %1976 = vmatpush.bf16.msra.mxu0 %v1540
        %1977 = vmatpush.bf16.msra.mxu0 %v1531
        %1978 = vmatmul.bf16.gmra.mxu0 %v471
        %v1979 = vpop.f32.mrf.mxu0
        %v1980 = vadd.f32 %v1966, %v1979
        %v1981 = vpop.f32.mrf.mxu0
        %v1982 = vadd.f32 %v1968, %v1981
        %1983 = vdwg.mxu0
        %1984 = vmatpush.bf16.msra.mxu0 %v1451
        %1985 = vmatpush.bf16.msra.mxu0 %v1442
        %1986 = vmatpush.bf16.msra.mxu0 %v1433
        %1987 = vmatpush.bf16.msra.mxu0 %v1424
        %1988 = vmatpush.bf16.msra.mxu0 %v1415
        %1989 = vmatpush.bf16.msra.mxu0 %v1406
        %1990 = vmatpush.bf16.msra.mxu0 %v1397
        %1991 = vmatpush.bf16.msra.mxu0 %v1388
        %1992 = vmatmul.bf16.gmra.mxu0 %v469
        %v1993 = vpop.f32.mrf.mxu0
        %v1994 = vadd.f32 0.0, %v1993
        %v1995 = vpop.f32.mrf.mxu0
        %v1996 = vadd.f32 0.0, %v1995
        %1997 = vdwg.mxu0
        %1998 = vmatpush.bf16.msra.mxu0 %v1523
        %1999 = vmatpush.bf16.msra.mxu0 %v1514
        %2000 = vmatpush.bf16.msra.mxu0 %v1505
        %2001 = vmatpush.bf16.msra.mxu0 %v1496
        %2002 = vmatpush.bf16.msra.mxu0 %v1487
        %2003 = vmatpush.bf16.msra.mxu0 %v1478
        %2004 = vmatpush.bf16.msra.mxu0 %v1469
        %2005 = vmatpush.bf16.msra.mxu0 %v1460
        %2006 = vmatmul.bf16.gmra.mxu0 %v470
        %v2007 = vpop.f32.mrf.mxu0
        %v2008 = vadd.f32 %v1994, %v2007
        %v2009 = vpop.f32.mrf.mxu0
        %v2010 = vadd.f32 %v1996, %v2009
        %2011 = vdwg.mxu0
        %2012 = vmatpush.bf16.msra.mxu0 %v1595
        %2013 = vmatpush.bf16.msra.mxu0 %v1586
        %2014 = vmatpush.bf16.msra.mxu0 %v1577
        %2015 = vmatpush.bf16.msra.mxu0 %v1568
        %2016 = vmatpush.bf16.msra.mxu0 %v1559
        %2017 = vmatpush.bf16.msra.mxu0 %v1550
        %2018 = vmatpush.bf16.msra.mxu0 %v1541
        %2019 = vmatpush.bf16.msra.mxu0 %v1532
        %2020 = vmatmul.bf16.gmra.mxu0 %v471
        %v2021 = vpop.f32.mrf.mxu0
        %v2022 = vadd.f32 %v2008, %v2021
        %v2023 = vpop.f32.mrf.mxu0
        %v2024 = vadd.f32 %v2010, %v2023
        %2025 = vdwg.mxu0
        %2026 = vmatpush.bf16.msra.mxu0 %v1452
        %2027 = vmatpush.bf16.msra.mxu0 %v1443
        %2028 = vmatpush.bf16.msra.mxu0 %v1434
        %2029 = vmatpush.bf16.msra.mxu0 %v1425
        %2030 = vmatpush.bf16.msra.mxu0 %v1416
        %2031 = vmatpush.bf16.msra.mxu0 %v1407
        %2032 = vmatpush.bf16.msra.mxu0 %v1398
        %2033 = vmatpush.bf16.msra.mxu0 %v1389
        %2034 = vmatmul.bf16.gmra.mxu0 %v469
        %v2035 = vpop.f32.mrf.mxu0
        %v2036 = vadd.f32 0.0, %v2035
        %v2037 = vpop.f32.mrf.mxu0
        %v2038 = vadd.f32 0.0, %v2037
        %2039 = vdwg.mxu0
        %2040 = vmatpush.bf16.msra.mxu0 %v1524
        %2041 = vmatpush.bf16.msra.mxu0 %v1515
        %2042 = vmatpush.bf16.msra.mxu0 %v1506
        %2043 = vmatpush.bf16.msra.mxu0 %v1497
        %2044 = vmatpush.bf16.msra.mxu0 %v1488
        %2045 = vmatpush.bf16.msra.mxu0 %v1479
        %2046 = vmatpush.bf16.msra.mxu0 %v1470
        %2047 = vmatpush.bf16.msra.mxu0 %v1461
        %2048 = vmatmul.bf16.gmra.mxu0 %v470
        %v2049 = vpop.f32.mrf.mxu0
        %v2050 = vadd.f32 %v2036, %v2049
        %v2051 = vpop.f32.mrf.mxu0
        %v2052 = vadd.f32 %v2038, %v2051
        %2053 = vdwg.mxu0
        %2054 = vmatpush.bf16.msra.mxu0 %v1596
        %2055 = vmatpush.bf16.msra.mxu0 %v1587
        %2056 = vmatpush.bf16.msra.mxu0 %v1578
        %2057 = vmatpush.bf16.msra.mxu0 %v1569
        %2058 = vmatpush.bf16.msra.mxu0 %v1560
        %2059 = vmatpush.bf16.msra.mxu0 %v1551
        %2060 = vmatpush.bf16.msra.mxu0 %v1542
        %2061 = vmatpush.bf16.msra.mxu0 %v1533
        %2062 = vmatmul.bf16.gmra.mxu0 %v471
        %v2063 = vpop.f32.mrf.mxu0
        %v2064 = vadd.f32 %v2050, %v2063
        %v2065 = vpop.f32.mrf.mxu0
        %v2066 = vadd.f32 %v2052, %v2065
        %2067 = vdwg.mxu0
        %2068 = vmatpush.bf16.msra.mxu0 %v1453
        %2069 = vmatpush.bf16.msra.mxu0 %v1444
        %2070 = vmatpush.bf16.msra.mxu0 %v1435
        %2071 = vmatpush.bf16.msra.mxu0 %v1426
        %2072 = vmatpush.bf16.msra.mxu0 %v1417
        %2073 = vmatpush.bf16.msra.mxu0 %v1408
        %2074 = vmatpush.bf16.msra.mxu0 %v1399
        %2075 = vmatpush.bf16.msra.mxu0 %v1390
        %2076 = vmatmul.bf16.gmra.mxu0 %v469
        %v2077 = vpop.f32.mrf.mxu0
        %v2078 = vadd.f32 0.0, %v2077
        %v2079 = vpop.f32.mrf.mxu0
        %v2080 = vadd.f32 0.0, %v2079
        %2081 = vdwg.mxu0
        %2082 = vmatpush.bf16.msra.mxu0 %v1525
        %2083 = vmatpush.bf16.msra.mxu0 %v1516
        %2084 = vmatpush.bf16.msra.mxu0 %v1507
        %2085 = vmatpush.bf16.msra.mxu0 %v1498
        %2086 = vmatpush.bf16.msra.mxu0 %v1489
        %2087 = vmatpush.bf16.msra.mxu0 %v1480
        %2088 = vmatpush.bf16.msra.mxu0 %v1471
        %2089 = vmatpush.bf16.msra.mxu0 %v1462
        %2090 = vmatmul.bf16.gmra.mxu0 %v470
        %v2091 = vpop.f32.mrf.mxu0
        %v2092 = vadd.f32 %v2078, %v2091
        %v2093 = vpop.f32.mrf.mxu0
        %v2094 = vadd.f32 %v2080, %v2093
        %2095 = vdwg.mxu0
        %2096 = vmatpush.bf16.msra.mxu0 %v1597
        %2097 = vmatpush.bf16.msra.mxu0 %v1588
        %2098 = vmatpush.bf16.msra.mxu0 %v1579
        %2099 = vmatpush.bf16.msra.mxu0 %v1570
        %2100 = vmatpush.bf16.msra.mxu0 %v1561
        %2101 = vmatpush.bf16.msra.mxu0 %v1552
        %2102 = vmatpush.bf16.msra.mxu0 %v1543
        %2103 = vmatpush.bf16.msra.mxu0 %v1534
        %2104 = vmatmul.bf16.gmra.mxu0 %v471
        %v2105 = vpop.f32.mrf.mxu0
        %v2106 = vadd.f32 %v2092, %v2105
        %v2107 = vpop.f32.mrf.mxu0
        %v2108 = vadd.f32 %v2094, %v2107
        %2109 = vdwg.mxu0
        %2110 = vmatpush.bf16.msra.mxu0 %v1454
        %2111 = vmatpush.bf16.msra.mxu0 %v1445
        %2112 = vmatpush.bf16.msra.mxu0 %v1436
        %2113 = vmatpush.bf16.msra.mxu0 %v1427
        %2114 = vmatpush.bf16.msra.mxu0 %v1418
        %2115 = vmatpush.bf16.msra.mxu0 %v1409
        %2116 = vmatpush.bf16.msra.mxu0 %v1400
        %2117 = vmatpush.bf16.msra.mxu0 %v1391
        %2118 = vmatmul.bf16.gmra.mxu0 %v469
        %v2119 = vpop.f32.mrf.mxu0
        %v2120 = vadd.f32 0.0, %v2119
        %v2121 = vpop.f32.mrf.mxu0
        %v2122 = vadd.f32 0.0, %v2121
        %2123 = vdwg.mxu0
        %2124 = vmatpush.bf16.msra.mxu0 %v1526
        %2125 = vmatpush.bf16.msra.mxu0 %v1517
        %2126 = vmatpush.bf16.msra.mxu0 %v1508
        %2127 = vmatpush.bf16.msra.mxu0 %v1499
        %2128 = vmatpush.bf16.msra.mxu0 %v1490
        %2129 = vmatpush.bf16.msra.mxu0 %v1481
        %2130 = vmatpush.bf16.msra.mxu0 %v1472
        %2131 = vmatpush.bf16.msra.mxu0 %v1463
        %2132 = vmatmul.bf16.gmra.mxu0 %v470
        %v2133 = vpop.f32.mrf.mxu0
        %v2134 = vadd.f32 %v2120, %v2133
        %v2135 = vpop.f32.mrf.mxu0
        %v2136 = vadd.f32 %v2122, %v2135
        %2137 = vdwg.mxu0
        %2138 = vmatpush.bf16.msra.mxu0 %v1598
        %2139 = vmatpush.bf16.msra.mxu0 %v1589
        %2140 = vmatpush.bf16.msra.mxu0 %v1580
        %2141 = vmatpush.bf16.msra.mxu0 %v1571
        %2142 = vmatpush.bf16.msra.mxu0 %v1562
        %2143 = vmatpush.bf16.msra.mxu0 %v1553
        %2144 = vmatpush.bf16.msra.mxu0 %v1544
        %2145 = vmatpush.bf16.msra.mxu0 %v1535
        %2146 = vmatmul.bf16.gmra.mxu0 %v471
        %v2147 = vpop.f32.mrf.mxu0
        %v2148 = vadd.f32 %v2134, %v2147
        %v2149 = vpop.f32.mrf.mxu0
        %v2150 = vadd.f32 %v2136, %v2149
        %2151 = vdwg.mxu0
        %2152 = vmatpush.bf16.msra.mxu0 %v1455
        %2153 = vmatpush.bf16.msra.mxu0 %v1446
        %2154 = vmatpush.bf16.msra.mxu0 %v1437
        %2155 = vmatpush.bf16.msra.mxu0 %v1428
        %2156 = vmatpush.bf16.msra.mxu0 %v1419
        %2157 = vmatpush.bf16.msra.mxu0 %v1410
        %2158 = vmatpush.bf16.msra.mxu0 %v1401
        %2159 = vmatpush.bf16.msra.mxu0 %v1392
        %2160 = vmatmul.bf16.gmra.mxu0 %v469
        %v2161 = vpop.f32.mrf.mxu0
        %v2162 = vadd.f32 0.0, %v2161
        %v2163 = vpop.f32.mrf.mxu0
        %v2164 = vadd.f32 0.0, %v2163
        %2165 = vdwg.mxu0
        %2166 = vmatpush.bf16.msra.mxu0 %v1527
        %2167 = vmatpush.bf16.msra.mxu0 %v1518
        %2168 = vmatpush.bf16.msra.mxu0 %v1509
        %2169 = vmatpush.bf16.msra.mxu0 %v1500
        %2170 = vmatpush.bf16.msra.mxu0 %v1491
        %2171 = vmatpush.bf16.msra.mxu0 %v1482
        %2172 = vmatpush.bf16.msra.mxu0 %v1473
        %2173 = vmatpush.bf16.msra.mxu0 %v1464
        %2174 = vmatmul.bf16.gmra.mxu0 %v470
        %v2175 = vpop.f32.mrf.mxu0
        %v2176 = vadd.f32 %v2162, %v2175
        %v2177 = vpop.f32.mrf.mxu0
        %v2178 = vadd.f32 %v2164, %v2177
        %2179 = vdwg.mxu0
        %2180 = vmatpush.bf16.msra.mxu0 %v1599
        %2181 = vmatpush.bf16.msra.mxu0 %v1590
        %2182 = vmatpush.bf16.msra.mxu0 %v1581
        %2183 = vmatpush.bf16.msra.mxu0 %v1572
        %2184 = vmatpush.bf16.msra.mxu0 %v1563
        %2185 = vmatpush.bf16.msra.mxu0 %v1554
        %2186 = vmatpush.bf16.msra.mxu0 %v1545
        %2187 = vmatpush.bf16.msra.mxu0 %v1536
        %2188 = vmatmul.bf16.gmra.mxu0 %v471
        %v2189 = vpop.f32.mrf.mxu0
        %v2190 = vadd.f32 %v2176, %v2189
        %v2191 = vpop.f32.mrf.mxu0
        %v2192 = vadd.f32 %v2178, %v2191
        %2193 = vdwg.mxu0
        %v2194 = vmul.f32 %v1854, 0.05103104
        %v2195 = vmul.f32 %v1896, 0.05103104
        %v2196 = vmul.f32 %v1938, 0.05103104
        %v2197 = vmul.f32 %v1856, 0.05103104
        %v2198 = vmul.f32 %v1898, 0.05103104
        %v2199 = vmul.f32 %v1940, 0.05103104
        %2202 = vrot.lane.b32.xlu0 %v2194, 64
        %v2203 = vpop.permute.xlu0 %2202
        %2204 = vrot.lane.b32.xlu0 %v2197, 64
        %v2205 = vpop.permute.xlu0 %2204
        %2210 = vrot.lane.b32.xlu0 %v2195, 64
        %v2211 = vpop.permute.xlu0 %2210
        %2212 = vrot.lane.b32.xlu0 %v2198, 64
        %v2213 = vpop.permute.xlu0 %2212
        %2218 = vrot.lane.b32.xlu0 %v2196, 64
        %v2219 = vpop.permute.xlu0 %2218
        %2220 = vrot.lane.b32.xlu0 %v2199, 64
        %v2221 = vpop.permute.xlu0 %2220
        %v2224 = vrot.slane %v2195, 4
        %vm2225 = vcmask 1047556
        %v2226 = vsel %vm2225, %v2224, %v2194
        %v2227 = vrot.slane %v2194, 4
        %v2228 = vsel %vm2225, %v2195, %v2227
        %v2230 = vunpack.c.l.s4 1983009808
        %v2231 = vunpack.c.0.s8 %v2230
        %v2232 = vperm.slane %v2226, %v2231
        %v2234 = vunpack.c.l.s4 1983009808
        %v2235 = vunpack.c.0.s8 %v2234
        %v2236 = vperm.slane %v2228, %v2235
        %v2237 = vrot.slane %v2211, 4
        %v2238 = vsel %vm2225, %v2237, %v2203
        %v2239 = vrot.slane %v2203, 4
        %v2240 = vsel %vm2225, %v2211, %v2239
        %v2242 = vunpack.c.l.s4 1983009808
        %v2243 = vunpack.c.0.s8 %v2242
        %v2244 = vperm.slane %v2238, %v2243
        %v2246 = vunpack.c.l.s4 1983009808
        %v2247 = vunpack.c.0.s8 %v2246
        %v2248 = vperm.slane %v2240, %v2247
        %v2249 = vrot.slane %v2196, 4
        %v2250 = vsel %vm2225, 0.0, %v2249
        %v2252 = vunpack.c.l.s4 1983009808
        %v2253 = vunpack.c.0.s8 %v2252
        %v2254 = vperm.slane %v2196, %v2253
        %v2256 = vunpack.c.l.s4 1983009808
        %v2257 = vunpack.c.0.s8 %v2256
        %v2258 = vperm.slane %v2250, %v2257
        %v2259 = vrot.slane %v2219, 4
        %v2260 = vsel %vm2225, 0.0, %v2259
        %v2262 = vunpack.c.l.s4 1983009808
        %v2263 = vunpack.c.0.s8 %v2262
        %v2264 = vperm.slane %v2219, %v2263
        %v2266 = vunpack.c.l.s4 1983009808
        %v2267 = vunpack.c.0.s8 %v2266
        %v2268 = vperm.slane %v2260, %v2267
        %v2269 = vrot.slane %v2244, 4
        %v2270 = vsel %vm2225, %v2269, %v2232
        %v2271 = vrot.slane %v2232, 4
        %v2272 = vsel %vm2225, %v2244, %v2271
        %v2274 = vunpack.c.l.s4 1934713408
        %v2275 = vunpack.c.0.s8 %v2274
        %v2276 = vperm.slane %v2270, %v2275
        %v2278 = vunpack.c.l.s4 1934713408
        %v2279 = vunpack.c.0.s8 %v2278
        %v2280 = vperm.slane %v2272, %v2279
        %v2281 = vrot.slane %v2248, 4
        %v2282 = vsel %vm2225, %v2281, %v2236
        %v2283 = vrot.slane %v2236, 4
        %v2284 = vsel %vm2225, %v2248, %v2283
        %v2286 = vunpack.c.l.s4 1934713408
        %v2287 = vunpack.c.0.s8 %v2286
        %v2288 = vperm.slane %v2282, %v2287
        %v2290 = vunpack.c.l.s4 1934713408
        %v2291 = vunpack.c.0.s8 %v2290
        %v2292 = vperm.slane %v2284, %v2291
        %v2293 = vrot.slane %v2264, 4
        %v2294 = vsel %vm2225, %v2293, %v2254
        %v2295 = vrot.slane %v2254, 4
        %v2296 = vsel %vm2225, %v2264, %v2295
        %v2298 = vunpack.c.l.s4 1934713408
        %v2299 = vunpack.c.0.s8 %v2298
        %v2300 = vperm.slane %v2294, %v2299
        %v2302 = vunpack.c.l.s4 1934713408
        %v2303 = vunpack.c.0.s8 %v2302
        %v2304 = vperm.slane %v2296, %v2303
        %v2305 = vrot.slane %v2268, 4
        %v2306 = vsel %vm2225, %v2305, %v2258
        %v2307 = vrot.slane %v2258, 4
        %v2308 = vsel %vm2225, %v2268, %v2307
        %v2310 = vunpack.c.l.s4 1934713408
        %v2311 = vunpack.c.0.s8 %v2310
        %v2312 = vperm.slane %v2306, %v2311
        %v2314 = vunpack.c.l.s4 1934713408
        %v2315 = vunpack.c.0.s8 %v2314
        %v2316 = vperm.slane %v2308, %v2315
        %v2317 = vrot.slane %v2300, 4
        %v2318 = vsel %vm2225, %v2317, %v2276
        %v2319 = vrot.slane %v2276, 4
        %v2320 = vsel %vm2225, %v2300, %v2319
        %v2321 = vrot.slane %v2304, 4
        %v2322 = vsel %vm2225, %v2321, %v2280
        %v2323 = vrot.slane %v2280, 4
        %v2324 = vsel %vm2225, %v2304, %v2323
        %v2325 = vrot.slane %v2312, 4
        %v2326 = vsel %vm2225, %v2325, %v2288
        %v2327 = vrot.slane %v2288, 4
        %v2328 = vsel %vm2225, %v2312, %v2327
        %v2329 = vrot.slane %v2316, 4
        %v2330 = vsel %vm2225, %v2329, %v2292
        %v2331 = vrot.slane %v2292, 4
        %v2332 = vsel %vm2225, %v2316, %v2331
        %v2333 = vrot.slane %v2198, 4
        %v2334 = vsel %vm2225, %v2333, %v2197
        %v2335 = vrot.slane %v2197, 4
        %v2336 = vsel %vm2225, %v2198, %v2335
        %v2338 = vunpack.c.l.s4 1983009808
        %v2339 = vunpack.c.0.s8 %v2338
        %v2340 = vperm.slane %v2334, %v2339
        %v2342 = vunpack.c.l.s4 1983009808
        %v2343 = vunpack.c.0.s8 %v2342
        %v2344 = vperm.slane %v2336, %v2343
        %v2345 = vrot.slane %v2213, 4
        %v2346 = vsel %vm2225, %v2345, %v2205
        %v2347 = vrot.slane %v2205, 4
        %v2348 = vsel %vm2225, %v2213, %v2347
        %v2350 = vunpack.c.l.s4 1983009808
        %v2351 = vunpack.c.0.s8 %v2350
        %v2352 = vperm.slane %v2346, %v2351
        %v2354 = vunpack.c.l.s4 1983009808
        %v2355 = vunpack.c.0.s8 %v2354
        %v2356 = vperm.slane %v2348, %v2355
        %v2357 = vrot.slane %v2199, 4
        %v2358 = vsel %vm2225, 0.0, %v2357
        %v2360 = vunpack.c.l.s4 1983009808
        %v2361 = vunpack.c.0.s8 %v2360
        %v2362 = vperm.slane %v2199, %v2361
        %v2364 = vunpack.c.l.s4 1983009808
        %v2365 = vunpack.c.0.s8 %v2364
        %v2366 = vperm.slane %v2358, %v2365
        %v2367 = vrot.slane %v2221, 4
        %v2368 = vsel %vm2225, 0.0, %v2367
        %v2370 = vunpack.c.l.s4 1983009808
        %v2371 = vunpack.c.0.s8 %v2370
        %v2372 = vperm.slane %v2221, %v2371
        %v2374 = vunpack.c.l.s4 1983009808
        %v2375 = vunpack.c.0.s8 %v2374
        %v2376 = vperm.slane %v2368, %v2375
        %v2377 = vrot.slane %v2352, 4
        %v2378 = vsel %vm2225, %v2377, %v2340
        %v2379 = vrot.slane %v2340, 4
        %v2380 = vsel %vm2225, %v2352, %v2379
        %v2382 = vunpack.c.l.s4 1934713408
        %v2383 = vunpack.c.0.s8 %v2382
        %v2384 = vperm.slane %v2378, %v2383
        %v2386 = vunpack.c.l.s4 1934713408
        %v2387 = vunpack.c.0.s8 %v2386
        %v2388 = vperm.slane %v2380, %v2387
        %v2389 = vrot.slane %v2356, 4
        %v2390 = vsel %vm2225, %v2389, %v2344
        %v2391 = vrot.slane %v2344, 4
        %v2392 = vsel %vm2225, %v2356, %v2391
        %v2394 = vunpack.c.l.s4 1934713408
        %v2395 = vunpack.c.0.s8 %v2394
        %v2396 = vperm.slane %v2390, %v2395
        %v2398 = vunpack.c.l.s4 1934713408
        %v2399 = vunpack.c.0.s8 %v2398
        %v2400 = vperm.slane %v2392, %v2399
        %v2401 = vrot.slane %v2372, 4
        %v2402 = vsel %vm2225, %v2401, %v2362
        %v2403 = vrot.slane %v2362, 4
        %v2404 = vsel %vm2225, %v2372, %v2403
        %v2406 = vunpack.c.l.s4 1934713408
        %v2407 = vunpack.c.0.s8 %v2406
        %v2408 = vperm.slane %v2402, %v2407
        %v2410 = vunpack.c.l.s4 1934713408
        %v2411 = vunpack.c.0.s8 %v2410
        %v2412 = vperm.slane %v2404, %v2411
        %v2413 = vrot.slane %v2376, 4
        %v2414 = vsel %vm2225, %v2413, %v2366
        %v2415 = vrot.slane %v2366, 4
        %v2416 = vsel %vm2225, %v2376, %v2415
        %v2418 = vunpack.c.l.s4 1934713408
        %v2419 = vunpack.c.0.s8 %v2418
        %v2420 = vperm.slane %v2414, %v2419
        %v2422 = vunpack.c.l.s4 1934713408
        %v2423 = vunpack.c.0.s8 %v2422
        %v2424 = vperm.slane %v2416, %v2423
        %v2425 = vrot.slane %v2408, 4
        %v2426 = vsel %vm2225, %v2425, %v2384
        %v2427 = vrot.slane %v2384, 4
        %v2428 = vsel %vm2225, %v2408, %v2427
        %v2429 = vrot.slane %v2412, 4
        %v2430 = vsel %vm2225, %v2429, %v2388
        %v2431 = vrot.slane %v2388, 4
        %v2432 = vsel %vm2225, %v2412, %v2431
        %v2433 = vrot.slane %v2420, 4
        %v2434 = vsel %vm2225, %v2433, %v2396
        %v2435 = vrot.slane %v2396, 4
        %v2436 = vsel %vm2225, %v2420, %v2435
        %v2437 = vrot.slane %v2424, 4
        %v2438 = vsel %vm2225, %v2437, %v2400
        %v2439 = vrot.slane %v2400, 4
        %v2440 = vsel %vm2225, %v2424, %v2439
        %v2441 = vrot.slane %v2322, 4
        %v2442 = vsel %vm2225, %v2441, %v2318
        %v2443 = vrot.slane %v2318, 4
        %v2444 = vsel %vm2225, %v2322, %v2443
        %v2446 = vunpack.c.l.s4 1983009808
        %v2447 = vunpack.c.0.s8 %v2446
        %v2448 = vperm.slane %v2442, %v2447
        %v2450 = vunpack.c.l.s4 1983009808
        %v2451 = vunpack.c.0.s8 %v2450
        %v2452 = vperm.slane %v2444, %v2451
        %v2453 = vrot.slane %v2324, 4
        %v2454 = vsel %vm2225, %v2453, %v2320
        %v2455 = vrot.slane %v2320, 4
        %v2456 = vsel %vm2225, %v2324, %v2455
        %v2458 = vunpack.c.l.s4 1983009808
        %v2459 = vunpack.c.0.s8 %v2458
        %v2460 = vperm.slane %v2454, %v2459
        %v2462 = vunpack.c.l.s4 1983009808
        %v2463 = vunpack.c.0.s8 %v2462
        %v2464 = vperm.slane %v2456, %v2463
        %v2465 = vrot.slane %v2330, 4
        %v2466 = vsel %vm2225, %v2465, %v2326
        %v2467 = vrot.slane %v2326, 4
        %v2468 = vsel %vm2225, %v2330, %v2467
        %v2470 = vunpack.c.l.s4 1983009808
        %v2471 = vunpack.c.0.s8 %v2470
        %v2472 = vperm.slane %v2466, %v2471
        %v2474 = vunpack.c.l.s4 1983009808
        %v2475 = vunpack.c.0.s8 %v2474
        %v2476 = vperm.slane %v2468, %v2475
        %v2477 = vrot.slane %v2332, 4
        %v2478 = vsel %vm2225, %v2477, %v2328
        %v2479 = vrot.slane %v2328, 4
        %v2480 = vsel %vm2225, %v2332, %v2479
        %v2482 = vunpack.c.l.s4 1983009808
        %v2483 = vunpack.c.0.s8 %v2482
        %v2484 = vperm.slane %v2478, %v2483
        %v2486 = vunpack.c.l.s4 1983009808
        %v2487 = vunpack.c.0.s8 %v2486
        %v2488 = vperm.slane %v2480, %v2487
        %v2489 = vrot.slane %v2460, 4
        %v2490 = vsel %vm2225, %v2489, %v2448
        %v2491 = vrot.slane %v2448, 4
        %v2492 = vsel %vm2225, %v2460, %v2491
        %v2494 = vunpack.c.l.s4 1934713408
        %v2495 = vunpack.c.0.s8 %v2494
        %v2496 = vperm.slane %v2490, %v2495
        %v2498 = vunpack.c.l.s4 1934713408
        %v2499 = vunpack.c.0.s8 %v2498
        %v2500 = vperm.slane %v2492, %v2499
        %v2501 = vrot.slane %v2464, 4
        %v2502 = vsel %vm2225, %v2501, %v2452
        %v2504 = vunpack.c.l.s4 1934713408
        %v2505 = vunpack.c.0.s8 %v2504
        %v2506 = vperm.slane %v2502, %v2505
        %v2507 = vrot.slane %v2484, 4
        %v2508 = vsel %vm2225, %v2507, %v2472
        %v2509 = vrot.slane %v2472, 4
        %v2510 = vsel %vm2225, %v2484, %v2509
        %v2512 = vunpack.c.l.s4 1934713408
        %v2513 = vunpack.c.0.s8 %v2512
        %v2514 = vperm.slane %v2508, %v2513
        %v2516 = vunpack.c.l.s4 1934713408
        %v2517 = vunpack.c.0.s8 %v2516
        %v2518 = vperm.slane %v2510, %v2517
        %v2519 = vrot.slane %v2488, 4
        %v2520 = vsel %vm2225, %v2519, %v2476
        %v2522 = vunpack.c.l.s4 1934713408
        %v2523 = vunpack.c.0.s8 %v2522
        %v2524 = vperm.slane %v2520, %v2523
        %v2525 = vrot.slane %v2514, 4
        %v2526 = vsel %vm2225, %v2525, %v2496
        %v2527 = vrot.slane %v2496, 4
        %v2528 = vsel %vm2225, %v2514, %v2527
        %v2529 = vrot.slane %v2518, 4
        %v2530 = vsel %vm2225, %v2529, %v2500
        %v2531 = vrot.slane %v2500, 4
        %v2532 = vsel %vm2225, %v2518, %v2531
        %v2533 = vrot.slane %v2524, 4
        %v2534 = vsel %vm2225, %v2533, %v2506
        %v2535 = vrot.slane %v2506, 4
        %v2536 = vsel %vm2225, %v2524, %v2535
        %v2537 = vrot.slane %v2430, 4
        %v2538 = vsel %vm2225, %v2537, %v2426
        %v2539 = vrot.slane %v2426, 4
        %v2540 = vsel %vm2225, %v2430, %v2539
        %v2542 = vunpack.c.l.s4 1983009808
        %v2543 = vunpack.c.0.s8 %v2542
        %v2544 = vperm.slane %v2538, %v2543
        %v2546 = vunpack.c.l.s4 1983009808
        %v2547 = vunpack.c.0.s8 %v2546
        %v2548 = vperm.slane %v2540, %v2547
        %v2549 = vrot.slane %v2432, 4
        %v2550 = vsel %vm2225, %v2549, %v2428
        %v2551 = vrot.slane %v2428, 4
        %v2552 = vsel %vm2225, %v2432, %v2551
        %v2554 = vunpack.c.l.s4 1983009808
        %v2555 = vunpack.c.0.s8 %v2554
        %v2556 = vperm.slane %v2550, %v2555
        %v2558 = vunpack.c.l.s4 1983009808
        %v2559 = vunpack.c.0.s8 %v2558
        %v2560 = vperm.slane %v2552, %v2559
        %v2561 = vrot.slane %v2438, 4
        %v2562 = vsel %vm2225, %v2561, %v2434
        %v2563 = vrot.slane %v2434, 4
        %v2564 = vsel %vm2225, %v2438, %v2563
        %v2566 = vunpack.c.l.s4 1983009808
        %v2567 = vunpack.c.0.s8 %v2566
        %v2568 = vperm.slane %v2562, %v2567
        %v2570 = vunpack.c.l.s4 1983009808
        %v2571 = vunpack.c.0.s8 %v2570
        %v2572 = vperm.slane %v2564, %v2571
        %v2573 = vrot.slane %v2440, 4
        %v2574 = vsel %vm2225, %v2573, %v2436
        %v2575 = vrot.slane %v2436, 4
        %v2576 = vsel %vm2225, %v2440, %v2575
        %v2578 = vunpack.c.l.s4 1983009808
        %v2579 = vunpack.c.0.s8 %v2578
        %v2580 = vperm.slane %v2574, %v2579
        %v2582 = vunpack.c.l.s4 1983009808
        %v2583 = vunpack.c.0.s8 %v2582
        %v2584 = vperm.slane %v2576, %v2583
        %v2585 = vrot.slane %v2556, 4
        %v2586 = vsel %vm2225, %v2585, %v2544
        %v2587 = vrot.slane %v2544, 4
        %v2588 = vsel %vm2225, %v2556, %v2587
        %v2590 = vunpack.c.l.s4 1934713408
        %v2591 = vunpack.c.0.s8 %v2590
        %v2592 = vperm.slane %v2586, %v2591
        %v2594 = vunpack.c.l.s4 1934713408
        %v2595 = vunpack.c.0.s8 %v2594
        %v2596 = vperm.slane %v2588, %v2595
        %v2597 = vrot.slane %v2560, 4
        %v2598 = vsel %vm2225, %v2597, %v2548
        %v2600 = vunpack.c.l.s4 1934713408
        %v2601 = vunpack.c.0.s8 %v2600
        %v2602 = vperm.slane %v2598, %v2601
        %v2603 = vrot.slane %v2580, 4
        %v2604 = vsel %vm2225, %v2603, %v2568
        %v2605 = vrot.slane %v2568, 4
        %v2606 = vsel %vm2225, %v2580, %v2605
        %v2608 = vunpack.c.l.s4 1934713408
        %v2609 = vunpack.c.0.s8 %v2608
        %v2610 = vperm.slane %v2604, %v2609
        %v2612 = vunpack.c.l.s4 1934713408
        %v2613 = vunpack.c.0.s8 %v2612
        %v2614 = vperm.slane %v2606, %v2613
        %v2615 = vrot.slane %v2584, 4
        %v2616 = vsel %vm2225, %v2615, %v2572
        %v2618 = vunpack.c.l.s4 1934713408
        %v2619 = vunpack.c.0.s8 %v2618
        %v2620 = vperm.slane %v2616, %v2619
        %v2621 = vrot.slane %v2610, 4
        %v2622 = vsel %vm2225, %v2621, %v2592
        %v2623 = vrot.slane %v2592, 4
        %v2624 = vsel %vm2225, %v2610, %v2623
        %v2625 = vrot.slane %v2614, 4
        %v2626 = vsel %vm2225, %v2625, %v2596
        %v2627 = vrot.slane %v2596, 4
        %v2628 = vsel %vm2225, %v2614, %v2627
        %v2629 = vrot.slane %v2620, 4
        %v2630 = vsel %vm2225, %v2629, %v2602
        %v2631 = vrot.slane %v2602, 4
        %v2632 = vsel %vm2225, %v2620, %v2631
        %2635 = vrot.lane.b32.xlu0 %v1980, 64
        %v2636 = vpop.permute.xlu0 %2635
        %2637 = vrot.lane.b32.xlu0 %v1982, 64
        %v2638 = vpop.permute.xlu0 %2637
        %2643 = vrot.lane.b32.xlu0 %v2022, 64
        %v2644 = vpop.permute.xlu0 %2643
        %2645 = vrot.lane.b32.xlu0 %v2024, 64
        %v2646 = vpop.permute.xlu0 %2645
        %2651 = vrot.lane.b32.xlu0 %v2064, 64
        %v2652 = vpop.permute.xlu0 %2651
        %2653 = vrot.lane.b32.xlu0 %v2066, 64
        %v2654 = vpop.permute.xlu0 %2653
        %v2657 = vrot.slane %v2022, 4
        %v2658 = vsel %vm2225, %v2657, %v1980
        %v2659 = vrot.slane %v1980, 4
        %v2660 = vsel %vm2225, %v2022, %v2659
        %v2662 = vunpack.c.l.s4 1983009808
        %v2663 = vunpack.c.0.s8 %v2662
        %v2664 = vperm.slane %v2658, %v2663
        %v2666 = vunpack.c.l.s4 1983009808
        %v2667 = vunpack.c.0.s8 %v2666
        %v2668 = vperm.slane %v2660, %v2667
        %v2669 = vrot.slane %v2644, 4
        %v2670 = vsel %vm2225, %v2669, %v2636
        %v2671 = vrot.slane %v2636, 4
        %v2672 = vsel %vm2225, %v2644, %v2671
        %v2674 = vunpack.c.l.s4 1983009808
        %v2675 = vunpack.c.0.s8 %v2674
        %v2676 = vperm.slane %v2670, %v2675
        %v2678 = vunpack.c.l.s4 1983009808
        %v2679 = vunpack.c.0.s8 %v2678
        %v2680 = vperm.slane %v2672, %v2679
        %v2681 = vrot.slane %v2064, 4
        %v2682 = vsel %vm2225, 0.0, %v2681
        %v2684 = vunpack.c.l.s4 1983009808
        %v2685 = vunpack.c.0.s8 %v2684
        %v2686 = vperm.slane %v2064, %v2685
        %v2688 = vunpack.c.l.s4 1983009808
        %v2689 = vunpack.c.0.s8 %v2688
        %v2690 = vperm.slane %v2682, %v2689
        %v2691 = vrot.slane %v2652, 4
        %v2692 = vsel %vm2225, 0.0, %v2691
        %v2694 = vunpack.c.l.s4 1983009808
        %v2695 = vunpack.c.0.s8 %v2694
        %v2696 = vperm.slane %v2652, %v2695
        %v2698 = vunpack.c.l.s4 1983009808
        %v2699 = vunpack.c.0.s8 %v2698
        %v2700 = vperm.slane %v2692, %v2699
        %v2701 = vrot.slane %v2676, 4
        %v2702 = vsel %vm2225, %v2701, %v2664
        %v2703 = vrot.slane %v2664, 4
        %v2704 = vsel %vm2225, %v2676, %v2703
        %v2706 = vunpack.c.l.s4 1934713408
        %v2707 = vunpack.c.0.s8 %v2706
        %v2708 = vperm.slane %v2702, %v2707
        %v2710 = vunpack.c.l.s4 1934713408
        %v2711 = vunpack.c.0.s8 %v2710
        %v2712 = vperm.slane %v2704, %v2711
        %v2713 = vrot.slane %v2680, 4
        %v2714 = vsel %vm2225, %v2713, %v2668
        %v2715 = vrot.slane %v2668, 4
        %v2716 = vsel %vm2225, %v2680, %v2715
        %v2718 = vunpack.c.l.s4 1934713408
        %v2719 = vunpack.c.0.s8 %v2718
        %v2720 = vperm.slane %v2714, %v2719
        %v2722 = vunpack.c.l.s4 1934713408
        %v2723 = vunpack.c.0.s8 %v2722
        %v2724 = vperm.slane %v2716, %v2723
        %v2725 = vrot.slane %v2696, 4
        %v2726 = vsel %vm2225, %v2725, %v2686
        %v2727 = vrot.slane %v2686, 4
        %v2728 = vsel %vm2225, %v2696, %v2727
        %v2730 = vunpack.c.l.s4 1934713408
        %v2731 = vunpack.c.0.s8 %v2730
        %v2732 = vperm.slane %v2726, %v2731
        %v2734 = vunpack.c.l.s4 1934713408
        %v2735 = vunpack.c.0.s8 %v2734
        %v2736 = vperm.slane %v2728, %v2735
        %v2737 = vrot.slane %v2700, 4
        %v2738 = vsel %vm2225, %v2737, %v2690
        %v2739 = vrot.slane %v2690, 4
        %v2740 = vsel %vm2225, %v2700, %v2739
        %v2742 = vunpack.c.l.s4 1934713408
        %v2743 = vunpack.c.0.s8 %v2742
        %v2744 = vperm.slane %v2738, %v2743
        %v2746 = vunpack.c.l.s4 1934713408
        %v2747 = vunpack.c.0.s8 %v2746
        %v2748 = vperm.slane %v2740, %v2747
        %v2749 = vrot.slane %v2732, 4
        %v2750 = vsel %vm2225, %v2749, %v2708
        %v2751 = vrot.slane %v2708, 4
        %v2752 = vsel %vm2225, %v2732, %v2751
        %v2753 = vrot.slane %v2736, 4
        %v2754 = vsel %vm2225, %v2753, %v2712
        %v2755 = vrot.slane %v2712, 4
        %v2756 = vsel %vm2225, %v2736, %v2755
        %v2757 = vrot.slane %v2744, 4
        %v2758 = vsel %vm2225, %v2757, %v2720
        %v2759 = vrot.slane %v2720, 4
        %v2760 = vsel %vm2225, %v2744, %v2759
        %v2761 = vrot.slane %v2748, 4
        %v2762 = vsel %vm2225, %v2761, %v2724
        %v2763 = vrot.slane %v2724, 4
        %v2764 = vsel %vm2225, %v2748, %v2763
        %v2765 = vrot.slane %v2024, 4
        %v2766 = vsel %vm2225, %v2765, %v1982
        %v2767 = vrot.slane %v1982, 4
        %v2768 = vsel %vm2225, %v2024, %v2767
        %v2770 = vunpack.c.l.s4 1983009808
        %v2771 = vunpack.c.0.s8 %v2770
        %v2772 = vperm.slane %v2766, %v2771
        %v2774 = vunpack.c.l.s4 1983009808
        %v2775 = vunpack.c.0.s8 %v2774
        %v2776 = vperm.slane %v2768, %v2775
        %v2777 = vrot.slane %v2646, 4
        %v2778 = vsel %vm2225, %v2777, %v2638
        %v2779 = vrot.slane %v2638, 4
        %v2780 = vsel %vm2225, %v2646, %v2779
        %v2782 = vunpack.c.l.s4 1983009808
        %v2783 = vunpack.c.0.s8 %v2782
        %v2784 = vperm.slane %v2778, %v2783
        %v2786 = vunpack.c.l.s4 1983009808
        %v2787 = vunpack.c.0.s8 %v2786
        %v2788 = vperm.slane %v2780, %v2787
        %v2789 = vrot.slane %v2066, 4
        %v2790 = vsel %vm2225, 0.0, %v2789
        %v2792 = vunpack.c.l.s4 1983009808
        %v2793 = vunpack.c.0.s8 %v2792
        %v2794 = vperm.slane %v2066, %v2793
        %v2796 = vunpack.c.l.s4 1983009808
        %v2797 = vunpack.c.0.s8 %v2796
        %v2798 = vperm.slane %v2790, %v2797
        %v2799 = vrot.slane %v2654, 4
        %v2800 = vsel %vm2225, 0.0, %v2799
        %v2802 = vunpack.c.l.s4 1983009808
        %v2803 = vunpack.c.0.s8 %v2802
        %v2804 = vperm.slane %v2654, %v2803
        %v2806 = vunpack.c.l.s4 1983009808
        %v2807 = vunpack.c.0.s8 %v2806
        %v2808 = vperm.slane %v2800, %v2807
        %v2809 = vrot.slane %v2784, 4
        %v2810 = vsel %vm2225, %v2809, %v2772
        %v2811 = vrot.slane %v2772, 4
        %v2812 = vsel %vm2225, %v2784, %v2811
        %v2814 = vunpack.c.l.s4 1934713408
        %v2815 = vunpack.c.0.s8 %v2814
        %v2816 = vperm.slane %v2810, %v2815
        %v2818 = vunpack.c.l.s4 1934713408
        %v2819 = vunpack.c.0.s8 %v2818
        %v2820 = vperm.slane %v2812, %v2819
        %v2821 = vrot.slane %v2788, 4
        %v2822 = vsel %vm2225, %v2821, %v2776
        %v2823 = vrot.slane %v2776, 4
        %v2824 = vsel %vm2225, %v2788, %v2823
        %v2826 = vunpack.c.l.s4 1934713408
        %v2827 = vunpack.c.0.s8 %v2826
        %v2828 = vperm.slane %v2822, %v2827
        %v2830 = vunpack.c.l.s4 1934713408
        %v2831 = vunpack.c.0.s8 %v2830
        %v2832 = vperm.slane %v2824, %v2831
        %v2833 = vrot.slane %v2804, 4
        %v2834 = vsel %vm2225, %v2833, %v2794
        %v2835 = vrot.slane %v2794, 4
        %v2836 = vsel %vm2225, %v2804, %v2835
        %v2838 = vunpack.c.l.s4 1934713408
        %v2839 = vunpack.c.0.s8 %v2838
        %v2840 = vperm.slane %v2834, %v2839
        %v2842 = vunpack.c.l.s4 1934713408
        %v2843 = vunpack.c.0.s8 %v2842
        %v2844 = vperm.slane %v2836, %v2843
        %v2845 = vrot.slane %v2808, 4
        %v2846 = vsel %vm2225, %v2845, %v2798
        %v2847 = vrot.slane %v2798, 4
        %v2848 = vsel %vm2225, %v2808, %v2847
        %v2850 = vunpack.c.l.s4 1934713408
        %v2851 = vunpack.c.0.s8 %v2850
        %v2852 = vperm.slane %v2846, %v2851
        %v2854 = vunpack.c.l.s4 1934713408
        %v2855 = vunpack.c.0.s8 %v2854
        %v2856 = vperm.slane %v2848, %v2855
        %v2857 = vrot.slane %v2840, 4
        %v2858 = vsel %vm2225, %v2857, %v2816
        %v2859 = vrot.slane %v2816, 4
        %v2860 = vsel %vm2225, %v2840, %v2859
        %v2861 = vrot.slane %v2844, 4
        %v2862 = vsel %vm2225, %v2861, %v2820
        %v2863 = vrot.slane %v2820, 4
        %v2864 = vsel %vm2225, %v2844, %v2863
        %v2865 = vrot.slane %v2852, 4
        %v2866 = vsel %vm2225, %v2865, %v2828
        %v2867 = vrot.slane %v2828, 4
        %v2868 = vsel %vm2225, %v2852, %v2867
        %v2869 = vrot.slane %v2856, 4
        %v2870 = vsel %vm2225, %v2869, %v2832
        %v2871 = vrot.slane %v2832, 4
        %v2872 = vsel %vm2225, %v2856, %v2871
        %v2873 = vrot.slane %v2754, 4
        %v2874 = vsel %vm2225, %v2873, %v2750
        %v2875 = vrot.slane %v2750, 4
        %v2876 = vsel %vm2225, %v2754, %v2875
        %v2878 = vunpack.c.l.s4 1983009808
        %v2879 = vunpack.c.0.s8 %v2878
        %v2880 = vperm.slane %v2874, %v2879
        %v2882 = vunpack.c.l.s4 1983009808
        %v2883 = vunpack.c.0.s8 %v2882
        %v2884 = vperm.slane %v2876, %v2883
        %v2885 = vrot.slane %v2756, 4
        %v2886 = vsel %vm2225, %v2885, %v2752
        %v2887 = vrot.slane %v2752, 4
        %v2888 = vsel %vm2225, %v2756, %v2887
        %v2890 = vunpack.c.l.s4 1983009808
        %v2891 = vunpack.c.0.s8 %v2890
        %v2892 = vperm.slane %v2886, %v2891
        %v2894 = vunpack.c.l.s4 1983009808
        %v2895 = vunpack.c.0.s8 %v2894
        %v2896 = vperm.slane %v2888, %v2895
        %v2897 = vrot.slane %v2762, 4
        %v2898 = vsel %vm2225, %v2897, %v2758
        %v2899 = vrot.slane %v2758, 4
        %v2900 = vsel %vm2225, %v2762, %v2899
        %v2902 = vunpack.c.l.s4 1983009808
        %v2903 = vunpack.c.0.s8 %v2902
        %v2904 = vperm.slane %v2898, %v2903
        %v2906 = vunpack.c.l.s4 1983009808
        %v2907 = vunpack.c.0.s8 %v2906
        %v2908 = vperm.slane %v2900, %v2907
        %v2909 = vrot.slane %v2764, 4
        %v2910 = vsel %vm2225, %v2909, %v2760
        %v2911 = vrot.slane %v2760, 4
        %v2912 = vsel %vm2225, %v2764, %v2911
        %v2914 = vunpack.c.l.s4 1983009808
        %v2915 = vunpack.c.0.s8 %v2914
        %v2916 = vperm.slane %v2910, %v2915
        %v2918 = vunpack.c.l.s4 1983009808
        %v2919 = vunpack.c.0.s8 %v2918
        %v2920 = vperm.slane %v2912, %v2919
        %v2921 = vrot.slane %v2892, 4
        %v2922 = vsel %vm2225, %v2921, %v2880
        %v2923 = vrot.slane %v2880, 4
        %v2924 = vsel %vm2225, %v2892, %v2923
        %v2926 = vunpack.c.l.s4 1934713408
        %v2927 = vunpack.c.0.s8 %v2926
        %v2928 = vperm.slane %v2922, %v2927
        %v2930 = vunpack.c.l.s4 1934713408
        %v2931 = vunpack.c.0.s8 %v2930
        %v2932 = vperm.slane %v2924, %v2931
        %v2933 = vrot.slane %v2896, 4
        %v2934 = vsel %vm2225, %v2933, %v2884
        %v2936 = vunpack.c.l.s4 1934713408
        %v2937 = vunpack.c.0.s8 %v2936
        %v2938 = vperm.slane %v2934, %v2937
        %v2939 = vrot.slane %v2916, 4
        %v2940 = vsel %vm2225, %v2939, %v2904
        %v2941 = vrot.slane %v2904, 4
        %v2942 = vsel %vm2225, %v2916, %v2941
        %v2944 = vunpack.c.l.s4 1934713408
        %v2945 = vunpack.c.0.s8 %v2944
        %v2946 = vperm.slane %v2940, %v2945
        %v2948 = vunpack.c.l.s4 1934713408
        %v2949 = vunpack.c.0.s8 %v2948
        %v2950 = vperm.slane %v2942, %v2949
        %v2951 = vrot.slane %v2920, 4
        %v2952 = vsel %vm2225, %v2951, %v2908
        %v2954 = vunpack.c.l.s4 1934713408
        %v2955 = vunpack.c.0.s8 %v2954
        %v2956 = vperm.slane %v2952, %v2955
        %v2957 = vrot.slane %v2946, 4
        %v2958 = vsel %vm2225, %v2957, %v2928
        %v2959 = vrot.slane %v2928, 4
        %v2960 = vsel %vm2225, %v2946, %v2959
        %v2961 = vrot.slane %v2950, 4
        %v2962 = vsel %vm2225, %v2961, %v2932
        %v2963 = vrot.slane %v2932, 4
        %v2964 = vsel %vm2225, %v2950, %v2963
        %v2965 = vrot.slane %v2956, 4
        %v2966 = vsel %vm2225, %v2965, %v2938
        %v2967 = vrot.slane %v2938, 4
        %v2968 = vsel %vm2225, %v2956, %v2967
        %v2969 = vrot.slane %v2862, 4
        %v2970 = vsel %vm2225, %v2969, %v2858
        %v2971 = vrot.slane %v2858, 4
        %v2972 = vsel %vm2225, %v2862, %v2971
        %v2974 = vunpack.c.l.s4 1983009808
        %v2975 = vunpack.c.0.s8 %v2974
        %v2976 = vperm.slane %v2970, %v2975
        %v2978 = vunpack.c.l.s4 1983009808
        %v2979 = vunpack.c.0.s8 %v2978
        %v2980 = vperm.slane %v2972, %v2979
        %v2981 = vrot.slane %v2864, 4
        %v2982 = vsel %vm2225, %v2981, %v2860
        %v2983 = vrot.slane %v2860, 4
        %v2984 = vsel %vm2225, %v2864, %v2983
        %v2986 = vunpack.c.l.s4 1983009808
        %v2987 = vunpack.c.0.s8 %v2986
        %v2988 = vperm.slane %v2982, %v2987
        %v2990 = vunpack.c.l.s4 1983009808
        %v2991 = vunpack.c.0.s8 %v2990
        %v2992 = vperm.slane %v2984, %v2991
        %v2993 = vrot.slane %v2870, 4
        %v2994 = vsel %vm2225, %v2993, %v2866
        %v2995 = vrot.slane %v2866, 4
        %v2996 = vsel %vm2225, %v2870, %v2995
        %v2998 = vunpack.c.l.s4 1983009808
        %v2999 = vunpack.c.0.s8 %v2998
        %v3000 = vperm.slane %v2994, %v2999
        %v3002 = vunpack.c.l.s4 1983009808
        %v3003 = vunpack.c.0.s8 %v3002
        %v3004 = vperm.slane %v2996, %v3003
        %v3005 = vrot.slane %v2872, 4
        %v3006 = vsel %vm2225, %v3005, %v2868
        %v3007 = vrot.slane %v2868, 4
        %v3008 = vsel %vm2225, %v2872, %v3007
        %v3010 = vunpack.c.l.s4 1983009808
        %v3011 = vunpack.c.0.s8 %v3010
        %v3012 = vperm.slane %v3006, %v3011
        %v3014 = vunpack.c.l.s4 1983009808
        %v3015 = vunpack.c.0.s8 %v3014
        %v3016 = vperm.slane %v3008, %v3015
        %v3017 = vrot.slane %v2988, 4
        %v3018 = vsel %vm2225, %v3017, %v2976
        %v3019 = vrot.slane %v2976, 4
        %v3020 = vsel %vm2225, %v2988, %v3019
        %v3022 = vunpack.c.l.s4 1934713408
        %v3023 = vunpack.c.0.s8 %v3022
        %v3024 = vperm.slane %v3018, %v3023
        %v3026 = vunpack.c.l.s4 1934713408
        %v3027 = vunpack.c.0.s8 %v3026
        %v3028 = vperm.slane %v3020, %v3027
        %v3029 = vrot.slane %v2992, 4
        %v3030 = vsel %vm2225, %v3029, %v2980
        %v3032 = vunpack.c.l.s4 1934713408
        %v3033 = vunpack.c.0.s8 %v3032
        %v3034 = vperm.slane %v3030, %v3033
        %v3035 = vrot.slane %v3012, 4
        %v3036 = vsel %vm2225, %v3035, %v3000
        %v3037 = vrot.slane %v3000, 4
        %v3038 = vsel %vm2225, %v3012, %v3037
        %v3040 = vunpack.c.l.s4 1934713408
        %v3041 = vunpack.c.0.s8 %v3040
        %v3042 = vperm.slane %v3036, %v3041
        %v3044 = vunpack.c.l.s4 1934713408
        %v3045 = vunpack.c.0.s8 %v3044
        %v3046 = vperm.slane %v3038, %v3045
        %v3047 = vrot.slane %v3016, 4
        %v3048 = vsel %vm2225, %v3047, %v3004
        %v3050 = vunpack.c.l.s4 1934713408
        %v3051 = vunpack.c.0.s8 %v3050
        %v3052 = vperm.slane %v3048, %v3051
        %v3053 = vrot.slane %v3042, 4
        %v3054 = vsel %vm2225, %v3053, %v3024
        %v3055 = vrot.slane %v3024, 4
        %v3056 = vsel %vm2225, %v3042, %v3055
        %v3057 = vrot.slane %v3046, 4
        %v3058 = vsel %vm2225, %v3057, %v3028
        %v3059 = vrot.slane %v3028, 4
        %v3060 = vsel %vm2225, %v3046, %v3059
        %v3061 = vrot.slane %v3052, 4
        %v3062 = vsel %vm2225, %v3061, %v3034
        %v3063 = vrot.slane %v3034, 4
        %v3064 = vsel %vm2225, %v3052, %v3063
        %3067 = vrot.lane.b32.xlu0 %v2106, 64
        %v3068 = vpop.permute.xlu0 %3067
        %3069 = vrot.lane.b32.xlu0 %v2108, 64
        %v3070 = vpop.permute.xlu0 %3069
        %3075 = vrot.lane.b32.xlu0 %v2148, 64
        %v3076 = vpop.permute.xlu0 %3075
        %3077 = vrot.lane.b32.xlu0 %v2150, 64
        %v3078 = vpop.permute.xlu0 %3077
        %3083 = vrot.lane.b32.xlu0 %v2190, 64
        %v3084 = vpop.permute.xlu0 %3083
        %3085 = vrot.lane.b32.xlu0 %v2192, 64
        %v3086 = vpop.permute.xlu0 %3085
        %v3089 = vrot.slane %v2148, 4
        %v3090 = vsel %vm2225, %v3089, %v2106
        %v3091 = vrot.slane %v2106, 4
        %v3092 = vsel %vm2225, %v2148, %v3091
        %v3094 = vunpack.c.l.s4 1983009808
        %v3095 = vunpack.c.0.s8 %v3094
        %v3096 = vperm.slane %v3090, %v3095
        %v3098 = vunpack.c.l.s4 1983009808
        %v3099 = vunpack.c.0.s8 %v3098
        %v3100 = vperm.slane %v3092, %v3099
        %v3101 = vrot.slane %v3076, 4
        %v3102 = vsel %vm2225, %v3101, %v3068
        %v3103 = vrot.slane %v3068, 4
        %v3104 = vsel %vm2225, %v3076, %v3103
        %v3106 = vunpack.c.l.s4 1983009808
        %v3107 = vunpack.c.0.s8 %v3106
        %v3108 = vperm.slane %v3102, %v3107
        %v3110 = vunpack.c.l.s4 1983009808
        %v3111 = vunpack.c.0.s8 %v3110
        %v3112 = vperm.slane %v3104, %v3111
        %v3113 = vrot.slane %v2190, 4
        %v3114 = vsel %vm2225, 0.0, %v3113
        %v3116 = vunpack.c.l.s4 1983009808
        %v3117 = vunpack.c.0.s8 %v3116
        %v3118 = vperm.slane %v2190, %v3117
        %v3120 = vunpack.c.l.s4 1983009808
        %v3121 = vunpack.c.0.s8 %v3120
        %v3122 = vperm.slane %v3114, %v3121
        %v3123 = vrot.slane %v3084, 4
        %v3124 = vsel %vm2225, 0.0, %v3123
        %v3126 = vunpack.c.l.s4 1983009808
        %v3127 = vunpack.c.0.s8 %v3126
        %v3128 = vperm.slane %v3084, %v3127
        %v3130 = vunpack.c.l.s4 1983009808
        %v3131 = vunpack.c.0.s8 %v3130
        %v3132 = vperm.slane %v3124, %v3131
        %v3133 = vrot.slane %v3108, 4
        %v3134 = vsel %vm2225, %v3133, %v3096
        %v3135 = vrot.slane %v3096, 4
        %v3136 = vsel %vm2225, %v3108, %v3135
        %v3138 = vunpack.c.l.s4 1934713408
        %v3139 = vunpack.c.0.s8 %v3138
        %v3140 = vperm.slane %v3134, %v3139
        %v3142 = vunpack.c.l.s4 1934713408
        %v3143 = vunpack.c.0.s8 %v3142
        %v3144 = vperm.slane %v3136, %v3143
        %v3145 = vrot.slane %v3112, 4
        %v3146 = vsel %vm2225, %v3145, %v3100
        %v3147 = vrot.slane %v3100, 4
        %v3148 = vsel %vm2225, %v3112, %v3147
        %v3150 = vunpack.c.l.s4 1934713408
        %v3151 = vunpack.c.0.s8 %v3150
        %v3152 = vperm.slane %v3146, %v3151
        %v3154 = vunpack.c.l.s4 1934713408
        %v3155 = vunpack.c.0.s8 %v3154
        %v3156 = vperm.slane %v3148, %v3155
        %v3157 = vrot.slane %v3128, 4
        %v3158 = vsel %vm2225, %v3157, %v3118
        %v3159 = vrot.slane %v3118, 4
        %v3160 = vsel %vm2225, %v3128, %v3159
        %v3162 = vunpack.c.l.s4 1934713408
        %v3163 = vunpack.c.0.s8 %v3162
        %v3164 = vperm.slane %v3158, %v3163
        %v3166 = vunpack.c.l.s4 1934713408
        %v3167 = vunpack.c.0.s8 %v3166
        %v3168 = vperm.slane %v3160, %v3167
        %v3169 = vrot.slane %v3132, 4
        %v3170 = vsel %vm2225, %v3169, %v3122
        %v3171 = vrot.slane %v3122, 4
        %v3172 = vsel %vm2225, %v3132, %v3171
        %v3174 = vunpack.c.l.s4 1934713408
        %v3175 = vunpack.c.0.s8 %v3174
        %v3176 = vperm.slane %v3170, %v3175
        %v3178 = vunpack.c.l.s4 1934713408
        %v3179 = vunpack.c.0.s8 %v3178
        %v3180 = vperm.slane %v3172, %v3179
        %v3181 = vrot.slane %v3164, 4
        %v3182 = vsel %vm2225, %v3181, %v3140
        %v3183 = vrot.slane %v3140, 4
        %v3184 = vsel %vm2225, %v3164, %v3183
        %v3185 = vrot.slane %v3168, 4
        %v3186 = vsel %vm2225, %v3185, %v3144
        %v3187 = vrot.slane %v3144, 4
        %v3188 = vsel %vm2225, %v3168, %v3187
        %v3189 = vrot.slane %v3176, 4
        %v3190 = vsel %vm2225, %v3189, %v3152
        %v3191 = vrot.slane %v3152, 4
        %v3192 = vsel %vm2225, %v3176, %v3191
        %v3193 = vrot.slane %v3180, 4
        %v3194 = vsel %vm2225, %v3193, %v3156
        %v3195 = vrot.slane %v3156, 4
        %v3196 = vsel %vm2225, %v3180, %v3195
        %v3197 = vrot.slane %v2150, 4
        %v3198 = vsel %vm2225, %v3197, %v2108
        %v3199 = vrot.slane %v2108, 4
        %v3200 = vsel %vm2225, %v2150, %v3199
        %v3202 = vunpack.c.l.s4 1983009808
        %v3203 = vunpack.c.0.s8 %v3202
        %v3204 = vperm.slane %v3198, %v3203
        %v3206 = vunpack.c.l.s4 1983009808
        %v3207 = vunpack.c.0.s8 %v3206
        %v3208 = vperm.slane %v3200, %v3207
        %v3209 = vrot.slane %v3078, 4
        %v3210 = vsel %vm2225, %v3209, %v3070
        %v3211 = vrot.slane %v3070, 4
        %v3212 = vsel %vm2225, %v3078, %v3211
        %v3214 = vunpack.c.l.s4 1983009808
        %v3215 = vunpack.c.0.s8 %v3214
        %v3216 = vperm.slane %v3210, %v3215
        %v3218 = vunpack.c.l.s4 1983009808
        %v3219 = vunpack.c.0.s8 %v3218
        %v3220 = vperm.slane %v3212, %v3219
        %v3221 = vrot.slane %v2192, 4
        %v3222 = vsel %vm2225, 0.0, %v3221
        %v3224 = vunpack.c.l.s4 1983009808
        %v3225 = vunpack.c.0.s8 %v3224
        %v3226 = vperm.slane %v2192, %v3225
        %v3228 = vunpack.c.l.s4 1983009808
        %v3229 = vunpack.c.0.s8 %v3228
        %v3230 = vperm.slane %v3222, %v3229
        %v3231 = vrot.slane %v3086, 4
        %v3232 = vsel %vm2225, 0.0, %v3231
        %v3234 = vunpack.c.l.s4 1983009808
        %v3235 = vunpack.c.0.s8 %v3234
        %v3236 = vperm.slane %v3086, %v3235
        %v3238 = vunpack.c.l.s4 1983009808
        %v3239 = vunpack.c.0.s8 %v3238
        %v3240 = vperm.slane %v3232, %v3239
        %v3241 = vrot.slane %v3216, 4
        %v3242 = vsel %vm2225, %v3241, %v3204
        %v3243 = vrot.slane %v3204, 4
        %v3244 = vsel %vm2225, %v3216, %v3243
        %v3246 = vunpack.c.l.s4 1934713408
        %v3247 = vunpack.c.0.s8 %v3246
        %v3248 = vperm.slane %v3242, %v3247
        %v3250 = vunpack.c.l.s4 1934713408
        %v3251 = vunpack.c.0.s8 %v3250
        %v3252 = vperm.slane %v3244, %v3251
        %v3253 = vrot.slane %v3220, 4
        %v3254 = vsel %vm2225, %v3253, %v3208
        %v3255 = vrot.slane %v3208, 4
        %v3256 = vsel %vm2225, %v3220, %v3255
        %v3258 = vunpack.c.l.s4 1934713408
        %v3259 = vunpack.c.0.s8 %v3258
        %v3260 = vperm.slane %v3254, %v3259
        %v3262 = vunpack.c.l.s4 1934713408
        %v3263 = vunpack.c.0.s8 %v3262
        %v3264 = vperm.slane %v3256, %v3263
        %v3265 = vrot.slane %v3236, 4
        %v3266 = vsel %vm2225, %v3265, %v3226
        %v3267 = vrot.slane %v3226, 4
        %v3268 = vsel %vm2225, %v3236, %v3267
        %v3270 = vunpack.c.l.s4 1934713408
        %v3271 = vunpack.c.0.s8 %v3270
        %v3272 = vperm.slane %v3266, %v3271
        %v3274 = vunpack.c.l.s4 1934713408
        %v3275 = vunpack.c.0.s8 %v3274
        %v3276 = vperm.slane %v3268, %v3275
        %v3277 = vrot.slane %v3240, 4
        %v3278 = vsel %vm2225, %v3277, %v3230
        %v3279 = vrot.slane %v3230, 4
        %v3280 = vsel %vm2225, %v3240, %v3279
        %v3282 = vunpack.c.l.s4 1934713408
        %v3283 = vunpack.c.0.s8 %v3282
        %v3284 = vperm.slane %v3278, %v3283
        %v3286 = vunpack.c.l.s4 1934713408
        %v3287 = vunpack.c.0.s8 %v3286
        %v3288 = vperm.slane %v3280, %v3287
        %v3289 = vrot.slane %v3272, 4
        %v3290 = vsel %vm2225, %v3289, %v3248
        %v3291 = vrot.slane %v3248, 4
        %v3292 = vsel %vm2225, %v3272, %v3291
        %v3293 = vrot.slane %v3276, 4
        %v3294 = vsel %vm2225, %v3293, %v3252
        %v3295 = vrot.slane %v3252, 4
        %v3296 = vsel %vm2225, %v3276, %v3295
        %v3297 = vrot.slane %v3284, 4
        %v3298 = vsel %vm2225, %v3297, %v3260
        %v3299 = vrot.slane %v3260, 4
        %v3300 = vsel %vm2225, %v3284, %v3299
        %v3301 = vrot.slane %v3288, 4
        %v3302 = vsel %vm2225, %v3301, %v3264
        %v3303 = vrot.slane %v3264, 4
        %v3304 = vsel %vm2225, %v3288, %v3303
        %v3305 = vrot.slane %v3186, 4
        %v3306 = vsel %vm2225, %v3305, %v3182
        %v3307 = vrot.slane %v3182, 4
        %v3308 = vsel %vm2225, %v3186, %v3307
        %v3310 = vunpack.c.l.s4 1983009808
        %v3311 = vunpack.c.0.s8 %v3310
        %v3312 = vperm.slane %v3306, %v3311
        %v3314 = vunpack.c.l.s4 1983009808
        %v3315 = vunpack.c.0.s8 %v3314
        %v3316 = vperm.slane %v3308, %v3315
        %v3317 = vrot.slane %v3188, 4
        %v3318 = vsel %vm2225, %v3317, %v3184
        %v3319 = vrot.slane %v3184, 4
        %v3320 = vsel %vm2225, %v3188, %v3319
        %v3322 = vunpack.c.l.s4 1983009808
        %v3323 = vunpack.c.0.s8 %v3322
        %v3324 = vperm.slane %v3318, %v3323
        %v3326 = vunpack.c.l.s4 1983009808
        %v3327 = vunpack.c.0.s8 %v3326
        %v3328 = vperm.slane %v3320, %v3327
        %v3329 = vrot.slane %v3194, 4
        %v3330 = vsel %vm2225, %v3329, %v3190
        %v3331 = vrot.slane %v3190, 4
        %v3332 = vsel %vm2225, %v3194, %v3331
        %v3334 = vunpack.c.l.s4 1983009808
        %v3335 = vunpack.c.0.s8 %v3334
        %v3336 = vperm.slane %v3330, %v3335
        %v3338 = vunpack.c.l.s4 1983009808
        %v3339 = vunpack.c.0.s8 %v3338
        %v3340 = vperm.slane %v3332, %v3339
        %v3341 = vrot.slane %v3196, 4
        %v3342 = vsel %vm2225, %v3341, %v3192
        %v3343 = vrot.slane %v3192, 4
        %v3344 = vsel %vm2225, %v3196, %v3343
        %v3346 = vunpack.c.l.s4 1983009808
        %v3347 = vunpack.c.0.s8 %v3346
        %v3348 = vperm.slane %v3342, %v3347
        %v3350 = vunpack.c.l.s4 1983009808
        %v3351 = vunpack.c.0.s8 %v3350
        %v3352 = vperm.slane %v3344, %v3351
        %v3353 = vrot.slane %v3324, 4
        %v3354 = vsel %vm2225, %v3353, %v3312
        %v3355 = vrot.slane %v3312, 4
        %v3356 = vsel %vm2225, %v3324, %v3355
        %v3358 = vunpack.c.l.s4 1934713408
        %v3359 = vunpack.c.0.s8 %v3358
        %v3360 = vperm.slane %v3354, %v3359
        %v3362 = vunpack.c.l.s4 1934713408
        %v3363 = vunpack.c.0.s8 %v3362
        %v3364 = vperm.slane %v3356, %v3363
        %v3365 = vrot.slane %v3328, 4
        %v3366 = vsel %vm2225, %v3365, %v3316
        %v3368 = vunpack.c.l.s4 1934713408
        %v3369 = vunpack.c.0.s8 %v3368
        %v3370 = vperm.slane %v3366, %v3369
        %v3371 = vrot.slane %v3348, 4
        %v3372 = vsel %vm2225, %v3371, %v3336
        %v3373 = vrot.slane %v3336, 4
        %v3374 = vsel %vm2225, %v3348, %v3373
        %v3376 = vunpack.c.l.s4 1934713408
        %v3377 = vunpack.c.0.s8 %v3376
        %v3378 = vperm.slane %v3372, %v3377
        %v3380 = vunpack.c.l.s4 1934713408
        %v3381 = vunpack.c.0.s8 %v3380
        %v3382 = vperm.slane %v3374, %v3381
        %v3383 = vrot.slane %v3352, 4
        %v3384 = vsel %vm2225, %v3383, %v3340
        %v3386 = vunpack.c.l.s4 1934713408
        %v3387 = vunpack.c.0.s8 %v3386
        %v3388 = vperm.slane %v3384, %v3387
        %v3389 = vrot.slane %v3378, 4
        %v3390 = vsel %vm2225, %v3389, %v3360
        %v3391 = vrot.slane %v3360, 4
        %v3392 = vsel %vm2225, %v3378, %v3391
        %v3393 = vrot.slane %v3382, 4
        %v3394 = vsel %vm2225, %v3393, %v3364
        %v3395 = vrot.slane %v3364, 4
        %v3396 = vsel %vm2225, %v3382, %v3395
        %v3397 = vrot.slane %v3388, 4
        %v3398 = vsel %vm2225, %v3397, %v3370
        %v3399 = vrot.slane %v3370, 4
        %v3400 = vsel %vm2225, %v3388, %v3399
        %v3401 = vrot.slane %v3294, 4
        %v3402 = vsel %vm2225, %v3401, %v3290
        %v3403 = vrot.slane %v3290, 4
        %v3404 = vsel %vm2225, %v3294, %v3403
        %v3406 = vunpack.c.l.s4 1983009808
        %v3407 = vunpack.c.0.s8 %v3406
        %v3408 = vperm.slane %v3402, %v3407
        %v3410 = vunpack.c.l.s4 1983009808
        %v3411 = vunpack.c.0.s8 %v3410
        %v3412 = vperm.slane %v3404, %v3411
        %v3413 = vrot.slane %v3296, 4
        %v3414 = vsel %vm2225, %v3413, %v3292
        %v3415 = vrot.slane %v3292, 4
        %v3416 = vsel %vm2225, %v3296, %v3415
        %v3418 = vunpack.c.l.s4 1983009808
        %v3419 = vunpack.c.0.s8 %v3418
        %v3420 = vperm.slane %v3414, %v3419
        %v3422 = vunpack.c.l.s4 1983009808
        %v3423 = vunpack.c.0.s8 %v3422
        %v3424 = vperm.slane %v3416, %v3423
        %v3425 = vrot.slane %v3302, 4
        %v3426 = vsel %vm2225, %v3425, %v3298
        %v3427 = vrot.slane %v3298, 4
        %v3428 = vsel %vm2225, %v3302, %v3427
        %v3430 = vunpack.c.l.s4 1983009808
        %v3431 = vunpack.c.0.s8 %v3430
        %v3432 = vperm.slane %v3426, %v3431
        %v3434 = vunpack.c.l.s4 1983009808
        %v3435 = vunpack.c.0.s8 %v3434
        %v3436 = vperm.slane %v3428, %v3435
        %v3437 = vrot.slane %v3304, 4
        %v3438 = vsel %vm2225, %v3437, %v3300
        %v3439 = vrot.slane %v3300, 4
        %v3440 = vsel %vm2225, %v3304, %v3439
        %v3442 = vunpack.c.l.s4 1983009808
        %v3443 = vunpack.c.0.s8 %v3442
        %v3444 = vperm.slane %v3438, %v3443
        %v3446 = vunpack.c.l.s4 1983009808
        %v3447 = vunpack.c.0.s8 %v3446
        %v3448 = vperm.slane %v3440, %v3447
        %v3449 = vrot.slane %v3420, 4
        %v3450 = vsel %vm2225, %v3449, %v3408
        %v3451 = vrot.slane %v3408, 4
        %v3452 = vsel %vm2225, %v3420, %v3451
        %v3454 = vunpack.c.l.s4 1934713408
        %v3455 = vunpack.c.0.s8 %v3454
        %v3456 = vperm.slane %v3450, %v3455
        %v3458 = vunpack.c.l.s4 1934713408
        %v3459 = vunpack.c.0.s8 %v3458
        %v3460 = vperm.slane %v3452, %v3459
        %v3461 = vrot.slane %v3424, 4
        %v3462 = vsel %vm2225, %v3461, %v3412
        %v3464 = vunpack.c.l.s4 1934713408
        %v3465 = vunpack.c.0.s8 %v3464
        %v3466 = vperm.slane %v3462, %v3465
        %v3467 = vrot.slane %v3444, 4
        %v3468 = vsel %vm2225, %v3467, %v3432
        %v3469 = vrot.slane %v3432, 4
        %v3470 = vsel %vm2225, %v3444, %v3469
        %v3472 = vunpack.c.l.s4 1934713408
        %v3473 = vunpack.c.0.s8 %v3472
        %v3474 = vperm.slane %v3468, %v3473
        %v3476 = vunpack.c.l.s4 1934713408
        %v3477 = vunpack.c.0.s8 %v3476
        %v3478 = vperm.slane %v3470, %v3477
        %v3479 = vrot.slane %v3448, 4
        %v3480 = vsel %vm2225, %v3479, %v3436
        %v3482 = vunpack.c.l.s4 1934713408
        %v3483 = vunpack.c.0.s8 %v3482
        %v3484 = vperm.slane %v3480, %v3483
        %v3485 = vrot.slane %v3474, 4
        %v3486 = vsel %vm2225, %v3485, %v3456
        %v3487 = vrot.slane %v3456, 4
        %v3488 = vsel %vm2225, %v3474, %v3487
        %v3489 = vrot.slane %v3478, 4
        %v3490 = vsel %vm2225, %v3489, %v3460
        %v3491 = vrot.slane %v3460, 4
        %v3492 = vsel %vm2225, %v3478, %v3491
        %v3493 = vrot.slane %v3484, 4
        %v3494 = vsel %vm2225, %v3493, %v3466
        %v3495 = vrot.slane %v3466, 4
        %v3496 = vsel %vm2225, %v3484, %v3495
        %vm3497 = vcmask 523264
        %v3499 = vsel %vm3497, %v2526, 0
        %v3502 = vsel %vm3497, %v2622, 0
        %v3505 = vsel %vm3497, %v2958, 0
        %v3508 = vsel %vm3497, %v3054, 0
        %3510 = vmatpush.xpose.msra.mxu0 0.0
        %3511 = vmatpush.xpose.msra.mxu0 0.0
        %3512 = vmatpush.xpose.msra.mxu0 0.0
        %3513 = vmatpush.xpose.msra.mxu0 0.0
        %3514 = vmatpush.xpose.msra.mxu0 0.0
        %3515 = vmatpush.xpose.msra.mxu0 0.0
        %3516 = vmatpush.xpose.msra.mxu0 0.0
        %3517 = vmatpush.xpose.msra.mxu0 0.0
        %3518 = vmatpush.xpose.msra.mxu0 0.0
        %3519 = vmatpush.xpose.msra.mxu0 0.0
        %3520 = vmatpush.xpose.msra.mxu0 0.0
        %3521 = vmatpush.xpose.msra.mxu0 0.0
        %3522 = vmatpush.xpose.msra.mxu0 0.0
        %3523 = vmatpush.xpose.msra.mxu0 0.0
        %3524 = vmatpush.xpose.msra.mxu0 %v3508
        %3525 = vmatpush.xpose.msra.mxu0 %v3505
        %3526 = vmatmul.f32.gmra.mxu0 %v3499
        %v3527 = vpop.f32.mrf.mxu0
        %v3528 = vadd.f32 0.0, %v3527
        %3529 = vmatmul.f32.gmra.mxu0 %v3502
        %v3530 = vpop.f32.mrf.mxu0
        %v3531 = vadd.f32 0.0, %v3530
        %3532 = vdwg.mxu0
        %v3534 = vsel %vm3497, %v2528, 0
        %v3537 = vsel %vm3497, %v2624, 0
        %v3540 = vsel %vm3497, %v2960, 0
        %v3543 = vsel %vm3497, %v3056, 0
        %3545 = vmatpush.xpose.msra.mxu0 0.0
        %3546 = vmatpush.xpose.msra.mxu0 0.0
        %3547 = vmatpush.xpose.msra.mxu0 0.0
        %3548 = vmatpush.xpose.msra.mxu0 0.0
        %3549 = vmatpush.xpose.msra.mxu0 0.0
        %3550 = vmatpush.xpose.msra.mxu0 0.0
        %3551 = vmatpush.xpose.msra.mxu0 0.0
        %3552 = vmatpush.xpose.msra.mxu0 0.0
        %3553 = vmatpush.xpose.msra.mxu0 0.0
        %3554 = vmatpush.xpose.msra.mxu0 0.0
        %3555 = vmatpush.xpose.msra.mxu0 0.0
        %3556 = vmatpush.xpose.msra.mxu0 0.0
        %3557 = vmatpush.xpose.msra.mxu0 0.0
        %3558 = vmatpush.xpose.msra.mxu0 0.0
        %3559 = vmatpush.xpose.msra.mxu0 %v3543
        %3560 = vmatpush.xpose.msra.mxu0 %v3540
        %3561 = vmatmul.f32.gmra.mxu0 %v3534
        %v3562 = vpop.f32.mrf.mxu0
        %v3563 = vadd.f32 0.0, %v3562
        %3564 = vmatmul.f32.gmra.mxu0 %v3537
        %v3565 = vpop.f32.mrf.mxu0
        %v3566 = vadd.f32 0.0, %v3565
        %3567 = vdwg.mxu0
        %v3569 = vsel %vm3497, %v2530, 0
        %v3572 = vsel %vm3497, %v2626, 0
        %v3575 = vsel %vm3497, %v2962, 0
        %v3578 = vsel %vm3497, %v3058, 0
        %3580 = vmatpush.xpose.msra.mxu0 0.0
        %3581 = vmatpush.xpose.msra.mxu0 0.0
        %3582 = vmatpush.xpose.msra.mxu0 0.0
        %3583 = vmatpush.xpose.msra.mxu0 0.0
        %3584 = vmatpush.xpose.msra.mxu0 0.0
        %3585 = vmatpush.xpose.msra.mxu0 0.0
        %3586 = vmatpush.xpose.msra.mxu0 0.0
        %3587 = vmatpush.xpose.msra.mxu0 0.0
        %3588 = vmatpush.xpose.msra.mxu0 0.0
        %3589 = vmatpush.xpose.msra.mxu0 0.0
        %3590 = vmatpush.xpose.msra.mxu0 0.0
        %3591 = vmatpush.xpose.msra.mxu0 0.0
        %3592 = vmatpush.xpose.msra.mxu0 0.0
        %3593 = vmatpush.xpose.msra.mxu0 0.0
        %3594 = vmatpush.xpose.msra.mxu0 %v3578
        %3595 = vmatpush.xpose.msra.mxu0 %v3575
        %3596 = vmatmul.f32.gmra.mxu0 %v3569
        %v3597 = vpop.f32.mrf.mxu0
        %v3598 = vadd.f32 0.0, %v3597
        %3599 = vmatmul.f32.gmra.mxu0 %v3572
        %v3600 = vpop.f32.mrf.mxu0
        %v3601 = vadd.f32 0.0, %v3600
        %3602 = vdwg.mxu0
        %v3604 = vsel %vm3497, %v2532, 0
        %v3607 = vsel %vm3497, %v2628, 0
        %v3610 = vsel %vm3497, %v2964, 0
        %v3613 = vsel %vm3497, %v3060, 0
        %3615 = vmatpush.xpose.msra.mxu0 0.0
        %3616 = vmatpush.xpose.msra.mxu0 0.0
        %3617 = vmatpush.xpose.msra.mxu0 0.0
        %3618 = vmatpush.xpose.msra.mxu0 0.0
        %3619 = vmatpush.xpose.msra.mxu0 0.0
        %3620 = vmatpush.xpose.msra.mxu0 0.0
        %3621 = vmatpush.xpose.msra.mxu0 0.0
        %3622 = vmatpush.xpose.msra.mxu0 0.0
        %3623 = vmatpush.xpose.msra.mxu0 0.0
        %3624 = vmatpush.xpose.msra.mxu0 0.0
        %3625 = vmatpush.xpose.msra.mxu0 0.0
        %3626 = vmatpush.xpose.msra.mxu0 0.0
        %3627 = vmatpush.xpose.msra.mxu0 0.0
        %3628 = vmatpush.xpose.msra.mxu0 0.0
        %3629 = vmatpush.xpose.msra.mxu0 %v3613
        %3630 = vmatpush.xpose.msra.mxu0 %v3610
        %3631 = vmatmul.f32.gmra.mxu0 %v3604
        %v3632 = vpop.f32.mrf.mxu0
        %v3633 = vadd.f32 0.0, %v3632
        %3634 = vmatmul.f32.gmra.mxu0 %v3607
        %v3635 = vpop.f32.mrf.mxu0
        %v3636 = vadd.f32 0.0, %v3635
        %3637 = vdwg.mxu0
        %v3639 = vsel %vm3497, %v2534, 0
        %v3642 = vsel %vm3497, %v2630, 0
        %v3645 = vsel %vm3497, %v2966, 0
        %v3648 = vsel %vm3497, %v3062, 0
        %3650 = vmatpush.xpose.msra.mxu0 0.0
        %3651 = vmatpush.xpose.msra.mxu0 0.0
        %3652 = vmatpush.xpose.msra.mxu0 0.0
        %3653 = vmatpush.xpose.msra.mxu0 0.0
        %3654 = vmatpush.xpose.msra.mxu0 0.0
        %3655 = vmatpush.xpose.msra.mxu0 0.0
        %3656 = vmatpush.xpose.msra.mxu0 0.0
        %3657 = vmatpush.xpose.msra.mxu0 0.0
        %3658 = vmatpush.xpose.msra.mxu0 0.0
        %3659 = vmatpush.xpose.msra.mxu0 0.0
        %3660 = vmatpush.xpose.msra.mxu0 0.0
        %3661 = vmatpush.xpose.msra.mxu0 0.0
        %3662 = vmatpush.xpose.msra.mxu0 0.0
        %3663 = vmatpush.xpose.msra.mxu0 0.0
        %3664 = vmatpush.xpose.msra.mxu0 %v3648
        %3665 = vmatpush.xpose.msra.mxu0 %v3645
        %3666 = vmatmul.f32.gmra.mxu0 %v3639
        %v3667 = vpop.f32.mrf.mxu0
        %v3668 = vadd.f32 0.0, %v3667
        %3669 = vmatmul.f32.gmra.mxu0 %v3642
        %v3670 = vpop.f32.mrf.mxu0
        %v3671 = vadd.f32 0.0, %v3670
        %3672 = vdwg.mxu0
        %v3674 = vsel %vm3497, %v2536, 0
        %v3677 = vsel %vm3497, %v2632, 0
        %v3680 = vsel %vm3497, %v2968, 0
        %v3683 = vsel %vm3497, %v3064, 0
        %3685 = vmatpush.xpose.msra.mxu0 0.0
        %3686 = vmatpush.xpose.msra.mxu0 0.0
        %3687 = vmatpush.xpose.msra.mxu0 0.0
        %3688 = vmatpush.xpose.msra.mxu0 0.0
        %3689 = vmatpush.xpose.msra.mxu0 0.0
        %3690 = vmatpush.xpose.msra.mxu0 0.0
        %3691 = vmatpush.xpose.msra.mxu0 0.0
        %3692 = vmatpush.xpose.msra.mxu0 0.0
        %3693 = vmatpush.xpose.msra.mxu0 0.0
        %3694 = vmatpush.xpose.msra.mxu0 0.0
        %3695 = vmatpush.xpose.msra.mxu0 0.0
        %3696 = vmatpush.xpose.msra.mxu0 0.0
        %3697 = vmatpush.xpose.msra.mxu0 0.0
        %3698 = vmatpush.xpose.msra.mxu0 0.0
        %3699 = vmatpush.xpose.msra.mxu0 %v3683
        %3700 = vmatpush.xpose.msra.mxu0 %v3680
        %3701 = vmatmul.f32.gmra.mxu0 %v3674
        %v3702 = vpop.f32.mrf.mxu0
        %v3703 = vadd.f32 0.0, %v3702
        %3704 = vmatmul.f32.gmra.mxu0 %v3677
        %v3705 = vpop.f32.mrf.mxu0
        %v3706 = vadd.f32 0.0, %v3705
        %3707 = vdwg.mxu0
        %vm3708 = vcmask 130048
        %v3709 = vsel %vm3708, %v3528, -inf
        %3710 = vmax.xlane.f32.xlu0 %v3709
        %v3711 = vpop.xlane.xlu0 %3710
        %v3712 = vsel %vm3708, %v3531, -inf
        %3713 = vmax.xlane.f32.xlu0 %v3712
        %v3714 = vpop.xlane.xlu0 %3713
        %v3715 = vsel %vm3708, %v3563, -inf
        %3716 = vmax.xlane.f32.xlu0 %v3715
        %v3717 = vpop.xlane.xlu0 %3716
        %v3718 = vsel %vm3708, %v3566, -inf
        %3719 = vmax.xlane.f32.xlu0 %v3718
        %v3720 = vpop.xlane.xlu0 %3719
        %v3721 = vsel %vm3708, %v3598, -inf
        %3722 = vmax.xlane.f32.xlu0 %v3721
        %v3723 = vpop.xlane.xlu0 %3722
        %v3724 = vsel %vm3708, %v3601, -inf
        %3725 = vmax.xlane.f32.xlu0 %v3724
        %v3726 = vpop.xlane.xlu0 %3725
        %v3727 = vsel %vm3708, %v3633, -inf
        %3728 = vmax.xlane.f32.xlu0 %v3727
        %v3729 = vpop.xlane.xlu0 %3728
        %v3730 = vsel %vm3708, %v3636, -inf
        %3731 = vmax.xlane.f32.xlu0 %v3730
        %v3732 = vpop.xlane.xlu0 %3731
        %v3733 = vsel %vm3708, %v3668, -inf
        %3734 = vmax.xlane.f32.xlu0 %v3733
        %v3735 = vpop.xlane.xlu0 %3734
        %v3736 = vsel %vm3708, %v3671, -inf
        %3737 = vmax.xlane.f32.xlu0 %v3736
        %v3738 = vpop.xlane.xlu0 %3737
        %v3739 = vsel %vm3708, %v3703, -inf
        %3740 = vmax.xlane.f32.xlu0 %v3739
        %v3741 = vpop.xlane.xlu0 %3740
        %v3742 = vsel %vm3708, %v3706, -inf
        %3743 = vmax.xlane.f32.xlu0 %v3742
        %v3744 = vpop.xlane.xlu0 %3743
        %v3745 = vsub.f32 %v3528, %v3711
        %v3746 = vsub.f32 %v3531, %v3714
        %v3747 = vsub.f32 %v3563, %v3717
        %v3748 = vsub.f32 %v3566, %v3720
        %v3749 = vsub.f32 %v3598, %v3723
        %v3750 = vsub.f32 %v3601, %v3726
        %v3751 = vsub.f32 %v3633, %v3729
        %v3752 = vsub.f32 %v3636, %v3732
        %v3753 = vsub.f32 %v3668, %v3735
        %v3754 = vsub.f32 %v3671, %v3738
        %v3755 = vsub.f32 %v3703, %v3741
        %v3756 = vsub.f32 %v3706, %v3744
        %v3757 = vmul.f32 %v3745, 1.442695
        %v3758 = vpow.pop %v3757
        %v3759 = vmul.f32 %v3746, 1.442695
        %v3760 = vpow.pop %v3759
        %v3761 = vmul.f32 %v3747, 1.442695
        %v3762 = vpow.pop %v3761
        %v3763 = vmul.f32 %v3748, 1.442695
        %v3764 = vpow.pop %v3763
        %v3765 = vmul.f32 %v3749, 1.442695
        %v3766 = vpow.pop %v3765
        %v3767 = vmul.f32 %v3750, 1.442695
        %v3768 = vpow.pop %v3767
        %v3769 = vmul.f32 %v3751, 1.442695
        %v3770 = vpow.pop %v3769
        %v3771 = vmul.f32 %v3752, 1.442695
        %v3772 = vpow.pop %v3771
        %v3773 = vmul.f32 %v3753, 1.442695
        %v3774 = vpow.pop %v3773
        %v3775 = vmul.f32 %v3754, 1.442695
        %v3776 = vpow.pop %v3775
        %v3777 = vmul.f32 %v3755, 1.442695
        %v3778 = vpow.pop %v3777
        %v3779 = vmul.f32 %v3756, 1.442695
        %v3780 = vpow.pop %v3779
        %v3781 = vsel %vm3708, %v3758, 0.0
        %3782 = vadd.xlane.f32.xlu0 %v3781
        %v3783 = vpop.xlane.xlu0 %3782
        %v3784 = vsel %vm3708, %v3760, 0.0
        %3785 = vadd.xlane.f32.xlu0 %v3784
        %v3786 = vpop.xlane.xlu0 %3785
        %v3787 = vsel %vm3708, %v3762, 0.0
        %3788 = vadd.xlane.f32.xlu0 %v3787
        %v3789 = vpop.xlane.xlu0 %3788
        %v3790 = vsel %vm3708, %v3764, 0.0
        %3791 = vadd.xlane.f32.xlu0 %v3790
        %v3792 = vpop.xlane.xlu0 %3791
        %v3793 = vsel %vm3708, %v3766, 0.0
        %3794 = vadd.xlane.f32.xlu0 %v3793
        %v3795 = vpop.xlane.xlu0 %3794
        %v3796 = vsel %vm3708, %v3768, 0.0
        %3797 = vadd.xlane.f32.xlu0 %v3796
        %v3798 = vpop.xlane.xlu0 %3797
        %v3799 = vsel %vm3708, %v3770, 0.0
        %3800 = vadd.xlane.f32.xlu0 %v3799
        %v3801 = vpop.xlane.xlu0 %3800
        %v3802 = vsel %vm3708, %v3772, 0.0
        %3803 = vadd.xlane.f32.xlu0 %v3802
        %v3804 = vpop.xlane.xlu0 %3803
        %v3805 = vsel %vm3708, %v3774, 0.0
        %3806 = vadd.xlane.f32.xlu0 %v3805
        %v3807 = vpop.xlane.xlu0 %3806
        %v3808 = vsel %vm3708, %v3776, 0.0
        %3809 = vadd.xlane.f32.xlu0 %v3808
        %v3810 = vpop.xlane.xlu0 %3809
        %v3811 = vsel %vm3708, %v3778, 0.0
        %3812 = vadd.xlane.f32.xlu0 %v3811
        %v3813 = vpop.xlane.xlu0 %3812
        %v3814 = vsel %vm3708, %v3780, 0.0
        %3815 = vadd.xlane.f32.xlu0 %v3814
        %v3816 = vpop.xlane.xlu0 %3815
        %v3817 = vrcp.pop %v3783
        %v3818 = vrcp.pop %v3786
        %v3819 = vrcp.pop %v3789
        %v3820 = vrcp.pop %v3792
        %v3821 = vrcp.pop %v3795
        %v3822 = vrcp.pop %v3798
        %v3823 = vrcp.pop %v3801
        %v3824 = vrcp.pop %v3804
        %v3825 = vrcp.pop %v3807
        %v3826 = vrcp.pop %v3810
        %v3827 = vrcp.pop %v3813
        %v3828 = vrcp.pop %v3816
        %v3829 = vmul.f32 %v3758, %v3817
        %v3830 = vmul.f32 %v3760, %v3818
        %v3831 = vmul.f32 %v3762, %v3819
        %v3832 = vmul.f32 %v3764, %v3820
        %v3833 = vmul.f32 %v3766, %v3821
        %v3834 = vmul.f32 %v3768, %v3822
        %v3835 = vmul.f32 %v3770, %v3823
        %v3836 = vmul.f32 %v3772, %v3824
        %v3837 = vmul.f32 %v3774, %v3825
        %v3838 = vmul.f32 %v3776, %v3826
        %v3839 = vmul.f32 %v3778, %v3827
        %v3840 = vmul.f32 %v3780, %v3828
        %v3842 = vsel %vm3708, %v3829, 0
        %v3845 = vsel %vm3708, %v3830, 0
        %3847 = vmatpush.msra.mxu0 0.0
        %3848 = vmatpush.msra.mxu0 0.0
        %3849 = vmatpush.msra.mxu0 0.0
        %3850 = vmatpush.msra.mxu0 0.0
        %3851 = vmatpush.msra.mxu0 0.0
        %3852 = vmatpush.msra.mxu0 0.0
        %3853 = vmatpush.msra.mxu0 0.0
        %3854 = vmatpush.msra.mxu0 0.0
        %3855 = vmatpush.msra.mxu0 0.0
        %3856 = vmatpush.msra.mxu0 0.0
        %3857 = vmatpush.msra.mxu0 0.0
        %3858 = vmatpush.msra.mxu0 0.0
        %3859 = vmatpush.msra.mxu0 0.0
        %3860 = vmatpush.msra.mxu0 0.0
        %3861 = vmatpush.msra.mxu0 %v3486
        %3862 = vmatpush.msra.mxu0 %v3390
        %3863 = vmatmul.f32.gmra.mxu0 %v3842
        %v3864 = vpop.f32.mrf.mxu0
        %v3865 = vadd.f32 0.0, %v3864
        %3866 = vmatmul.f32.gmra.mxu0 %v3845
        %v3867 = vpop.f32.mrf.mxu0
        %v3868 = vadd.f32 0.0, %v3867
        %3869 = vdwg.mxu0
        %v3871 = vsel %vm3708, %v3831, 0
        %v3874 = vsel %vm3708, %v3832, 0
        %3876 = vmatpush.msra.mxu0 0.0
        %3877 = vmatpush.msra.mxu0 0.0
        %3878 = vmatpush.msra.mxu0 0.0
        %3879 = vmatpush.msra.mxu0 0.0
        %3880 = vmatpush.msra.mxu0 0.0
        %3881 = vmatpush.msra.mxu0 0.0
        %3882 = vmatpush.msra.mxu0 0.0
        %3883 = vmatpush.msra.mxu0 0.0
        %3884 = vmatpush.msra.mxu0 0.0
        %3885 = vmatpush.msra.mxu0 0.0
        %3886 = vmatpush.msra.mxu0 0.0
        %3887 = vmatpush.msra.mxu0 0.0
        %3888 = vmatpush.msra.mxu0 0.0
        %3889 = vmatpush.msra.mxu0 0.0
        %3890 = vmatpush.msra.mxu0 %v3488
        %3891 = vmatpush.msra.mxu0 %v3392
        %3892 = vmatmul.f32.gmra.mxu0 %v3871
        %v3893 = vpop.f32.mrf.mxu0
        %v3894 = vadd.f32 0.0, %v3893
        %3895 = vmatmul.f32.gmra.mxu0 %v3874
        %v3896 = vpop.f32.mrf.mxu0
        %v3897 = vadd.f32 0.0, %v3896
        %3898 = vdwg.mxu0
        %v3900 = vsel %vm3708, %v3833, 0
        %v3903 = vsel %vm3708, %v3834, 0
        %3905 = vmatpush.msra.mxu0 0.0
        %3906 = vmatpush.msra.mxu0 0.0
        %3907 = vmatpush.msra.mxu0 0.0
        %3908 = vmatpush.msra.mxu0 0.0
        %3909 = vmatpush.msra.mxu0 0.0
        %3910 = vmatpush.msra.mxu0 0.0
        %3911 = vmatpush.msra.mxu0 0.0
        %3912 = vmatpush.msra.mxu0 0.0
        %3913 = vmatpush.msra.mxu0 0.0
        %3914 = vmatpush.msra.mxu0 0.0
        %3915 = vmatpush.msra.mxu0 0.0
        %3916 = vmatpush.msra.mxu0 0.0
        %3917 = vmatpush.msra.mxu0 0.0
        %3918 = vmatpush.msra.mxu0 0.0
        %3919 = vmatpush.msra.mxu0 %v3490
        %3920 = vmatpush.msra.mxu0 %v3394
        %3921 = vmatmul.f32.gmra.mxu0 %v3900
        %v3922 = vpop.f32.mrf.mxu0
        %v3923 = vadd.f32 0.0, %v3922
        %3924 = vmatmul.f32.gmra.mxu0 %v3903
        %v3925 = vpop.f32.mrf.mxu0
        %v3926 = vadd.f32 0.0, %v3925
        %3927 = vdwg.mxu0
        %v3929 = vsel %vm3708, %v3835, 0
        %v3932 = vsel %vm3708, %v3836, 0
        %3934 = vmatpush.msra.mxu0 0.0
        %3935 = vmatpush.msra.mxu0 0.0
        %3936 = vmatpush.msra.mxu0 0.0
        %3937 = vmatpush.msra.mxu0 0.0
        %3938 = vmatpush.msra.mxu0 0.0
        %3939 = vmatpush.msra.mxu0 0.0
        %3940 = vmatpush.msra.mxu0 0.0
        %3941 = vmatpush.msra.mxu0 0.0
        %3942 = vmatpush.msra.mxu0 0.0
        %3943 = vmatpush.msra.mxu0 0.0
        %3944 = vmatpush.msra.mxu0 0.0
        %3945 = vmatpush.msra.mxu0 0.0
        %3946 = vmatpush.msra.mxu0 0.0
        %3947 = vmatpush.msra.mxu0 0.0
        %3948 = vmatpush.msra.mxu0 %v3492
        %3949 = vmatpush.msra.mxu0 %v3396
        %3950 = vmatmul.f32.gmra.mxu0 %v3929
        %v3951 = vpop.f32.mrf.mxu0
        %v3952 = vadd.f32 0.0, %v3951
        %3953 = vmatmul.f32.gmra.mxu0 %v3932
        %v3954 = vpop.f32.mrf.mxu0
        %v3955 = vadd.f32 0.0, %v3954
        %3956 = vdwg.mxu0
        %v3958 = vsel %vm3708, %v3837, 0
        %v3961 = vsel %vm3708, %v3838, 0
        %3963 = vmatpush.msra.mxu0 0.0
        %3964 = vmatpush.msra.mxu0 0.0
        %3965 = vmatpush.msra.mxu0 0.0
        %3966 = vmatpush.msra.mxu0 0.0
        %3967 = vmatpush.msra.mxu0 0.0
        %3968 = vmatpush.msra.mxu0 0.0
        %3969 = vmatpush.msra.mxu0 0.0
        %3970 = vmatpush.msra.mxu0 0.0
        %3971 = vmatpush.msra.mxu0 0.0
        %3972 = vmatpush.msra.mxu0 0.0
        %3973 = vmatpush.msra.mxu0 0.0
        %3974 = vmatpush.msra.mxu0 0.0
        %3975 = vmatpush.msra.mxu0 0.0
        %3976 = vmatpush.msra.mxu0 0.0
        %3977 = vmatpush.msra.mxu0 %v3494
        %3978 = vmatpush.msra.mxu0 %v3398
        %3979 = vmatmul.f32.gmra.mxu0 %v3958
        %v3980 = vpop.f32.mrf.mxu0
        %v3981 = vadd.f32 0.0, %v3980
        %3982 = vmatmul.f32.gmra.mxu0 %v3961
        %v3983 = vpop.f32.mrf.mxu0
        %v3984 = vadd.f32 0.0, %v3983
        %3985 = vdwg.mxu0
        %v3987 = vsel %vm3708, %v3839, 0
        %v3990 = vsel %vm3708, %v3840, 0
        %3992 = vmatpush.msra.mxu0 0.0
        %3993 = vmatpush.msra.mxu0 0.0
        %3994 = vmatpush.msra.mxu0 0.0
        %3995 = vmatpush.msra.mxu0 0.0
        %3996 = vmatpush.msra.mxu0 0.0
        %3997 = vmatpush.msra.mxu0 0.0
        %3998 = vmatpush.msra.mxu0 0.0
        %3999 = vmatpush.msra.mxu0 0.0
        %4000 = vmatpush.msra.mxu0 0.0
        %4001 = vmatpush.msra.mxu0 0.0
        %4002 = vmatpush.msra.mxu0 0.0
        %4003 = vmatpush.msra.mxu0 0.0
        %4004 = vmatpush.msra.mxu0 0.0
        %4005 = vmatpush.msra.mxu0 0.0
        %4006 = vmatpush.msra.mxu0 %v3496
        %4007 = vmatpush.msra.mxu0 %v3400
        %4008 = vmatmul.f32.gmra.mxu0 %v3987
        %v4009 = vpop.f32.mrf.mxu0
        %v4010 = vadd.f32 0.0, %v4009
        %4011 = vmatmul.f32.gmra.mxu0 %v3990
        %v4012 = vpop.f32.mrf.mxu0
        %v4013 = vadd.f32 0.0, %v4012
        %4014 = vdwg.mxu0
        %v4015 = vrot.slane %v3923, 4
        %v4016 = vsel %vm2225, %v4015, %v3865
        %v4017 = vrot.slane %v3865, 4
        %v4018 = vsel %vm2225, %v3923, %v4017
        %v4020 = vunpack.c.l.s4 1983009808
        %v4021 = vunpack.c.0.s8 %v4020
        %v4022 = vperm.slane %v4016, %v4021
        %v4024 = vunpack.c.l.s4 1983009808
        %v4025 = vunpack.c.0.s8 %v4024
        %v4026 = vperm.slane %v4018, %v4025
        %v4027 = vrot.slane %v3952, 4
        %v4028 = vsel %vm2225, %v4027, %v3894
        %v4029 = vrot.slane %v3894, 4
        %v4030 = vsel %vm2225, %v3952, %v4029
        %v4032 = vunpack.c.l.s4 1983009808
        %v4033 = vunpack.c.0.s8 %v4032
        %v4034 = vperm.slane %v4028, %v4033
        %v4036 = vunpack.c.l.s4 1983009808
        %v4037 = vunpack.c.0.s8 %v4036
        %v4038 = vperm.slane %v4030, %v4037
        %v4039 = vrot.slane %v3981, 4
        %v4040 = vsel %vm2225, 0.0, %v4039
        %v4042 = vunpack.c.l.s4 1983009808
        %v4043 = vunpack.c.0.s8 %v4042
        %v4044 = vperm.slane %v3981, %v4043
        %v4046 = vunpack.c.l.s4 1983009808
        %v4047 = vunpack.c.0.s8 %v4046
        %v4048 = vperm.slane %v4040, %v4047
        %v4049 = vrot.slane %v4010, 4
        %v4050 = vsel %vm2225, 0.0, %v4049
        %v4052 = vunpack.c.l.s4 1983009808
        %v4053 = vunpack.c.0.s8 %v4052
        %v4054 = vperm.slane %v4010, %v4053
        %v4056 = vunpack.c.l.s4 1983009808
        %v4057 = vunpack.c.0.s8 %v4056
        %v4058 = vperm.slane %v4050, %v4057
        %v4059 = vrot.slane %v4034, 4
        %v4060 = vsel %vm2225, %v4059, %v4022
        %v4061 = vrot.slane %v4022, 4
        %v4062 = vsel %vm2225, %v4034, %v4061
        %v4064 = vunpack.c.l.s4 1934713408
        %v4065 = vunpack.c.0.s8 %v4064
        %v4066 = vperm.slane %v4060, %v4065
        %v4068 = vunpack.c.l.s4 1934713408
        %v4069 = vunpack.c.0.s8 %v4068
        %v4070 = vperm.slane %v4062, %v4069
        %v4071 = vrot.slane %v4038, 4
        %v4072 = vsel %vm2225, %v4071, %v4026
        %v4073 = vrot.slane %v4026, 4
        %v4074 = vsel %vm2225, %v4038, %v4073
        %v4076 = vunpack.c.l.s4 1934713408
        %v4077 = vunpack.c.0.s8 %v4076
        %v4078 = vperm.slane %v4072, %v4077
        %v4080 = vunpack.c.l.s4 1934713408
        %v4081 = vunpack.c.0.s8 %v4080
        %v4082 = vperm.slane %v4074, %v4081
        %v4083 = vrot.slane %v4054, 4
        %v4084 = vsel %vm2225, %v4083, %v4044
        %v4085 = vrot.slane %v4044, 4
        %v4086 = vsel %vm2225, %v4054, %v4085
        %v4088 = vunpack.c.l.s4 1934713408
        %v4089 = vunpack.c.0.s8 %v4088
        %v4090 = vperm.slane %v4084, %v4089
        %v4092 = vunpack.c.l.s4 1934713408
        %v4093 = vunpack.c.0.s8 %v4092
        %v4094 = vperm.slane %v4086, %v4093
        %v4095 = vrot.slane %v4058, 4
        %v4096 = vsel %vm2225, %v4095, %v4048
        %v4097 = vrot.slane %v4048, 4
        %v4098 = vsel %vm2225, %v4058, %v4097
        %v4100 = vunpack.c.l.s4 1934713408
        %v4101 = vunpack.c.0.s8 %v4100
        %v4102 = vperm.slane %v4096, %v4101
        %v4104 = vunpack.c.l.s4 1934713408
        %v4105 = vunpack.c.0.s8 %v4104
        %v4106 = vperm.slane %v4098, %v4105
        %v4107 = vrot.slane %v4090, 4
        %v4108 = vsel %vm2225, %v4107, %v4066
        %v4109 = vrot.slane %v4066, 4
        %v4110 = vsel %vm2225, %v4090, %v4109
        %v4111 = vrot.slane %v4094, 4
        %v4112 = vsel %vm2225, %v4111, %v4070
        %v4113 = vrot.slane %v4070, 4
        %v4114 = vsel %vm2225, %v4094, %v4113
        %v4115 = vrot.slane %v4102, 4
        %v4116 = vsel %vm2225, %v4115, %v4078
        %v4117 = vrot.slane %v4078, 4
        %v4118 = vsel %vm2225, %v4102, %v4117
        %v4119 = vrot.slane %v4106, 4
        %v4120 = vsel %vm2225, %v4119, %v4082
        %v4121 = vrot.slane %v4082, 4
        %v4122 = vsel %vm2225, %v4106, %v4121
        %v4123 = vrot.slane %v3926, 4
        %v4124 = vsel %vm2225, %v4123, %v3868
        %v4125 = vrot.slane %v3868, 4
        %v4126 = vsel %vm2225, %v3926, %v4125
        %v4128 = vunpack.c.l.s4 1983009808
        %v4129 = vunpack.c.0.s8 %v4128
        %v4130 = vperm.slane %v4124, %v4129
        %v4132 = vunpack.c.l.s4 1983009808
        %v4133 = vunpack.c.0.s8 %v4132
        %v4134 = vperm.slane %v4126, %v4133
        %v4135 = vrot.slane %v3955, 4
        %v4136 = vsel %vm2225, %v4135, %v3897
        %v4137 = vrot.slane %v3897, 4
        %v4138 = vsel %vm2225, %v3955, %v4137
        %v4140 = vunpack.c.l.s4 1983009808
        %v4141 = vunpack.c.0.s8 %v4140
        %v4142 = vperm.slane %v4136, %v4141
        %v4144 = vunpack.c.l.s4 1983009808
        %v4145 = vunpack.c.0.s8 %v4144
        %v4146 = vperm.slane %v4138, %v4145
        %v4147 = vrot.slane %v3984, 4
        %v4148 = vsel %vm2225, 0.0, %v4147
        %v4150 = vunpack.c.l.s4 1983009808
        %v4151 = vunpack.c.0.s8 %v4150
        %v4152 = vperm.slane %v3984, %v4151
        %v4154 = vunpack.c.l.s4 1983009808
        %v4155 = vunpack.c.0.s8 %v4154
        %v4156 = vperm.slane %v4148, %v4155
        %v4157 = vrot.slane %v4013, 4
        %v4158 = vsel %vm2225, 0.0, %v4157
        %v4160 = vunpack.c.l.s4 1983009808
        %v4161 = vunpack.c.0.s8 %v4160
        %v4162 = vperm.slane %v4013, %v4161
        %v4164 = vunpack.c.l.s4 1983009808
        %v4165 = vunpack.c.0.s8 %v4164
        %v4166 = vperm.slane %v4158, %v4165
        %v4167 = vrot.slane %v4142, 4
        %v4168 = vsel %vm2225, %v4167, %v4130
        %v4169 = vrot.slane %v4130, 4
        %v4170 = vsel %vm2225, %v4142, %v4169
        %v4172 = vunpack.c.l.s4 1934713408
        %v4173 = vunpack.c.0.s8 %v4172
        %v4174 = vperm.slane %v4168, %v4173
        %v4176 = vunpack.c.l.s4 1934713408
        %v4177 = vunpack.c.0.s8 %v4176
        %v4178 = vperm.slane %v4170, %v4177
        %v4179 = vrot.slane %v4146, 4
        %v4180 = vsel %vm2225, %v4179, %v4134
        %v4181 = vrot.slane %v4134, 4
        %v4182 = vsel %vm2225, %v4146, %v4181
        %v4184 = vunpack.c.l.s4 1934713408
        %v4185 = vunpack.c.0.s8 %v4184
        %v4186 = vperm.slane %v4180, %v4185
        %v4188 = vunpack.c.l.s4 1934713408
        %v4189 = vunpack.c.0.s8 %v4188
        %v4190 = vperm.slane %v4182, %v4189
        %v4191 = vrot.slane %v4162, 4
        %v4192 = vsel %vm2225, %v4191, %v4152
        %v4193 = vrot.slane %v4152, 4
        %v4194 = vsel %vm2225, %v4162, %v4193
        %v4196 = vunpack.c.l.s4 1934713408
        %v4197 = vunpack.c.0.s8 %v4196
        %v4198 = vperm.slane %v4192, %v4197
        %v4200 = vunpack.c.l.s4 1934713408
        %v4201 = vunpack.c.0.s8 %v4200
        %v4202 = vperm.slane %v4194, %v4201
        %v4203 = vrot.slane %v4166, 4
        %v4204 = vsel %vm2225, %v4203, %v4156
        %v4205 = vrot.slane %v4156, 4
        %v4206 = vsel %vm2225, %v4166, %v4205
        %v4208 = vunpack.c.l.s4 1934713408
        %v4209 = vunpack.c.0.s8 %v4208
        %v4210 = vperm.slane %v4204, %v4209
        %v4212 = vunpack.c.l.s4 1934713408
        %v4213 = vunpack.c.0.s8 %v4212
        %v4214 = vperm.slane %v4206, %v4213
        %v4215 = vrot.slane %v4198, 4
        %v4216 = vsel %vm2225, %v4215, %v4174
        %v4217 = vrot.slane %v4174, 4
        %v4218 = vsel %vm2225, %v4198, %v4217
        %v4219 = vrot.slane %v4202, 4
        %v4220 = vsel %vm2225, %v4219, %v4178
        %v4221 = vrot.slane %v4178, 4
        %v4222 = vsel %vm2225, %v4202, %v4221
        %v4223 = vrot.slane %v4210, 4
        %v4224 = vsel %vm2225, %v4223, %v4186
        %v4225 = vrot.slane %v4186, 4
        %v4226 = vsel %vm2225, %v4210, %v4225
        %v4227 = vrot.slane %v4214, 4
        %v4228 = vsel %vm2225, %v4227, %v4190
        %v4229 = vrot.slane %v4190, 4
        %v4230 = vsel %vm2225, %v4214, %v4229
        %v4231 = vrot.slane %v4112, 4
        %v4232 = vsel %vm2225, %v4231, %v4108
        %v4233 = vrot.slane %v4108, 4
        %v4234 = vsel %vm2225, %v4112, %v4233
        %v4236 = vunpack.c.l.s4 1983009808
        %v4237 = vunpack.c.0.s8 %v4236
        %v4238 = vperm.slane %v4232, %v4237
        %v4240 = vunpack.c.l.s4 1983009808
        %v4241 = vunpack.c.0.s8 %v4240
        %v4242 = vperm.slane %v4234, %v4241
        %v4243 = vrot.slane %v4114, 4
        %v4244 = vsel %vm2225, %v4243, %v4110
        %v4245 = vrot.slane %v4110, 4
        %v4246 = vsel %vm2225, %v4114, %v4245
        %v4248 = vunpack.c.l.s4 1983009808
        %v4249 = vunpack.c.0.s8 %v4248
        %v4250 = vperm.slane %v4244, %v4249
        %v4252 = vunpack.c.l.s4 1983009808
        %v4253 = vunpack.c.0.s8 %v4252
        %v4254 = vperm.slane %v4246, %v4253
        %v4255 = vrot.slane %v4120, 4
        %v4256 = vsel %vm2225, %v4255, %v4116
        %v4257 = vrot.slane %v4116, 4
        %v4258 = vsel %vm2225, %v4120, %v4257
        %v4260 = vunpack.c.l.s4 1983009808
        %v4261 = vunpack.c.0.s8 %v4260
        %v4262 = vperm.slane %v4256, %v4261
        %v4264 = vunpack.c.l.s4 1983009808
        %v4265 = vunpack.c.0.s8 %v4264
        %v4266 = vperm.slane %v4258, %v4265
        %v4267 = vrot.slane %v4122, 4
        %v4268 = vsel %vm2225, %v4267, %v4118
        %v4269 = vrot.slane %v4118, 4
        %v4270 = vsel %vm2225, %v4122, %v4269
        %v4272 = vunpack.c.l.s4 1983009808
        %v4273 = vunpack.c.0.s8 %v4272
        %v4274 = vperm.slane %v4268, %v4273
        %v4276 = vunpack.c.l.s4 1983009808
        %v4277 = vunpack.c.0.s8 %v4276
        %v4278 = vperm.slane %v4270, %v4277
        %v4279 = vrot.slane %v4250, 4
        %v4280 = vsel %vm2225, %v4279, %v4238
        %v4281 = vrot.slane %v4238, 4
        %v4282 = vsel %vm2225, %v4250, %v4281
        %v4284 = vunpack.c.l.s4 1934713408
        %v4285 = vunpack.c.0.s8 %v4284
        %v4286 = vperm.slane %v4280, %v4285
        %v4288 = vunpack.c.l.s4 1934713408
        %v4289 = vunpack.c.0.s8 %v4288
        %v4290 = vperm.slane %v4282, %v4289
        %v4291 = vrot.slane %v4254, 4
        %v4292 = vsel %vm2225, %v4291, %v4242
        %v4294 = vunpack.c.l.s4 1934713408
        %v4295 = vunpack.c.0.s8 %v4294
        %v4296 = vperm.slane %v4292, %v4295
        %v4297 = vrot.slane %v4274, 4
        %v4298 = vsel %vm2225, %v4297, %v4262
        %v4299 = vrot.slane %v4262, 4
        %v4300 = vsel %vm2225, %v4274, %v4299
        %v4302 = vunpack.c.l.s4 1934713408
        %v4303 = vunpack.c.0.s8 %v4302
        %v4304 = vperm.slane %v4298, %v4303
        %v4306 = vunpack.c.l.s4 1934713408
        %v4307 = vunpack.c.0.s8 %v4306
        %v4308 = vperm.slane %v4300, %v4307
        %v4309 = vrot.slane %v4278, 4
        %v4310 = vsel %vm2225, %v4309, %v4266
        %v4312 = vunpack.c.l.s4 1934713408
        %v4313 = vunpack.c.0.s8 %v4312
        %v4314 = vperm.slane %v4310, %v4313
        %v4315 = vrot.slane %v4304, 4
        %v4316 = vsel %vm2225, %v4315, %v4286
        %v4317 = vrot.slane %v4286, 4
        %v4318 = vsel %vm2225, %v4304, %v4317
        %v4319 = vrot.slane %v4308, 4
        %v4320 = vsel %vm2225, %v4319, %v4290
        %v4321 = vrot.slane %v4290, 4
        %v4322 = vsel %vm2225, %v4308, %v4321
        %v4323 = vrot.slane %v4314, 4
        %v4324 = vsel %vm2225, %v4323, %v4296
        %v4325 = vrot.slane %v4296, 4
        %v4326 = vsel %vm2225, %v4314, %v4325
        %v4327 = vrot.slane %v4220, 4
        %v4328 = vsel %vm2225, %v4327, %v4216
        %v4329 = vrot.slane %v4216, 4
        %v4330 = vsel %vm2225, %v4220, %v4329
        %v4332 = vunpack.c.l.s4 1983009808
        %v4333 = vunpack.c.0.s8 %v4332
        %v4334 = vperm.slane %v4328, %v4333
        %v4336 = vunpack.c.l.s4 1983009808
        %v4337 = vunpack.c.0.s8 %v4336
        %v4338 = vperm.slane %v4330, %v4337
        %v4339 = vrot.slane %v4222, 4
        %v4340 = vsel %vm2225, %v4339, %v4218
        %v4341 = vrot.slane %v4218, 4
        %v4342 = vsel %vm2225, %v4222, %v4341
        %v4344 = vunpack.c.l.s4 1983009808
        %v4345 = vunpack.c.0.s8 %v4344
        %v4346 = vperm.slane %v4340, %v4345
        %v4348 = vunpack.c.l.s4 1983009808
        %v4349 = vunpack.c.0.s8 %v4348
        %v4350 = vperm.slane %v4342, %v4349
        %v4351 = vrot.slane %v4228, 4
        %v4352 = vsel %vm2225, %v4351, %v4224
        %v4353 = vrot.slane %v4224, 4
        %v4354 = vsel %vm2225, %v4228, %v4353
        %v4356 = vunpack.c.l.s4 1983009808
        %v4357 = vunpack.c.0.s8 %v4356
        %v4358 = vperm.slane %v4352, %v4357
        %v4360 = vunpack.c.l.s4 1983009808
        %v4361 = vunpack.c.0.s8 %v4360
        %v4362 = vperm.slane %v4354, %v4361
        %v4363 = vrot.slane %v4230, 4
        %v4364 = vsel %vm2225, %v4363, %v4226
        %v4365 = vrot.slane %v4226, 4
        %v4366 = vsel %vm2225, %v4230, %v4365
        %v4368 = vunpack.c.l.s4 1983009808
        %v4369 = vunpack.c.0.s8 %v4368
        %v4370 = vperm.slane %v4364, %v4369
        %v4372 = vunpack.c.l.s4 1983009808
        %v4373 = vunpack.c.0.s8 %v4372
        %v4374 = vperm.slane %v4366, %v4373
        %v4375 = vrot.slane %v4346, 4
        %v4376 = vsel %vm2225, %v4375, %v4334
        %v4377 = vrot.slane %v4334, 4
        %v4378 = vsel %vm2225, %v4346, %v4377
        %v4380 = vunpack.c.l.s4 1934713408
        %v4381 = vunpack.c.0.s8 %v4380
        %v4382 = vperm.slane %v4376, %v4381
        %v4384 = vunpack.c.l.s4 1934713408
        %v4385 = vunpack.c.0.s8 %v4384
        %v4386 = vperm.slane %v4378, %v4385
        %v4387 = vrot.slane %v4350, 4
        %v4388 = vsel %vm2225, %v4387, %v4338
        %v4390 = vunpack.c.l.s4 1934713408
        %v4391 = vunpack.c.0.s8 %v4390
        %v4392 = vperm.slane %v4388, %v4391
        %v4393 = vrot.slane %v4370, 4
        %v4394 = vsel %vm2225, %v4393, %v4358
        %v4395 = vrot.slane %v4358, 4
        %v4396 = vsel %vm2225, %v4370, %v4395
        %v4398 = vunpack.c.l.s4 1934713408
        %v4399 = vunpack.c.0.s8 %v4398
        %v4400 = vperm.slane %v4394, %v4399
        %v4402 = vunpack.c.l.s4 1934713408
        %v4403 = vunpack.c.0.s8 %v4402
        %v4404 = vperm.slane %v4396, %v4403
        %v4405 = vrot.slane %v4374, 4
        %v4406 = vsel %vm2225, %v4405, %v4362
        %v4408 = vunpack.c.l.s4 1934713408
        %v4409 = vunpack.c.0.s8 %v4408
        %v4410 = vperm.slane %v4406, %v4409
        %v4411 = vrot.slane %v4400, 4
        %v4412 = vsel %vm2225, %v4411, %v4382
        %v4413 = vrot.slane %v4382, 4
        %v4414 = vsel %vm2225, %v4400, %v4413
        %v4415 = vrot.slane %v4404, 4
        %v4416 = vsel %vm2225, %v4415, %v4386
        %v4417 = vrot.slane %v4386, 4
        %v4418 = vsel %vm2225, %v4404, %v4417
        %v4419 = vrot.slane %v4410, 4
        %v4420 = vsel %vm2225, %v4419, %v4392
        %v4421 = vrot.slane %v4392, 4
        %v4422 = vsel %vm2225, %v4410, %v4421
        %4425 = vrot.lane.b32.xlu0 %v4318, 64
        %v4426 = vpop.permute.xlu0 %4425
        %4427 = vrot.lane.b32.xlu0 %v4414, 64
        %v4428 = vpop.permute.xlu0 %4427
        %4433 = vrot.lane.b32.xlu0 %v4322, 64
        %v4434 = vpop.permute.xlu0 %4433
        %4435 = vrot.lane.b32.xlu0 %v4418, 64
        %v4436 = vpop.permute.xlu0 %4435
        %4441 = vrot.lane.b32.xlu0 %v4326, 64
        %v4442 = vpop.permute.xlu0 %4441
        %4443 = vrot.lane.b32.xlu0 %v4422, 64
        %v4444 = vpop.permute.xlu0 %4443
        %v4447 = vsel %vm3497, %v4316, %v4426
        %v4448 = vsel %vm3497, %v4412, %v4428
        %v4449 = vsel %vm3497, %v4320, %v4434
        %v4450 = vsel %vm3497, %v4416, %v4436
        %v4451 = vsel %vm3497, %v4324, %v4442
        %v4452 = vsel %vm3497, %v4420, %v4444
        %v4453 = vpack.c.bf16 %v4448, %v4447
        %v4454 = vpack.c.bf16 %v4450, %v4449
        %v4455 = vpack.c.bf16 %v4452, %v4451
        %v4456 = vld [vmem:[#allocation7] sm:$0xff]
        %v4457 = vld [vmem:[#allocation7 + $0x8] sm:$0xf]
        %v4458 = vld [vmem:[#allocation7 + $0xc] sm:$0xff]
        %v4459 = vld [vmem:[#allocation7 + $0x14] sm:$0xf]
        %v4460 = vld [vmem:[#allocation7 + $0x18] sm:$0xff]
        %v4461 = vld [vmem:[#allocation7 + $0x20] sm:$0xf]
        %v4462 = vld [vmem:[#allocation7 + $0x24] sm:$0xff]
        %v4463 = vld [vmem:[#allocation7 + $0x2c] sm:$0xf]
        %v4464 = vld [vmem:[#allocation7 + $0x30] sm:$0xff]
        %v4465 = vld [vmem:[#allocation7 + $0x38] sm:$0xf]
        %v4466 = vld [vmem:[#allocation7 + $0x3c] sm:$0xff]
        %v4467 = vld [vmem:[#allocation7 + $0x44] sm:$0xf]
        %v4468 = vld [vmem:[#allocation7 + $0x48] sm:$0xff]
        %v4469 = vld [vmem:[#allocation7 + $0x50] sm:$0xf]
        %v4470 = vld [vmem:[#allocation7 + $0x54] sm:$0xff]
        %v4471 = vld [vmem:[#allocation7 + $0x5c] sm:$0xf]
        %v4472 = vld [vmem:[#allocation7 + $0x60] sm:$0xff]
        %v4473 = vld [vmem:[#allocation7 + $0x68] sm:$0xf]
        %v4474 = vld [vmem:[#allocation7 + $0x6c] sm:$0xff]
        %v4475 = vld [vmem:[#allocation7 + $0x74] sm:$0xf]
        %v4476 = vld [vmem:[#allocation7 + $0x78] sm:$0xff]
        %v4477 = vld [vmem:[#allocation7 + $0x80] sm:$0xf]
        %v4478 = vld [vmem:[#allocation7 + $0x84] sm:$0xff]
        %v4479 = vld [vmem:[#allocation7 + $0x8c] sm:$0xf]
        %v4480 = vld [vmem:[#allocation7 + $0x90] sm:$0xff]
        %v4481 = vld [vmem:[#allocation7 + $0x98] sm:$0xf]
        %v4482 = vld [vmem:[#allocation7 + $0x9c] sm:$0xff]
        %v4483 = vld [vmem:[#allocation7 + $0xa4] sm:$0xf]
        %v4484 = vld [vmem:[#allocation7 + $0xa8] sm:$0xff]
        %v4485 = vld [vmem:[#allocation7 + $0xb0] sm:$0xf]
        %v4486 = vld [vmem:[#allocation7 + $0xb4] sm:$0xff]
        %v4487 = vld [vmem:[#allocation7 + $0xbc] sm:$0xf]
        %v4488 = vld [vmem:[#allocation7 + $0xc0] sm:$0xff]
        %v4489 = vld [vmem:[#allocation7 + $0xc8] sm:$0xf]
        %v4490 = vld [vmem:[#allocation7 + $0xcc] sm:$0xff]
        %v4491 = vld [vmem:[#allocation7 + $0xd4] sm:$0xf]
        %v4492 = vld [vmem:[#allocation7 + $0xd8] sm:$0xff]
        %v4493 = vld [vmem:[#allocation7 + $0xe0] sm:$0xf]
        %v4494 = vld [vmem:[#allocation7 + $0xe4] sm:$0xff]
        %v4495 = vld [vmem:[#allocation7 + $0xec] sm:$0xf]
        %v4496 = vld [vmem:[#allocation7 + $0xf0] sm:$0xff]
        %v4497 = vld [vmem:[#allocation7 + $0xf8] sm:$0xf]
        %v4498 = vld [vmem:[#allocation7 + $0xfc] sm:$0xff]
        %v4499 = vld [vmem:[#allocation7 + $0x104] sm:$0xf]
        %v4500 = vld [vmem:[#allocation7 + $0x108] sm:$0xff]
        %v4501 = vld [vmem:[#allocation7 + $0x110] sm:$0xf]
        %v4502 = vld [vmem:[#allocation7 + $0x114] sm:$0xff]
        %v4503 = vld [vmem:[#allocation7 + $0x11c] sm:$0xf]
        %v4504 = vld [vmem:[#allocation7 + $0x120] sm:$0xff]
        %v4505 = vld [vmem:[#allocation7 + $0x128] sm:$0xf]
        %v4506 = vld [vmem:[#allocation7 + $0x12c] sm:$0xff]
        %v4507 = vld [vmem:[#allocation7 + $0x134] sm:$0xf]
        %v4508 = vld [vmem:[#allocation7 + $0x138] sm:$0xff]
        %v4509 = vld [vmem:[#allocation7 + $0x140] sm:$0xf]
        %v4510 = vld [vmem:[#allocation7 + $0x144] sm:$0xff]
        %v4511 = vld [vmem:[#allocation7 + $0x14c] sm:$0xf]
        %v4512 = vld [vmem:[#allocation7 + $0x150] sm:$0xff]
        %v4513 = vld [vmem:[#allocation7 + $0x158] sm:$0xf]
        %v4514 = vld [vmem:[#allocation7 + $0x15c] sm:$0xff]
        %v4515 = vld [vmem:[#allocation7 + $0x164] sm:$0xf]
        %v4516 = vld [vmem:[#allocation7 + $0x168] sm:$0xff]
        %v4517 = vld [vmem:[#allocation7 + $0x170] sm:$0xf]
        %v4518 = vld [vmem:[#allocation7 + $0x174] sm:$0xff]
        %v4519 = vld [vmem:[#allocation7 + $0x17c] sm:$0xf]
        %v4520 = vld [vmem:[#allocation7 + $0x180] sm:$0xff]
        %v4521 = vld [vmem:[#allocation7 + $0x188] sm:$0xf]
        %v4522 = vld [vmem:[#allocation7 + $0x18c] sm:$0xff]
        %v4523 = vld [vmem:[#allocation7 + $0x194] sm:$0xf]
        %v4524 = vld [vmem:[#allocation7 + $0x198] sm:$0xff]
        %v4525 = vld [vmem:[#allocation7 + $0x1a0] sm:$0xf]
        %v4526 = vld [vmem:[#allocation7 + $0x1a4] sm:$0xff]
        %v4527 = vld [vmem:[#allocation7 + $0x1ac] sm:$0xf]
        %v4528 = vld [vmem:[#allocation7 + $0x1b0] sm:$0xff]
        %v4529 = vld [vmem:[#allocation7 + $0x1b8] sm:$0xf]
        %v4530 = vld [vmem:[#allocation7 + $0x1bc] sm:$0xff]
        %v4531 = vld [vmem:[#allocation7 + $0x1c4] sm:$0xf]
        %v4532 = vld [vmem:[#allocation7 + $0x1c8] sm:$0xff]
        %v4533 = vld [vmem:[#allocation7 + $0x1d0] sm:$0xf]
        %v4534 = vld [vmem:[#allocation7 + $0x1d4] sm:$0xff]
        %v4535 = vld [vmem:[#allocation7 + $0x1dc] sm:$0xf]
        %v4536 = vld [vmem:[#allocation7 + $0x1e0] sm:$0xff]
        %v4537 = vld [vmem:[#allocation7 + $0x1e8] sm:$0xf]
        %v4538 = vld [vmem:[#allocation7 + $0x1ec] sm:$0xff]
        %v4539 = vld [vmem:[#allocation7 + $0x1f4] sm:$0xf]
        %v4540 = vld [vmem:[#allocation7 + $0x1f8] sm:$0xff]
        %v4541 = vld [vmem:[#allocation7 + $0x200] sm:$0xf]
        %v4542 = vld [vmem:[#allocation7 + $0x204] sm:$0xff]
        %v4543 = vld [vmem:[#allocation7 + $0x20c] sm:$0xf]
        %v4544 = vld [vmem:[#allocation7 + $0x210] sm:$0xff]
        %v4545 = vld [vmem:[#allocation7 + $0x218] sm:$0xf]
        %v4546 = vld [vmem:[#allocation7 + $0x21c] sm:$0xff]
        %v4547 = vld [vmem:[#allocation7 + $0x224] sm:$0xf]
        %v4548 = vld [vmem:[#allocation7 + $0x228] sm:$0xff]
        %v4549 = vld [vmem:[#allocation7 + $0x230] sm:$0xf]
        %v4550 = vld [vmem:[#allocation7 + $0x234] sm:$0xff]
        %v4551 = vld [vmem:[#allocation7 + $0x23c] sm:$0xf]
        %v4553 = vperm.slane %v359, 0
        %v4554 = vperm.slane %v359, 1
        %v4555 = vperm.slane %v359, 2
        %v4655 = vunpack.c.l.b16 %v4456
        %v4656 = vunpack.c.h.b16 %v4456
        %v4657 = vunpack.c.l.b16 %v4457
        %v4658 = vunpack.c.l.b16 %v4458
        %v4659 = vunpack.c.h.b16 %v4458
        %v4660 = vunpack.c.l.b16 %v4459
        %v4661 = vunpack.c.l.b16 %v4460
        %v4662 = vunpack.c.h.b16 %v4460
        %v4663 = vunpack.c.l.b16 %v4461
        %v4664 = vunpack.c.l.b16 %v4462
        %v4665 = vunpack.c.h.b16 %v4462
        %v4666 = vunpack.c.l.b16 %v4463
        %v4667 = vunpack.c.l.b16 %v4464
        %v4668 = vunpack.c.h.b16 %v4464
        %v4669 = vunpack.c.l.b16 %v4465
        %v4670 = vunpack.c.l.b16 %v4466
        %v4671 = vunpack.c.h.b16 %v4466
        %v4672 = vunpack.c.l.b16 %v4467
        %v4673 = vunpack.c.l.b16 %v4468
        %v4674 = vunpack.c.h.b16 %v4468
        %v4675 = vunpack.c.l.b16 %v4469
        %v4676 = vunpack.c.l.b16 %v4470
        %v4677 = vunpack.c.h.b16 %v4470
        %v4678 = vunpack.c.l.b16 %v4471
        %v4679 = vunpack.c.l.b16 %v4472
        %v4680 = vunpack.c.h.b16 %v4472
        %v4681 = vunpack.c.l.b16 %v4473
        %v4682 = vunpack.c.l.b16 %v4474
        %v4683 = vunpack.c.h.b16 %v4474
        %v4684 = vunpack.c.l.b16 %v4475
        %v4685 = vunpack.c.l.b16 %v4476
        %v4686 = vunpack.c.h.b16 %v4476
        %v4687 = vunpack.c.l.b16 %v4477
        %v4688 = vunpack.c.l.b16 %v4478
        %v4689 = vunpack.c.h.b16 %v4478
        %v4690 = vunpack.c.l.b16 %v4479
        %v4691 = vunpack.c.l.b16 %v4480
        %v4692 = vunpack.c.h.b16 %v4480
        %v4693 = vunpack.c.l.b16 %v4481
        %v4694 = vunpack.c.l.b16 %v4482
        %v4695 = vunpack.c.h.b16 %v4482
        %v4696 = vunpack.c.l.b16 %v4483
        %v4697 = vunpack.c.l.b16 %v4484
        %v4698 = vunpack.c.h.b16 %v4484
        %v4699 = vunpack.c.l.b16 %v4485
        %v4700 = vunpack.c.l.b16 %v4486
        %v4701 = vunpack.c.h.b16 %v4486
        %v4702 = vunpack.c.l.b16 %v4487
        %v4703 = vunpack.c.l.b16 %v4488
        %v4704 = vunpack.c.h.b16 %v4488
        %v4705 = vunpack.c.l.b16 %v4489
        %v4706 = vunpack.c.l.b16 %v4490
        %v4707 = vunpack.c.h.b16 %v4490
        %v4708 = vunpack.c.l.b16 %v4491
        %v4709 = vunpack.c.l.b16 %v4492
        %v4710 = vunpack.c.h.b16 %v4492
        %v4711 = vunpack.c.l.b16 %v4493
        %v4712 = vunpack.c.l.b16 %v4494
        %v4713 = vunpack.c.h.b16 %v4494
        %v4714 = vunpack.c.l.b16 %v4495
        %v4715 = vunpack.c.l.b16 %v4496
        %v4716 = vunpack.c.h.b16 %v4496
        %v4717 = vunpack.c.l.b16 %v4497
        %v4718 = vunpack.c.l.b16 %v4498
        %v4719 = vunpack.c.h.b16 %v4498
        %v4720 = vunpack.c.l.b16 %v4499
        %v4721 = vunpack.c.l.b16 %v4500
        %v4722 = vunpack.c.h.b16 %v4500
        %v4723 = vunpack.c.l.b16 %v4501
        %v4724 = vunpack.c.l.b16 %v4502
        %v4725 = vunpack.c.h.b16 %v4502
        %v4726 = vunpack.c.l.b16 %v4503
        %v4727 = vunpack.c.l.b16 %v4504
        %v4728 = vunpack.c.h.b16 %v4504
        %v4729 = vunpack.c.l.b16 %v4505
        %v4730 = vunpack.c.l.b16 %v4506
        %v4731 = vunpack.c.h.b16 %v4506
        %v4732 = vunpack.c.l.b16 %v4507
        %v4733 = vunpack.c.l.b16 %v4508
        %v4734 = vunpack.c.h.b16 %v4508
        %v4735 = vunpack.c.l.b16 %v4509
        %v4736 = vunpack.c.l.b16 %v4510
        %v4737 = vunpack.c.h.b16 %v4510
        %v4738 = vunpack.c.l.b16 %v4511
        %v4739 = vunpack.c.l.b16 %v4512
        %v4740 = vunpack.c.h.b16 %v4512
        %v4741 = vunpack.c.l.b16 %v4513
        %v4742 = vunpack.c.l.b16 %v4514
        %v4743 = vunpack.c.h.b16 %v4514
        %v4744 = vunpack.c.l.b16 %v4515
        %v4745 = vunpack.c.l.b16 %v4516
        %v4746 = vunpack.c.h.b16 %v4516
        %v4747 = vunpack.c.l.b16 %v4517
        %v4748 = vunpack.c.l.b16 %v4518
        %v4749 = vunpack.c.h.b16 %v4518
        %v4750 = vunpack.c.l.b16 %v4519
        %v4751 = vunpack.c.l.b16 %v4520
        %v4752 = vunpack.c.h.b16 %v4520
        %v4753 = vunpack.c.l.b16 %v4521
        %v4754 = vunpack.c.l.b16 %v4522
        %v4755 = vunpack.c.h.b16 %v4522
        %v4756 = vunpack.c.l.b16 %v4523
        %v4757 = vunpack.c.l.b16 %v4524
        %v4758 = vunpack.c.h.b16 %v4524
        %v4759 = vunpack.c.l.b16 %v4525
        %v4760 = vunpack.c.l.b16 %v4526
        %v4761 = vunpack.c.h.b16 %v4526
        %v4762 = vunpack.c.l.b16 %v4527
        %v4763 = vunpack.c.l.b16 %v4528
        %v4764 = vunpack.c.h.b16 %v4528
        %v4765 = vunpack.c.l.b16 %v4529
        %v4766 = vunpack.c.l.b16 %v4530
        %v4767 = vunpack.c.h.b16 %v4530
        %v4768 = vunpack.c.l.b16 %v4531
        %v4769 = vunpack.c.l.b16 %v4532
        %v4770 = vunpack.c.h.b16 %v4532
        %v4771 = vunpack.c.l.b16 %v4533
        %v4772 = vunpack.c.l.b16 %v4534
        %v4773 = vunpack.c.h.b16 %v4534
        %v4774 = vunpack.c.l.b16 %v4535
        %v4775 = vunpack.c.l.b16 %v4536
        %v4776 = vunpack.c.h.b16 %v4536
        %v4777 = vunpack.c.l.b16 %v4537
        %v4778 = vunpack.c.l.b16 %v4538
        %v4779 = vunpack.c.h.b16 %v4538
        %v4780 = vunpack.c.l.b16 %v4539
        %v4781 = vunpack.c.l.b16 %v4540
        %v4782 = vunpack.c.h.b16 %v4540
        %v4783 = vunpack.c.l.b16 %v4541
        %v4784 = vunpack.c.l.b16 %v4542
        %v4785 = vunpack.c.h.b16 %v4542
        %v4786 = vunpack.c.l.b16 %v4543
        %v4787 = vunpack.c.l.b16 %v4544
        %v4788 = vunpack.c.h.b16 %v4544
        %v4789 = vunpack.c.l.b16 %v4545
        %v4790 = vunpack.c.l.b16 %v4546
        %v4791 = vunpack.c.h.b16 %v4546
        %v4792 = vunpack.c.l.b16 %v4547
        %v4793 = vunpack.c.l.b16 %v4548
        %v4794 = vunpack.c.h.b16 %v4548
        %v4795 = vunpack.c.l.b16 %v4549
        %v4796 = vunpack.c.l.b16 %v4550
        %v4797 = vunpack.c.h.b16 %v4550
        %v4798 = vunpack.c.l.b16 %v4551
        %v4799 = vpack.c.b16 %v4658, %v4655
        %v4800 = vpack.c.b16 %v4659, %v4656
        %v4801 = vpack.c.b16 %v4660, %v4657
        %v4802 = vpack.c.b16 %v4664, %v4661
        %v4803 = vpack.c.b16 %v4665, %v4662
        %v4804 = vpack.c.b16 %v4666, %v4663
        %v4805 = vpack.c.b16 %v4670, %v4667
        %v4806 = vpack.c.b16 %v4671, %v4668
        %v4807 = vpack.c.b16 %v4672, %v4669
        %v4808 = vpack.c.b16 %v4676, %v4673
        %v4809 = vpack.c.b16 %v4677, %v4674
        %v4810 = vpack.c.b16 %v4678, %v4675
        %v4811 = vpack.c.b16 %v4682, %v4679
        %v4812 = vpack.c.b16 %v4683, %v4680
        %v4813 = vpack.c.b16 %v4684, %v4681
        %v4814 = vpack.c.b16 %v4688, %v4685
        %v4815 = vpack.c.b16 %v4689, %v4686
        %v4816 = vpack.c.b16 %v4690, %v4687
        %v4817 = vpack.c.b16 %v4694, %v4691
        %v4818 = vpack.c.b16 %v4695, %v4692
        %v4819 = vpack.c.b16 %v4696, %v4693
        %v4820 = vpack.c.b16 %v4700, %v4697
        %v4821 = vpack.c.b16 %v4701, %v4698
        %v4822 = vpack.c.b16 %v4702, %v4699
        %v4823 = vpack.c.b16 %v4706, %v4703
        %v4824 = vpack.c.b16 %v4707, %v4704
        %v4825 = vpack.c.b16 %v4708, %v4705
        %v4826 = vpack.c.b16 %v4712, %v4709
        %v4827 = vpack.c.b16 %v4713, %v4710
        %v4828 = vpack.c.b16 %v4714, %v4711
        %v4829 = vpack.c.b16 %v4718, %v4715
        %v4830 = vpack.c.b16 %v4719, %v4716
        %v4831 = vpack.c.b16 %v4720, %v4717
        %v4832 = vpack.c.b16 %v4724, %v4721
        %v4833 = vpack.c.b16 %v4725, %v4722
        %v4834 = vpack.c.b16 %v4726, %v4723
        %v4835 = vpack.c.b16 %v4730, %v4727
        %v4836 = vpack.c.b16 %v4731, %v4728
        %v4837 = vpack.c.b16 %v4732, %v4729
        %v4838 = vpack.c.b16 %v4736, %v4733
        %v4839 = vpack.c.b16 %v4737, %v4734
        %v4840 = vpack.c.b16 %v4738, %v4735
        %v4841 = vpack.c.b16 %v4742, %v4739
        %v4842 = vpack.c.b16 %v4743, %v4740
        %v4843 = vpack.c.b16 %v4744, %v4741
        %v4844 = vpack.c.b16 %v4748, %v4745
        %v4845 = vpack.c.b16 %v4749, %v4746
        %v4846 = vpack.c.b16 %v4750, %v4747
        %v4847 = vpack.c.b16 %v4754, %v4751
        %v4848 = vpack.c.b16 %v4755, %v4752
        %v4849 = vpack.c.b16 %v4756, %v4753
        %v4850 = vpack.c.b16 %v4760, %v4757
        %v4851 = vpack.c.b16 %v4761, %v4758
        %v4852 = vpack.c.b16 %v4762, %v4759
        %v4853 = vpack.c.b16 %v4766, %v4763
        %v4854 = vpack.c.b16 %v4767, %v4764
        %v4855 = vpack.c.b16 %v4768, %v4765
        %v4856 = vpack.c.b16 %v4772, %v4769
        %v4857 = vpack.c.b16 %v4773, %v4770
        %v4858 = vpack.c.b16 %v4774, %v4771
        %v4859 = vpack.c.b16 %v4778, %v4775
        %v4860 = vpack.c.b16 %v4779, %v4776
        %v4861 = vpack.c.b16 %v4780, %v4777
        %v4862 = vpack.c.b16 %v4784, %v4781
        %v4863 = vpack.c.b16 %v4785, %v4782
        %v4864 = vpack.c.b16 %v4786, %v4783
        %v4865 = vpack.c.b16 %v4790, %v4787
        %v4866 = vpack.c.b16 %v4791, %v4788
        %v4867 = vpack.c.b16 %v4792, %v4789
        %v4868 = vpack.c.b16 %v4796, %v4793
        %v4869 = vpack.c.b16 %v4797, %v4794
        %v4870 = vpack.c.b16 %v4798, %v4795
        %4943 = vmatpush.bf16.msra.mxu0 %v4820
        %4944 = vmatpush.bf16.msra.mxu0 %v4817
        %4945 = vmatpush.bf16.msra.mxu0 %v4814
        %4946 = vmatpush.bf16.msra.mxu0 %v4811
        %4947 = vmatpush.bf16.msra.mxu0 %v4808
        %4948 = vmatpush.bf16.msra.mxu0 %v4805
        %4949 = vmatpush.bf16.msra.mxu0 %v4802
        %4950 = vmatpush.bf16.msra.mxu0 %v4799
        %4951 = vmatmul.bf16.gmra.mxu0 %v4453
        %v4952 = vpop.f32.mrf.mxu0
        %v4953 = vadd.f32 %v4553, %v4952
        %v4954 = vpop.f32.mrf.mxu0
        %v4955 = vadd.f32 %v4553, %v4954
        %4956 = vdwg.mxu0
        %4957 = vmatpush.bf16.msra.mxu0 %v4844
        %4958 = vmatpush.bf16.msra.mxu0 %v4841
        %4959 = vmatpush.bf16.msra.mxu0 %v4838
        %4960 = vmatpush.bf16.msra.mxu0 %v4835
        %4961 = vmatpush.bf16.msra.mxu0 %v4832
        %4962 = vmatpush.bf16.msra.mxu0 %v4829
        %4963 = vmatpush.bf16.msra.mxu0 %v4826
        %4964 = vmatpush.bf16.msra.mxu0 %v4823
        %4965 = vmatmul.bf16.gmra.mxu0 %v4454
        %v4966 = vpop.f32.mrf.mxu0
        %v4967 = vadd.f32 %v4953, %v4966
        %v4968 = vpop.f32.mrf.mxu0
        %v4969 = vadd.f32 %v4955, %v4968
        %4970 = vdwg.mxu0
        %4971 = vmatpush.bf16.msra.mxu0 %v4868
        %4972 = vmatpush.bf16.msra.mxu0 %v4865
        %4973 = vmatpush.bf16.msra.mxu0 %v4862
        %4974 = vmatpush.bf16.msra.mxu0 %v4859
        %4975 = vmatpush.bf16.msra.mxu0 %v4856
        %4976 = vmatpush.bf16.msra.mxu0 %v4853
        %4977 = vmatpush.bf16.msra.mxu0 %v4850
        %4978 = vmatpush.bf16.msra.mxu0 %v4847
        %4979 = vmatmul.bf16.gmra.mxu0 %v4455
        %v4980 = vpop.f32.mrf.mxu0
        %v4981 = vadd.f32 %v4967, %v4980
        %v4982 = vpop.f32.mrf.mxu0
        %v4983 = vadd.f32 %v4969, %v4982
        %4984 = vdwg.mxu0
        %4985 = vmatpush.bf16.msra.mxu0 %v4821
        %4986 = vmatpush.bf16.msra.mxu0 %v4818
        %4987 = vmatpush.bf16.msra.mxu0 %v4815
        %4988 = vmatpush.bf16.msra.mxu0 %v4812
        %4989 = vmatpush.bf16.msra.mxu0 %v4809
        %4990 = vmatpush.bf16.msra.mxu0 %v4806
        %4991 = vmatpush.bf16.msra.mxu0 %v4803
        %4992 = vmatpush.bf16.msra.mxu0 %v4800
        %4993 = vmatmul.bf16.gmra.mxu0 %v4453
        %v4994 = vpop.f32.mrf.mxu0
        %v4995 = vadd.f32 %v4554, %v4994
        %v4996 = vpop.f32.mrf.mxu0
        %v4997 = vadd.f32 %v4554, %v4996
        %4998 = vdwg.mxu0
        %4999 = vmatpush.bf16.msra.mxu0 %v4845
        %5000 = vmatpush.bf16.msra.mxu0 %v4842
        %5001 = vmatpush.bf16.msra.mxu0 %v4839
        %5002 = vmatpush.bf16.msra.mxu0 %v4836
        %5003 = vmatpush.bf16.msra.mxu0 %v4833
        %5004 = vmatpush.bf16.msra.mxu0 %v4830
        %5005 = vmatpush.bf16.msra.mxu0 %v4827
        %5006 = vmatpush.bf16.msra.mxu0 %v4824
        %5007 = vmatmul.bf16.gmra.mxu0 %v4454
        %v5008 = vpop.f32.mrf.mxu0
        %v5009 = vadd.f32 %v4995, %v5008
        %v5010 = vpop.f32.mrf.mxu0
        %v5011 = vadd.f32 %v4997, %v5010
        %5012 = vdwg.mxu0
        %5013 = vmatpush.bf16.msra.mxu0 %v4869
        %5014 = vmatpush.bf16.msra.mxu0 %v4866
        %5015 = vmatpush.bf16.msra.mxu0 %v4863
        %5016 = vmatpush.bf16.msra.mxu0 %v4860
        %5017 = vmatpush.bf16.msra.mxu0 %v4857
        %5018 = vmatpush.bf16.msra.mxu0 %v4854
        %5019 = vmatpush.bf16.msra.mxu0 %v4851
        %5020 = vmatpush.bf16.msra.mxu0 %v4848
        %5021 = vmatmul.bf16.gmra.mxu0 %v4455
        %v5022 = vpop.f32.mrf.mxu0
        %v5023 = vadd.f32 %v5009, %v5022
        %v5024 = vpop.f32.mrf.mxu0
        %v5025 = vadd.f32 %v5011, %v5024
        %5026 = vdwg.mxu0
        %5027 = vmatpush.bf16.msra.mxu0 %v4822
        %5028 = vmatpush.bf16.msra.mxu0 %v4819
        %5029 = vmatpush.bf16.msra.mxu0 %v4816
        %5030 = vmatpush.bf16.msra.mxu0 %v4813
        %5031 = vmatpush.bf16.msra.mxu0 %v4810
        %5032 = vmatpush.bf16.msra.mxu0 %v4807
        %5033 = vmatpush.bf16.msra.mxu0 %v4804
        %5034 = vmatpush.bf16.msra.mxu0 %v4801
        %5035 = vmatmul.bf16.gmra.mxu0 %v4453
        %v5036 = vpop.f32.mrf.mxu0
        %v5037 = vadd.f32 %v4555, %v5036
        %v5038 = vpop.f32.mrf.mxu0
        %v5039 = vadd.f32 %v4555, %v5038
        %5040 = vdwg.mxu0
        %5041 = vmatpush.bf16.msra.mxu0 %v4846
        %5042 = vmatpush.bf16.msra.mxu0 %v4843
        %5043 = vmatpush.bf16.msra.mxu0 %v4840
        %5044 = vmatpush.bf16.msra.mxu0 %v4837
        %5045 = vmatpush.bf16.msra.mxu0 %v4834
        %5046 = vmatpush.bf16.msra.mxu0 %v4831
        %5047 = vmatpush.bf16.msra.mxu0 %v4828
        %5048 = vmatpush.bf16.msra.mxu0 %v4825
        %5049 = vmatmul.bf16.gmra.mxu0 %v4454
        %v5050 = vpop.f32.mrf.mxu0
        %v5051 = vadd.f32 %v5037, %v5050
        %v5052 = vpop.f32.mrf.mxu0
        %v5053 = vadd.f32 %v5039, %v5052
        %5054 = vdwg.mxu0
        %5055 = vmatpush.bf16.msra.mxu0 %v4870
        %5056 = vmatpush.bf16.msra.mxu0 %v4867
        %5057 = vmatpush.bf16.msra.mxu0 %v4864
        %5058 = vmatpush.bf16.msra.mxu0 %v4861
        %5059 = vmatpush.bf16.msra.mxu0 %v4858
        %5060 = vmatpush.bf16.msra.mxu0 %v4855
        %5061 = vmatpush.bf16.msra.mxu0 %v4852
        %5062 = vmatpush.bf16.msra.mxu0 %v4849
        %5063 = vmatmul.bf16.gmra.mxu0 %v4455
        %v5064 = vpop.f32.mrf.mxu0
        %v5065 = vadd.f32 %v5051, %v5064
        %v5066 = vpop.f32.mrf.mxu0
        %v5067 = vadd.f32 %v5053, %v5066
        %5068 = vdwg.mxu0
        %v5069 = vadd.f32 %v370, %v4981
        %v5070 = vadd.f32 %v371, %v5023
        %v5071 = vadd.f32 %v372, %v5065
        %v5072 = vadd.f32 %v373, %v4983
        %v5073 = vadd.f32 %v374, %v5025
        %v5074 = vadd.f32 %v375, %v5067
        %v5075 = vadd.f32 %v5069, %v5070
        %v5076 = vadd.f32 %v5075, %v5071
        %5077 = vadd.xlane.f32.xlu0 %v5076
        %v5078 = vpop.xlane.xlu0 %5077
        %v5079 = vadd.f32 %v5072, %v5073
        %v5080 = vadd.f32 %v5079, %v5074
        %5081 = vadd.xlane.f32.xlu0 %v5080
        %v5082 = vpop.xlane.xlu0 %5081
        %v5083 = vmul.f32 %v5078, %v390
        %v5084 = vmul.f32 %v5082, %v390
        %v5085 = vsub.f32 %v5069, %v5083
        %v5086 = vsub.f32 %v5070, %v5083
        %v5087 = vsub.f32 %v5071, %v5083
        %v5088 = vsub.f32 %v5072, %v5084
        %v5089 = vsub.f32 %v5073, %v5084
        %v5090 = vsub.f32 %v5074, %v5084
        %v5091 = vmul.f32 %v5085, %v5085
        %v5092 = vmul.f32 %v5086, %v5086
        %v5093 = vmul.f32 %v5087, %v5087
        %v5094 = vmul.f32 %v5088, %v5088
        %v5095 = vmul.f32 %v5089, %v5089
        %v5096 = vmul.f32 %v5090, %v5090
        %v5097 = vadd.f32 %v5091, %v5092
        %v5098 = vadd.f32 %v5097, %v5093
        %5099 = vadd.xlane.f32.xlu0 %v5098
        %v5100 = vpop.xlane.xlu0 %5099
        %v5101 = vadd.f32 %v5094, %v5095
        %v5102 = vadd.f32 %v5101, %v5096
        %5103 = vadd.xlane.f32.xlu0 %v5102
        %v5104 = vpop.xlane.xlu0 %5103
        %v5105 = vmul.f32 %v5100, %v390
        %v5106 = vmul.f32 %v5104, %v390
        %v5107 = vadd.f32 %v5105, 1e-05
        %v5108 = vadd.f32 %v5106, 1e-05
        %v5109 = vrsqrt.pop %v5107
        %v5110 = vmul.f32 %v5109, %v5107
        %v5111 = vmul.f32 %v5110, %v5109
        %v5112 = vmul.f32 0.5, %v5111
        %v5113 = vsub.f32 1.5, %v5112
        %v5114 = vmul.f32 %v5109, %v5113
        %vm5115 = vweird.f32 %v5107
        %vm5116 = vweird.f32 %v5109
        %vm5117 = vmor %vm5115, %vm5116
        %v5118 = vsel %vm5117, %v5109, %v5114
        %v5119 = vrsqrt.pop %v5108
        %v5120 = vmul.f32 %v5119, %v5108
        %v5121 = vmul.f32 %v5120, %v5119
        %v5122 = vmul.f32 0.5, %v5121
        %v5123 = vsub.f32 1.5, %v5122
        %v5124 = vmul.f32 %v5119, %v5123
        %vm5125 = vweird.f32 %v5108
        %vm5126 = vweird.f32 %v5119
        %vm5127 = vmor %vm5125, %vm5126
        %v5128 = vsel %vm5127, %v5119, %v5124
        %v5129 = vmul.f32 %v5085, %v5118
        %v5130 = vmul.f32 %v5086, %v5118
        %v5131 = vmul.f32 %v5087, %v5118
        %v5132 = vmul.f32 %v5088, %v5128
        %v5133 = vmul.f32 %v5089, %v5128
        %v5134 = vmul.f32 %v5090, %v5128
        %v5136 = vperm.slane %v367, 0
        %v5137 = vperm.slane %v367, 1
        %v5138 = vperm.slane %v367, 2
        %v5142 = vmul.f32 %v5129, %v5136
        %v5143 = vmul.f32 %v5130, %v5137
        %v5144 = vmul.f32 %v5131, %v5138
        %v5145 = vmul.f32 %v5132, %v5136
        %v5146 = vmul.f32 %v5133, %v5137
        %v5147 = vmul.f32 %v5134, %v5138
        %v5149 = vperm.slane %v369, 0
        %v5150 = vperm.slane %v369, 1
        %v5151 = vperm.slane %v369, 2
        %v5155 = vadd.f32 %v5142, %v5149
        %v5156 = vadd.f32 %v5143, %v5150
        %v5157 = vadd.f32 %v5144, %v5151
        %v5158 = vadd.f32 %v5145, %v5149
        %v5159 = vadd.f32 %v5146, %v5150
        %v5160 = vadd.f32 %v5147, %v5151
        %v5161 = vpack.c.bf16 %v5158, %v5155
        %v5162 = vpack.c.bf16 %v5159, %v5156
        %v5163 = vpack.c.bf16 %v5160, %v5157
        %v5164 = vld [vmem:[#allocation8] sm:$0xff]
        %v5165 = vld [vmem:[#allocation8 + $0x8] sm:$0xff]
        %v5166 = vld [vmem:[#allocation8 + $0x10] sm:$0xff]
        %v5167 = vld [vmem:[#allocation8 + $0x18] sm:$0xff]
        %v5168 = vld [vmem:[#allocation8 + $0x20] sm:$0xff]
        %v5169 = vld [vmem:[#allocation8 + $0x28] sm:$0xff]
        %v5170 = vld [vmem:[#allocation8 + $0x30] sm:$0xff]
        %v5171 = vld [vmem:[#allocation8 + $0x38] sm:$0xff]
        %v5172 = vld [vmem:[#allocation8 + $0x40] sm:$0xff]
        %v5173 = vld [vmem:[#allocation8 + $0x48] sm:$0xff]
        %v5174 = vld [vmem:[#allocation8 + $0x50] sm:$0xff]
        %v5175 = vld [vmem:[#allocation8 + $0x58] sm:$0xff]
        %v5176 = vld [vmem:[#allocation8 + $0x60] sm:$0xff]
        %v5177 = vld [vmem:[#allocation8 + $0x68] sm:$0xff]
        %v5178 = vld [vmem:[#allocation8 + $0x70] sm:$0xff]
        %v5179 = vld [vmem:[#allocation8 + $0x78] sm:$0xff]
        %v5180 = vld [vmem:[#allocation8 + $0x80] sm:$0xff]
        %v5181 = vld [vmem:[#allocation8 + $0x88] sm:$0xff]
        %v5182 = vld [vmem:[#allocation8 + $0x90] sm:$0xff]
        %v5183 = vld [vmem:[#allocation8 + $0x98] sm:$0xff]
        %v5184 = vld [vmem:[#allocation8 + $0xa0] sm:$0xff]
        %v5185 = vld [vmem:[#allocation8 + $0xa8] sm:$0xff]
        %v5186 = vld [vmem:[#allocation8 + $0xb0] sm:$0xff]
        %v5187 = vld [vmem:[#allocation8 + $0xb8] sm:$0xff]
        %v5188 = vld [vmem:[#allocation8 + $0xc0] sm:$0xff]
        %v5189 = vld [vmem:[#allocation8 + $0xc8] sm:$0xff]
        %v5190 = vld [vmem:[#allocation8 + $0xd0] sm:$0xff]
        %v5191 = vld [vmem:[#allocation8 + $0xd8] sm:$0xff]
        %v5192 = vld [vmem:[#allocation8 + $0xe0] sm:$0xff]
        %v5193 = vld [vmem:[#allocation8 + $0xe8] sm:$0xff]
        %v5194 = vld [vmem:[#allocation8 + $0xf0] sm:$0xff]
        %v5195 = vld [vmem:[#allocation8 + $0xf8] sm:$0xff]
        %v5196 = vld [vmem:[#allocation8 + $0x100] sm:$0xff]
        %v5197 = vld [vmem:[#allocation8 + $0x108] sm:$0xff]
        %v5198 = vld [vmem:[#allocation8 + $0x110] sm:$0xff]
        %v5199 = vld [vmem:[#allocation8 + $0x118] sm:$0xff]
        %v5200 = vld [vmem:[#allocation8 + $0x120] sm:$0xff]
        %v5201 = vld [vmem:[#allocation8 + $0x128] sm:$0xff]
        %v5202 = vld [vmem:[#allocation8 + $0x130] sm:$0xff]
        %v5203 = vld [vmem:[#allocation8 + $0x138] sm:$0xff]
        %v5204 = vld [vmem:[#allocation8 + $0x140] sm:$0xff]
        %v5205 = vld [vmem:[#allocation8 + $0x148] sm:$0xff]
        %v5206 = vld [vmem:[#allocation8 + $0x150] sm:$0xff]
        %v5207 = vld [vmem:[#allocation8 + $0x158] sm:$0xff]
        %v5208 = vld [vmem:[#allocation8 + $0x160] sm:$0xff]
        %v5209 = vld [vmem:[#allocation8 + $0x168] sm:$0xff]
        %v5210 = vld [vmem:[#allocation8 + $0x170] sm:$0xff]
        %v5211 = vld [vmem:[#allocation8 + $0x178] sm:$0xff]
        %v5212 = vld [vmem:[#allocation8 + $0x180] sm:$0xff]
        %v5213 = vld [vmem:[#allocation8 + $0x188] sm:$0xff]
        %v5214 = vld [vmem:[#allocation8 + $0x190] sm:$0xff]
        %v5215 = vld [vmem:[#allocation8 + $0x198] sm:$0xff]
        %v5216 = vld [vmem:[#allocation8 + $0x1a0] sm:$0xff]
        %v5217 = vld [vmem:[#allocation8 + $0x1a8] sm:$0xff]
        %v5218 = vld [vmem:[#allocation8 + $0x1b0] sm:$0xff]
        %v5219 = vld [vmem:[#allocation8 + $0x1b8] sm:$0xff]
        %v5220 = vld [vmem:[#allocation8 + $0x1c0] sm:$0xff]
        %v5221 = vld [vmem:[#allocation8 + $0x1c8] sm:$0xff]
        %v5222 = vld [vmem:[#allocation8 + $0x1d0] sm:$0xff]
        %v5223 = vld [vmem:[#allocation8 + $0x1d8] sm:$0xff]
        %v5224 = vld [vmem:[#allocation8 + $0x1e0] sm:$0xff]
        %v5225 = vld [vmem:[#allocation8 + $0x1e8] sm:$0xff]
        %v5226 = vld [vmem:[#allocation8 + $0x1f0] sm:$0xff]
        %v5227 = vld [vmem:[#allocation8 + $0x1f8] sm:$0xff]
        %v5228 = vld [vmem:[#allocation8 + $0x200] sm:$0xff]
        %v5229 = vld [vmem:[#allocation8 + $0x208] sm:$0xff]
        %v5230 = vld [vmem:[#allocation8 + $0x210] sm:$0xff]
        %v5231 = vld [vmem:[#allocation8 + $0x218] sm:$0xff]
        %v5232 = vld [vmem:[#allocation8 + $0x220] sm:$0xff]
        %v5233 = vld [vmem:[#allocation8 + $0x228] sm:$0xff]
        %v5234 = vld [vmem:[#allocation8 + $0x230] sm:$0xff]
        %v5235 = vld [vmem:[#allocation8 + $0x238] sm:$0xff]
        %v5236 = vld [vmem:[#allocation8 + $0x240] sm:$0xff]
        %v5237 = vld [vmem:[#allocation8 + $0x248] sm:$0xff]
        %v5238 = vld [vmem:[#allocation8 + $0x250] sm:$0xff]
        %v5239 = vld [vmem:[#allocation8 + $0x258] sm:$0xff]
        %v5240 = vld [vmem:[#allocation8 + $0x260] sm:$0xff]
        %v5241 = vld [vmem:[#allocation8 + $0x268] sm:$0xff]
        %v5242 = vld [vmem:[#allocation8 + $0x270] sm:$0xff]
        %v5243 = vld [vmem:[#allocation8 + $0x278] sm:$0xff]
        %v5244 = vld [vmem:[#allocation8 + $0x280] sm:$0xff]
        %v5245 = vld [vmem:[#allocation8 + $0x288] sm:$0xff]
        %v5246 = vld [vmem:[#allocation8 + $0x290] sm:$0xff]
        %v5247 = vld [vmem:[#allocation8 + $0x298] sm:$0xff]
        %v5248 = vld [vmem:[#allocation8 + $0x2a0] sm:$0xff]
        %v5249 = vld [vmem:[#allocation8 + $0x2a8] sm:$0xff]
        %v5250 = vld [vmem:[#allocation8 + $0x2b0] sm:$0xff]
        %v5251 = vld [vmem:[#allocation8 + $0x2b8] sm:$0xff]
        %v5252 = vld [vmem:[#allocation8 + $0x2c0] sm:$0xff]
        %v5253 = vld [vmem:[#allocation8 + $0x2c8] sm:$0xff]
        %v5254 = vld [vmem:[#allocation8 + $0x2d0] sm:$0xff]
        %v5255 = vld [vmem:[#allocation8 + $0x2d8] sm:$0xff]
        %v5256 = vld [vmem:[#allocation8 + $0x2e0] sm:$0xff]
        %v5257 = vld [vmem:[#allocation8 + $0x2e8] sm:$0xff]
        %v5258 = vld [vmem:[#allocation8 + $0x2f0] sm:$0xff]
        %v5259 = vld [vmem:[#allocation8 + $0x2f8] sm:$0xff]
        %v5260 = vld [vmem:[#allocation8 + $0x300] sm:$0xff]
        %v5261 = vld [vmem:[#allocation8 + $0x308] sm:$0xff]
        %v5262 = vld [vmem:[#allocation8 + $0x310] sm:$0xff]
        %v5263 = vld [vmem:[#allocation8 + $0x318] sm:$0xff]
        %v5264 = vld [vmem:[#allocation8 + $0x320] sm:$0xff]
        %v5265 = vld [vmem:[#allocation8 + $0x328] sm:$0xff]
        %v5266 = vld [vmem:[#allocation8 + $0x330] sm:$0xff]
        %v5267 = vld [vmem:[#allocation8 + $0x338] sm:$0xff]
        %v5268 = vld [vmem:[#allocation8 + $0x340] sm:$0xff]
        %v5269 = vld [vmem:[#allocation8 + $0x348] sm:$0xff]
        %v5270 = vld [vmem:[#allocation8 + $0x350] sm:$0xff]
        %v5271 = vld [vmem:[#allocation8 + $0x358] sm:$0xff]
        %v5272 = vld [vmem:[#allocation8 + $0x360] sm:$0xff]
        %v5273 = vld [vmem:[#allocation8 + $0x368] sm:$0xff]
        %v5274 = vld [vmem:[#allocation8 + $0x370] sm:$0xff]
        %v5275 = vld [vmem:[#allocation8 + $0x378] sm:$0xff]
        %v5276 = vld [vmem:[#allocation8 + $0x380] sm:$0xff]
        %v5277 = vld [vmem:[#allocation8 + $0x388] sm:$0xff]
        %v5278 = vld [vmem:[#allocation8 + $0x390] sm:$0xff]
        %v5279 = vld [vmem:[#allocation8 + $0x398] sm:$0xff]
        %v5280 = vld [vmem:[#allocation8 + $0x3a0] sm:$0xff]
        %v5281 = vld [vmem:[#allocation8 + $0x3a8] sm:$0xff]
        %v5282 = vld [vmem:[#allocation8 + $0x3b0] sm:$0xff]
        %v5283 = vld [vmem:[#allocation8 + $0x3b8] sm:$0xff]
        %v5284 = vld [vmem:[#allocation8 + $0x3c0] sm:$0xff]
        %v5285 = vld [vmem:[#allocation8 + $0x3c8] sm:$0xff]
        %v5286 = vld [vmem:[#allocation8 + $0x3d0] sm:$0xff]
        %v5287 = vld [vmem:[#allocation8 + $0x3d8] sm:$0xff]
        %v5288 = vld [vmem:[#allocation8 + $0x3e0] sm:$0xff]
        %v5289 = vld [vmem:[#allocation8 + $0x3e8] sm:$0xff]
        %v5290 = vld [vmem:[#allocation8 + $0x3f0] sm:$0xff]
        %v5291 = vld [vmem:[#allocation8 + $0x3f8] sm:$0xff]
        %v5292 = vld [vmem:[#allocation8 + $0x400] sm:$0xff]
        %v5293 = vld [vmem:[#allocation8 + $0x408] sm:$0xff]
        %v5294 = vld [vmem:[#allocation8 + $0x410] sm:$0xff]
        %v5295 = vld [vmem:[#allocation8 + $0x418] sm:$0xff]
        %v5296 = vld [vmem:[#allocation8 + $0x420] sm:$0xff]
        %v5297 = vld [vmem:[#allocation8 + $0x428] sm:$0xff]
        %v5298 = vld [vmem:[#allocation8 + $0x430] sm:$0xff]
        %v5299 = vld [vmem:[#allocation8 + $0x438] sm:$0xff]
        %v5300 = vld [vmem:[#allocation8 + $0x440] sm:$0xff]
        %v5301 = vld [vmem:[#allocation8 + $0x448] sm:$0xff]
        %v5302 = vld [vmem:[#allocation8 + $0x450] sm:$0xff]
        %v5303 = vld [vmem:[#allocation8 + $0x458] sm:$0xff]
        %v5304 = vld [vmem:[#allocation8 + $0x460] sm:$0xff]
        %v5305 = vld [vmem:[#allocation8 + $0x468] sm:$0xff]
        %v5306 = vld [vmem:[#allocation8 + $0x470] sm:$0xff]
        %v5307 = vld [vmem:[#allocation8 + $0x478] sm:$0xff]
        %v5308 = vld [vmem:[#allocation8 + $0x480] sm:$0xff]
        %v5309 = vld [vmem:[#allocation8 + $0x488] sm:$0xff]
        %v5310 = vld [vmem:[#allocation8 + $0x490] sm:$0xff]
        %v5311 = vld [vmem:[#allocation8 + $0x498] sm:$0xff]
        %v5312 = vld [vmem:[#allocation8 + $0x4a0] sm:$0xff]
        %v5313 = vld [vmem:[#allocation8 + $0x4a8] sm:$0xff]
        %v5314 = vld [vmem:[#allocation8 + $0x4b0] sm:$0xff]
        %v5315 = vld [vmem:[#allocation8 + $0x4b8] sm:$0xff]
        %v5316 = vld [vmem:[#allocation8 + $0x4c0] sm:$0xff]
        %v5317 = vld [vmem:[#allocation8 + $0x4c8] sm:$0xff]
        %v5318 = vld [vmem:[#allocation8 + $0x4d0] sm:$0xff]
        %v5319 = vld [vmem:[#allocation8 + $0x4d8] sm:$0xff]
        %v5320 = vld [vmem:[#allocation8 + $0x4e0] sm:$0xff]
        %v5321 = vld [vmem:[#allocation8 + $0x4e8] sm:$0xff]
        %v5322 = vld [vmem:[#allocation8 + $0x4f0] sm:$0xff]
        %v5323 = vld [vmem:[#allocation8 + $0x4f8] sm:$0xff]
        %v5324 = vld [vmem:[#allocation8 + $0x500] sm:$0xff]
        %v5325 = vld [vmem:[#allocation8 + $0x508] sm:$0xff]
        %v5326 = vld [vmem:[#allocation8 + $0x510] sm:$0xff]
        %v5327 = vld [vmem:[#allocation8 + $0x518] sm:$0xff]
        %v5328 = vld [vmem:[#allocation8 + $0x520] sm:$0xff]
        %v5329 = vld [vmem:[#allocation8 + $0x528] sm:$0xff]
        %v5330 = vld [vmem:[#allocation8 + $0x530] sm:$0xff]
        %v5331 = vld [vmem:[#allocation8 + $0x538] sm:$0xff]
        %v5332 = vld [vmem:[#allocation8 + $0x540] sm:$0xff]
        %v5333 = vld [vmem:[#allocation8 + $0x548] sm:$0xff]
        %v5334 = vld [vmem:[#allocation8 + $0x550] sm:$0xff]
        %v5335 = vld [vmem:[#allocation8 + $0x558] sm:$0xff]
        %v5336 = vld [vmem:[#allocation8 + $0x560] sm:$0xff]
        %v5337 = vld [vmem:[#allocation8 + $0x568] sm:$0xff]
        %v5338 = vld [vmem:[#allocation8 + $0x570] sm:$0xff]
        %v5339 = vld [vmem:[#allocation8 + $0x578] sm:$0xff]
        %v5340 = vld [vmem:[#allocation8 + $0x580] sm:$0xff]
        %v5341 = vld [vmem:[#allocation8 + $0x588] sm:$0xff]
        %v5342 = vld [vmem:[#allocation8 + $0x590] sm:$0xff]
        %v5343 = vld [vmem:[#allocation8 + $0x598] sm:$0xff]
        %v5344 = vld [vmem:[#allocation8 + $0x5a0] sm:$0xff]
        %v5345 = vld [vmem:[#allocation8 + $0x5a8] sm:$0xff]
        %v5346 = vld [vmem:[#allocation8 + $0x5b0] sm:$0xff]
        %v5347 = vld [vmem:[#allocation8 + $0x5b8] sm:$0xff]
        %v5348 = vld [vmem:[#allocation8 + $0x5c0] sm:$0xff]
        %v5349 = vld [vmem:[#allocation8 + $0x5c8] sm:$0xff]
        %v5350 = vld [vmem:[#allocation8 + $0x5d0] sm:$0xff]
        %v5351 = vld [vmem:[#allocation8 + $0x5d8] sm:$0xff]
        %v5352 = vld [vmem:[#allocation8 + $0x5e0] sm:$0xff]
        %v5353 = vld [vmem:[#allocation8 + $0x5e8] sm:$0xff]
        %v5354 = vld [vmem:[#allocation8 + $0x5f0] sm:$0xff]
        %v5355 = vld [vmem:[#allocation8 + $0x5f8] sm:$0xff]
        %v5356 = vld [vmem:[#allocation8 + $0x600] sm:$0xff]
        %v5357 = vld [vmem:[#allocation8 + $0x608] sm:$0xff]
        %v5358 = vld [vmem:[#allocation8 + $0x610] sm:$0xff]
        %v5359 = vld [vmem:[#allocation8 + $0x618] sm:$0xff]
        %v5360 = vld [vmem:[#allocation8 + $0x620] sm:$0xff]
        %v5361 = vld [vmem:[#allocation8 + $0x628] sm:$0xff]
        %v5362 = vld [vmem:[#allocation8 + $0x630] sm:$0xff]
        %v5363 = vld [vmem:[#allocation8 + $0x638] sm:$0xff]
        %v5364 = vld [vmem:[#allocation8 + $0x640] sm:$0xff]
        %v5365 = vld [vmem:[#allocation8 + $0x648] sm:$0xff]
        %v5366 = vld [vmem:[#allocation8 + $0x650] sm:$0xff]
        %v5367 = vld [vmem:[#allocation8 + $0x658] sm:$0xff]
        %v5368 = vld [vmem:[#allocation8 + $0x660] sm:$0xff]
        %v5369 = vld [vmem:[#allocation8 + $0x668] sm:$0xff]
        %v5370 = vld [vmem:[#allocation8 + $0x670] sm:$0xff]
        %v5371 = vld [vmem:[#allocation8 + $0x678] sm:$0xff]
        %v5372 = vld [vmem:[#allocation8 + $0x680] sm:$0xff]
        %v5373 = vld [vmem:[#allocation8 + $0x688] sm:$0xff]
        %v5374 = vld [vmem:[#allocation8 + $0x690] sm:$0xff]
        %v5375 = vld [vmem:[#allocation8 + $0x698] sm:$0xff]
        %v5376 = vld [vmem:[#allocation8 + $0x6a0] sm:$0xff]
        %v5377 = vld [vmem:[#allocation8 + $0x6a8] sm:$0xff]
        %v5378 = vld [vmem:[#allocation8 + $0x6b0] sm:$0xff]
        %v5379 = vld [vmem:[#allocation8 + $0x6b8] sm:$0xff]
        %v5380 = vld [vmem:[#allocation8 + $0x6c0] sm:$0xff]
        %v5381 = vld [vmem:[#allocation8 + $0x6c8] sm:$0xff]
        %v5382 = vld [vmem:[#allocation8 + $0x6d0] sm:$0xff]
        %v5383 = vld [vmem:[#allocation8 + $0x6d8] sm:$0xff]
        %v5384 = vld [vmem:[#allocation8 + $0x6e0] sm:$0xff]
        %v5385 = vld [vmem:[#allocation8 + $0x6e8] sm:$0xff]
        %v5386 = vld [vmem:[#allocation8 + $0x6f0] sm:$0xff]
        %v5387 = vld [vmem:[#allocation8 + $0x6f8] sm:$0xff]
        %v5388 = vld [vmem:[#allocation8 + $0x700] sm:$0xff]
        %v5389 = vld [vmem:[#allocation8 + $0x708] sm:$0xff]
        %v5390 = vld [vmem:[#allocation8 + $0x710] sm:$0xff]
        %v5391 = vld [vmem:[#allocation8 + $0x718] sm:$0xff]
        %v5392 = vld [vmem:[#allocation8 + $0x720] sm:$0xff]
        %v5393 = vld [vmem:[#allocation8 + $0x728] sm:$0xff]
        %v5394 = vld [vmem:[#allocation8 + $0x730] sm:$0xff]
        %v5395 = vld [vmem:[#allocation8 + $0x738] sm:$0xff]
        %v5396 = vld [vmem:[#allocation8 + $0x740] sm:$0xff]
        %v5397 = vld [vmem:[#allocation8 + $0x748] sm:$0xff]
        %v5398 = vld [vmem:[#allocation8 + $0x750] sm:$0xff]
        %v5399 = vld [vmem:[#allocation8 + $0x758] sm:$0xff]
        %v5400 = vld [vmem:[#allocation8 + $0x760] sm:$0xff]
        %v5401 = vld [vmem:[#allocation8 + $0x768] sm:$0xff]
        %v5402 = vld [vmem:[#allocation8 + $0x770] sm:$0xff]
        %v5403 = vld [vmem:[#allocation8 + $0x778] sm:$0xff]
        %v5404 = vld [vmem:[#allocation8 + $0x780] sm:$0xff]
        %v5405 = vld [vmem:[#allocation8 + $0x788] sm:$0xff]
        %v5406 = vld [vmem:[#allocation8 + $0x790] sm:$0xff]
        %v5407 = vld [vmem:[#allocation8 + $0x798] sm:$0xff]
        %v5408 = vld [vmem:[#allocation8 + $0x7a0] sm:$0xff]
        %v5409 = vld [vmem:[#allocation8 + $0x7a8] sm:$0xff]
        %v5410 = vld [vmem:[#allocation8 + $0x7b0] sm:$0xff]
        %v5411 = vld [vmem:[#allocation8 + $0x7b8] sm:$0xff]
        %v5412 = vld [vmem:[#allocation8 + $0x7c0] sm:$0xff]
        %v5413 = vld [vmem:[#allocation8 + $0x7c8] sm:$0xff]
        %v5414 = vld [vmem:[#allocation8 + $0x7d0] sm:$0xff]
        %v5415 = vld [vmem:[#allocation8 + $0x7d8] sm:$0xff]
        %v5416 = vld [vmem:[#allocation8 + $0x7e0] sm:$0xff]
        %v5417 = vld [vmem:[#allocation8 + $0x7e8] sm:$0xff]
        %v5418 = vld [vmem:[#allocation8 + $0x7f0] sm:$0xff]
        %v5419 = vld [vmem:[#allocation8 + $0x7f8] sm:$0xff]
        %v5420 = vld [vmem:[#allocation8 + $0x800] sm:$0xff]
        %v5421 = vld [vmem:[#allocation8 + $0x808] sm:$0xff]
        %v5422 = vld [vmem:[#allocation8 + $0x810] sm:$0xff]
        %v5423 = vld [vmem:[#allocation8 + $0x818] sm:$0xff]
        %v5424 = vld [vmem:[#allocation8 + $0x820] sm:$0xff]
        %v5425 = vld [vmem:[#allocation8 + $0x828] sm:$0xff]
        %v5426 = vld [vmem:[#allocation8 + $0x830] sm:$0xff]
        %v5427 = vld [vmem:[#allocation8 + $0x838] sm:$0xff]
        %v5428 = vld [vmem:[#allocation8 + $0x840] sm:$0xff]
        %v5429 = vld [vmem:[#allocation8 + $0x848] sm:$0xff]
        %v5430 = vld [vmem:[#allocation8 + $0x850] sm:$0xff]
        %v5431 = vld [vmem:[#allocation8 + $0x858] sm:$0xff]
        %v5432 = vld [vmem:[#allocation8 + $0x860] sm:$0xff]
        %v5433 = vld [vmem:[#allocation8 + $0x868] sm:$0xff]
        %v5434 = vld [vmem:[#allocation8 + $0x870] sm:$0xff]
        %v5435 = vld [vmem:[#allocation8 + $0x878] sm:$0xff]
        %v5436 = vld [vmem:[#allocation8 + $0x880] sm:$0xff]
        %v5437 = vld [vmem:[#allocation8 + $0x888] sm:$0xff]
        %v5438 = vld [vmem:[#allocation8 + $0x890] sm:$0xff]
        %v5439 = vld [vmem:[#allocation8 + $0x898] sm:$0xff]
        %v5440 = vld [vmem:[#allocation8 + $0x8a0] sm:$0xff]
        %v5441 = vld [vmem:[#allocation8 + $0x8a8] sm:$0xff]
        %v5442 = vld [vmem:[#allocation8 + $0x8b0] sm:$0xff]
        %v5443 = vld [vmem:[#allocation8 + $0x8b8] sm:$0xff]
        %v5444 = vld [vmem:[#allocation8 + $0x8c0] sm:$0xff]
        %v5445 = vld [vmem:[#allocation8 + $0x8c8] sm:$0xff]
        %v5446 = vld [vmem:[#allocation8 + $0x8d0] sm:$0xff]
        %v5447 = vld [vmem:[#allocation8 + $0x8d8] sm:$0xff]
        %v5448 = vld [vmem:[#allocation8 + $0x8e0] sm:$0xff]
        %v5449 = vld [vmem:[#allocation8 + $0x8e8] sm:$0xff]
        %v5450 = vld [vmem:[#allocation8 + $0x8f0] sm:$0xff]
        %v5451 = vld [vmem:[#allocation8 + $0x8f8] sm:$0xff]
        %v5454 = vperm.slane %v355, 0
        %v5455 = vperm.slane %v355, 1
        %v5456 = vperm.slane %v355, 2
        %v5457 = vperm.slane %v355, 3
        %v5458 = vperm.slane %v355, 4
        %v5459 = vperm.slane %v355, 5
        %v5460 = vperm.slane %v355, 6
        %v5461 = vperm.slane %v355, 7
        %v5462 = vperm.slane %v357, 0
        %v5463 = vperm.slane %v357, 1
        %v5464 = vperm.slane %v357, 2
        %v5465 = vperm.slane %v357, 3
        %v5766 = vunpack.c.l.b16 %v5164
        %v5767 = vunpack.c.h.b16 %v5164
        %v5768 = vunpack.c.l.b16 %v5165
        %v5769 = vunpack.c.h.b16 %v5165
        %v5770 = vunpack.c.l.b16 %v5166
        %v5771 = vunpack.c.h.b16 %v5166
        %v5772 = vunpack.c.l.b16 %v5167
        %v5773 = vunpack.c.h.b16 %v5167
        %v5774 = vunpack.c.l.b16 %v5168
        %v5775 = vunpack.c.h.b16 %v5168
        %v5776 = vunpack.c.l.b16 %v5169
        %v5777 = vunpack.c.h.b16 %v5169
        %v5778 = vunpack.c.l.b16 %v5170
        %v5779 = vunpack.c.h.b16 %v5170
        %v5780 = vunpack.c.l.b16 %v5171
        %v5781 = vunpack.c.h.b16 %v5171
        %v5782 = vunpack.c.l.b16 %v5172
        %v5783 = vunpack.c.h.b16 %v5172
        %v5784 = vunpack.c.l.b16 %v5173
        %v5785 = vunpack.c.h.b16 %v5173
        %v5786 = vunpack.c.l.b16 %v5174
        %v5787 = vunpack.c.h.b16 %v5174
        %v5788 = vunpack.c.l.b16 %v5175
        %v5789 = vunpack.c.h.b16 %v5175
        %v5790 = vunpack.c.l.b16 %v5176
        %v5791 = vunpack.c.h.b16 %v5176
        %v5792 = vunpack.c.l.b16 %v5177
        %v5793 = vunpack.c.h.b16 %v5177
        %v5794 = vunpack.c.l.b16 %v5178
        %v5795 = vunpack.c.h.b16 %v5178
        %v5796 = vunpack.c.l.b16 %v5179
        %v5797 = vunpack.c.h.b16 %v5179
        %v5798 = vunpack.c.l.b16 %v5180
        %v5799 = vunpack.c.h.b16 %v5180
        %v5800 = vunpack.c.l.b16 %v5181
        %v5801 = vunpack.c.h.b16 %v5181
        %v5802 = vunpack.c.l.b16 %v5182
        %v5803 = vunpack.c.h.b16 %v5182
        %v5804 = vunpack.c.l.b16 %v5183
        %v5805 = vunpack.c.h.b16 %v5183
        %v5806 = vunpack.c.l.b16 %v5184
        %v5807 = vunpack.c.h.b16 %v5184
        %v5808 = vunpack.c.l.b16 %v5185
        %v5809 = vunpack.c.h.b16 %v5185
        %v5810 = vunpack.c.l.b16 %v5186
        %v5811 = vunpack.c.h.b16 %v5186
        %v5812 = vunpack.c.l.b16 %v5187
        %v5813 = vunpack.c.h.b16 %v5187
        %v5814 = vunpack.c.l.b16 %v5188
        %v5815 = vunpack.c.h.b16 %v5188
        %v5816 = vunpack.c.l.b16 %v5189
        %v5817 = vunpack.c.h.b16 %v5189
        %v5818 = vunpack.c.l.b16 %v5190
        %v5819 = vunpack.c.h.b16 %v5190
        %v5820 = vunpack.c.l.b16 %v5191
        %v5821 = vunpack.c.h.b16 %v5191
        %v5822 = vunpack.c.l.b16 %v5192
        %v5823 = vunpack.c.h.b16 %v5192
        %v5824 = vunpack.c.l.b16 %v5193
        %v5825 = vunpack.c.h.b16 %v5193
        %v5826 = vunpack.c.l.b16 %v5194
        %v5827 = vunpack.c.h.b16 %v5194
        %v5828 = vunpack.c.l.b16 %v5195
        %v5829 = vunpack.c.h.b16 %v5195
        %v5830 = vunpack.c.l.b16 %v5196
        %v5831 = vunpack.c.h.b16 %v5196
        %v5832 = vunpack.c.l.b16 %v5197
        %v5833 = vunpack.c.h.b16 %v5197
        %v5834 = vunpack.c.l.b16 %v5198
        %v5835 = vunpack.c.h.b16 %v5198
        %v5836 = vunpack.c.l.b16 %v5199
        %v5837 = vunpack.c.h.b16 %v5199
        %v5838 = vunpack.c.l.b16 %v5200
        %v5839 = vunpack.c.h.b16 %v5200
        %v5840 = vunpack.c.l.b16 %v5201
        %v5841 = vunpack.c.h.b16 %v5201
        %v5842 = vunpack.c.l.b16 %v5202
        %v5843 = vunpack.c.h.b16 %v5202
        %v5844 = vunpack.c.l.b16 %v5203
        %v5845 = vunpack.c.h.b16 %v5203
        %v5846 = vunpack.c.l.b16 %v5204
        %v5847 = vunpack.c.h.b16 %v5204
        %v5848 = vunpack.c.l.b16 %v5205
        %v5849 = vunpack.c.h.b16 %v5205
        %v5850 = vunpack.c.l.b16 %v5206
        %v5851 = vunpack.c.h.b16 %v5206
        %v5852 = vunpack.c.l.b16 %v5207
        %v5853 = vunpack.c.h.b16 %v5207
        %v5854 = vunpack.c.l.b16 %v5208
        %v5855 = vunpack.c.h.b16 %v5208
        %v5856 = vunpack.c.l.b16 %v5209
        %v5857 = vunpack.c.h.b16 %v5209
        %v5858 = vunpack.c.l.b16 %v5210
        %v5859 = vunpack.c.h.b16 %v5210
        %v5860 = vunpack.c.l.b16 %v5211
        %v5861 = vunpack.c.h.b16 %v5211
        %v5862 = vunpack.c.l.b16 %v5212
        %v5863 = vunpack.c.h.b16 %v5212
        %v5864 = vunpack.c.l.b16 %v5213
        %v5865 = vunpack.c.h.b16 %v5213
        %v5866 = vunpack.c.l.b16 %v5214
        %v5867 = vunpack.c.h.b16 %v5214
        %v5868 = vunpack.c.l.b16 %v5215
        %v5869 = vunpack.c.h.b16 %v5215
        %v5870 = vunpack.c.l.b16 %v5216
        %v5871 = vunpack.c.h.b16 %v5216
        %v5872 = vunpack.c.l.b16 %v5217
        %v5873 = vunpack.c.h.b16 %v5217
        %v5874 = vunpack.c.l.b16 %v5218
        %v5875 = vunpack.c.h.b16 %v5218
        %v5876 = vunpack.c.l.b16 %v5219
        %v5877 = vunpack.c.h.b16 %v5219
        %v5878 = vunpack.c.l.b16 %v5220
        %v5879 = vunpack.c.h.b16 %v5220
        %v5880 = vunpack.c.l.b16 %v5221
        %v5881 = vunpack.c.h.b16 %v5221
        %v5882 = vunpack.c.l.b16 %v5222
        %v5883 = vunpack.c.h.b16 %v5222
        %v5884 = vunpack.c.l.b16 %v5223
        %v5885 = vunpack.c.h.b16 %v5223
        %v5886 = vunpack.c.l.b16 %v5224
        %v5887 = vunpack.c.h.b16 %v5224
        %v5888 = vunpack.c.l.b16 %v5225
        %v5889 = vunpack.c.h.b16 %v5225
        %v5890 = vunpack.c.l.b16 %v5226
        %v5891 = vunpack.c.h.b16 %v5226
        %v5892 = vunpack.c.l.b16 %v5227
        %v5893 = vunpack.c.h.b16 %v5227
        %v5894 = vunpack.c.l.b16 %v5228
        %v5895 = vunpack.c.h.b16 %v5228
        %v5896 = vunpack.c.l.b16 %v5229
        %v5897 = vunpack.c.h.b16 %v5229
        %v5898 = vunpack.c.l.b16 %v5230
        %v5899 = vunpack.c.h.b16 %v5230
        %v5900 = vunpack.c.l.b16 %v5231
        %v5901 = vunpack.c.h.b16 %v5231
        %v5902 = vunpack.c.l.b16 %v5232
        %v5903 = vunpack.c.h.b16 %v5232
        %v5904 = vunpack.c.l.b16 %v5233
        %v5905 = vunpack.c.h.b16 %v5233
        %v5906 = vunpack.c.l.b16 %v5234
        %v5907 = vunpack.c.h.b16 %v5234
        %v5908 = vunpack.c.l.b16 %v5235
        %v5909 = vunpack.c.h.b16 %v5235
        %v5910 = vunpack.c.l.b16 %v5236
        %v5911 = vunpack.c.h.b16 %v5236
        %v5912 = vunpack.c.l.b16 %v5237
        %v5913 = vunpack.c.h.b16 %v5237
        %v5914 = vunpack.c.l.b16 %v5238
        %v5915 = vunpack.c.h.b16 %v5238
        %v5916 = vunpack.c.l.b16 %v5239
        %v5917 = vunpack.c.h.b16 %v5239
        %v5918 = vunpack.c.l.b16 %v5240
        %v5919 = vunpack.c.h.b16 %v5240
        %v5920 = vunpack.c.l.b16 %v5241
        %v5921 = vunpack.c.h.b16 %v5241
        %v5922 = vunpack.c.l.b16 %v5242
        %v5923 = vunpack.c.h.b16 %v5242
        %v5924 = vunpack.c.l.b16 %v5243
        %v5925 = vunpack.c.h.b16 %v5243
        %v5926 = vunpack.c.l.b16 %v5244
        %v5927 = vunpack.c.h.b16 %v5244
        %v5928 = vunpack.c.l.b16 %v5245
        %v5929 = vunpack.c.h.b16 %v5245
        %v5930 = vunpack.c.l.b16 %v5246
        %v5931 = vunpack.c.h.b16 %v5246
        %v5932 = vunpack.c.l.b16 %v5247
        %v5933 = vunpack.c.h.b16 %v5247
        %v5934 = vunpack.c.l.b16 %v5248
        %v5935 = vunpack.c.h.b16 %v5248
        %v5936 = vunpack.c.l.b16 %v5249
        %v5937 = vunpack.c.h.b16 %v5249
        %v5938 = vunpack.c.l.b16 %v5250
        %v5939 = vunpack.c.h.b16 %v5250
        %v5940 = vunpack.c.l.b16 %v5251
        %v5941 = vunpack.c.h.b16 %v5251
        %v5942 = vunpack.c.l.b16 %v5252
        %v5943 = vunpack.c.h.b16 %v5252
        %v5944 = vunpack.c.l.b16 %v5253
        %v5945 = vunpack.c.h.b16 %v5253
        %v5946 = vunpack.c.l.b16 %v5254
        %v5947 = vunpack.c.h.b16 %v5254
        %v5948 = vunpack.c.l.b16 %v5255
        %v5949 = vunpack.c.h.b16 %v5255
        %v5950 = vunpack.c.l.b16 %v5256
        %v5951 = vunpack.c.h.b16 %v5256
        %v5952 = vunpack.c.l.b16 %v5257
        %v5953 = vunpack.c.h.b16 %v5257
        %v5954 = vunpack.c.l.b16 %v5258
        %v5955 = vunpack.c.h.b16 %v5258
        %v5956 = vunpack.c.l.b16 %v5259
        %v5957 = vunpack.c.h.b16 %v5259
        %v5958 = vunpack.c.l.b16 %v5260
        %v5959 = vunpack.c.h.b16 %v5260
        %v5960 = vunpack.c.l.b16 %v5261
        %v5961 = vunpack.c.h.b16 %v5261
        %v5962 = vunpack.c.l.b16 %v5262
        %v5963 = vunpack.c.h.b16 %v5262
        %v5964 = vunpack.c.l.b16 %v5263
        %v5965 = vunpack.c.h.b16 %v5263
        %v5966 = vunpack.c.l.b16 %v5264
        %v5967 = vunpack.c.h.b16 %v5264
        %v5968 = vunpack.c.l.b16 %v5265
        %v5969 = vunpack.c.h.b16 %v5265
        %v5970 = vunpack.c.l.b16 %v5266
        %v5971 = vunpack.c.h.b16 %v5266
        %v5972 = vunpack.c.l.b16 %v5267
        %v5973 = vunpack.c.h.b16 %v5267
        %v5974 = vunpack.c.l.b16 %v5268
        %v5975 = vunpack.c.h.b16 %v5268
        %v5976 = vunpack.c.l.b16 %v5269
        %v5977 = vunpack.c.h.b16 %v5269
        %v5978 = vunpack.c.l.b16 %v5270
        %v5979 = vunpack.c.h.b16 %v5270
        %v5980 = vunpack.c.l.b16 %v5271
        %v5981 = vunpack.c.h.b16 %v5271
        %v5982 = vunpack.c.l.b16 %v5272
        %v5983 = vunpack.c.h.b16 %v5272
        %v5984 = vunpack.c.l.b16 %v5273
        %v5985 = vunpack.c.h.b16 %v5273
        %v5986 = vunpack.c.l.b16 %v5274
        %v5987 = vunpack.c.h.b16 %v5274
        %v5988 = vunpack.c.l.b16 %v5275
        %v5989 = vunpack.c.h.b16 %v5275
        %v5990 = vunpack.c.l.b16 %v5276
        %v5991 = vunpack.c.h.b16 %v5276
        %v5992 = vunpack.c.l.b16 %v5277
        %v5993 = vunpack.c.h.b16 %v5277
        %v5994 = vunpack.c.l.b16 %v5278
        %v5995 = vunpack.c.h.b16 %v5278
        %v5996 = vunpack.c.l.b16 %v5279
        %v5997 = vunpack.c.h.b16 %v5279
        %v5998 = vunpack.c.l.b16 %v5280
        %v5999 = vunpack.c.h.b16 %v5280
        %v6000 = vunpack.c.l.b16 %v5281
        %v6001 = vunpack.c.h.b16 %v5281
        %v6002 = vunpack.c.l.b16 %v5282
        %v6003 = vunpack.c.h.b16 %v5282
        %v6004 = vunpack.c.l.b16 %v5283
        %v6005 = vunpack.c.h.b16 %v5283
        %v6006 = vunpack.c.l.b16 %v5284
        %v6007 = vunpack.c.h.b16 %v5284
        %v6008 = vunpack.c.l.b16 %v5285
        %v6009 = vunpack.c.h.b16 %v5285
        %v6010 = vunpack.c.l.b16 %v5286
        %v6011 = vunpack.c.h.b16 %v5286
        %v6012 = vunpack.c.l.b16 %v5287
        %v6013 = vunpack.c.h.b16 %v5287
        %v6014 = vunpack.c.l.b16 %v5288
        %v6015 = vunpack.c.h.b16 %v5288
        %v6016 = vunpack.c.l.b16 %v5289
        %v6017 = vunpack.c.h.b16 %v5289
        %v6018 = vunpack.c.l.b16 %v5290
        %v6019 = vunpack.c.h.b16 %v5290
        %v6020 = vunpack.c.l.b16 %v5291
        %v6021 = vunpack.c.h.b16 %v5291
        %v6022 = vunpack.c.l.b16 %v5292
        %v6023 = vunpack.c.h.b16 %v5292
        %v6024 = vunpack.c.l.b16 %v5293
        %v6025 = vunpack.c.h.b16 %v5293
        %v6026 = vunpack.c.l.b16 %v5294
        %v6027 = vunpack.c.h.b16 %v5294
        %v6028 = vunpack.c.l.b16 %v5295
        %v6029 = vunpack.c.h.b16 %v5295
        %v6030 = vunpack.c.l.b16 %v5296
        %v6031 = vunpack.c.h.b16 %v5296
        %v6032 = vunpack.c.l.b16 %v5297
        %v6033 = vunpack.c.h.b16 %v5297
        %v6034 = vunpack.c.l.b16 %v5298
        %v6035 = vunpack.c.h.b16 %v5298
        %v6036 = vunpack.c.l.b16 %v5299
        %v6037 = vunpack.c.h.b16 %v5299
        %v6038 = vunpack.c.l.b16 %v5300
        %v6039 = vunpack.c.h.b16 %v5300
        %v6040 = vunpack.c.l.b16 %v5301
        %v6041 = vunpack.c.h.b16 %v5301
        %v6042 = vunpack.c.l.b16 %v5302
        %v6043 = vunpack.c.h.b16 %v5302
        %v6044 = vunpack.c.l.b16 %v5303
        %v6045 = vunpack.c.h.b16 %v5303
        %v6046 = vunpack.c.l.b16 %v5304
        %v6047 = vunpack.c.h.b16 %v5304
        %v6048 = vunpack.c.l.b16 %v5305
        %v6049 = vunpack.c.h.b16 %v5305
        %v6050 = vunpack.c.l.b16 %v5306
        %v6051 = vunpack.c.h.b16 %v5306
        %v6052 = vunpack.c.l.b16 %v5307
        %v6053 = vunpack.c.h.b16 %v5307
        %v6054 = vunpack.c.l.b16 %v5308
        %v6055 = vunpack.c.h.b16 %v5308
        %v6056 = vunpack.c.l.b16 %v5309
        %v6057 = vunpack.c.h.b16 %v5309
        %v6058 = vunpack.c.l.b16 %v5310
        %v6059 = vunpack.c.h.b16 %v5310
        %v6060 = vunpack.c.l.b16 %v5311
        %v6061 = vunpack.c.h.b16 %v5311
        %v6062 = vunpack.c.l.b16 %v5312
        %v6063 = vunpack.c.h.b16 %v5312
        %v6064 = vunpack.c.l.b16 %v5313
        %v6065 = vunpack.c.h.b16 %v5313
        %v6066 = vunpack.c.l.b16 %v5314
        %v6067 = vunpack.c.h.b16 %v5314
        %v6068 = vunpack.c.l.b16 %v5315
        %v6069 = vunpack.c.h.b16 %v5315
        %v6070 = vunpack.c.l.b16 %v5316
        %v6071 = vunpack.c.h.b16 %v5316
        %v6072 = vunpack.c.l.b16 %v5317
        %v6073 = vunpack.c.h.b16 %v5317
        %v6074 = vunpack.c.l.b16 %v5318
        %v6075 = vunpack.c.h.b16 %v5318
        %v6076 = vunpack.c.l.b16 %v5319
        %v6077 = vunpack.c.h.b16 %v5319
        %v6078 = vunpack.c.l.b16 %v5320
        %v6079 = vunpack.c.h.b16 %v5320
        %v6080 = vunpack.c.l.b16 %v5321
        %v6081 = vunpack.c.h.b16 %v5321
        %v6082 = vunpack.c.l.b16 %v5322
        %v6083 = vunpack.c.h.b16 %v5322
        %v6084 = vunpack.c.l.b16 %v5323
        %v6085 = vunpack.c.h.b16 %v5323
        %v6086 = vunpack.c.l.b16 %v5324
        %v6087 = vunpack.c.h.b16 %v5324
        %v6088 = vunpack.c.l.b16 %v5325
        %v6089 = vunpack.c.h.b16 %v5325
        %v6090 = vunpack.c.l.b16 %v5326
        %v6091 = vunpack.c.h.b16 %v5326
        %v6092 = vunpack.c.l.b16 %v5327
        %v6093 = vunpack.c.h.b16 %v5327
        %v6094 = vunpack.c.l.b16 %v5328
        %v6095 = vunpack.c.h.b16 %v5328
        %v6096 = vunpack.c.l.b16 %v5329
        %v6097 = vunpack.c.h.b16 %v5329
        %v6098 = vunpack.c.l.b16 %v5330
        %v6099 = vunpack.c.h.b16 %v5330
        %v6100 = vunpack.c.l.b16 %v5331
        %v6101 = vunpack.c.h.b16 %v5331
        %v6102 = vunpack.c.l.b16 %v5332
        %v6103 = vunpack.c.h.b16 %v5332
        %v6104 = vunpack.c.l.b16 %v5333
        %v6105 = vunpack.c.h.b16 %v5333
        %v6106 = vunpack.c.l.b16 %v5334
        %v6107 = vunpack.c.h.b16 %v5334
        %v6108 = vunpack.c.l.b16 %v5335
        %v6109 = vunpack.c.h.b16 %v5335
        %v6110 = vunpack.c.l.b16 %v5336
        %v6111 = vunpack.c.h.b16 %v5336
        %v6112 = vunpack.c.l.b16 %v5337
        %v6113 = vunpack.c.h.b16 %v5337
        %v6114 = vunpack.c.l.b16 %v5338
        %v6115 = vunpack.c.h.b16 %v5338
        %v6116 = vunpack.c.l.b16 %v5339
        %v6117 = vunpack.c.h.b16 %v5339
        %v6118 = vunpack.c.l.b16 %v5340
        %v6119 = vunpack.c.h.b16 %v5340
        %v6120 = vunpack.c.l.b16 %v5341
        %v6121 = vunpack.c.h.b16 %v5341
        %v6122 = vunpack.c.l.b16 %v5342
        %v6123 = vunpack.c.h.b16 %v5342
        %v6124 = vunpack.c.l.b16 %v5343
        %v6125 = vunpack.c.h.b16 %v5343
        %v6126 = vunpack.c.l.b16 %v5344
        %v6127 = vunpack.c.h.b16 %v5344
        %v6128 = vunpack.c.l.b16 %v5345
        %v6129 = vunpack.c.h.b16 %v5345
        %v6130 = vunpack.c.l.b16 %v5346
        %v6131 = vunpack.c.h.b16 %v5346
        %v6132 = vunpack.c.l.b16 %v5347
        %v6133 = vunpack.c.h.b16 %v5347
        %v6134 = vunpack.c.l.b16 %v5348
        %v6135 = vunpack.c.h.b16 %v5348
        %v6136 = vunpack.c.l.b16 %v5349
        %v6137 = vunpack.c.h.b16 %v5349
        %v6138 = vunpack.c.l.b16 %v5350
        %v6139 = vunpack.c.h.b16 %v5350
        %v6140 = vunpack.c.l.b16 %v5351
        %v6141 = vunpack.c.h.b16 %v5351
        %v6142 = vunpack.c.l.b16 %v5352
        %v6143 = vunpack.c.h.b16 %v5352
        %v6144 = vunpack.c.l.b16 %v5353
        %v6145 = vunpack.c.h.b16 %v5353
        %v6146 = vunpack.c.l.b16 %v5354
        %v6147 = vunpack.c.h.b16 %v5354
        %v6148 = vunpack.c.l.b16 %v5355
        %v6149 = vunpack.c.h.b16 %v5355
        %v6150 = vunpack.c.l.b16 %v5356
        %v6151 = vunpack.c.h.b16 %v5356
        %v6152 = vunpack.c.l.b16 %v5357
        %v6153 = vunpack.c.h.b16 %v5357
        %v6154 = vunpack.c.l.b16 %v5358
        %v6155 = vunpack.c.h.b16 %v5358
        %v6156 = vunpack.c.l.b16 %v5359
        %v6157 = vunpack.c.h.b16 %v5359
        %v6158 = vunpack.c.l.b16 %v5360
        %v6159 = vunpack.c.h.b16 %v5360
        %v6160 = vunpack.c.l.b16 %v5361
        %v6161 = vunpack.c.h.b16 %v5361
        %v6162 = vunpack.c.l.b16 %v5362
        %v6163 = vunpack.c.h.b16 %v5362
        %v6164 = vunpack.c.l.b16 %v5363
        %v6165 = vunpack.c.h.b16 %v5363
        %v6166 = vunpack.c.l.b16 %v5364
        %v6167 = vunpack.c.h.b16 %v5364
        %v6168 = vunpack.c.l.b16 %v5365
        %v6169 = vunpack.c.h.b16 %v5365
        %v6170 = vunpack.c.l.b16 %v5366
        %v6171 = vunpack.c.h.b16 %v5366
        %v6172 = vunpack.c.l.b16 %v5367
        %v6173 = vunpack.c.h.b16 %v5367
        %v6174 = vunpack.c.l.b16 %v5368
        %v6175 = vunpack.c.h.b16 %v5368
        %v6176 = vunpack.c.l.b16 %v5369
        %v6177 = vunpack.c.h.b16 %v5369
        %v6178 = vunpack.c.l.b16 %v5370
        %v6179 = vunpack.c.h.b16 %v5370
        %v6180 = vunpack.c.l.b16 %v5371
        %v6181 = vunpack.c.h.b16 %v5371
        %v6182 = vunpack.c.l.b16 %v5372
        %v6183 = vunpack.c.h.b16 %v5372
        %v6184 = vunpack.c.l.b16 %v5373
        %v6185 = vunpack.c.h.b16 %v5373
        %v6186 = vunpack.c.l.b16 %v5374
        %v6187 = vunpack.c.h.b16 %v5374
        %v6188 = vunpack.c.l.b16 %v5375
        %v6189 = vunpack.c.h.b16 %v5375
        %v6190 = vunpack.c.l.b16 %v5376
        %v6191 = vunpack.c.h.b16 %v5376
        %v6192 = vunpack.c.l.b16 %v5377
        %v6193 = vunpack.c.h.b16 %v5377
        %v6194 = vunpack.c.l.b16 %v5378
        %v6195 = vunpack.c.h.b16 %v5378
        %v6196 = vunpack.c.l.b16 %v5379
        %v6197 = vunpack.c.h.b16 %v5379
        %v6198 = vunpack.c.l.b16 %v5380
        %v6199 = vunpack.c.h.b16 %v5380
        %v6200 = vunpack.c.l.b16 %v5381
        %v6201 = vunpack.c.h.b16 %v5381
        %v6202 = vunpack.c.l.b16 %v5382
        %v6203 = vunpack.c.h.b16 %v5382
        %v6204 = vunpack.c.l.b16 %v5383
        %v6205 = vunpack.c.h.b16 %v5383
        %v6206 = vunpack.c.l.b16 %v5384
        %v6207 = vunpack.c.h.b16 %v5384
        %v6208 = vunpack.c.l.b16 %v5385
        %v6209 = vunpack.c.h.b16 %v5385
        %v6210 = vunpack.c.l.b16 %v5386
        %v6211 = vunpack.c.h.b16 %v5386
        %v6212 = vunpack.c.l.b16 %v5387
        %v6213 = vunpack.c.h.b16 %v5387
        %v6214 = vunpack.c.l.b16 %v5388
        %v6215 = vunpack.c.h.b16 %v5388
        %v6216 = vunpack.c.l.b16 %v5389
        %v6217 = vunpack.c.h.b16 %v5389
        %v6218 = vunpack.c.l.b16 %v5390
        %v6219 = vunpack.c.h.b16 %v5390
        %v6220 = vunpack.c.l.b16 %v5391
        %v6221 = vunpack.c.h.b16 %v5391
        %v6222 = vunpack.c.l.b16 %v5392
        %v6223 = vunpack.c.h.b16 %v5392
        %v6224 = vunpack.c.l.b16 %v5393
        %v6225 = vunpack.c.h.b16 %v5393
        %v6226 = vunpack.c.l.b16 %v5394
        %v6227 = vunpack.c.h.b16 %v5394
        %v6228 = vunpack.c.l.b16 %v5395
        %v6229 = vunpack.c.h.b16 %v5395
        %v6230 = vunpack.c.l.b16 %v5396
        %v6231 = vunpack.c.h.b16 %v5396
        %v6232 = vunpack.c.l.b16 %v5397
        %v6233 = vunpack.c.h.b16 %v5397
        %v6234 = vunpack.c.l.b16 %v5398
        %v6235 = vunpack.c.h.b16 %v5398
        %v6236 = vunpack.c.l.b16 %v5399
        %v6237 = vunpack.c.h.b16 %v5399
        %v6238 = vunpack.c.l.b16 %v5400
        %v6239 = vunpack.c.h.b16 %v5400
        %v6240 = vunpack.c.l.b16 %v5401
        %v6241 = vunpack.c.h.b16 %v5401
        %v6242 = vunpack.c.l.b16 %v5402
        %v6243 = vunpack.c.h.b16 %v5402
        %v6244 = vunpack.c.l.b16 %v5403
        %v6245 = vunpack.c.h.b16 %v5403
        %v6246 = vunpack.c.l.b16 %v5404
        %v6247 = vunpack.c.h.b16 %v5404
        %v6248 = vunpack.c.l.b16 %v5405
        %v6249 = vunpack.c.h.b16 %v5405
        %v6250 = vunpack.c.l.b16 %v5406
        %v6251 = vunpack.c.h.b16 %v5406
        %v6252 = vunpack.c.l.b16 %v5407
        %v6253 = vunpack.c.h.b16 %v5407
        %v6254 = vunpack.c.l.b16 %v5408
        %v6255 = vunpack.c.h.b16 %v5408
        %v6256 = vunpack.c.l.b16 %v5409
        %v6257 = vunpack.c.h.b16 %v5409
        %v6258 = vunpack.c.l.b16 %v5410
        %v6259 = vunpack.c.h.b16 %v5410
        %v6260 = vunpack.c.l.b16 %v5411
        %v6261 = vunpack.c.h.b16 %v5411
        %v6262 = vunpack.c.l.b16 %v5412
        %v6263 = vunpack.c.h.b16 %v5412
        %v6264 = vunpack.c.l.b16 %v5413
        %v6265 = vunpack.c.h.b16 %v5413
        %v6266 = vunpack.c.l.b16 %v5414
        %v6267 = vunpack.c.h.b16 %v5414
        %v6268 = vunpack.c.l.b16 %v5415
        %v6269 = vunpack.c.h.b16 %v5415
        %v6270 = vunpack.c.l.b16 %v5416
        %v6271 = vunpack.c.h.b16 %v5416
        %v6272 = vunpack.c.l.b16 %v5417
        %v6273 = vunpack.c.h.b16 %v5417
        %v6274 = vunpack.c.l.b16 %v5418
        %v6275 = vunpack.c.h.b16 %v5418
        %v6276 = vunpack.c.l.b16 %v5419
        %v6277 = vunpack.c.h.b16 %v5419
        %v6278 = vunpack.c.l.b16 %v5420
        %v6279 = vunpack.c.h.b16 %v5420
        %v6280 = vunpack.c.l.b16 %v5421
        %v6281 = vunpack.c.h.b16 %v5421
        %v6282 = vunpack.c.l.b16 %v5422
        %v6283 = vunpack.c.h.b16 %v5422
        %v6284 = vunpack.c.l.b16 %v5423
        %v6285 = vunpack.c.h.b16 %v5423
        %v6286 = vunpack.c.l.b16 %v5424
        %v6287 = vunpack.c.h.b16 %v5424
        %v6288 = vunpack.c.l.b16 %v5425
        %v6289 = vunpack.c.h.b16 %v5425
        %v6290 = vunpack.c.l.b16 %v5426
        %v6291 = vunpack.c.h.b16 %v5426
        %v6292 = vunpack.c.l.b16 %v5427
        %v6293 = vunpack.c.h.b16 %v5427
        %v6294 = vunpack.c.l.b16 %v5428
        %v6295 = vunpack.c.h.b16 %v5428
        %v6296 = vunpack.c.l.b16 %v5429
        %v6297 = vunpack.c.h.b16 %v5429
        %v6298 = vunpack.c.l.b16 %v5430
        %v6299 = vunpack.c.h.b16 %v5430
        %v6300 = vunpack.c.l.b16 %v5431
        %v6301 = vunpack.c.h.b16 %v5431
        %v6302 = vunpack.c.l.b16 %v5432
        %v6303 = vunpack.c.h.b16 %v5432
        %v6304 = vunpack.c.l.b16 %v5433
        %v6305 = vunpack.c.h.b16 %v5433
        %v6306 = vunpack.c.l.b16 %v5434
        %v6307 = vunpack.c.h.b16 %v5434
        %v6308 = vunpack.c.l.b16 %v5435
        %v6309 = vunpack.c.h.b16 %v5435
        %v6310 = vunpack.c.l.b16 %v5436
        %v6311 = vunpack.c.h.b16 %v5436
        %v6312 = vunpack.c.l.b16 %v5437
        %v6313 = vunpack.c.h.b16 %v5437
        %v6314 = vunpack.c.l.b16 %v5438
        %v6315 = vunpack.c.h.b16 %v5438
        %v6316 = vunpack.c.l.b16 %v5439
        %v6317 = vunpack.c.h.b16 %v5439
        %v6318 = vunpack.c.l.b16 %v5440
        %v6319 = vunpack.c.h.b16 %v5440
        %v6320 = vunpack.c.l.b16 %v5441
        %v6321 = vunpack.c.h.b16 %v5441
        %v6322 = vunpack.c.l.b16 %v5442
        %v6323 = vunpack.c.h.b16 %v5442
        %v6324 = vunpack.c.l.b16 %v5443
        %v6325 = vunpack.c.h.b16 %v5443
        %v6326 = vunpack.c.l.b16 %v5444
        %v6327 = vunpack.c.h.b16 %v5444
        %v6328 = vunpack.c.l.b16 %v5445
        %v6329 = vunpack.c.h.b16 %v5445
        %v6330 = vunpack.c.l.b16 %v5446
        %v6331 = vunpack.c.h.b16 %v5446
        %v6332 = vunpack.c.l.b16 %v5447
        %v6333 = vunpack.c.h.b16 %v5447
        %v6334 = vunpack.c.l.b16 %v5448
        %v6335 = vunpack.c.h.b16 %v5448
        %v6336 = vunpack.c.l.b16 %v5449
        %v6337 = vunpack.c.h.b16 %v5449
        %v6338 = vunpack.c.l.b16 %v5450
        %v6339 = vunpack.c.h.b16 %v5450
        %v6340 = vunpack.c.l.b16 %v5451
        %v6341 = vunpack.c.h.b16 %v5451
        %v6342 = vpack.c.b16 %v5778, %v5766
        %v6343 = vpack.c.b16 %v5779, %v5767
        %v6344 = vpack.c.b16 %v5780, %v5768
        %v6345 = vpack.c.b16 %v5781, %v5769
        %v6346 = vpack.c.b16 %v5782, %v5770
        %v6347 = vpack.c.b16 %v5783, %v5771
        %v6348 = vpack.c.b16 %v5784, %v5772
        %v6349 = vpack.c.b16 %v5785, %v5773
        %v6350 = vpack.c.b16 %v5786, %v5774
        %v6351 = vpack.c.b16 %v5787, %v5775
        %v6352 = vpack.c.b16 %v5788, %v5776
        %v6353 = vpack.c.b16 %v5789, %v5777
        %v6354 = vpack.c.b16 %v5802, %v5790
        %v6355 = vpack.c.b16 %v5803, %v5791
        %v6356 = vpack.c.b16 %v5804, %v5792
        %v6357 = vpack.c.b16 %v5805, %v5793
        %v6358 = vpack.c.b16 %v5806, %v5794
        %v6359 = vpack.c.b16 %v5807, %v5795
        %v6360 = vpack.c.b16 %v5808, %v5796
        %v6361 = vpack.c.b16 %v5809, %v5797
        %v6362 = vpack.c.b16 %v5810, %v5798
        %v6363 = vpack.c.b16 %v5811, %v5799
        %v6364 = vpack.c.b16 %v5812, %v5800
        %v6365 = vpack.c.b16 %v5813, %v5801
        %v6366 = vpack.c.b16 %v5826, %v5814
        %v6367 = vpack.c.b16 %v5827, %v5815
        %v6368 = vpack.c.b16 %v5828, %v5816
        %v6369 = vpack.c.b16 %v5829, %v5817
        %v6370 = vpack.c.b16 %v5830, %v5818
        %v6371 = vpack.c.b16 %v5831, %v5819
        %v6372 = vpack.c.b16 %v5832, %v5820
        %v6373 = vpack.c.b16 %v5833, %v5821
        %v6374 = vpack.c.b16 %v5834, %v5822
        %v6375 = vpack.c.b16 %v5835, %v5823
        %v6376 = vpack.c.b16 %v5836, %v5824
        %v6377 = vpack.c.b16 %v5837, %v5825
        %v6378 = vpack.c.b16 %v5850, %v5838
        %v6379 = vpack.c.b16 %v5851, %v5839
        %v6380 = vpack.c.b16 %v5852, %v5840
        %v6381 = vpack.c.b16 %v5853, %v5841
        %v6382 = vpack.c.b16 %v5854, %v5842
        %v6383 = vpack.c.b16 %v5855, %v5843
        %v6384 = vpack.c.b16 %v5856, %v5844
        %v6385 = vpack.c.b16 %v5857, %v5845
        %v6386 = vpack.c.b16 %v5858, %v5846
        %v6387 = vpack.c.b16 %v5859, %v5847
        %v6388 = vpack.c.b16 %v5860, %v5848
        %v6389 = vpack.c.b16 %v5861, %v5849
        %v6390 = vpack.c.b16 %v5874, %v5862
        %v6391 = vpack.c.b16 %v5875, %v5863
        %v6392 = vpack.c.b16 %v5876, %v5864
        %v6393 = vpack.c.b16 %v5877, %v5865
        %v6394 = vpack.c.b16 %v5878, %v5866
        %v6395 = vpack.c.b16 %v5879, %v5867
        %v6396 = vpack.c.b16 %v5880, %v5868
        %v6397 = vpack.c.b16 %v5881, %v5869
        %v6398 = vpack.c.b16 %v5882, %v5870
        %v6399 = vpack.c.b16 %v5883, %v5871
        %v6400 = vpack.c.b16 %v5884, %v5872
        %v6401 = vpack.c.b16 %v5885, %v5873
        %v6402 = vpack.c.b16 %v5898, %v5886
        %v6403 = vpack.c.b16 %v5899, %v5887
        %v6404 = vpack.c.b16 %v5900, %v5888
        %v6405 = vpack.c.b16 %v5901, %v5889
        %v6406 = vpack.c.b16 %v5902, %v5890
        %v6407 = vpack.c.b16 %v5903, %v5891
        %v6408 = vpack.c.b16 %v5904, %v5892
        %v6409 = vpack.c.b16 %v5905, %v5893
        %v6410 = vpack.c.b16 %v5906, %v5894
        %v6411 = vpack.c.b16 %v5907, %v5895
        %v6412 = vpack.c.b16 %v5908, %v5896
        %v6413 = vpack.c.b16 %v5909, %v5897
        %v6414 = vpack.c.b16 %v5922, %v5910
        %v6415 = vpack.c.b16 %v5923, %v5911
        %v6416 = vpack.c.b16 %v5924, %v5912
        %v6417 = vpack.c.b16 %v5925, %v5913
        %v6418 = vpack.c.b16 %v5926, %v5914
        %v6419 = vpack.c.b16 %v5927, %v5915
        %v6420 = vpack.c.b16 %v5928, %v5916
        %v6421 = vpack.c.b16 %v5929, %v5917
        %v6422 = vpack.c.b16 %v5930, %v5918
        %v6423 = vpack.c.b16 %v5931, %v5919
        %v6424 = vpack.c.b16 %v5932, %v5920
        %v6425 = vpack.c.b16 %v5933, %v5921
        %v6426 = vpack.c.b16 %v5946, %v5934
        %v6427 = vpack.c.b16 %v5947, %v5935
        %v6428 = vpack.c.b16 %v5948, %v5936
        %v6429 = vpack.c.b16 %v5949, %v5937
        %v6430 = vpack.c.b16 %v5950, %v5938
        %v6431 = vpack.c.b16 %v5951, %v5939
        %v6432 = vpack.c.b16 %v5952, %v5940
        %v6433 = vpack.c.b16 %v5953, %v5941
        %v6434 = vpack.c.b16 %v5954, %v5942
        %v6435 = vpack.c.b16 %v5955, %v5943
        %v6436 = vpack.c.b16 %v5956, %v5944
        %v6437 = vpack.c.b16 %v5957, %v5945
        %v6438 = vpack.c.b16 %v5970, %v5958
        %v6439 = vpack.c.b16 %v5971, %v5959
        %v6440 = vpack.c.b16 %v5972, %v5960
        %v6441 = vpack.c.b16 %v5973, %v5961
        %v6442 = vpack.c.b16 %v5974, %v5962
        %v6443 = vpack.c.b16 %v5975, %v5963
        %v6444 = vpack.c.b16 %v5976, %v5964
        %v6445 = vpack.c.b16 %v5977, %v5965
        %v6446 = vpack.c.b16 %v5978, %v5966
        %v6447 = vpack.c.b16 %v5979, %v5967
        %v6448 = vpack.c.b16 %v5980, %v5968
        %v6449 = vpack.c.b16 %v5981, %v5969
        %v6450 = vpack.c.b16 %v5994, %v5982
        %v6451 = vpack.c.b16 %v5995, %v5983
        %v6452 = vpack.c.b16 %v5996, %v5984
        %v6453 = vpack.c.b16 %v5997, %v5985
        %v6454 = vpack.c.b16 %v5998, %v5986
        %v6455 = vpack.c.b16 %v5999, %v5987
        %v6456 = vpack.c.b16 %v6000, %v5988
        %v6457 = vpack.c.b16 %v6001, %v5989
        %v6458 = vpack.c.b16 %v6002, %v5990
        %v6459 = vpack.c.b16 %v6003, %v5991
        %v6460 = vpack.c.b16 %v6004, %v5992
        %v6461 = vpack.c.b16 %v6005, %v5993
        %v6462 = vpack.c.b16 %v6018, %v6006
        %v6463 = vpack.c.b16 %v6019, %v6007
        %v6464 = vpack.c.b16 %v6020, %v6008
        %v6465 = vpack.c.b16 %v6021, %v6009
        %v6466 = vpack.c.b16 %v6022, %v6010
        %v6467 = vpack.c.b16 %v6023, %v6011
        %v6468 = vpack.c.b16 %v6024, %v6012
        %v6469 = vpack.c.b16 %v6025, %v6013
        %v6470 = vpack.c.b16 %v6026, %v6014
        %v6471 = vpack.c.b16 %v6027, %v6015
        %v6472 = vpack.c.b16 %v6028, %v6016
        %v6473 = vpack.c.b16 %v6029, %v6017
        %v6474 = vpack.c.b16 %v6042, %v6030
        %v6475 = vpack.c.b16 %v6043, %v6031
        %v6476 = vpack.c.b16 %v6044, %v6032
        %v6477 = vpack.c.b16 %v6045, %v6033
        %v6478 = vpack.c.b16 %v6046, %v6034
        %v6479 = vpack.c.b16 %v6047, %v6035
        %v6480 = vpack.c.b16 %v6048, %v6036
        %v6481 = vpack.c.b16 %v6049, %v6037
        %v6482 = vpack.c.b16 %v6050, %v6038
        %v6483 = vpack.c.b16 %v6051, %v6039
        %v6484 = vpack.c.b16 %v6052, %v6040
        %v6485 = vpack.c.b16 %v6053, %v6041
        %v6486 = vpack.c.b16 %v6066, %v6054
        %v6487 = vpack.c.b16 %v6067, %v6055
        %v6488 = vpack.c.b16 %v6068, %v6056
        %v6489 = vpack.c.b16 %v6069, %v6057
        %v6490 = vpack.c.b16 %v6070, %v6058
        %v6491 = vpack.c.b16 %v6071, %v6059
        %v6492 = vpack.c.b16 %v6072, %v6060
        %v6493 = vpack.c.b16 %v6073, %v6061
        %v6494 = vpack.c.b16 %v6074, %v6062
        %v6495 = vpack.c.b16 %v6075, %v6063
        %v6496 = vpack.c.b16 %v6076, %v6064
        %v6497 = vpack.c.b16 %v6077, %v6065
        %v6498 = vpack.c.b16 %v6090, %v6078
        %v6499 = vpack.c.b16 %v6091, %v6079
        %v6500 = vpack.c.b16 %v6092, %v6080
        %v6501 = vpack.c.b16 %v6093, %v6081
        %v6502 = vpack.c.b16 %v6094, %v6082
        %v6503 = vpack.c.b16 %v6095, %v6083
        %v6504 = vpack.c.b16 %v6096, %v6084
        %v6505 = vpack.c.b16 %v6097, %v6085
        %v6506 = vpack.c.b16 %v6098, %v6086
        %v6507 = vpack.c.b16 %v6099, %v6087
        %v6508 = vpack.c.b16 %v6100, %v6088
        %v6509 = vpack.c.b16 %v6101, %v6089
        %v6510 = vpack.c.b16 %v6114, %v6102
        %v6511 = vpack.c.b16 %v6115, %v6103
        %v6512 = vpack.c.b16 %v6116, %v6104
        %v6513 = vpack.c.b16 %v6117, %v6105
        %v6514 = vpack.c.b16 %v6118, %v6106
        %v6515 = vpack.c.b16 %v6119, %v6107
        %v6516 = vpack.c.b16 %v6120, %v6108
        %v6517 = vpack.c.b16 %v6121, %v6109
        %v6518 = vpack.c.b16 %v6122, %v6110
        %v6519 = vpack.c.b16 %v6123, %v6111
        %v6520 = vpack.c.b16 %v6124, %v6112
        %v6521 = vpack.c.b16 %v6125, %v6113
        %v6522 = vpack.c.b16 %v6138, %v6126
        %v6523 = vpack.c.b16 %v6139, %v6127
        %v6524 = vpack.c.b16 %v6140, %v6128
        %v6525 = vpack.c.b16 %v6141, %v6129
        %v6526 = vpack.c.b16 %v6142, %v6130
        %v6527 = vpack.c.b16 %v6143, %v6131
        %v6528 = vpack.c.b16 %v6144, %v6132
        %v6529 = vpack.c.b16 %v6145, %v6133
        %v6530 = vpack.c.b16 %v6146, %v6134
        %v6531 = vpack.c.b16 %v6147, %v6135
        %v6532 = vpack.c.b16 %v6148, %v6136
        %v6533 = vpack.c.b16 %v6149, %v6137
        %v6534 = vpack.c.b16 %v6162, %v6150
        %v6535 = vpack.c.b16 %v6163, %v6151
        %v6536 = vpack.c.b16 %v6164, %v6152
        %v6537 = vpack.c.b16 %v6165, %v6153
        %v6538 = vpack.c.b16 %v6166, %v6154
        %v6539 = vpack.c.b16 %v6167, %v6155
        %v6540 = vpack.c.b16 %v6168, %v6156
        %v6541 = vpack.c.b16 %v6169, %v6157
        %v6542 = vpack.c.b16 %v6170, %v6158
        %v6543 = vpack.c.b16 %v6171, %v6159
        %v6544 = vpack.c.b16 %v6172, %v6160
        %v6545 = vpack.c.b16 %v6173, %v6161
        %v6546 = vpack.c.b16 %v6186, %v6174
        %v6547 = vpack.c.b16 %v6187, %v6175
        %v6548 = vpack.c.b16 %v6188, %v6176
        %v6549 = vpack.c.b16 %v6189, %v6177
        %v6550 = vpack.c.b16 %v6190, %v6178
        %v6551 = vpack.c.b16 %v6191, %v6179
        %v6552 = vpack.c.b16 %v6192, %v6180
        %v6553 = vpack.c.b16 %v6193, %v6181
        %v6554 = vpack.c.b16 %v6194, %v6182
        %v6555 = vpack.c.b16 %v6195, %v6183
        %v6556 = vpack.c.b16 %v6196, %v6184
        %v6557 = vpack.c.b16 %v6197, %v6185
        %v6558 = vpack.c.b16 %v6210, %v6198
        %v6559 = vpack.c.b16 %v6211, %v6199
        %v6560 = vpack.c.b16 %v6212, %v6200
        %v6561 = vpack.c.b16 %v6213, %v6201
        %v6562 = vpack.c.b16 %v6214, %v6202
        %v6563 = vpack.c.b16 %v6215, %v6203
        %v6564 = vpack.c.b16 %v6216, %v6204
        %v6565 = vpack.c.b16 %v6217, %v6205
        %v6566 = vpack.c.b16 %v6218, %v6206
        %v6567 = vpack.c.b16 %v6219, %v6207
        %v6568 = vpack.c.b16 %v6220, %v6208
        %v6569 = vpack.c.b16 %v6221, %v6209
        %v6570 = vpack.c.b16 %v6234, %v6222
        %v6571 = vpack.c.b16 %v6235, %v6223
        %v6572 = vpack.c.b16 %v6236, %v6224
        %v6573 = vpack.c.b16 %v6237, %v6225
        %v6574 = vpack.c.b16 %v6238, %v6226
        %v6575 = vpack.c.b16 %v6239, %v6227
        %v6576 = vpack.c.b16 %v6240, %v6228
        %v6577 = vpack.c.b16 %v6241, %v6229
        %v6578 = vpack.c.b16 %v6242, %v6230
        %v6579 = vpack.c.b16 %v6243, %v6231
        %v6580 = vpack.c.b16 %v6244, %v6232
        %v6581 = vpack.c.b16 %v6245, %v6233
        %v6582 = vpack.c.b16 %v6258, %v6246
        %v6583 = vpack.c.b16 %v6259, %v6247
        %v6584 = vpack.c.b16 %v6260, %v6248
        %v6585 = vpack.c.b16 %v6261, %v6249
        %v6586 = vpack.c.b16 %v6262, %v6250
        %v6587 = vpack.c.b16 %v6263, %v6251
        %v6588 = vpack.c.b16 %v6264, %v6252
        %v6589 = vpack.c.b16 %v6265, %v6253
        %v6590 = vpack.c.b16 %v6266, %v6254
        %v6591 = vpack.c.b16 %v6267, %v6255
        %v6592 = vpack.c.b16 %v6268, %v6256
        %v6593 = vpack.c.b16 %v6269, %v6257
        %v6594 = vpack.c.b16 %v6282, %v6270
        %v6595 = vpack.c.b16 %v6283, %v6271
        %v6596 = vpack.c.b16 %v6284, %v6272
        %v6597 = vpack.c.b16 %v6285, %v6273
        %v6598 = vpack.c.b16 %v6286, %v6274
        %v6599 = vpack.c.b16 %v6287, %v6275
        %v6600 = vpack.c.b16 %v6288, %v6276
        %v6601 = vpack.c.b16 %v6289, %v6277
        %v6602 = vpack.c.b16 %v6290, %v6278
        %v6603 = vpack.c.b16 %v6291, %v6279
        %v6604 = vpack.c.b16 %v6292, %v6280
        %v6605 = vpack.c.b16 %v6293, %v6281
        %v6606 = vpack.c.b16 %v6306, %v6294
        %v6607 = vpack.c.b16 %v6307, %v6295
        %v6608 = vpack.c.b16 %v6308, %v6296
        %v6609 = vpack.c.b16 %v6309, %v6297
        %v6610 = vpack.c.b16 %v6310, %v6298
        %v6611 = vpack.c.b16 %v6311, %v6299
        %v6612 = vpack.c.b16 %v6312, %v6300
        %v6613 = vpack.c.b16 %v6313, %v6301
        %v6614 = vpack.c.b16 %v6314, %v6302
        %v6615 = vpack.c.b16 %v6315, %v6303
        %v6616 = vpack.c.b16 %v6316, %v6304
        %v6617 = vpack.c.b16 %v6317, %v6305
        %v6618 = vpack.c.b16 %v6330, %v6318
        %v6619 = vpack.c.b16 %v6331, %v6319
        %v6620 = vpack.c.b16 %v6332, %v6320
        %v6621 = vpack.c.b16 %v6333, %v6321
        %v6622 = vpack.c.b16 %v6334, %v6322
        %v6623 = vpack.c.b16 %v6335, %v6323
        %v6624 = vpack.c.b16 %v6336, %v6324
        %v6625 = vpack.c.b16 %v6337, %v6325
        %v6626 = vpack.c.b16 %v6338, %v6326
        %v6627 = vpack.c.b16 %v6339, %v6327
        %v6628 = vpack.c.b16 %v6340, %v6328
        %v6629 = vpack.c.b16 %v6341, %v6329
        %6918 = vmatpush.bf16.msra.mxu0 %v6426
        %6919 = vmatpush.bf16.msra.mxu0 %v6414
        %6920 = vmatpush.bf16.msra.mxu0 %v6402
        %6921 = vmatpush.bf16.msra.mxu0 %v6390
        %6922 = vmatpush.bf16.msra.mxu0 %v6378
        %6923 = vmatpush.bf16.msra.mxu0 %v6366
        %6924 = vmatpush.bf16.msra.mxu0 %v6354
        %6925 = vmatpush.bf16.msra.mxu0 %v6342
        %6926 = vmatmul.bf16.gmra.mxu0 %v5161
        %v6927 = vpop.f32.mrf.mxu0
        %v6928 = vadd.f32 %v5454, %v6927
        %v6929 = vpop.f32.mrf.mxu0
        %v6930 = vadd.f32 %v5454, %v6929
        %6931 = vdwg.mxu0
        %6932 = vmatpush.bf16.msra.mxu0 %v6522
        %6933 = vmatpush.bf16.msra.mxu0 %v6510
        %6934 = vmatpush.bf16.msra.mxu0 %v6498
        %6935 = vmatpush.bf16.msra.mxu0 %v6486
        %6936 = vmatpush.bf16.msra.mxu0 %v6474
        %6937 = vmatpush.bf16.msra.mxu0 %v6462
        %6938 = vmatpush.bf16.msra.mxu0 %v6450
        %6939 = vmatpush.bf16.msra.mxu0 %v6438
        %6940 = vmatmul.bf16.gmra.mxu0 %v5162
        %v6941 = vpop.f32.mrf.mxu0
        %v6942 = vadd.f32 %v6928, %v6941
        %v6943 = vpop.f32.mrf.mxu0
        %v6944 = vadd.f32 %v6930, %v6943
        %6945 = vdwg.mxu0
        %6946 = vmatpush.bf16.msra.mxu0 %v6618
        %6947 = vmatpush.bf16.msra.mxu0 %v6606
        %6948 = vmatpush.bf16.msra.mxu0 %v6594
        %6949 = vmatpush.bf16.msra.mxu0 %v6582
        %6950 = vmatpush.bf16.msra.mxu0 %v6570
        %6951 = vmatpush.bf16.msra.mxu0 %v6558
        %6952 = vmatpush.bf16.msra.mxu0 %v6546
        %6953 = vmatpush.bf16.msra.mxu0 %v6534
        %6954 = vmatmul.bf16.gmra.mxu0 %v5163
        %v6955 = vpop.f32.mrf.mxu0
        %v6956 = vadd.f32 %v6942, %v6955
        %v6957 = vpop.f32.mrf.mxu0
        %v6958 = vadd.f32 %v6944, %v6957
        %6959 = vdwg.mxu0
        %6960 = vmatpush.bf16.msra.mxu0 %v6427
        %6961 = vmatpush.bf16.msra.mxu0 %v6415
        %6962 = vmatpush.bf16.msra.mxu0 %v6403
        %6963 = vmatpush.bf16.msra.mxu0 %v6391
        %6964 = vmatpush.bf16.msra.mxu0 %v6379
        %6965 = vmatpush.bf16.msra.mxu0 %v6367
        %6966 = vmatpush.bf16.msra.mxu0 %v6355
        %6967 = vmatpush.bf16.msra.mxu0 %v6343
        %6968 = vmatmul.bf16.gmra.mxu0 %v5161
        %v6969 = vpop.f32.mrf.mxu0
        %v6970 = vadd.f32 %v5455, %v6969
        %v6971 = vpop.f32.mrf.mxu0
        %v6972 = vadd.f32 %v5455, %v6971
        %6973 = vdwg.mxu0
        %6974 = vmatpush.bf16.msra.mxu0 %v6523
        %6975 = vmatpush.bf16.msra.mxu0 %v6511
        %6976 = vmatpush.bf16.msra.mxu0 %v6499
        %6977 = vmatpush.bf16.msra.mxu0 %v6487
        %6978 = vmatpush.bf16.msra.mxu0 %v6475
        %6979 = vmatpush.bf16.msra.mxu0 %v6463
        %6980 = vmatpush.bf16.msra.mxu0 %v6451
        %6981 = vmatpush.bf16.msra.mxu0 %v6439
        %6982 = vmatmul.bf16.gmra.mxu0 %v5162
        %v6983 = vpop.f32.mrf.mxu0
        %v6984 = vadd.f32 %v6970, %v6983
        %v6985 = vpop.f32.mrf.mxu0
        %v6986 = vadd.f32 %v6972, %v6985
        %6987 = vdwg.mxu0
        %6988 = vmatpush.bf16.msra.mxu0 %v6619
        %6989 = vmatpush.bf16.msra.mxu0 %v6607
        %6990 = vmatpush.bf16.msra.mxu0 %v6595
        %6991 = vmatpush.bf16.msra.mxu0 %v6583
        %6992 = vmatpush.bf16.msra.mxu0 %v6571
        %6993 = vmatpush.bf16.msra.mxu0 %v6559
        %6994 = vmatpush.bf16.msra.mxu0 %v6547
        %6995 = vmatpush.bf16.msra.mxu0 %v6535
        %6996 = vmatmul.bf16.gmra.mxu0 %v5163
        %v6997 = vpop.f32.mrf.mxu0
        %v6998 = vadd.f32 %v6984, %v6997
        %v6999 = vpop.f32.mrf.mxu0
        %v7000 = vadd.f32 %v6986, %v6999
        %7001 = vdwg.mxu0
        %7002 = vmatpush.bf16.msra.mxu0 %v6428
        %7003 = vmatpush.bf16.msra.mxu0 %v6416
        %7004 = vmatpush.bf16.msra.mxu0 %v6404
        %7005 = vmatpush.bf16.msra.mxu0 %v6392
        %7006 = vmatpush.bf16.msra.mxu0 %v6380
        %7007 = vmatpush.bf16.msra.mxu0 %v6368
        %7008 = vmatpush.bf16.msra.mxu0 %v6356
        %7009 = vmatpush.bf16.msra.mxu0 %v6344
        %7010 = vmatmul.bf16.gmra.mxu0 %v5161
        %v7011 = vpop.f32.mrf.mxu0
        %v7012 = vadd.f32 %v5456, %v7011
        %v7013 = vpop.f32.mrf.mxu0
        %v7014 = vadd.f32 %v5456, %v7013
        %7015 = vdwg.mxu0
        %7016 = vmatpush.bf16.msra.mxu0 %v6524
        %7017 = vmatpush.bf16.msra.mxu0 %v6512
        %7018 = vmatpush.bf16.msra.mxu0 %v6500
        %7019 = vmatpush.bf16.msra.mxu0 %v6488
        %7020 = vmatpush.bf16.msra.mxu0 %v6476
        %7021 = vmatpush.bf16.msra.mxu0 %v6464
        %7022 = vmatpush.bf16.msra.mxu0 %v6452
        %7023 = vmatpush.bf16.msra.mxu0 %v6440
        %7024 = vmatmul.bf16.gmra.mxu0 %v5162
        %v7025 = vpop.f32.mrf.mxu0
        %v7026 = vadd.f32 %v7012, %v7025
        %v7027 = vpop.f32.mrf.mxu0
        %v7028 = vadd.f32 %v7014, %v7027
        %7029 = vdwg.mxu0
        %7030 = vmatpush.bf16.msra.mxu0 %v6620
        %7031 = vmatpush.bf16.msra.mxu0 %v6608
        %7032 = vmatpush.bf16.msra.mxu0 %v6596
        %7033 = vmatpush.bf16.msra.mxu0 %v6584
        %7034 = vmatpush.bf16.msra.mxu0 %v6572
        %7035 = vmatpush.bf16.msra.mxu0 %v6560
        %7036 = vmatpush.bf16.msra.mxu0 %v6548
        %7037 = vmatpush.bf16.msra.mxu0 %v6536
        %7038 = vmatmul.bf16.gmra.mxu0 %v5163
        %v7039 = vpop.f32.mrf.mxu0
        %v7040 = vadd.f32 %v7026, %v7039
        %v7041 = vpop.f32.mrf.mxu0
        %v7042 = vadd.f32 %v7028, %v7041
        %7043 = vdwg.mxu0
        %7044 = vmatpush.bf16.msra.mxu0 %v6429
        %7045 = vmatpush.bf16.msra.mxu0 %v6417
        %7046 = vmatpush.bf16.msra.mxu0 %v6405
        %7047 = vmatpush.bf16.msra.mxu0 %v6393
        %7048 = vmatpush.bf16.msra.mxu0 %v6381
        %7049 = vmatpush.bf16.msra.mxu0 %v6369
        %7050 = vmatpush.bf16.msra.mxu0 %v6357
        %7051 = vmatpush.bf16.msra.mxu0 %v6345
        %7052 = vmatmul.bf16.gmra.mxu0 %v5161
        %v7053 = vpop.f32.mrf.mxu0
        %v7054 = vadd.f32 %v5457, %v7053
        %v7055 = vpop.f32.mrf.mxu0
        %v7056 = vadd.f32 %v5457, %v7055
        %7057 = vdwg.mxu0
        %7058 = vmatpush.bf16.msra.mxu0 %v6525
        %7059 = vmatpush.bf16.msra.mxu0 %v6513
        %7060 = vmatpush.bf16.msra.mxu0 %v6501
        %7061 = vmatpush.bf16.msra.mxu0 %v6489
        %7062 = vmatpush.bf16.msra.mxu0 %v6477
        %7063 = vmatpush.bf16.msra.mxu0 %v6465
        %7064 = vmatpush.bf16.msra.mxu0 %v6453
        %7065 = vmatpush.bf16.msra.mxu0 %v6441
        %7066 = vmatmul.bf16.gmra.mxu0 %v5162
        %v7067 = vpop.f32.mrf.mxu0
        %v7068 = vadd.f32 %v7054, %v7067
        %v7069 = vpop.f32.mrf.mxu0
        %v7070 = vadd.f32 %v7056, %v7069
        %7071 = vdwg.mxu0
        %7072 = vmatpush.bf16.msra.mxu0 %v6621
        %7073 = vmatpush.bf16.msra.mxu0 %v6609
        %7074 = vmatpush.bf16.msra.mxu0 %v6597
        %7075 = vmatpush.bf16.msra.mxu0 %v6585
        %7076 = vmatpush.bf16.msra.mxu0 %v6573
        %7077 = vmatpush.bf16.msra.mxu0 %v6561
        %7078 = vmatpush.bf16.msra.mxu0 %v6549
        %7079 = vmatpush.bf16.msra.mxu0 %v6537
        %7080 = vmatmul.bf16.gmra.mxu0 %v5163
        %v7081 = vpop.f32.mrf.mxu0
        %v7082 = vadd.f32 %v7068, %v7081
        %v7083 = vpop.f32.mrf.mxu0
        %v7084 = vadd.f32 %v7070, %v7083
        %7085 = vdwg.mxu0
        %7086 = vmatpush.bf16.msra.mxu0 %v6430
        %7087 = vmatpush.bf16.msra.mxu0 %v6418
        %7088 = vmatpush.bf16.msra.mxu0 %v6406
        %7089 = vmatpush.bf16.msra.mxu0 %v6394
        %7090 = vmatpush.bf16.msra.mxu0 %v6382
        %7091 = vmatpush.bf16.msra.mxu0 %v6370
        %7092 = vmatpush.bf16.msra.mxu0 %v6358
        %7093 = vmatpush.bf16.msra.mxu0 %v6346
        %7094 = vmatmul.bf16.gmra.mxu0 %v5161
        %v7095 = vpop.f32.mrf.mxu0
        %v7096 = vadd.f32 %v5458, %v7095
        %v7097 = vpop.f32.mrf.mxu0
        %v7098 = vadd.f32 %v5458, %v7097
        %7099 = vdwg.mxu0
        %7100 = vmatpush.bf16.msra.mxu0 %v6526
        %7101 = vmatpush.bf16.msra.mxu0 %v6514
        %7102 = vmatpush.bf16.msra.mxu0 %v6502
        %7103 = vmatpush.bf16.msra.mxu0 %v6490
        %7104 = vmatpush.bf16.msra.mxu0 %v6478
        %7105 = vmatpush.bf16.msra.mxu0 %v6466
        %7106 = vmatpush.bf16.msra.mxu0 %v6454
        %7107 = vmatpush.bf16.msra.mxu0 %v6442
        %7108 = vmatmul.bf16.gmra.mxu0 %v5162
        %v7109 = vpop.f32.mrf.mxu0
        %v7110 = vadd.f32 %v7096, %v7109
        %v7111 = vpop.f32.mrf.mxu0
        %v7112 = vadd.f32 %v7098, %v7111
        %7113 = vdwg.mxu0
        %7114 = vmatpush.bf16.msra.mxu0 %v6622
        %7115 = vmatpush.bf16.msra.mxu0 %v6610
        %7116 = vmatpush.bf16.msra.mxu0 %v6598
        %7117 = vmatpush.bf16.msra.mxu0 %v6586
        %7118 = vmatpush.bf16.msra.mxu0 %v6574
        %7119 = vmatpush.bf16.msra.mxu0 %v6562
        %7120 = vmatpush.bf16.msra.mxu0 %v6550
        %7121 = vmatpush.bf16.msra.mxu0 %v6538
        %7122 = vmatmul.bf16.gmra.mxu0 %v5163
        %v7123 = vpop.f32.mrf.mxu0
        %v7124 = vadd.f32 %v7110, %v7123
        %v7125 = vpop.f32.mrf.mxu0
        %v7126 = vadd.f32 %v7112, %v7125
        %7127 = vdwg.mxu0
        %7128 = vmatpush.bf16.msra.mxu0 %v6431
        %7129 = vmatpush.bf16.msra.mxu0 %v6419
        %7130 = vmatpush.bf16.msra.mxu0 %v6407
        %7131 = vmatpush.bf16.msra.mxu0 %v6395
        %7132 = vmatpush.bf16.msra.mxu0 %v6383
        %7133 = vmatpush.bf16.msra.mxu0 %v6371
        %7134 = vmatpush.bf16.msra.mxu0 %v6359
        %7135 = vmatpush.bf16.msra.mxu0 %v6347
        %7136 = vmatmul.bf16.gmra.mxu0 %v5161
        %v7137 = vpop.f32.mrf.mxu0
        %v7138 = vadd.f32 %v5459, %v7137
        %v7139 = vpop.f32.mrf.mxu0
        %v7140 = vadd.f32 %v5459, %v7139
        %7141 = vdwg.mxu0
        %7142 = vmatpush.bf16.msra.mxu0 %v6527
        %7143 = vmatpush.bf16.msra.mxu0 %v6515
        %7144 = vmatpush.bf16.msra.mxu0 %v6503
        %7145 = vmatpush.bf16.msra.mxu0 %v6491
        %7146 = vmatpush.bf16.msra.mxu0 %v6479
        %7147 = vmatpush.bf16.msra.mxu0 %v6467
        %7148 = vmatpush.bf16.msra.mxu0 %v6455
        %7149 = vmatpush.bf16.msra.mxu0 %v6443
        %7150 = vmatmul.bf16.gmra.mxu0 %v5162
        %v7151 = vpop.f32.mrf.mxu0
        %v7152 = vadd.f32 %v7138, %v7151
        %v7153 = vpop.f32.mrf.mxu0
        %v7154 = vadd.f32 %v7140, %v7153
        %7155 = vdwg.mxu0
        %7156 = vmatpush.bf16.msra.mxu0 %v6623
        %7157 = vmatpush.bf16.msra.mxu0 %v6611
        %7158 = vmatpush.bf16.msra.mxu0 %v6599
        %7159 = vmatpush.bf16.msra.mxu0 %v6587
        %7160 = vmatpush.bf16.msra.mxu0 %v6575
        %7161 = vmatpush.bf16.msra.mxu0 %v6563
        %7162 = vmatpush.bf16.msra.mxu0 %v6551
        %7163 = vmatpush.bf16.msra.mxu0 %v6539
        %7164 = vmatmul.bf16.gmra.mxu0 %v5163
        %v7165 = vpop.f32.mrf.mxu0
        %v7166 = vadd.f32 %v7152, %v7165
        %v7167 = vpop.f32.mrf.mxu0
        %v7168 = vadd.f32 %v7154, %v7167
        %7169 = vdwg.mxu0
        %7170 = vmatpush.bf16.msra.mxu0 %v6432
        %7171 = vmatpush.bf16.msra.mxu0 %v6420
        %7172 = vmatpush.bf16.msra.mxu0 %v6408
        %7173 = vmatpush.bf16.msra.mxu0 %v6396
        %7174 = vmatpush.bf16.msra.mxu0 %v6384
        %7175 = vmatpush.bf16.msra.mxu0 %v6372
        %7176 = vmatpush.bf16.msra.mxu0 %v6360
        %7177 = vmatpush.bf16.msra.mxu0 %v6348
        %7178 = vmatmul.bf16.gmra.mxu0 %v5161
        %v7179 = vpop.f32.mrf.mxu0
        %v7180 = vadd.f32 %v5460, %v7179
        %v7181 = vpop.f32.mrf.mxu0
        %v7182 = vadd.f32 %v5460, %v7181
        %7183 = vdwg.mxu0
        %7184 = vmatpush.bf16.msra.mxu0 %v6528
        %7185 = vmatpush.bf16.msra.mxu0 %v6516
        %7186 = vmatpush.bf16.msra.mxu0 %v6504
        %7187 = vmatpush.bf16.msra.mxu0 %v6492
        %7188 = vmatpush.bf16.msra.mxu0 %v6480
        %7189 = vmatpush.bf16.msra.mxu0 %v6468
        %7190 = vmatpush.bf16.msra.mxu0 %v6456
        %7191 = vmatpush.bf16.msra.mxu0 %v6444
        %7192 = vmatmul.bf16.gmra.mxu0 %v5162
        %v7193 = vpop.f32.mrf.mxu0
        %v7194 = vadd.f32 %v7180, %v7193
        %v7195 = vpop.f32.mrf.mxu0
        %v7196 = vadd.f32 %v7182, %v7195
        %7197 = vdwg.mxu0
        %7198 = vmatpush.bf16.msra.mxu0 %v6624
        %7199 = vmatpush.bf16.msra.mxu0 %v6612
        %7200 = vmatpush.bf16.msra.mxu0 %v6600
        %7201 = vmatpush.bf16.msra.mxu0 %v6588
        %7202 = vmatpush.bf16.msra.mxu0 %v6576
        %7203 = vmatpush.bf16.msra.mxu0 %v6564
        %7204 = vmatpush.bf16.msra.mxu0 %v6552
        %7205 = vmatpush.bf16.msra.mxu0 %v6540
        %7206 = vmatmul.bf16.gmra.mxu0 %v5163
        %v7207 = vpop.f32.mrf.mxu0
        %v7208 = vadd.f32 %v7194, %v7207
        %v7209 = vpop.f32.mrf.mxu0
        %v7210 = vadd.f32 %v7196, %v7209
        %7211 = vdwg.mxu0
        %7212 = vmatpush.bf16.msra.mxu0 %v6433
        %7213 = vmatpush.bf16.msra.mxu0 %v6421
        %7214 = vmatpush.bf16.msra.mxu0 %v6409
        %7215 = vmatpush.bf16.msra.mxu0 %v6397
        %7216 = vmatpush.bf16.msra.mxu0 %v6385
        %7217 = vmatpush.bf16.msra.mxu0 %v6373
        %7218 = vmatpush.bf16.msra.mxu0 %v6361
        %7219 = vmatpush.bf16.msra.mxu0 %v6349
        %7220 = vmatmul.bf16.gmra.mxu0 %v5161
        %v7221 = vpop.f32.mrf.mxu0
        %v7222 = vadd.f32 %v5461, %v7221
        %v7223 = vpop.f32.mrf.mxu0
        %v7224 = vadd.f32 %v5461, %v7223
        %7225 = vdwg.mxu0
        %7226 = vmatpush.bf16.msra.mxu0 %v6529
        %7227 = vmatpush.bf16.msra.mxu0 %v6517
        %7228 = vmatpush.bf16.msra.mxu0 %v6505
        %7229 = vmatpush.bf16.msra.mxu0 %v6493
        %7230 = vmatpush.bf16.msra.mxu0 %v6481
        %7231 = vmatpush.bf16.msra.mxu0 %v6469
        %7232 = vmatpush.bf16.msra.mxu0 %v6457
        %7233 = vmatpush.bf16.msra.mxu0 %v6445
        %7234 = vmatmul.bf16.gmra.mxu0 %v5162
        %v7235 = vpop.f32.mrf.mxu0
        %v7236 = vadd.f32 %v7222, %v7235
        %v7237 = vpop.f32.mrf.mxu0
        %v7238 = vadd.f32 %v7224, %v7237
        %7239 = vdwg.mxu0
        %7240 = vmatpush.bf16.msra.mxu0 %v6625
        %7241 = vmatpush.bf16.msra.mxu0 %v6613
        %7242 = vmatpush.bf16.msra.mxu0 %v6601
        %7243 = vmatpush.bf16.msra.mxu0 %v6589
        %7244 = vmatpush.bf16.msra.mxu0 %v6577
        %7245 = vmatpush.bf16.msra.mxu0 %v6565
        %7246 = vmatpush.bf16.msra.mxu0 %v6553
        %7247 = vmatpush.bf16.msra.mxu0 %v6541
        %7248 = vmatmul.bf16.gmra.mxu0 %v5163
        %v7249 = vpop.f32.mrf.mxu0
        %v7250 = vadd.f32 %v7236, %v7249
        %v7251 = vpop.f32.mrf.mxu0
        %v7252 = vadd.f32 %v7238, %v7251
        %7253 = vdwg.mxu0
        %7254 = vmatpush.bf16.msra.mxu0 %v6434
        %7255 = vmatpush.bf16.msra.mxu0 %v6422
        %7256 = vmatpush.bf16.msra.mxu0 %v6410
        %7257 = vmatpush.bf16.msra.mxu0 %v6398
        %7258 = vmatpush.bf16.msra.mxu0 %v6386
        %7259 = vmatpush.bf16.msra.mxu0 %v6374
        %7260 = vmatpush.bf16.msra.mxu0 %v6362
        %7261 = vmatpush.bf16.msra.mxu0 %v6350
        %7262 = vmatmul.bf16.gmra.mxu0 %v5161
        %v7263 = vpop.f32.mrf.mxu0
        %v7264 = vadd.f32 %v5462, %v7263
        %v7265 = vpop.f32.mrf.mxu0
        %v7266 = vadd.f32 %v5462, %v7265
        %7267 = vdwg.mxu0
        %7268 = vmatpush.bf16.msra.mxu0 %v6530
        %7269 = vmatpush.bf16.msra.mxu0 %v6518
        %7270 = vmatpush.bf16.msra.mxu0 %v6506
        %7271 = vmatpush.bf16.msra.mxu0 %v6494
        %7272 = vmatpush.bf16.msra.mxu0 %v6482
        %7273 = vmatpush.bf16.msra.mxu0 %v6470
        %7274 = vmatpush.bf16.msra.mxu0 %v6458
        %7275 = vmatpush.bf16.msra.mxu0 %v6446
        %7276 = vmatmul.bf16.gmra.mxu0 %v5162
        %v7277 = vpop.f32.mrf.mxu0
        %v7278 = vadd.f32 %v7264, %v7277
        %v7279 = vpop.f32.mrf.mxu0
        %v7280 = vadd.f32 %v7266, %v7279
        %7281 = vdwg.mxu0
        %7282 = vmatpush.bf16.msra.mxu0 %v6626
        %7283 = vmatpush.bf16.msra.mxu0 %v6614
        %7284 = vmatpush.bf16.msra.mxu0 %v6602
        %7285 = vmatpush.bf16.msra.mxu0 %v6590
        %7286 = vmatpush.bf16.msra.mxu0 %v6578
        %7287 = vmatpush.bf16.msra.mxu0 %v6566
        %7288 = vmatpush.bf16.msra.mxu0 %v6554
        %7289 = vmatpush.bf16.msra.mxu0 %v6542
        %7290 = vmatmul.bf16.gmra.mxu0 %v5163
        %v7291 = vpop.f32.mrf.mxu0
        %v7292 = vadd.f32 %v7278, %v7291
        %v7293 = vpop.f32.mrf.mxu0
        %v7294 = vadd.f32 %v7280, %v7293
        %7295 = vdwg.mxu0
        %7296 = vmatpush.bf16.msra.mxu0 %v6435
        %7297 = vmatpush.bf16.msra.mxu0 %v6423
        %7298 = vmatpush.bf16.msra.mxu0 %v6411
        %7299 = vmatpush.bf16.msra.mxu0 %v6399
        %7300 = vmatpush.bf16.msra.mxu0 %v6387
        %7301 = vmatpush.bf16.msra.mxu0 %v6375
        %7302 = vmatpush.bf16.msra.mxu0 %v6363
        %7303 = vmatpush.bf16.msra.mxu0 %v6351
        %7304 = vmatmul.bf16.gmra.mxu0 %v5161
        %v7305 = vpop.f32.mrf.mxu0
        %v7306 = vadd.f32 %v5463, %v7305
        %v7307 = vpop.f32.mrf.mxu0
        %v7308 = vadd.f32 %v5463, %v7307
        %7309 = vdwg.mxu0
        %7310 = vmatpush.bf16.msra.mxu0 %v6531
        %7311 = vmatpush.bf16.msra.mxu0 %v6519
        %7312 = vmatpush.bf16.msra.mxu0 %v6507
        %7313 = vmatpush.bf16.msra.mxu0 %v6495
        %7314 = vmatpush.bf16.msra.mxu0 %v6483
        %7315 = vmatpush.bf16.msra.mxu0 %v6471
        %7316 = vmatpush.bf16.msra.mxu0 %v6459
        %7317 = vmatpush.bf16.msra.mxu0 %v6447
        %7318 = vmatmul.bf16.gmra.mxu0 %v5162
        %v7319 = vpop.f32.mrf.mxu0
        %v7320 = vadd.f32 %v7306, %v7319
        %v7321 = vpop.f32.mrf.mxu0
        %v7322 = vadd.f32 %v7308, %v7321
        %7323 = vdwg.mxu0
        %7324 = vmatpush.bf16.msra.mxu0 %v6627
        %7325 = vmatpush.bf16.msra.mxu0 %v6615
        %7326 = vmatpush.bf16.msra.mxu0 %v6603
        %7327 = vmatpush.bf16.msra.mxu0 %v6591
        %7328 = vmatpush.bf16.msra.mxu0 %v6579
        %7329 = vmatpush.bf16.msra.mxu0 %v6567
        %7330 = vmatpush.bf16.msra.mxu0 %v6555
        %7331 = vmatpush.bf16.msra.mxu0 %v6543
        %7332 = vmatmul.bf16.gmra.mxu0 %v5163
        %v7333 = vpop.f32.mrf.mxu0
        %v7334 = vadd.f32 %v7320, %v7333
        %v7335 = vpop.f32.mrf.mxu0
        %v7336 = vadd.f32 %v7322, %v7335
        %7337 = vdwg.mxu0
        %7338 = vmatpush.bf16.msra.mxu0 %v6436
        %7339 = vmatpush.bf16.msra.mxu0 %v6424
        %7340 = vmatpush.bf16.msra.mxu0 %v6412
        %7341 = vmatpush.bf16.msra.mxu0 %v6400
        %7342 = vmatpush.bf16.msra.mxu0 %v6388
        %7343 = vmatpush.bf16.msra.mxu0 %v6376
        %7344 = vmatpush.bf16.msra.mxu0 %v6364
        %7345 = vmatpush.bf16.msra.mxu0 %v6352
        %7346 = vmatmul.bf16.gmra.mxu0 %v5161
        %v7347 = vpop.f32.mrf.mxu0
        %v7348 = vadd.f32 %v5464, %v7347
        %v7349 = vpop.f32.mrf.mxu0
        %v7350 = vadd.f32 %v5464, %v7349
        %7351 = vdwg.mxu0
        %7352 = vmatpush.bf16.msra.mxu0 %v6532
        %7353 = vmatpush.bf16.msra.mxu0 %v6520
        %7354 = vmatpush.bf16.msra.mxu0 %v6508
        %7355 = vmatpush.bf16.msra.mxu0 %v6496
        %7356 = vmatpush.bf16.msra.mxu0 %v6484
        %7357 = vmatpush.bf16.msra.mxu0 %v6472
        %7358 = vmatpush.bf16.msra.mxu0 %v6460
        %7359 = vmatpush.bf16.msra.mxu0 %v6448
        %7360 = vmatmul.bf16.gmra.mxu0 %v5162
        %v7361 = vpop.f32.mrf.mxu0
        %v7362 = vadd.f32 %v7348, %v7361
        %v7363 = vpop.f32.mrf.mxu0
        %v7364 = vadd.f32 %v7350, %v7363
        %7365 = vdwg.mxu0
        %7366 = vmatpush.bf16.msra.mxu0 %v6628
        %7367 = vmatpush.bf16.msra.mxu0 %v6616
        %7368 = vmatpush.bf16.msra.mxu0 %v6604
        %7369 = vmatpush.bf16.msra.mxu0 %v6592
        %7370 = vmatpush.bf16.msra.mxu0 %v6580
        %7371 = vmatpush.bf16.msra.mxu0 %v6568
        %7372 = vmatpush.bf16.msra.mxu0 %v6556
        %7373 = vmatpush.bf16.msra.mxu0 %v6544
        %7374 = vmatmul.bf16.gmra.mxu0 %v5163
        %v7375 = vpop.f32.mrf.mxu0
        %v7376 = vadd.f32 %v7362, %v7375
        %v7377 = vpop.f32.mrf.mxu0
        %v7378 = vadd.f32 %v7364, %v7377
        %7379 = vdwg.mxu0
        %7380 = vmatpush.bf16.msra.mxu0 %v6437
        %7381 = vmatpush.bf16.msra.mxu0 %v6425
        %7382 = vmatpush.bf16.msra.mxu0 %v6413
        %7383 = vmatpush.bf16.msra.mxu0 %v6401
        %7384 = vmatpush.bf16.msra.mxu0 %v6389
        %7385 = vmatpush.bf16.msra.mxu0 %v6377
        %7386 = vmatpush.bf16.msra.mxu0 %v6365
        %7387 = vmatpush.bf16.msra.mxu0 %v6353
        %7388 = vmatmul.bf16.gmra.mxu0 %v5161
        %v7389 = vpop.f32.mrf.mxu0
        %v7390 = vadd.f32 %v5465, %v7389
        %v7391 = vpop.f32.mrf.mxu0
        %v7392 = vadd.f32 %v5465, %v7391
        %7393 = vdwg.mxu0
        %7394 = vmatpush.bf16.msra.mxu0 %v6533
        %7395 = vmatpush.bf16.msra.mxu0 %v6521
        %7396 = vmatpush.bf16.msra.mxu0 %v6509
        %7397 = vmatpush.bf16.msra.mxu0 %v6497
        %7398 = vmatpush.bf16.msra.mxu0 %v6485
        %7399 = vmatpush.bf16.msra.mxu0 %v6473
        %7400 = vmatpush.bf16.msra.mxu0 %v6461
        %7401 = vmatpush.bf16.msra.mxu0 %v6449
        %7402 = vmatmul.bf16.gmra.mxu0 %v5162
        %v7403 = vpop.f32.mrf.mxu0
        %v7404 = vadd.f32 %v7390, %v7403
        %v7405 = vpop.f32.mrf.mxu0
        %v7406 = vadd.f32 %v7392, %v7405
        %7407 = vdwg.mxu0
        %7408 = vmatpush.bf16.msra.mxu0 %v6629
        %7409 = vmatpush.bf16.msra.mxu0 %v6617
        %7410 = vmatpush.bf16.msra.mxu0 %v6605
        %7411 = vmatpush.bf16.msra.mxu0 %v6593
        %7412 = vmatpush.bf16.msra.mxu0 %v6581
        %7413 = vmatpush.bf16.msra.mxu0 %v6569
        %7414 = vmatpush.bf16.msra.mxu0 %v6557
        %7415 = vmatpush.bf16.msra.mxu0 %v6545
        %7416 = vmatmul.bf16.gmra.mxu0 %v5163
        %v7417 = vpop.f32.mrf.mxu0
        %v7418 = vadd.f32 %v7404, %v7417
        %v7419 = vpop.f32.mrf.mxu0
        %v7420 = vadd.f32 %v7406, %v7419
        %7421 = vdwg.mxu0
        %v7422 = vmax.f32 %v6956, 0.0
        %v7423 = vmax.f32 %v6998, 0.0
        %v7424 = vmax.f32 %v7040, 0.0
        %v7425 = vmax.f32 %v7082, 0.0
        %v7426 = vmax.f32 %v7124, 0.0
        %v7427 = vmax.f32 %v7166, 0.0
        %v7428 = vmax.f32 %v7208, 0.0
        %v7429 = vmax.f32 %v7250, 0.0
        %v7430 = vmax.f32 %v7292, 0.0
        %v7431 = vmax.f32 %v7334, 0.0
        %v7432 = vmax.f32 %v7376, 0.0
        %v7433 = vmax.f32 %v7418, 0.0
        %v7434 = vmax.f32 %v6958, 0.0
        %v7435 = vmax.f32 %v7000, 0.0
        %v7436 = vmax.f32 %v7042, 0.0
        %v7437 = vmax.f32 %v7084, 0.0
        %v7438 = vmax.f32 %v7126, 0.0
        %v7439 = vmax.f32 %v7168, 0.0
        %v7440 = vmax.f32 %v7210, 0.0
        %v7441 = vmax.f32 %v7252, 0.0
        %v7442 = vmax.f32 %v7294, 0.0
        %v7443 = vmax.f32 %v7336, 0.0
        %v7444 = vmax.f32 %v7378, 0.0
        %v7445 = vmax.f32 %v7420, 0.0
        %v7446 = vpack.c.bf16 %v7434, %v7422
        %v7447 = vpack.c.bf16 %v7435, %v7423
        %v7448 = vpack.c.bf16 %v7436, %v7424
        %v7449 = vpack.c.bf16 %v7437, %v7425
        %v7450 = vpack.c.bf16 %v7438, %v7426
        %v7451 = vpack.c.bf16 %v7439, %v7427
        %v7452 = vpack.c.bf16 %v7440, %v7428
        %v7453 = vpack.c.bf16 %v7441, %v7429
        %v7454 = vpack.c.bf16 %v7442, %v7430
        %v7455 = vpack.c.bf16 %v7443, %v7431
        %v7456 = vpack.c.bf16 %v7444, %v7432
        %v7457 = vpack.c.bf16 %v7445, %v7433
        %v7458 = vld [vmem:[#allocation10] sm:$0xff]
        %v7459 = vld [vmem:[#allocation10 + $0x8] sm:$0xf]
        %v7460 = vld [vmem:[#allocation10 + $0xc] sm:$0xff]
        %v7461 = vld [vmem:[#allocation10 + $0x14] sm:$0xf]
        %v7462 = vld [vmem:[#allocation10 + $0x18] sm:$0xff]
        %v7463 = vld [vmem:[#allocation10 + $0x20] sm:$0xf]
        %v7464 = vld [vmem:[#allocation10 + $0x24] sm:$0xff]
        %v7465 = vld [vmem:[#allocation10 + $0x2c] sm:$0xf]
        %v7466 = vld [vmem:[#allocation10 + $0x30] sm:$0xff]
        %v7467 = vld [vmem:[#allocation10 + $0x38] sm:$0xf]
        %v7468 = vld [vmem:[#allocation10 + $0x3c] sm:$0xff]
        %v7469 = vld [vmem:[#allocation10 + $0x44] sm:$0xf]
        %v7470 = vld [vmem:[#allocation10 + $0x48] sm:$0xff]
        %v7471 = vld [vmem:[#allocation10 + $0x50] sm:$0xf]
        %v7472 = vld [vmem:[#allocation10 + $0x54] sm:$0xff]
        %v7473 = vld [vmem:[#allocation10 + $0x5c] sm:$0xf]
        %v7474 = vld [vmem:[#allocation10 + $0x60] sm:$0xff]
        %v7475 = vld [vmem:[#allocation10 + $0x68] sm:$0xf]
        %v7476 = vld [vmem:[#allocation10 + $0x6c] sm:$0xff]
        %v7477 = vld [vmem:[#allocation10 + $0x74] sm:$0xf]
        %v7478 = vld [vmem:[#allocation10 + $0x78] sm:$0xff]
        %v7479 = vld [vmem:[#allocation10 + $0x80] sm:$0xf]
        %v7480 = vld [vmem:[#allocation10 + $0x84] sm:$0xff]
        %v7481 = vld [vmem:[#allocation10 + $0x8c] sm:$0xf]
        %v7482 = vld [vmem:[#allocation10 + $0x90] sm:$0xff]
        %v7483 = vld [vmem:[#allocation10 + $0x98] sm:$0xf]
        %v7484 = vld [vmem:[#allocation10 + $0x9c] sm:$0xff]
        %v7485 = vld [vmem:[#allocation10 + $0xa4] sm:$0xf]
        %v7486 = vld [vmem:[#allocation10 + $0xa8] sm:$0xff]
        %v7487 = vld [vmem:[#allocation10 + $0xb0] sm:$0xf]
        %v7488 = vld [vmem:[#allocation10 + $0xb4] sm:$0xff]
        %v7489 = vld [vmem:[#allocation10 + $0xbc] sm:$0xf]
        %v7490 = vld [vmem:[#allocation10 + $0xc0] sm:$0xff]
        %v7491 = vld [vmem:[#allocation10 + $0xc8] sm:$0xf]
        %v7492 = vld [vmem:[#allocation10 + $0xcc] sm:$0xff]
        %v7493 = vld [vmem:[#allocation10 + $0xd4] sm:$0xf]
        %v7494 = vld [vmem:[#allocation10 + $0xd8] sm:$0xff]
        %v7495 = vld [vmem:[#allocation10 + $0xe0] sm:$0xf]
        %v7496 = vld [vmem:[#allocation10 + $0xe4] sm:$0xff]
        %v7497 = vld [vmem:[#allocation10 + $0xec] sm:$0xf]
        %v7498 = vld [vmem:[#allocation10 + $0xf0] sm:$0xff]
        %v7499 = vld [vmem:[#allocation10 + $0xf8] sm:$0xf]
        %v7500 = vld [vmem:[#allocation10 + $0xfc] sm:$0xff]
        %v7501 = vld [vmem:[#allocation10 + $0x104] sm:$0xf]
        %v7502 = vld [vmem:[#allocation10 + $0x108] sm:$0xff]
        %v7503 = vld [vmem:[#allocation10 + $0x110] sm:$0xf]
        %v7504 = vld [vmem:[#allocation10 + $0x114] sm:$0xff]
        %v7505 = vld [vmem:[#allocation10 + $0x11c] sm:$0xf]
        %v7506 = vld [vmem:[#allocation10 + $0x120] sm:$0xff]
        %v7507 = vld [vmem:[#allocation10 + $0x128] sm:$0xf]
        %v7508 = vld [vmem:[#allocation10 + $0x12c] sm:$0xff]
        %v7509 = vld [vmem:[#allocation10 + $0x134] sm:$0xf]
        %v7510 = vld [vmem:[#allocation10 + $0x138] sm:$0xff]
        %v7511 = vld [vmem:[#allocation10 + $0x140] sm:$0xf]
        %v7512 = vld [vmem:[#allocation10 + $0x144] sm:$0xff]
        %v7513 = vld [vmem:[#allocation10 + $0x14c] sm:$0xf]
        %v7514 = vld [vmem:[#allocation10 + $0x150] sm:$0xff]
        %v7515 = vld [vmem:[#allocation10 + $0x158] sm:$0xf]
        %v7516 = vld [vmem:[#allocation10 + $0x15c] sm:$0xff]
        %v7517 = vld [vmem:[#allocation10 + $0x164] sm:$0xf]
        %v7518 = vld [vmem:[#allocation10 + $0x168] sm:$0xff]
        %v7519 = vld [vmem:[#allocation10 + $0x170] sm:$0xf]
        %v7520 = vld [vmem:[#allocation10 + $0x174] sm:$0xff]
        %v7521 = vld [vmem:[#allocation10 + $0x17c] sm:$0xf]
        %v7522 = vld [vmem:[#allocation10 + $0x180] sm:$0xff]
        %v7523 = vld [vmem:[#allocation10 + $0x188] sm:$0xf]
        %v7524 = vld [vmem:[#allocation10 + $0x18c] sm:$0xff]
        %v7525 = vld [vmem:[#allocation10 + $0x194] sm:$0xf]
        %v7526 = vld [vmem:[#allocation10 + $0x198] sm:$0xff]
        %v7527 = vld [vmem:[#allocation10 + $0x1a0] sm:$0xf]
        %v7528 = vld [vmem:[#allocation10 + $0x1a4] sm:$0xff]
        %v7529 = vld [vmem:[#allocation10 + $0x1ac] sm:$0xf]
        %v7530 = vld [vmem:[#allocation10 + $0x1b0] sm:$0xff]
        %v7531 = vld [vmem:[#allocation10 + $0x1b8] sm:$0xf]
        %v7532 = vld [vmem:[#allocation10 + $0x1bc] sm:$0xff]
        %v7533 = vld [vmem:[#allocation10 + $0x1c4] sm:$0xf]
        %v7534 = vld [vmem:[#allocation10 + $0x1c8] sm:$0xff]
        %v7535 = vld [vmem:[#allocation10 + $0x1d0] sm:$0xf]
        %v7536 = vld [vmem:[#allocation10 + $0x1d4] sm:$0xff]
        %v7537 = vld [vmem:[#allocation10 + $0x1dc] sm:$0xf]
        %v7538 = vld [vmem:[#allocation10 + $0x1e0] sm:$0xff]
        %v7539 = vld [vmem:[#allocation10 + $0x1e8] sm:$0xf]
        %v7540 = vld [vmem:[#allocation10 + $0x1ec] sm:$0xff]
        %v7541 = vld [vmem:[#allocation10 + $0x1f4] sm:$0xf]
        %v7542 = vld [vmem:[#allocation10 + $0x1f8] sm:$0xff]
        %v7543 = vld [vmem:[#allocation10 + $0x200] sm:$0xf]
        %v7544 = vld [vmem:[#allocation10 + $0x204] sm:$0xff]
        %v7545 = vld [vmem:[#allocation10 + $0x20c] sm:$0xf]
        %v7546 = vld [vmem:[#allocation10 + $0x210] sm:$0xff]
        %v7547 = vld [vmem:[#allocation10 + $0x218] sm:$0xf]
        %v7548 = vld [vmem:[#allocation10 + $0x21c] sm:$0xff]
        %v7549 = vld [vmem:[#allocation10 + $0x224] sm:$0xf]
        %v7550 = vld [vmem:[#allocation10 + $0x228] sm:$0xff]
        %v7551 = vld [vmem:[#allocation10 + $0x230] sm:$0xf]
        %v7552 = vld [vmem:[#allocation10 + $0x234] sm:$0xff]
        %v7553 = vld [vmem:[#allocation10 + $0x23c] sm:$0xf]
        %v7554 = vld [vmem:[#allocation10 + $0x240] sm:$0xff]
        %v7555 = vld [vmem:[#allocation10 + $0x248] sm:$0xf]
        %v7556 = vld [vmem:[#allocation10 + $0x24c] sm:$0xff]
        %v7557 = vld [vmem:[#allocation10 + $0x254] sm:$0xf]
        %v7558 = vld [vmem:[#allocation10 + $0x258] sm:$0xff]
        %v7559 = vld [vmem:[#allocation10 + $0x260] sm:$0xf]
        %v7560 = vld [vmem:[#allocation10 + $0x264] sm:$0xff]
        %v7561 = vld [vmem:[#allocation10 + $0x26c] sm:$0xf]
        %v7562 = vld [vmem:[#allocation10 + $0x270] sm:$0xff]
        %v7563 = vld [vmem:[#allocation10 + $0x278] sm:$0xf]
        %v7564 = vld [vmem:[#allocation10 + $0x27c] sm:$0xff]
        %v7565 = vld [vmem:[#allocation10 + $0x284] sm:$0xf]
        %v7566 = vld [vmem:[#allocation10 + $0x288] sm:$0xff]
        %v7567 = vld [vmem:[#allocation10 + $0x290] sm:$0xf]
        %v7568 = vld [vmem:[#allocation10 + $0x294] sm:$0xff]
        %v7569 = vld [vmem:[#allocation10 + $0x29c] sm:$0xf]
        %v7570 = vld [vmem:[#allocation10 + $0x2a0] sm:$0xff]
        %v7571 = vld [vmem:[#allocation10 + $0x2a8] sm:$0xf]
        %v7572 = vld [vmem:[#allocation10 + $0x2ac] sm:$0xff]
        %v7573 = vld [vmem:[#allocation10 + $0x2b4] sm:$0xf]
        %v7574 = vld [vmem:[#allocation10 + $0x2b8] sm:$0xff]
        %v7575 = vld [vmem:[#allocation10 + $0x2c0] sm:$0xf]
        %v7576 = vld [vmem:[#allocation10 + $0x2c4] sm:$0xff]
        %v7577 = vld [vmem:[#allocation10 + $0x2cc] sm:$0xf]
        %v7578 = vld [vmem:[#allocation10 + $0x2d0] sm:$0xff]
        %v7579 = vld [vmem:[#allocation10 + $0x2d8] sm:$0xf]
        %v7580 = vld [vmem:[#allocation10 + $0x2dc] sm:$0xff]
        %v7581 = vld [vmem:[#allocation10 + $0x2e4] sm:$0xf]
        %v7582 = vld [vmem:[#allocation10 + $0x2e8] sm:$0xff]
        %v7583 = vld [vmem:[#allocation10 + $0x2f0] sm:$0xf]
        %v7584 = vld [vmem:[#allocation10 + $0x2f4] sm:$0xff]
        %v7585 = vld [vmem:[#allocation10 + $0x2fc] sm:$0xf]
        %v7586 = vld [vmem:[#allocation10 + $0x300] sm:$0xff]
        %v7587 = vld [vmem:[#allocation10 + $0x308] sm:$0xf]
        %v7588 = vld [vmem:[#allocation10 + $0x30c] sm:$0xff]
        %v7589 = vld [vmem:[#allocation10 + $0x314] sm:$0xf]
        %v7590 = vld [vmem:[#allocation10 + $0x318] sm:$0xff]
        %v7591 = vld [vmem:[#allocation10 + $0x320] sm:$0xf]
        %v7592 = vld [vmem:[#allocation10 + $0x324] sm:$0xff]
        %v7593 = vld [vmem:[#allocation10 + $0x32c] sm:$0xf]
        %v7594 = vld [vmem:[#allocation10 + $0x330] sm:$0xff]
        %v7595 = vld [vmem:[#allocation10 + $0x338] sm:$0xf]
        %v7596 = vld [vmem:[#allocation10 + $0x33c] sm:$0xff]
        %v7597 = vld [vmem:[#allocation10 + $0x344] sm:$0xf]
        %v7598 = vld [vmem:[#allocation10 + $0x348] sm:$0xff]
        %v7599 = vld [vmem:[#allocation10 + $0x350] sm:$0xf]
        %v7600 = vld [vmem:[#allocation10 + $0x354] sm:$0xff]
        %v7601 = vld [vmem:[#allocation10 + $0x35c] sm:$0xf]
        %v7602 = vld [vmem:[#allocation10 + $0x360] sm:$0xff]
        %v7603 = vld [vmem:[#allocation10 + $0x368] sm:$0xf]
        %v7604 = vld [vmem:[#allocation10 + $0x36c] sm:$0xff]
        %v7605 = vld [vmem:[#allocation10 + $0x374] sm:$0xf]
        %v7606 = vld [vmem:[#allocation10 + $0x378] sm:$0xff]
        %v7607 = vld [vmem:[#allocation10 + $0x380] sm:$0xf]
        %v7608 = vld [vmem:[#allocation10 + $0x384] sm:$0xff]
        %v7609 = vld [vmem:[#allocation10 + $0x38c] sm:$0xf]
        %v7610 = vld [vmem:[#allocation10 + $0x390] sm:$0xff]
        %v7611 = vld [vmem:[#allocation10 + $0x398] sm:$0xf]
        %v7612 = vld [vmem:[#allocation10 + $0x39c] sm:$0xff]
        %v7613 = vld [vmem:[#allocation10 + $0x3a4] sm:$0xf]
        %v7614 = vld [vmem:[#allocation10 + $0x3a8] sm:$0xff]
        %v7615 = vld [vmem:[#allocation10 + $0x3b0] sm:$0xf]
        %v7616 = vld [vmem:[#allocation10 + $0x3b4] sm:$0xff]
        %v7617 = vld [vmem:[#allocation10 + $0x3bc] sm:$0xf]
        %v7618 = vld [vmem:[#allocation10 + $0x3c0] sm:$0xff]
        %v7619 = vld [vmem:[#allocation10 + $0x3c8] sm:$0xf]
        %v7620 = vld [vmem:[#allocation10 + $0x3cc] sm:$0xff]
        %v7621 = vld [vmem:[#allocation10 + $0x3d4] sm:$0xf]
        %v7622 = vld [vmem:[#allocation10 + $0x3d8] sm:$0xff]
        %v7623 = vld [vmem:[#allocation10 + $0x3e0] sm:$0xf]
        %v7624 = vld [vmem:[#allocation10 + $0x3e4] sm:$0xff]
        %v7625 = vld [vmem:[#allocation10 + $0x3ec] sm:$0xf]
        %v7626 = vld [vmem:[#allocation10 + $0x3f0] sm:$0xff]
        %v7627 = vld [vmem:[#allocation10 + $0x3f8] sm:$0xf]
        %v7628 = vld [vmem:[#allocation10 + $0x3fc] sm:$0xff]
        %v7629 = vld [vmem:[#allocation10 + $0x404] sm:$0xf]
        %v7630 = vld [vmem:[#allocation10 + $0x408] sm:$0xff]
        %v7631 = vld [vmem:[#allocation10 + $0x410] sm:$0xf]
        %v7632 = vld [vmem:[#allocation10 + $0x414] sm:$0xff]
        %v7633 = vld [vmem:[#allocation10 + $0x41c] sm:$0xf]
        %v7634 = vld [vmem:[#allocation10 + $0x420] sm:$0xff]
        %v7635 = vld [vmem:[#allocation10 + $0x428] sm:$0xf]
        %v7636 = vld [vmem:[#allocation10 + $0x42c] sm:$0xff]
        %v7637 = vld [vmem:[#allocation10 + $0x434] sm:$0xf]
        %v7638 = vld [vmem:[#allocation10 + $0x438] sm:$0xff]
        %v7639 = vld [vmem:[#allocation10 + $0x440] sm:$0xf]
        %v7640 = vld [vmem:[#allocation10 + $0x444] sm:$0xff]
        %v7641 = vld [vmem:[#allocation10 + $0x44c] sm:$0xf]
        %v7642 = vld [vmem:[#allocation10 + $0x450] sm:$0xff]
        %v7643 = vld [vmem:[#allocation10 + $0x458] sm:$0xf]
        %v7644 = vld [vmem:[#allocation10 + $0x45c] sm:$0xff]
        %v7645 = vld [vmem:[#allocation10 + $0x464] sm:$0xf]
        %v7646 = vld [vmem:[#allocation10 + $0x468] sm:$0xff]
        %v7647 = vld [vmem:[#allocation10 + $0x470] sm:$0xf]
        %v7648 = vld [vmem:[#allocation10 + $0x474] sm:$0xff]
        %v7649 = vld [vmem:[#allocation10 + $0x47c] sm:$0xf]
        %v7650 = vld [vmem:[#allocation10 + $0x480] sm:$0xff]
        %v7651 = vld [vmem:[#allocation10 + $0x488] sm:$0xf]
        %v7652 = vld [vmem:[#allocation10 + $0x48c] sm:$0xff]
        %v7653 = vld [vmem:[#allocation10 + $0x494] sm:$0xf]
        %v7654 = vld [vmem:[#allocation10 + $0x498] sm:$0xff]
        %v7655 = vld [vmem:[#allocation10 + $0x4a0] sm:$0xf]
        %v7656 = vld [vmem:[#allocation10 + $0x4a4] sm:$0xff]
        %v7657 = vld [vmem:[#allocation10 + $0x4ac] sm:$0xf]
        %v7658 = vld [vmem:[#allocation10 + $0x4b0] sm:$0xff]
        %v7659 = vld [vmem:[#allocation10 + $0x4b8] sm:$0xf]
        %v7660 = vld [vmem:[#allocation10 + $0x4bc] sm:$0xff]
        %v7661 = vld [vmem:[#allocation10 + $0x4c4] sm:$0xf]
        %v7662 = vld [vmem:[#allocation10 + $0x4c8] sm:$0xff]
        %v7663 = vld [vmem:[#allocation10 + $0x4d0] sm:$0xf]
        %v7664 = vld [vmem:[#allocation10 + $0x4d4] sm:$0xff]
        %v7665 = vld [vmem:[#allocation10 + $0x4dc] sm:$0xf]
        %v7666 = vld [vmem:[#allocation10 + $0x4e0] sm:$0xff]
        %v7667 = vld [vmem:[#allocation10 + $0x4e8] sm:$0xf]
        %v7668 = vld [vmem:[#allocation10 + $0x4ec] sm:$0xff]
        %v7669 = vld [vmem:[#allocation10 + $0x4f4] sm:$0xf]
        %v7670 = vld [vmem:[#allocation10 + $0x4f8] sm:$0xff]
        %v7671 = vld [vmem:[#allocation10 + $0x500] sm:$0xf]
        %v7672 = vld [vmem:[#allocation10 + $0x504] sm:$0xff]
        %v7673 = vld [vmem:[#allocation10 + $0x50c] sm:$0xf]
        %v7674 = vld [vmem:[#allocation10 + $0x510] sm:$0xff]
        %v7675 = vld [vmem:[#allocation10 + $0x518] sm:$0xf]
        %v7676 = vld [vmem:[#allocation10 + $0x51c] sm:$0xff]
        %v7677 = vld [vmem:[#allocation10 + $0x524] sm:$0xf]
        %v7678 = vld [vmem:[#allocation10 + $0x528] sm:$0xff]
        %v7679 = vld [vmem:[#allocation10 + $0x530] sm:$0xf]
        %v7680 = vld [vmem:[#allocation10 + $0x534] sm:$0xff]
        %v7681 = vld [vmem:[#allocation10 + $0x53c] sm:$0xf]
        %v7682 = vld [vmem:[#allocation10 + $0x540] sm:$0xff]
        %v7683 = vld [vmem:[#allocation10 + $0x548] sm:$0xf]
        %v7684 = vld [vmem:[#allocation10 + $0x54c] sm:$0xff]
        %v7685 = vld [vmem:[#allocation10 + $0x554] sm:$0xf]
        %v7686 = vld [vmem:[#allocation10 + $0x558] sm:$0xff]
        %v7687 = vld [vmem:[#allocation10 + $0x560] sm:$0xf]
        %v7688 = vld [vmem:[#allocation10 + $0x564] sm:$0xff]
        %v7689 = vld [vmem:[#allocation10 + $0x56c] sm:$0xf]
        %v7690 = vld [vmem:[#allocation10 + $0x570] sm:$0xff]
        %v7691 = vld [vmem:[#allocation10 + $0x578] sm:$0xf]
        %v7692 = vld [vmem:[#allocation10 + $0x57c] sm:$0xff]
        %v7693 = vld [vmem:[#allocation10 + $0x584] sm:$0xf]
        %v7694 = vld [vmem:[#allocation10 + $0x588] sm:$0xff]
        %v7695 = vld [vmem:[#allocation10 + $0x590] sm:$0xf]
        %v7696 = vld [vmem:[#allocation10 + $0x594] sm:$0xff]
        %v7697 = vld [vmem:[#allocation10 + $0x59c] sm:$0xf]
        %v7698 = vld [vmem:[#allocation10 + $0x5a0] sm:$0xff]
        %v7699 = vld [vmem:[#allocation10 + $0x5a8] sm:$0xf]
        %v7700 = vld [vmem:[#allocation10 + $0x5ac] sm:$0xff]
        %v7701 = vld [vmem:[#allocation10 + $0x5b4] sm:$0xf]
        %v7702 = vld [vmem:[#allocation10 + $0x5b8] sm:$0xff]
        %v7703 = vld [vmem:[#allocation10 + $0x5c0] sm:$0xf]
        %v7704 = vld [vmem:[#allocation10 + $0x5c4] sm:$0xff]
        %v7705 = vld [vmem:[#allocation10 + $0x5cc] sm:$0xf]
        %v7706 = vld [vmem:[#allocation10 + $0x5d0] sm:$0xff]
        %v7707 = vld [vmem:[#allocation10 + $0x5d8] sm:$0xf]
        %v7708 = vld [vmem:[#allocation10 + $0x5dc] sm:$0xff]
        %v7709 = vld [vmem:[#allocation10 + $0x5e4] sm:$0xf]
        %v7710 = vld [vmem:[#allocation10 + $0x5e8] sm:$0xff]
        %v7711 = vld [vmem:[#allocation10 + $0x5f0] sm:$0xf]
        %v7712 = vld [vmem:[#allocation10 + $0x5f4] sm:$0xff]
        %v7713 = vld [vmem:[#allocation10 + $0x5fc] sm:$0xf]
        %v7714 = vld [vmem:[#allocation10 + $0x600] sm:$0xff]
        %v7715 = vld [vmem:[#allocation10 + $0x608] sm:$0xf]
        %v7716 = vld [vmem:[#allocation10 + $0x60c] sm:$0xff]
        %v7717 = vld [vmem:[#allocation10 + $0x614] sm:$0xf]
        %v7718 = vld [vmem:[#allocation10 + $0x618] sm:$0xff]
        %v7719 = vld [vmem:[#allocation10 + $0x620] sm:$0xf]
        %v7720 = vld [vmem:[#allocation10 + $0x624] sm:$0xff]
        %v7721 = vld [vmem:[#allocation10 + $0x62c] sm:$0xf]
        %v7722 = vld [vmem:[#allocation10 + $0x630] sm:$0xff]
        %v7723 = vld [vmem:[#allocation10 + $0x638] sm:$0xf]
        %v7724 = vld [vmem:[#allocation10 + $0x63c] sm:$0xff]
        %v7725 = vld [vmem:[#allocation10 + $0x644] sm:$0xf]
        %v7726 = vld [vmem:[#allocation10 + $0x648] sm:$0xff]
        %v7727 = vld [vmem:[#allocation10 + $0x650] sm:$0xf]
        %v7728 = vld [vmem:[#allocation10 + $0x654] sm:$0xff]
        %v7729 = vld [vmem:[#allocation10 + $0x65c] sm:$0xf]
        %v7730 = vld [vmem:[#allocation10 + $0x660] sm:$0xff]
        %v7731 = vld [vmem:[#allocation10 + $0x668] sm:$0xf]
        %v7732 = vld [vmem:[#allocation10 + $0x66c] sm:$0xff]
        %v7733 = vld [vmem:[#allocation10 + $0x674] sm:$0xf]
        %v7734 = vld [vmem:[#allocation10 + $0x678] sm:$0xff]
        %v7735 = vld [vmem:[#allocation10 + $0x680] sm:$0xf]
        %v7736 = vld [vmem:[#allocation10 + $0x684] sm:$0xff]
        %v7737 = vld [vmem:[#allocation10 + $0x68c] sm:$0xf]
        %v7738 = vld [vmem:[#allocation10 + $0x690] sm:$0xff]
        %v7739 = vld [vmem:[#allocation10 + $0x698] sm:$0xf]
        %v7740 = vld [vmem:[#allocation10 + $0x69c] sm:$0xff]
        %v7741 = vld [vmem:[#allocation10 + $0x6a4] sm:$0xf]
        %v7742 = vld [vmem:[#allocation10 + $0x6a8] sm:$0xff]
        %v7743 = vld [vmem:[#allocation10 + $0x6b0] sm:$0xf]
        %v7744 = vld [vmem:[#allocation10 + $0x6b4] sm:$0xff]
        %v7745 = vld [vmem:[#allocation10 + $0x6bc] sm:$0xf]
        %v7746 = vld [vmem:[#allocation10 + $0x6c0] sm:$0xff]
        %v7747 = vld [vmem:[#allocation10 + $0x6c8] sm:$0xf]
        %v7748 = vld [vmem:[#allocation10 + $0x6cc] sm:$0xff]
        %v7749 = vld [vmem:[#allocation10 + $0x6d4] sm:$0xf]
        %v7750 = vld [vmem:[#allocation10 + $0x6d8] sm:$0xff]
        %v7751 = vld [vmem:[#allocation10 + $0x6e0] sm:$0xf]
        %v7752 = vld [vmem:[#allocation10 + $0x6e4] sm:$0xff]
        %v7753 = vld [vmem:[#allocation10 + $0x6ec] sm:$0xf]
        %v7754 = vld [vmem:[#allocation10 + $0x6f0] sm:$0xff]
        %v7755 = vld [vmem:[#allocation10 + $0x6f8] sm:$0xf]
        %v7756 = vld [vmem:[#allocation10 + $0x6fc] sm:$0xff]
        %v7757 = vld [vmem:[#allocation10 + $0x704] sm:$0xf]
        %v7758 = vld [vmem:[#allocation10 + $0x708] sm:$0xff]
        %v7759 = vld [vmem:[#allocation10 + $0x710] sm:$0xf]
        %v7760 = vld [vmem:[#allocation10 + $0x714] sm:$0xff]
        %v7761 = vld [vmem:[#allocation10 + $0x71c] sm:$0xf]
        %v7762 = vld [vmem:[#allocation10 + $0x720] sm:$0xff]
        %v7763 = vld [vmem:[#allocation10 + $0x728] sm:$0xf]
        %v7764 = vld [vmem:[#allocation10 + $0x72c] sm:$0xff]
        %v7765 = vld [vmem:[#allocation10 + $0x734] sm:$0xf]
        %v7766 = vld [vmem:[#allocation10 + $0x738] sm:$0xff]
        %v7767 = vld [vmem:[#allocation10 + $0x740] sm:$0xf]
        %v7768 = vld [vmem:[#allocation10 + $0x744] sm:$0xff]
        %v7769 = vld [vmem:[#allocation10 + $0x74c] sm:$0xf]
        %v7770 = vld [vmem:[#allocation10 + $0x750] sm:$0xff]
        %v7771 = vld [vmem:[#allocation10 + $0x758] sm:$0xf]
        %v7772 = vld [vmem:[#allocation10 + $0x75c] sm:$0xff]
        %v7773 = vld [vmem:[#allocation10 + $0x764] sm:$0xf]
        %v7774 = vld [vmem:[#allocation10 + $0x768] sm:$0xff]
        %v7775 = vld [vmem:[#allocation10 + $0x770] sm:$0xf]
        %v7776 = vld [vmem:[#allocation10 + $0x774] sm:$0xff]
        %v7777 = vld [vmem:[#allocation10 + $0x77c] sm:$0xf]
        %v7778 = vld [vmem:[#allocation10 + $0x780] sm:$0xff]
        %v7779 = vld [vmem:[#allocation10 + $0x788] sm:$0xf]
        %v7780 = vld [vmem:[#allocation10 + $0x78c] sm:$0xff]
        %v7781 = vld [vmem:[#allocation10 + $0x794] sm:$0xf]
        %v7782 = vld [vmem:[#allocation10 + $0x798] sm:$0xff]
        %v7783 = vld [vmem:[#allocation10 + $0x7a0] sm:$0xf]
        %v7784 = vld [vmem:[#allocation10 + $0x7a4] sm:$0xff]
        %v7785 = vld [vmem:[#allocation10 + $0x7ac] sm:$0xf]
        %v7786 = vld [vmem:[#allocation10 + $0x7b0] sm:$0xff]
        %v7787 = vld [vmem:[#allocation10 + $0x7b8] sm:$0xf]
        %v7788 = vld [vmem:[#allocation10 + $0x7bc] sm:$0xff]
        %v7789 = vld [vmem:[#allocation10 + $0x7c4] sm:$0xf]
        %v7790 = vld [vmem:[#allocation10 + $0x7c8] sm:$0xff]
        %v7791 = vld [vmem:[#allocation10 + $0x7d0] sm:$0xf]
        %v7792 = vld [vmem:[#allocation10 + $0x7d4] sm:$0xff]
        %v7793 = vld [vmem:[#allocation10 + $0x7dc] sm:$0xf]
        %v7794 = vld [vmem:[#allocation10 + $0x7e0] sm:$0xff]
        %v7795 = vld [vmem:[#allocation10 + $0x7e8] sm:$0xf]
        %v7796 = vld [vmem:[#allocation10 + $0x7ec] sm:$0xff]
        %v7797 = vld [vmem:[#allocation10 + $0x7f4] sm:$0xf]
        %v7798 = vld [vmem:[#allocation10 + $0x7f8] sm:$0xff]
        %v7799 = vld [vmem:[#allocation10 + $0x800] sm:$0xf]
        %v7800 = vld [vmem:[#allocation10 + $0x804] sm:$0xff]
        %v7801 = vld [vmem:[#allocation10 + $0x80c] sm:$0xf]
        %v7802 = vld [vmem:[#allocation10 + $0x810] sm:$0xff]
        %v7803 = vld [vmem:[#allocation10 + $0x818] sm:$0xf]
        %v7804 = vld [vmem:[#allocation10 + $0x81c] sm:$0xff]
        %v7805 = vld [vmem:[#allocation10 + $0x824] sm:$0xf]
        %v7806 = vld [vmem:[#allocation10 + $0x828] sm:$0xff]
        %v7807 = vld [vmem:[#allocation10 + $0x830] sm:$0xf]
        %v7808 = vld [vmem:[#allocation10 + $0x834] sm:$0xff]
        %v7809 = vld [vmem:[#allocation10 + $0x83c] sm:$0xf]
        %v7810 = vld [vmem:[#allocation10 + $0x840] sm:$0xff]
        %v7811 = vld [vmem:[#allocation10 + $0x848] sm:$0xf]
        %v7812 = vld [vmem:[#allocation10 + $0x84c] sm:$0xff]
        %v7813 = vld [vmem:[#allocation10 + $0x854] sm:$0xf]
        %v7814 = vld [vmem:[#allocation10 + $0x858] sm:$0xff]
        %v7815 = vld [vmem:[#allocation10 + $0x860] sm:$0xf]
        %v7816 = vld [vmem:[#allocation10 + $0x864] sm:$0xff]
        %v7817 = vld [vmem:[#allocation10 + $0x86c] sm:$0xf]
        %v7818 = vld [vmem:[#allocation10 + $0x870] sm:$0xff]
        %v7819 = vld [vmem:[#allocation10 + $0x878] sm:$0xf]
        %v7820 = vld [vmem:[#allocation10 + $0x87c] sm:$0xff]
        %v7821 = vld [vmem:[#allocation10 + $0x884] sm:$0xf]
        %v7822 = vld [vmem:[#allocation10 + $0x888] sm:$0xff]
        %v7823 = vld [vmem:[#allocation10 + $0x890] sm:$0xf]
        %v7824 = vld [vmem:[#allocation10 + $0x894] sm:$0xff]
        %v7825 = vld [vmem:[#allocation10 + $0x89c] sm:$0xf]
        %v7826 = vld [vmem:[#allocation10 + $0x8a0] sm:$0xff]
        %v7827 = vld [vmem:[#allocation10 + $0x8a8] sm:$0xf]
        %v7828 = vld [vmem:[#allocation10 + $0x8ac] sm:$0xff]
        %v7829 = vld [vmem:[#allocation10 + $0x8b4] sm:$0xf]
        %v7830 = vld [vmem:[#allocation10 + $0x8b8] sm:$0xff]
        %v7831 = vld [vmem:[#allocation10 + $0x8c0] sm:$0xf]
        %v7832 = vld [vmem:[#allocation10 + $0x8c4] sm:$0xff]
        %v7833 = vld [vmem:[#allocation10 + $0x8cc] sm:$0xf]
        %v7834 = vld [vmem:[#allocation10 + $0x8d0] sm:$0xff]
        %v7835 = vld [vmem:[#allocation10 + $0x8d8] sm:$0xf]
        %v7836 = vld [vmem:[#allocation10 + $0x8dc] sm:$0xff]
        %v7837 = vld [vmem:[#allocation10 + $0x8e4] sm:$0xf]
        %v7838 = vld [vmem:[#allocation10 + $0x8e8] sm:$0xff]
        %v7839 = vld [vmem:[#allocation10 + $0x8f0] sm:$0xf]
        %v7840 = vld [vmem:[#allocation10 + $0x8f4] sm:$0xff]
        %v7841 = vld [vmem:[#allocation10 + $0x8fc] sm:$0xf]
        %v7843 = vperm.slane %v361, 0
        %v7844 = vperm.slane %v361, 1
        %v7845 = vperm.slane %v361, 2
        %v8233 = vunpack.c.l.b16 %v7458
        %v8234 = vunpack.c.h.b16 %v7458
        %v8235 = vunpack.c.l.b16 %v7459
        %v8236 = vunpack.c.l.b16 %v7460
        %v8237 = vunpack.c.h.b16 %v7460
        %v8238 = vunpack.c.l.b16 %v7461
        %v8239 = vunpack.c.l.b16 %v7462
        %v8240 = vunpack.c.h.b16 %v7462
        %v8241 = vunpack.c.l.b16 %v7463
        %v8242 = vunpack.c.l.b16 %v7464
        %v8243 = vunpack.c.h.b16 %v7464
        %v8244 = vunpack.c.l.b16 %v7465
        %v8245 = vunpack.c.l.b16 %v7466
        %v8246 = vunpack.c.h.b16 %v7466
        %v8247 = vunpack.c.l.b16 %v7467
        %v8248 = vunpack.c.l.b16 %v7468
        %v8249 = vunpack.c.h.b16 %v7468
        %v8250 = vunpack.c.l.b16 %v7469
        %v8251 = vunpack.c.l.b16 %v7470
        %v8252 = vunpack.c.h.b16 %v7470
        %v8253 = vunpack.c.l.b16 %v7471
        %v8254 = vunpack.c.l.b16 %v7472
        %v8255 = vunpack.c.h.b16 %v7472
        %v8256 = vunpack.c.l.b16 %v7473
        %v8257 = vunpack.c.l.b16 %v7474
        %v8258 = vunpack.c.h.b16 %v7474
        %v8259 = vunpack.c.l.b16 %v7475
        %v8260 = vunpack.c.l.b16 %v7476
        %v8261 = vunpack.c.h.b16 %v7476
        %v8262 = vunpack.c.l.b16 %v7477
        %v8263 = vunpack.c.l.b16 %v7478
        %v8264 = vunpack.c.h.b16 %v7478
        %v8265 = vunpack.c.l.b16 %v7479
        %v8266 = vunpack.c.l.b16 %v7480
        %v8267 = vunpack.c.h.b16 %v7480
        %v8268 = vunpack.c.l.b16 %v7481
        %v8269 = vunpack.c.l.b16 %v7482
        %v8270 = vunpack.c.h.b16 %v7482
        %v8271 = vunpack.c.l.b16 %v7483
        %v8272 = vunpack.c.l.b16 %v7484
        %v8273 = vunpack.c.h.b16 %v7484
        %v8274 = vunpack.c.l.b16 %v7485
        %v8275 = vunpack.c.l.b16 %v7486
        %v8276 = vunpack.c.h.b16 %v7486
        %v8277 = vunpack.c.l.b16 %v7487
        %v8278 = vunpack.c.l.b16 %v7488
        %v8279 = vunpack.c.h.b16 %v7488
        %v8280 = vunpack.c.l.b16 %v7489
        %v8281 = vunpack.c.l.b16 %v7490
        %v8282 = vunpack.c.h.b16 %v7490
        %v8283 = vunpack.c.l.b16 %v7491
        %v8284 = vunpack.c.l.b16 %v7492
        %v8285 = vunpack.c.h.b16 %v7492
        %v8286 = vunpack.c.l.b16 %v7493
        %v8287 = vunpack.c.l.b16 %v7494
        %v8288 = vunpack.c.h.b16 %v7494
        %v8289 = vunpack.c.l.b16 %v7495
        %v8290 = vunpack.c.l.b16 %v7496
        %v8291 = vunpack.c.h.b16 %v7496
        %v8292 = vunpack.c.l.b16 %v7497
        %v8293 = vunpack.c.l.b16 %v7498
        %v8294 = vunpack.c.h.b16 %v7498
        %v8295 = vunpack.c.l.b16 %v7499
        %v8296 = vunpack.c.l.b16 %v7500
        %v8297 = vunpack.c.h.b16 %v7500
        %v8298 = vunpack.c.l.b16 %v7501
        %v8299 = vunpack.c.l.b16 %v7502
        %v8300 = vunpack.c.h.b16 %v7502
        %v8301 = vunpack.c.l.b16 %v7503
        %v8302 = vunpack.c.l.b16 %v7504
        %v8303 = vunpack.c.h.b16 %v7504
        %v8304 = vunpack.c.l.b16 %v7505
        %v8305 = vunpack.c.l.b16 %v7506
        %v8306 = vunpack.c.h.b16 %v7506
        %v8307 = vunpack.c.l.b16 %v7507
        %v8308 = vunpack.c.l.b16 %v7508
        %v8309 = vunpack.c.h.b16 %v7508
        %v8310 = vunpack.c.l.b16 %v7509
        %v8311 = vunpack.c.l.b16 %v7510
        %v8312 = vunpack.c.h.b16 %v7510
        %v8313 = vunpack.c.l.b16 %v7511
        %v8314 = vunpack.c.l.b16 %v7512
        %v8315 = vunpack.c.h.b16 %v7512
        %v8316 = vunpack.c.l.b16 %v7513
        %v8317 = vunpack.c.l.b16 %v7514
        %v8318 = vunpack.c.h.b16 %v7514
        %v8319 = vunpack.c.l.b16 %v7515
        %v8320 = vunpack.c.l.b16 %v7516
        %v8321 = vunpack.c.h.b16 %v7516
        %v8322 = vunpack.c.l.b16 %v7517
        %v8323 = vunpack.c.l.b16 %v7518
        %v8324 = vunpack.c.h.b16 %v7518
        %v8325 = vunpack.c.l.b16 %v7519
        %v8326 = vunpack.c.l.b16 %v7520
        %v8327 = vunpack.c.h.b16 %v7520
        %v8328 = vunpack.c.l.b16 %v7521
        %v8329 = vunpack.c.l.b16 %v7522
        %v8330 = vunpack.c.h.b16 %v7522
        %v8331 = vunpack.c.l.b16 %v7523
        %v8332 = vunpack.c.l.b16 %v7524
        %v8333 = vunpack.c.h.b16 %v7524
        %v8334 = vunpack.c.l.b16 %v7525
        %v8335 = vunpack.c.l.b16 %v7526
        %v8336 = vunpack.c.h.b16 %v7526
        %v8337 = vunpack.c.l.b16 %v7527
        %v8338 = vunpack.c.l.b16 %v7528
        %v8339 = vunpack.c.h.b16 %v7528
        %v8340 = vunpack.c.l.b16 %v7529
        %v8341 = vunpack.c.l.b16 %v7530
        %v8342 = vunpack.c.h.b16 %v7530
        %v8343 = vunpack.c.l.b16 %v7531
        %v8344 = vunpack.c.l.b16 %v7532
        %v8345 = vunpack.c.h.b16 %v7532
        %v8346 = vunpack.c.l.b16 %v7533
        %v8347 = vunpack.c.l.b16 %v7534
        %v8348 = vunpack.c.h.b16 %v7534
        %v8349 = vunpack.c.l.b16 %v7535
        %v8350 = vunpack.c.l.b16 %v7536
        %v8351 = vunpack.c.h.b16 %v7536
        %v8352 = vunpack.c.l.b16 %v7537
        %v8353 = vunpack.c.l.b16 %v7538
        %v8354 = vunpack.c.h.b16 %v7538
        %v8355 = vunpack.c.l.b16 %v7539
        %v8356 = vunpack.c.l.b16 %v7540
        %v8357 = vunpack.c.h.b16 %v7540
        %v8358 = vunpack.c.l.b16 %v7541
        %v8359 = vunpack.c.l.b16 %v7542
        %v8360 = vunpack.c.h.b16 %v7542
        %v8361 = vunpack.c.l.b16 %v7543
        %v8362 = vunpack.c.l.b16 %v7544
        %v8363 = vunpack.c.h.b16 %v7544
        %v8364 = vunpack.c.l.b16 %v7545
        %v8365 = vunpack.c.l.b16 %v7546
        %v8366 = vunpack.c.h.b16 %v7546
        %v8367 = vunpack.c.l.b16 %v7547
        %v8368 = vunpack.c.l.b16 %v7548
        %v8369 = vunpack.c.h.b16 %v7548
        %v8370 = vunpack.c.l.b16 %v7549
        %v8371 = vunpack.c.l.b16 %v7550
        %v8372 = vunpack.c.h.b16 %v7550
        %v8373 = vunpack.c.l.b16 %v7551
        %v8374 = vunpack.c.l.b16 %v7552
        %v8375 = vunpack.c.h.b16 %v7552
        %v8376 = vunpack.c.l.b16 %v7553
        %v8377 = vunpack.c.l.b16 %v7554
        %v8378 = vunpack.c.h.b16 %v7554
        %v8379 = vunpack.c.l.b16 %v7555
        %v8380 = vunpack.c.l.b16 %v7556
        %v8381 = vunpack.c.h.b16 %v7556
        %v8382 = vunpack.c.l.b16 %v7557
        %v8383 = vunpack.c.l.b16 %v7558
        %v8384 = vunpack.c.h.b16 %v7558
        %v8385 = vunpack.c.l.b16 %v7559
        %v8386 = vunpack.c.l.b16 %v7560
        %v8387 = vunpack.c.h.b16 %v7560
        %v8388 = vunpack.c.l.b16 %v7561
        %v8389 = vunpack.c.l.b16 %v7562
        %v8390 = vunpack.c.h.b16 %v7562
        %v8391 = vunpack.c.l.b16 %v7563
        %v8392 = vunpack.c.l.b16 %v7564
        %v8393 = vunpack.c.h.b16 %v7564
        %v8394 = vunpack.c.l.b16 %v7565
        %v8395 = vunpack.c.l.b16 %v7566
        %v8396 = vunpack.c.h.b16 %v7566
        %v8397 = vunpack.c.l.b16 %v7567
        %v8398 = vunpack.c.l.b16 %v7568
        %v8399 = vunpack.c.h.b16 %v7568
        %v8400 = vunpack.c.l.b16 %v7569
        %v8401 = vunpack.c.l.b16 %v7570
        %v8402 = vunpack.c.h.b16 %v7570
        %v8403 = vunpack.c.l.b16 %v7571
        %v8404 = vunpack.c.l.b16 %v7572
        %v8405 = vunpack.c.h.b16 %v7572
        %v8406 = vunpack.c.l.b16 %v7573
        %v8407 = vunpack.c.l.b16 %v7574
        %v8408 = vunpack.c.h.b16 %v7574
        %v8409 = vunpack.c.l.b16 %v7575
        %v8410 = vunpack.c.l.b16 %v7576
        %v8411 = vunpack.c.h.b16 %v7576
        %v8412 = vunpack.c.l.b16 %v7577
        %v8413 = vunpack.c.l.b16 %v7578
        %v8414 = vunpack.c.h.b16 %v7578
        %v8415 = vunpack.c.l.b16 %v7579
        %v8416 = vunpack.c.l.b16 %v7580
        %v8417 = vunpack.c.h.b16 %v7580
        %v8418 = vunpack.c.l.b16 %v7581
        %v8419 = vunpack.c.l.b16 %v7582
        %v8420 = vunpack.c.h.b16 %v7582
        %v8421 = vunpack.c.l.b16 %v7583
        %v8422 = vunpack.c.l.b16 %v7584
        %v8423 = vunpack.c.h.b16 %v7584
        %v8424 = vunpack.c.l.b16 %v7585
        %v8425 = vunpack.c.l.b16 %v7586
        %v8426 = vunpack.c.h.b16 %v7586
        %v8427 = vunpack.c.l.b16 %v7587
        %v8428 = vunpack.c.l.b16 %v7588
        %v8429 = vunpack.c.h.b16 %v7588
        %v8430 = vunpack.c.l.b16 %v7589
        %v8431 = vunpack.c.l.b16 %v7590
        %v8432 = vunpack.c.h.b16 %v7590
        %v8433 = vunpack.c.l.b16 %v7591
        %v8434 = vunpack.c.l.b16 %v7592
        %v8435 = vunpack.c.h.b16 %v7592
        %v8436 = vunpack.c.l.b16 %v7593
        %v8437 = vunpack.c.l.b16 %v7594
        %v8438 = vunpack.c.h.b16 %v7594
        %v8439 = vunpack.c.l.b16 %v7595
        %v8440 = vunpack.c.l.b16 %v7596
        %v8441 = vunpack.c.h.b16 %v7596
        %v8442 = vunpack.c.l.b16 %v7597
        %v8443 = vunpack.c.l.b16 %v7598
        %v8444 = vunpack.c.h.b16 %v7598
        %v8445 = vunpack.c.l.b16 %v7599
        %v8446 = vunpack.c.l.b16 %v7600
        %v8447 = vunpack.c.h.b16 %v7600
        %v8448 = vunpack.c.l.b16 %v7601
        %v8449 = vunpack.c.l.b16 %v7602
        %v8450 = vunpack.c.h.b16 %v7602
        %v8451 = vunpack.c.l.b16 %v7603
        %v8452 = vunpack.c.l.b16 %v7604
        %v8453 = vunpack.c.h.b16 %v7604
        %v8454 = vunpack.c.l.b16 %v7605
        %v8455 = vunpack.c.l.b16 %v7606
        %v8456 = vunpack.c.h.b16 %v7606
        %v8457 = vunpack.c.l.b16 %v7607
        %v8458 = vunpack.c.l.b16 %v7608
        %v8459 = vunpack.c.h.b16 %v7608
        %v8460 = vunpack.c.l.b16 %v7609
        %v8461 = vunpack.c.l.b16 %v7610
        %v8462 = vunpack.c.h.b16 %v7610
        %v8463 = vunpack.c.l.b16 %v7611
        %v8464 = vunpack.c.l.b16 %v7612
        %v8465 = vunpack.c.h.b16 %v7612
        %v8466 = vunpack.c.l.b16 %v7613
        %v8467 = vunpack.c.l.b16 %v7614
        %v8468 = vunpack.c.h.b16 %v7614
        %v8469 = vunpack.c.l.b16 %v7615
        %v8470 = vunpack.c.l.b16 %v7616
        %v8471 = vunpack.c.h.b16 %v7616
        %v8472 = vunpack.c.l.b16 %v7617
        %v8473 = vunpack.c.l.b16 %v7618
        %v8474 = vunpack.c.h.b16 %v7618
        %v8475 = vunpack.c.l.b16 %v7619
        %v8476 = vunpack.c.l.b16 %v7620
        %v8477 = vunpack.c.h.b16 %v7620
        %v8478 = vunpack.c.l.b16 %v7621
        %v8479 = vunpack.c.l.b16 %v7622
        %v8480 = vunpack.c.h.b16 %v7622
        %v8481 = vunpack.c.l.b16 %v7623
        %v8482 = vunpack.c.l.b16 %v7624
        %v8483 = vunpack.c.h.b16 %v7624
        %v8484 = vunpack.c.l.b16 %v7625
        %v8485 = vunpack.c.l.b16 %v7626
        %v8486 = vunpack.c.h.b16 %v7626
        %v8487 = vunpack.c.l.b16 %v7627
        %v8488 = vunpack.c.l.b16 %v7628
        %v8489 = vunpack.c.h.b16 %v7628
        %v8490 = vunpack.c.l.b16 %v7629
        %v8491 = vunpack.c.l.b16 %v7630
        %v8492 = vunpack.c.h.b16 %v7630
        %v8493 = vunpack.c.l.b16 %v7631
        %v8494 = vunpack.c.l.b16 %v7632
        %v8495 = vunpack.c.h.b16 %v7632
        %v8496 = vunpack.c.l.b16 %v7633
        %v8497 = vunpack.c.l.b16 %v7634
        %v8498 = vunpack.c.h.b16 %v7634
        %v8499 = vunpack.c.l.b16 %v7635
        %v8500 = vunpack.c.l.b16 %v7636
        %v8501 = vunpack.c.h.b16 %v7636
        %v8502 = vunpack.c.l.b16 %v7637
        %v8503 = vunpack.c.l.b16 %v7638
        %v8504 = vunpack.c.h.b16 %v7638
        %v8505 = vunpack.c.l.b16 %v7639
        %v8506 = vunpack.c.l.b16 %v7640
        %v8507 = vunpack.c.h.b16 %v7640
        %v8508 = vunpack.c.l.b16 %v7641
        %v8509 = vunpack.c.l.b16 %v7642
        %v8510 = vunpack.c.h.b16 %v7642
        %v8511 = vunpack.c.l.b16 %v7643
        %v8512 = vunpack.c.l.b16 %v7644
        %v8513 = vunpack.c.h.b16 %v7644
        %v8514 = vunpack.c.l.b16 %v7645
        %v8515 = vunpack.c.l.b16 %v7646
        %v8516 = vunpack.c.h.b16 %v7646
        %v8517 = vunpack.c.l.b16 %v7647
        %v8518 = vunpack.c.l.b16 %v7648
        %v8519 = vunpack.c.h.b16 %v7648
        %v8520 = vunpack.c.l.b16 %v7649
        %v8521 = vunpack.c.l.b16 %v7650
        %v8522 = vunpack.c.h.b16 %v7650
        %v8523 = vunpack.c.l.b16 %v7651
        %v8524 = vunpack.c.l.b16 %v7652
        %v8525 = vunpack.c.h.b16 %v7652
        %v8526 = vunpack.c.l.b16 %v7653
        %v8527 = vunpack.c.l.b16 %v7654
        %v8528 = vunpack.c.h.b16 %v7654
        %v8529 = vunpack.c.l.b16 %v7655
        %v8530 = vunpack.c.l.b16 %v7656
        %v8531 = vunpack.c.h.b16 %v7656
        %v8532 = vunpack.c.l.b16 %v7657
        %v8533 = vunpack.c.l.b16 %v7658
        %v8534 = vunpack.c.h.b16 %v7658
        %v8535 = vunpack.c.l.b16 %v7659
        %v8536 = vunpack.c.l.b16 %v7660
        %v8537 = vunpack.c.h.b16 %v7660
        %v8538 = vunpack.c.l.b16 %v7661
        %v8539 = vunpack.c.l.b16 %v7662
        %v8540 = vunpack.c.h.b16 %v7662
        %v8541 = vunpack.c.l.b16 %v7663
        %v8542 = vunpack.c.l.b16 %v7664
        %v8543 = vunpack.c.h.b16 %v7664
        %v8544 = vunpack.c.l.b16 %v7665
        %v8545 = vunpack.c.l.b16 %v7666
        %v8546 = vunpack.c.h.b16 %v7666
        %v8547 = vunpack.c.l.b16 %v7667
        %v8548 = vunpack.c.l.b16 %v7668
        %v8549 = vunpack.c.h.b16 %v7668
        %v8550 = vunpack.c.l.b16 %v7669
        %v8551 = vunpack.c.l.b16 %v7670
        %v8552 = vunpack.c.h.b16 %v7670
        %v8553 = vunpack.c.l.b16 %v7671
        %v8554 = vunpack.c.l.b16 %v7672
        %v8555 = vunpack.c.h.b16 %v7672
        %v8556 = vunpack.c.l.b16 %v7673
        %v8557 = vunpack.c.l.b16 %v7674
        %v8558 = vunpack.c.h.b16 %v7674
        %v8559 = vunpack.c.l.b16 %v7675
        %v8560 = vunpack.c.l.b16 %v7676
        %v8561 = vunpack.c.h.b16 %v7676
        %v8562 = vunpack.c.l.b16 %v7677
        %v8563 = vunpack.c.l.b16 %v7678
        %v8564 = vunpack.c.h.b16 %v7678
        %v8565 = vunpack.c.l.b16 %v7679
        %v8566 = vunpack.c.l.b16 %v7680
        %v8567 = vunpack.c.h.b16 %v7680
        %v8568 = vunpack.c.l.b16 %v7681
        %v8569 = vunpack.c.l.b16 %v7682
        %v8570 = vunpack.c.h.b16 %v7682
        %v8571 = vunpack.c.l.b16 %v7683
        %v8572 = vunpack.c.l.b16 %v7684
        %v8573 = vunpack.c.h.b16 %v7684
        %v8574 = vunpack.c.l.b16 %v7685
        %v8575 = vunpack.c.l.b16 %v7686
        %v8576 = vunpack.c.h.b16 %v7686
        %v8577 = vunpack.c.l.b16 %v7687
        %v8578 = vunpack.c.l.b16 %v7688
        %v8579 = vunpack.c.h.b16 %v7688
        %v8580 = vunpack.c.l.b16 %v7689
        %v8581 = vunpack.c.l.b16 %v7690
        %v8582 = vunpack.c.h.b16 %v7690
        %v8583 = vunpack.c.l.b16 %v7691
        %v8584 = vunpack.c.l.b16 %v7692
        %v8585 = vunpack.c.h.b16 %v7692
        %v8586 = vunpack.c.l.b16 %v7693
        %v8587 = vunpack.c.l.b16 %v7694
        %v8588 = vunpack.c.h.b16 %v7694
        %v8589 = vunpack.c.l.b16 %v7695
        %v8590 = vunpack.c.l.b16 %v7696
        %v8591 = vunpack.c.h.b16 %v7696
        %v8592 = vunpack.c.l.b16 %v7697
        %v8593 = vunpack.c.l.b16 %v7698
        %v8594 = vunpack.c.h.b16 %v7698
        %v8595 = vunpack.c.l.b16 %v7699
        %v8596 = vunpack.c.l.b16 %v7700
        %v8597 = vunpack.c.h.b16 %v7700
        %v8598 = vunpack.c.l.b16 %v7701
        %v8599 = vunpack.c.l.b16 %v7702
        %v8600 = vunpack.c.h.b16 %v7702
        %v8601 = vunpack.c.l.b16 %v7703
        %v8602 = vunpack.c.l.b16 %v7704
        %v8603 = vunpack.c.h.b16 %v7704
        %v8604 = vunpack.c.l.b16 %v7705
        %v8605 = vunpack.c.l.b16 %v7706
        %v8606 = vunpack.c.h.b16 %v7706
        %v8607 = vunpack.c.l.b16 %v7707
        %v8608 = vunpack.c.l.b16 %v7708
        %v8609 = vunpack.c.h.b16 %v7708
        %v8610 = vunpack.c.l.b16 %v7709
        %v8611 = vunpack.c.l.b16 %v7710
        %v8612 = vunpack.c.h.b16 %v7710
        %v8613 = vunpack.c.l.b16 %v7711
        %v8614 = vunpack.c.l.b16 %v7712
        %v8615 = vunpack.c.h.b16 %v7712
        %v8616 = vunpack.c.l.b16 %v7713
        %v8617 = vunpack.c.l.b16 %v7714
        %v8618 = vunpack.c.h.b16 %v7714
        %v8619 = vunpack.c.l.b16 %v7715
        %v8620 = vunpack.c.l.b16 %v7716
        %v8621 = vunpack.c.h.b16 %v7716
        %v8622 = vunpack.c.l.b16 %v7717
        %v8623 = vunpack.c.l.b16 %v7718
        %v8624 = vunpack.c.h.b16 %v7718
        %v8625 = vunpack.c.l.b16 %v7719
        %v8626 = vunpack.c.l.b16 %v7720
        %v8627 = vunpack.c.h.b16 %v7720
        %v8628 = vunpack.c.l.b16 %v7721
        %v8629 = vunpack.c.l.b16 %v7722
        %v8630 = vunpack.c.h.b16 %v7722
        %v8631 = vunpack.c.l.b16 %v7723
        %v8632 = vunpack.c.l.b16 %v7724
        %v8633 = vunpack.c.h.b16 %v7724
        %v8634 = vunpack.c.l.b16 %v7725
        %v8635 = vunpack.c.l.b16 %v7726
        %v8636 = vunpack.c.h.b16 %v7726
        %v8637 = vunpack.c.l.b16 %v7727
        %v8638 = vunpack.c.l.b16 %v7728
        %v8639 = vunpack.c.h.b16 %v7728
        %v8640 = vunpack.c.l.b16 %v7729
        %v8641 = vunpack.c.l.b16 %v7730
        %v8642 = vunpack.c.h.b16 %v7730
        %v8643 = vunpack.c.l.b16 %v7731
        %v8644 = vunpack.c.l.b16 %v7732
        %v8645 = vunpack.c.h.b16 %v7732
        %v8646 = vunpack.c.l.b16 %v7733
        %v8647 = vunpack.c.l.b16 %v7734
        %v8648 = vunpack.c.h.b16 %v7734
        %v8649 = vunpack.c.l.b16 %v7735
        %v8650 = vunpack.c.l.b16 %v7736
        %v8651 = vunpack.c.h.b16 %v7736
        %v8652 = vunpack.c.l.b16 %v7737
        %v8653 = vunpack.c.l.b16 %v7738
        %v8654 = vunpack.c.h.b16 %v7738
        %v8655 = vunpack.c.l.b16 %v7739
        %v8656 = vunpack.c.l.b16 %v7740
        %v8657 = vunpack.c.h.b16 %v7740
        %v8658 = vunpack.c.l.b16 %v7741
        %v8659 = vunpack.c.l.b16 %v7742
        %v8660 = vunpack.c.h.b16 %v7742
        %v8661 = vunpack.c.l.b16 %v7743
        %v8662 = vunpack.c.l.b16 %v7744
        %v8663 = vunpack.c.h.b16 %v7744
        %v8664 = vunpack.c.l.b16 %v7745
        %v8665 = vunpack.c.l.b16 %v7746
        %v8666 = vunpack.c.h.b16 %v7746
        %v8667 = vunpack.c.l.b16 %v7747
        %v8668 = vunpack.c.l.b16 %v7748
        %v8669 = vunpack.c.h.b16 %v7748
        %v8670 = vunpack.c.l.b16 %v7749
        %v8671 = vunpack.c.l.b16 %v7750
        %v8672 = vunpack.c.h.b16 %v7750
        %v8673 = vunpack.c.l.b16 %v7751
        %v8674 = vunpack.c.l.b16 %v7752
        %v8675 = vunpack.c.h.b16 %v7752
        %v8676 = vunpack.c.l.b16 %v7753
        %v8677 = vunpack.c.l.b16 %v7754
        %v8678 = vunpack.c.h.b16 %v7754
        %v8679 = vunpack.c.l.b16 %v7755
        %v8680 = vunpack.c.l.b16 %v7756
        %v8681 = vunpack.c.h.b16 %v7756
        %v8682 = vunpack.c.l.b16 %v7757
        %v8683 = vunpack.c.l.b16 %v7758
        %v8684 = vunpack.c.h.b16 %v7758
        %v8685 = vunpack.c.l.b16 %v7759
        %v8686 = vunpack.c.l.b16 %v7760
        %v8687 = vunpack.c.h.b16 %v7760
        %v8688 = vunpack.c.l.b16 %v7761
        %v8689 = vunpack.c.l.b16 %v7762
        %v8690 = vunpack.c.h.b16 %v7762
        %v8691 = vunpack.c.l.b16 %v7763
        %v8692 = vunpack.c.l.b16 %v7764
        %v8693 = vunpack.c.h.b16 %v7764
        %v8694 = vunpack.c.l.b16 %v7765
        %v8695 = vunpack.c.l.b16 %v7766
        %v8696 = vunpack.c.h.b16 %v7766
        %v8697 = vunpack.c.l.b16 %v7767
        %v8698 = vunpack.c.l.b16 %v7768
        %v8699 = vunpack.c.h.b16 %v7768
        %v8700 = vunpack.c.l.b16 %v7769
        %v8701 = vunpack.c.l.b16 %v7770
        %v8702 = vunpack.c.h.b16 %v7770
        %v8703 = vunpack.c.l.b16 %v7771
        %v8704 = vunpack.c.l.b16 %v7772
        %v8705 = vunpack.c.h.b16 %v7772
        %v8706 = vunpack.c.l.b16 %v7773
        %v8707 = vunpack.c.l.b16 %v7774
        %v8708 = vunpack.c.h.b16 %v7774
        %v8709 = vunpack.c.l.b16 %v7775
        %v8710 = vunpack.c.l.b16 %v7776
        %v8711 = vunpack.c.h.b16 %v7776
        %v8712 = vunpack.c.l.b16 %v7777
        %v8713 = vunpack.c.l.b16 %v7778
        %v8714 = vunpack.c.h.b16 %v7778
        %v8715 = vunpack.c.l.b16 %v7779
        %v8716 = vunpack.c.l.b16 %v7780
        %v8717 = vunpack.c.h.b16 %v7780
        %v8718 = vunpack.c.l.b16 %v7781
        %v8719 = vunpack.c.l.b16 %v7782
        %v8720 = vunpack.c.h.b16 %v7782
        %v8721 = vunpack.c.l.b16 %v7783
        %v8722 = vunpack.c.l.b16 %v7784
        %v8723 = vunpack.c.h.b16 %v7784
        %v8724 = vunpack.c.l.b16 %v7785
        %v8725 = vunpack.c.l.b16 %v7786
        %v8726 = vunpack.c.h.b16 %v7786
        %v8727 = vunpack.c.l.b16 %v7787
        %v8728 = vunpack.c.l.b16 %v7788
        %v8729 = vunpack.c.h.b16 %v7788
        %v8730 = vunpack.c.l.b16 %v7789
        %v8731 = vunpack.c.l.b16 %v7790
        %v8732 = vunpack.c.h.b16 %v7790
        %v8733 = vunpack.c.l.b16 %v7791
        %v8734 = vunpack.c.l.b16 %v7792
        %v8735 = vunpack.c.h.b16 %v7792
        %v8736 = vunpack.c.l.b16 %v7793
        %v8737 = vunpack.c.l.b16 %v7794
        %v8738 = vunpack.c.h.b16 %v7794
        %v8739 = vunpack.c.l.b16 %v7795
        %v8740 = vunpack.c.l.b16 %v7796
        %v8741 = vunpack.c.h.b16 %v7796
        %v8742 = vunpack.c.l.b16 %v7797
        %v8743 = vunpack.c.l.b16 %v7798
        %v8744 = vunpack.c.h.b16 %v7798
        %v8745 = vunpack.c.l.b16 %v7799
        %v8746 = vunpack.c.l.b16 %v7800
        %v8747 = vunpack.c.h.b16 %v7800
        %v8748 = vunpack.c.l.b16 %v7801
        %v8749 = vunpack.c.l.b16 %v7802
        %v8750 = vunpack.c.h.b16 %v7802
        %v8751 = vunpack.c.l.b16 %v7803
        %v8752 = vunpack.c.l.b16 %v7804
        %v8753 = vunpack.c.h.b16 %v7804
        %v8754 = vunpack.c.l.b16 %v7805
        %v8755 = vunpack.c.l.b16 %v7806
        %v8756 = vunpack.c.h.b16 %v7806
        %v8757 = vunpack.c.l.b16 %v7807
        %v8758 = vunpack.c.l.b16 %v7808
        %v8759 = vunpack.c.h.b16 %v7808
        %v8760 = vunpack.c.l.b16 %v7809
        %v8761 = vunpack.c.l.b16 %v7810
        %v8762 = vunpack.c.h.b16 %v7810
        %v8763 = vunpack.c.l.b16 %v7811
        %v8764 = vunpack.c.l.b16 %v7812
        %v8765 = vunpack.c.h.b16 %v7812
        %v8766 = vunpack.c.l.b16 %v7813
        %v8767 = vunpack.c.l.b16 %v7814
        %v8768 = vunpack.c.h.b16 %v7814
        %v8769 = vunpack.c.l.b16 %v7815
        %v8770 = vunpack.c.l.b16 %v7816
        %v8771 = vunpack.c.h.b16 %v7816
        %v8772 = vunpack.c.l.b16 %v7817
        %v8773 = vunpack.c.l.b16 %v7818
        %v8774 = vunpack.c.h.b16 %v7818
        %v8775 = vunpack.c.l.b16 %v7819
        %v8776 = vunpack.c.l.b16 %v7820
        %v8777 = vunpack.c.h.b16 %v7820
        %v8778 = vunpack.c.l.b16 %v7821
        %v8779 = vunpack.c.l.b16 %v7822
        %v8780 = vunpack.c.h.b16 %v7822
        %v8781 = vunpack.c.l.b16 %v7823
        %v8782 = vunpack.c.l.b16 %v7824
        %v8783 = vunpack.c.h.b16 %v7824
        %v8784 = vunpack.c.l.b16 %v7825
        %v8785 = vunpack.c.l.b16 %v7826
        %v8786 = vunpack.c.h.b16 %v7826
        %v8787 = vunpack.c.l.b16 %v7827
        %v8788 = vunpack.c.l.b16 %v7828
        %v8789 = vunpack.c.h.b16 %v7828
        %v8790 = vunpack.c.l.b16 %v7829
        %v8791 = vunpack.c.l.b16 %v7830
        %v8792 = vunpack.c.h.b16 %v7830
        %v8793 = vunpack.c.l.b16 %v7831
        %v8794 = vunpack.c.l.b16 %v7832
        %v8795 = vunpack.c.h.b16 %v7832
        %v8796 = vunpack.c.l.b16 %v7833
        %v8797 = vunpack.c.l.b16 %v7834
        %v8798 = vunpack.c.h.b16 %v7834
        %v8799 = vunpack.c.l.b16 %v7835
        %v8800 = vunpack.c.l.b16 %v7836
        %v8801 = vunpack.c.h.b16 %v7836
        %v8802 = vunpack.c.l.b16 %v7837
        %v8803 = vunpack.c.l.b16 %v7838
        %v8804 = vunpack.c.h.b16 %v7838
        %v8805 = vunpack.c.l.b16 %v7839
        %v8806 = vunpack.c.l.b16 %v7840
        %v8807 = vunpack.c.h.b16 %v7840
        %v8808 = vunpack.c.l.b16 %v7841
        %v8809 = vpack.c.b16 %v8236, %v8233
        %v8810 = vpack.c.b16 %v8237, %v8234
        %v8811 = vpack.c.b16 %v8238, %v8235
        %v8812 = vpack.c.b16 %v8242, %v8239
        %v8813 = vpack.c.b16 %v8243, %v8240
        %v8814 = vpack.c.b16 %v8244, %v8241
        %v8815 = vpack.c.b16 %v8248, %v8245
        %v8816 = vpack.c.b16 %v8249, %v8246
        %v8817 = vpack.c.b16 %v8250, %v8247
        %v8818 = vpack.c.b16 %v8254, %v8251
        %v8819 = vpack.c.b16 %v8255, %v8252
        %v8820 = vpack.c.b16 %v8256, %v8253
        %v8821 = vpack.c.b16 %v8260, %v8257
        %v8822 = vpack.c.b16 %v8261, %v8258
        %v8823 = vpack.c.b16 %v8262, %v8259
        %v8824 = vpack.c.b16 %v8266, %v8263
        %v8825 = vpack.c.b16 %v8267, %v8264
        %v8826 = vpack.c.b16 %v8268, %v8265
        %v8827 = vpack.c.b16 %v8272, %v8269
        %v8828 = vpack.c.b16 %v8273, %v8270
        %v8829 = vpack.c.b16 %v8274, %v8271
        %v8830 = vpack.c.b16 %v8278, %v8275
        %v8831 = vpack.c.b16 %v8279, %v8276
        %v8832 = vpack.c.b16 %v8280, %v8277
        %v8833 = vpack.c.b16 %v8284, %v8281
        %v8834 = vpack.c.b16 %v8285, %v8282
        %v8835 = vpack.c.b16 %v8286, %v8283
        %v8836 = vpack.c.b16 %v8290, %v8287
        %v8837 = vpack.c.b16 %v8291, %v8288
        %v8838 = vpack.c.b16 %v8292, %v8289
        %v8839 = vpack.c.b16 %v8296, %v8293
        %v8840 = vpack.c.b16 %v8297, %v8294
        %v8841 = vpack.c.b16 %v8298, %v8295
        %v8842 = vpack.c.b16 %v8302, %v8299
        %v8843 = vpack.c.b16 %v8303, %v8300
        %v8844 = vpack.c.b16 %v8304, %v8301
        %v8845 = vpack.c.b16 %v8308, %v8305
        %v8846 = vpack.c.b16 %v8309, %v8306
        %v8847 = vpack.c.b16 %v8310, %v8307
        %v8848 = vpack.c.b16 %v8314, %v8311
        %v8849 = vpack.c.b16 %v8315, %v8312
        %v8850 = vpack.c.b16 %v8316, %v8313
        %v8851 = vpack.c.b16 %v8320, %v8317
        %v8852 = vpack.c.b16 %v8321, %v8318
        %v8853 = vpack.c.b16 %v8322, %v8319
        %v8854 = vpack.c.b16 %v8326, %v8323
        %v8855 = vpack.c.b16 %v8327, %v8324
        %v8856 = vpack.c.b16 %v8328, %v8325
        %v8857 = vpack.c.b16 %v8332, %v8329
        %v8858 = vpack.c.b16 %v8333, %v8330
        %v8859 = vpack.c.b16 %v8334, %v8331
        %v8860 = vpack.c.b16 %v8338, %v8335
        %v8861 = vpack.c.b16 %v8339, %v8336
        %v8862 = vpack.c.b16 %v8340, %v8337
        %v8863 = vpack.c.b16 %v8344, %v8341
        %v8864 = vpack.c.b16 %v8345, %v8342
        %v8865 = vpack.c.b16 %v8346, %v8343
        %v8866 = vpack.c.b16 %v8350, %v8347
        %v8867 = vpack.c.b16 %v8351, %v8348
        %v8868 = vpack.c.b16 %v8352, %v8349
        %v8869 = vpack.c.b16 %v8356, %v8353
        %v8870 = vpack.c.b16 %v8357, %v8354
        %v8871 = vpack.c.b16 %v8358, %v8355
        %v8872 = vpack.c.b16 %v8362, %v8359
        %v8873 = vpack.c.b16 %v8363, %v8360
        %v8874 = vpack.c.b16 %v8364, %v8361
        %v8875 = vpack.c.b16 %v8368, %v8365
        %v8876 = vpack.c.b16 %v8369, %v8366
        %v8877 = vpack.c.b16 %v8370, %v8367
        %v8878 = vpack.c.b16 %v8374, %v8371
        %v8879 = vpack.c.b16 %v8375, %v8372
        %v8880 = vpack.c.b16 %v8376, %v8373
        %v8881 = vpack.c.b16 %v8380, %v8377
        %v8882 = vpack.c.b16 %v8381, %v8378
        %v8883 = vpack.c.b16 %v8382, %v8379
        %v8884 = vpack.c.b16 %v8386, %v8383
        %v8885 = vpack.c.b16 %v8387, %v8384
        %v8886 = vpack.c.b16 %v8388, %v8385
        %v8887 = vpack.c.b16 %v8392, %v8389
        %v8888 = vpack.c.b16 %v8393, %v8390
        %v8889 = vpack.c.b16 %v8394, %v8391
        %v8890 = vpack.c.b16 %v8398, %v8395
        %v8891 = vpack.c.b16 %v8399, %v8396
        %v8892 = vpack.c.b16 %v8400, %v8397
        %v8893 = vpack.c.b16 %v8404, %v8401
        %v8894 = vpack.c.b16 %v8405, %v8402
        %v8895 = vpack.c.b16 %v8406, %v8403
        %v8896 = vpack.c.b16 %v8410, %v8407
        %v8897 = vpack.c.b16 %v8411, %v8408
        %v8898 = vpack.c.b16 %v8412, %v8409
        %v8899 = vpack.c.b16 %v8416, %v8413
        %v8900 = vpack.c.b16 %v8417, %v8414
        %v8901 = vpack.c.b16 %v8418, %v8415
        %v8902 = vpack.c.b16 %v8422, %v8419
        %v8903 = vpack.c.b16 %v8423, %v8420
        %v8904 = vpack.c.b16 %v8424, %v8421
        %v8905 = vpack.c.b16 %v8428, %v8425
        %v8906 = vpack.c.b16 %v8429, %v8426
        %v8907 = vpack.c.b16 %v8430, %v8427
        %v8908 = vpack.c.b16 %v8434, %v8431
        %v8909 = vpack.c.b16 %v8435, %v8432
        %v8910 = vpack.c.b16 %v8436, %v8433
        %v8911 = vpack.c.b16 %v8440, %v8437
        %v8912 = vpack.c.b16 %v8441, %v8438
        %v8913 = vpack.c.b16 %v8442, %v8439
        %v8914 = vpack.c.b16 %v8446, %v8443
        %v8915 = vpack.c.b16 %v8447, %v8444
        %v8916 = vpack.c.b16 %v8448, %v8445
        %v8917 = vpack.c.b16 %v8452, %v8449
        %v8918 = vpack.c.b16 %v8453, %v8450
        %v8919 = vpack.c.b16 %v8454, %v8451
        %v8920 = vpack.c.b16 %v8458, %v8455
        %v8921 = vpack.c.b16 %v8459, %v8456
        %v8922 = vpack.c.b16 %v8460, %v8457
        %v8923 = vpack.c.b16 %v8464, %v8461
        %v8924 = vpack.c.b16 %v8465, %v8462
        %v8925 = vpack.c.b16 %v8466, %v8463
        %v8926 = vpack.c.b16 %v8470, %v8467
        %v8927 = vpack.c.b16 %v8471, %v8468
        %v8928 = vpack.c.b16 %v8472, %v8469
        %v8929 = vpack.c.b16 %v8476, %v8473
        %v8930 = vpack.c.b16 %v8477, %v8474
        %v8931 = vpack.c.b16 %v8478, %v8475
        %v8932 = vpack.c.b16 %v8482, %v8479
        %v8933 = vpack.c.b16 %v8483, %v8480
        %v8934 = vpack.c.b16 %v8484, %v8481
        %v8935 = vpack.c.b16 %v8488, %v8485
        %v8936 = vpack.c.b16 %v8489, %v8486
        %v8937 = vpack.c.b16 %v8490, %v8487
        %v8938 = vpack.c.b16 %v8494, %v8491
        %v8939 = vpack.c.b16 %v8495, %v8492
        %v8940 = vpack.c.b16 %v8496, %v8493
        %v8941 = vpack.c.b16 %v8500, %v8497
        %v8942 = vpack.c.b16 %v8501, %v8498
        %v8943 = vpack.c.b16 %v8502, %v8499
        %v8944 = vpack.c.b16 %v8506, %v8503
        %v8945 = vpack.c.b16 %v8507, %v8504
        %v8946 = vpack.c.b16 %v8508, %v8505
        %v8947 = vpack.c.b16 %v8512, %v8509
        %v8948 = vpack.c.b16 %v8513, %v8510
        %v8949 = vpack.c.b16 %v8514, %v8511
        %v8950 = vpack.c.b16 %v8518, %v8515
        %v8951 = vpack.c.b16 %v8519, %v8516
        %v8952 = vpack.c.b16 %v8520, %v8517
        %v8953 = vpack.c.b16 %v8524, %v8521
        %v8954 = vpack.c.b16 %v8525, %v8522
        %v8955 = vpack.c.b16 %v8526, %v8523
        %v8956 = vpack.c.b16 %v8530, %v8527
        %v8957 = vpack.c.b16 %v8531, %v8528
        %v8958 = vpack.c.b16 %v8532, %v8529
        %v8959 = vpack.c.b16 %v8536, %v8533
        %v8960 = vpack.c.b16 %v8537, %v8534
        %v8961 = vpack.c.b16 %v8538, %v8535
        %v8962 = vpack.c.b16 %v8542, %v8539
        %v8963 = vpack.c.b16 %v8543, %v8540
        %v8964 = vpack.c.b16 %v8544, %v8541
        %v8965 = vpack.c.b16 %v8548, %v8545
        %v8966 = vpack.c.b16 %v8549, %v8546
        %v8967 = vpack.c.b16 %v8550, %v8547
        %v8968 = vpack.c.b16 %v8554, %v8551
        %v8969 = vpack.c.b16 %v8555, %v8552
        %v8970 = vpack.c.b16 %v8556, %v8553
        %v8971 = vpack.c.b16 %v8560, %v8557
        %v8972 = vpack.c.b16 %v8561, %v8558
        %v8973 = vpack.c.b16 %v8562, %v8559
        %v8974 = vpack.c.b16 %v8566, %v8563
        %v8975 = vpack.c.b16 %v8567, %v8564
        %v8976 = vpack.c.b16 %v8568, %v8565
        %v8977 = vpack.c.b16 %v8572, %v8569
        %v8978 = vpack.c.b16 %v8573, %v8570
        %v8979 = vpack.c.b16 %v8574, %v8571
        %v8980 = vpack.c.b16 %v8578, %v8575
        %v8981 = vpack.c.b16 %v8579, %v8576
        %v8982 = vpack.c.b16 %v8580, %v8577
        %v8983 = vpack.c.b16 %v8584, %v8581
        %v8984 = vpack.c.b16 %v8585, %v8582
        %v8985 = vpack.c.b16 %v8586, %v8583
        %v8986 = vpack.c.b16 %v8590, %v8587
        %v8987 = vpack.c.b16 %v8591, %v8588
        %v8988 = vpack.c.b16 %v8592, %v8589
        %v8989 = vpack.c.b16 %v8596, %v8593
        %v8990 = vpack.c.b16 %v8597, %v8594
        %v8991 = vpack.c.b16 %v8598, %v8595
        %v8992 = vpack.c.b16 %v8602, %v8599
        %v8993 = vpack.c.b16 %v8603, %v8600
        %v8994 = vpack.c.b16 %v8604, %v8601
        %v8995 = vpack.c.b16 %v8608, %v8605
        %v8996 = vpack.c.b16 %v8609, %v8606
        %v8997 = vpack.c.b16 %v8610, %v8607
        %v8998 = vpack.c.b16 %v8614, %v8611
        %v8999 = vpack.c.b16 %v8615, %v8612
        %v9000 = vpack.c.b16 %v8616, %v8613
        %v9001 = vpack.c.b16 %v8620, %v8617
        %v9002 = vpack.c.b16 %v8621, %v8618
        %v9003 = vpack.c.b16 %v8622, %v8619
        %v9004 = vpack.c.b16 %v8626, %v8623
        %v9005 = vpack.c.b16 %v8627, %v8624
        %v9006 = vpack.c.b16 %v8628, %v8625
        %v9007 = vpack.c.b16 %v8632, %v8629
        %v9008 = vpack.c.b16 %v8633, %v8630
        %v9009 = vpack.c.b16 %v8634, %v8631
        %v9010 = vpack.c.b16 %v8638, %v8635
        %v9011 = vpack.c.b16 %v8639, %v8636
        %v9012 = vpack.c.b16 %v8640, %v8637
        %v9013 = vpack.c.b16 %v8644, %v8641
        %v9014 = vpack.c.b16 %v8645, %v8642
        %v9015 = vpack.c.b16 %v8646, %v8643
        %v9016 = vpack.c.b16 %v8650, %v8647
        %v9017 = vpack.c.b16 %v8651, %v8648
        %v9018 = vpack.c.b16 %v8652, %v8649
        %v9019 = vpack.c.b16 %v8656, %v8653
        %v9020 = vpack.c.b16 %v8657, %v8654
        %v9021 = vpack.c.b16 %v8658, %v8655
        %v9022 = vpack.c.b16 %v8662, %v8659
        %v9023 = vpack.c.b16 %v8663, %v8660
        %v9024 = vpack.c.b16 %v8664, %v8661
        %v9025 = vpack.c.b16 %v8668, %v8665
        %v9026 = vpack.c.b16 %v8669, %v8666
        %v9027 = vpack.c.b16 %v8670, %v8667
        %v9028 = vpack.c.b16 %v8674, %v8671
        %v9029 = vpack.c.b16 %v8675, %v8672
        %v9030 = vpack.c.b16 %v8676, %v8673
        %v9031 = vpack.c.b16 %v8680, %v8677
        %v9032 = vpack.c.b16 %v8681, %v8678
        %v9033 = vpack.c.b16 %v8682, %v8679
        %v9034 = vpack.c.b16 %v8686, %v8683
        %v9035 = vpack.c.b16 %v8687, %v8684
        %v9036 = vpack.c.b16 %v8688, %v8685
        %v9037 = vpack.c.b16 %v8692, %v8689
        %v9038 = vpack.c.b16 %v8693, %v8690
        %v9039 = vpack.c.b16 %v8694, %v8691
        %v9040 = vpack.c.b16 %v8698, %v8695
        %v9041 = vpack.c.b16 %v8699, %v8696
        %v9042 = vpack.c.b16 %v8700, %v8697
        %v9043 = vpack.c.b16 %v8704, %v8701
        %v9044 = vpack.c.b16 %v8705, %v8702
        %v9045 = vpack.c.b16 %v8706, %v8703
        %v9046 = vpack.c.b16 %v8710, %v8707
        %v9047 = vpack.c.b16 %v8711, %v8708
        %v9048 = vpack.c.b16 %v8712, %v8709
        %v9049 = vpack.c.b16 %v8716, %v8713
        %v9050 = vpack.c.b16 %v8717, %v8714
        %v9051 = vpack.c.b16 %v8718, %v8715
        %v9052 = vpack.c.b16 %v8722, %v8719
        %v9053 = vpack.c.b16 %v8723, %v8720
        %v9054 = vpack.c.b16 %v8724, %v8721
        %v9055 = vpack.c.b16 %v8728, %v8725
        %v9056 = vpack.c.b16 %v8729, %v8726
        %v9057 = vpack.c.b16 %v8730, %v8727
        %v9058 = vpack.c.b16 %v8734, %v8731
        %v9059 = vpack.c.b16 %v8735, %v8732
        %v9060 = vpack.c.b16 %v8736, %v8733
        %v9061 = vpack.c.b16 %v8740, %v8737
        %v9062 = vpack.c.b16 %v8741, %v8738
        %v9063 = vpack.c.b16 %v8742, %v8739
        %v9064 = vpack.c.b16 %v8746, %v8743
        %v9065 = vpack.c.b16 %v8747, %v8744
        %v9066 = vpack.c.b16 %v8748, %v8745
        %v9067 = vpack.c.b16 %v8752, %v8749
        %v9068 = vpack.c.b16 %v8753, %v8750
        %v9069 = vpack.c.b16 %v8754, %v8751
        %v9070 = vpack.c.b16 %v8758, %v8755
        %v9071 = vpack.c.b16 %v8759, %v8756
        %v9072 = vpack.c.b16 %v8760, %v8757
        %v9073 = vpack.c.b16 %v8764, %v8761
        %v9074 = vpack.c.b16 %v8765, %v8762
        %v9075 = vpack.c.b16 %v8766, %v8763
        %v9076 = vpack.c.b16 %v8770, %v8767
        %v9077 = vpack.c.b16 %v8771, %v8768
        %v9078 = vpack.c.b16 %v8772, %v8769
        %v9079 = vpack.c.b16 %v8776, %v8773
        %v9080 = vpack.c.b16 %v8777, %v8774
        %v9081 = vpack.c.b16 %v8778, %v8775
        %v9082 = vpack.c.b16 %v8782, %v8779
        %v9083 = vpack.c.b16 %v8783, %v8780
        %v9084 = vpack.c.b16 %v8784, %v8781
        %v9085 = vpack.c.b16 %v8788, %v8785
        %v9086 = vpack.c.b16 %v8789, %v8786
        %v9087 = vpack.c.b16 %v8790, %v8787
        %v9088 = vpack.c.b16 %v8794, %v8791
        %v9089 = vpack.c.b16 %v8795, %v8792
        %v9090 = vpack.c.b16 %v8796, %v8793
        %v9091 = vpack.c.b16 %v8800, %v8797
        %v9092 = vpack.c.b16 %v8801, %v8798
        %v9093 = vpack.c.b16 %v8802, %v8799
        %v9094 = vpack.c.b16 %v8806, %v8803
        %v9095 = vpack.c.b16 %v8807, %v8804
        %v9096 = vpack.c.b16 %v8808, %v8805
        %9385 = vmatpush.bf16.msra.mxu0 %v8830
        %9386 = vmatpush.bf16.msra.mxu0 %v8827
        %9387 = vmatpush.bf16.msra.mxu0 %v8824
        %9388 = vmatpush.bf16.msra.mxu0 %v8821
        %9389 = vmatpush.bf16.msra.mxu0 %v8818
        %9390 = vmatpush.bf16.msra.mxu0 %v8815
        %9391 = vmatpush.bf16.msra.mxu0 %v8812
        %9392 = vmatpush.bf16.msra.mxu0 %v8809
        %9393 = vmatmul.bf16.gmra.mxu0 %v7446
        %v9394 = vpop.f32.mrf.mxu0
        %v9395 = vadd.f32 %v7843, %v9394
        %v9396 = vpop.f32.mrf.mxu0
        %v9397 = vadd.f32 %v7843, %v9396
        %9398 = vdwg.mxu0
        %9399 = vmatpush.bf16.msra.mxu0 %v8854
        %9400 = vmatpush.bf16.msra.mxu0 %v8851
        %9401 = vmatpush.bf16.msra.mxu0 %v8848
        %9402 = vmatpush.bf16.msra.mxu0 %v8845
        %9403 = vmatpush.bf16.msra.mxu0 %v8842
        %9404 = vmatpush.bf16.msra.mxu0 %v8839
        %9405 = vmatpush.bf16.msra.mxu0 %v8836
        %9406 = vmatpush.bf16.msra.mxu0 %v8833
        %9407 = vmatmul.bf16.gmra.mxu0 %v7447
        %v9408 = vpop.f32.mrf.mxu0
        %v9409 = vadd.f32 %v9395, %v9408
        %v9410 = vpop.f32.mrf.mxu0
        %v9411 = vadd.f32 %v9397, %v9410
        %9412 = vdwg.mxu0
        %9413 = vmatpush.bf16.msra.mxu0 %v8878
        %9414 = vmatpush.bf16.msra.mxu0 %v8875
        %9415 = vmatpush.bf16.msra.mxu0 %v8872
        %9416 = vmatpush.bf16.msra.mxu0 %v8869
        %9417 = vmatpush.bf16.msra.mxu0 %v8866
        %9418 = vmatpush.bf16.msra.mxu0 %v8863
        %9419 = vmatpush.bf16.msra.mxu0 %v8860
        %9420 = vmatpush.bf16.msra.mxu0 %v8857
        %9421 = vmatmul.bf16.gmra.mxu0 %v7448
        %v9422 = vpop.f32.mrf.mxu0
        %v9423 = vadd.f32 %v9409, %v9422
        %v9424 = vpop.f32.mrf.mxu0
        %v9425 = vadd.f32 %v9411, %v9424
        %9426 = vdwg.mxu0
        %9427 = vmatpush.bf16.msra.mxu0 %v8902
        %9428 = vmatpush.bf16.msra.mxu0 %v8899
        %9429 = vmatpush.bf16.msra.mxu0 %v8896
        %9430 = vmatpush.bf16.msra.mxu0 %v8893
        %9431 = vmatpush.bf16.msra.mxu0 %v8890
        %9432 = vmatpush.bf16.msra.mxu0 %v8887
        %9433 = vmatpush.bf16.msra.mxu0 %v8884
        %9434 = vmatpush.bf16.msra.mxu0 %v8881
        %9435 = vmatmul.bf16.gmra.mxu0 %v7449
        %v9436 = vpop.f32.mrf.mxu0
        %v9437 = vadd.f32 %v9423, %v9436
        %v9438 = vpop.f32.mrf.mxu0
        %v9439 = vadd.f32 %v9425, %v9438
        %9440 = vdwg.mxu0
        %9441 = vmatpush.bf16.msra.mxu0 %v8926
        %9442 = vmatpush.bf16.msra.mxu0 %v8923
        %9443 = vmatpush.bf16.msra.mxu0 %v8920
        %9444 = vmatpush.bf16.msra.mxu0 %v8917
        %9445 = vmatpush.bf16.msra.mxu0 %v8914
        %9446 = vmatpush.bf16.msra.mxu0 %v8911
        %9447 = vmatpush.bf16.msra.mxu0 %v8908
        %9448 = vmatpush.bf16.msra.mxu0 %v8905
        %9449 = vmatmul.bf16.gmra.mxu0 %v7450
        %v9450 = vpop.f32.mrf.mxu0
        %v9451 = vadd.f32 %v9437, %v9450
        %v9452 = vpop.f32.mrf.mxu0
        %v9453 = vadd.f32 %v9439, %v9452
        %9454 = vdwg.mxu0
        %9455 = vmatpush.bf16.msra.mxu0 %v8950
        %9456 = vmatpush.bf16.msra.mxu0 %v8947
        %9457 = vmatpush.bf16.msra.mxu0 %v8944
        %9458 = vmatpush.bf16.msra.mxu0 %v8941
        %9459 = vmatpush.bf16.msra.mxu0 %v8938
        %9460 = vmatpush.bf16.msra.mxu0 %v8935
        %9461 = vmatpush.bf16.msra.mxu0 %v8932
        %9462 = vmatpush.bf16.msra.mxu0 %v8929
        %9463 = vmatmul.bf16.gmra.mxu0 %v7451
        %v9464 = vpop.f32.mrf.mxu0
        %v9465 = vadd.f32 %v9451, %v9464
        %v9466 = vpop.f32.mrf.mxu0
        %v9467 = vadd.f32 %v9453, %v9466
        %9468 = vdwg.mxu0
        %9469 = vmatpush.bf16.msra.mxu0 %v8974
        %9470 = vmatpush.bf16.msra.mxu0 %v8971
        %9471 = vmatpush.bf16.msra.mxu0 %v8968
        %9472 = vmatpush.bf16.msra.mxu0 %v8965
        %9473 = vmatpush.bf16.msra.mxu0 %v8962
        %9474 = vmatpush.bf16.msra.mxu0 %v8959
        %9475 = vmatpush.bf16.msra.mxu0 %v8956
        %9476 = vmatpush.bf16.msra.mxu0 %v8953
        %9477 = vmatmul.bf16.gmra.mxu0 %v7452
        %v9478 = vpop.f32.mrf.mxu0
        %v9479 = vadd.f32 %v9465, %v9478
        %v9480 = vpop.f32.mrf.mxu0
        %v9481 = vadd.f32 %v9467, %v9480
        %9482 = vdwg.mxu0
        %9483 = vmatpush.bf16.msra.mxu0 %v8998
        %9484 = vmatpush.bf16.msra.mxu0 %v8995
        %9485 = vmatpush.bf16.msra.mxu0 %v8992
        %9486 = vmatpush.bf16.msra.mxu0 %v8989
        %9487 = vmatpush.bf16.msra.mxu0 %v8986
        %9488 = vmatpush.bf16.msra.mxu0 %v8983
        %9489 = vmatpush.bf16.msra.mxu0 %v8980
        %9490 = vmatpush.bf16.msra.mxu0 %v8977
        %9491 = vmatmul.bf16.gmra.mxu0 %v7453
        %v9492 = vpop.f32.mrf.mxu0
        %v9493 = vadd.f32 %v9479, %v9492
        %v9494 = vpop.f32.mrf.mxu0
        %v9495 = vadd.f32 %v9481, %v9494
        %9496 = vdwg.mxu0
        %9497 = vmatpush.bf16.msra.mxu0 %v9022
        %9498 = vmatpush.bf16.msra.mxu0 %v9019
        %9499 = vmatpush.bf16.msra.mxu0 %v9016
        %9500 = vmatpush.bf16.msra.mxu0 %v9013
        %9501 = vmatpush.bf16.msra.mxu0 %v9010
        %9502 = vmatpush.bf16.msra.mxu0 %v9007
        %9503 = vmatpush.bf16.msra.mxu0 %v9004
        %9504 = vmatpush.bf16.msra.mxu0 %v9001
        %9505 = vmatmul.bf16.gmra.mxu0 %v7454
        %v9506 = vpop.f32.mrf.mxu0
        %v9507 = vadd.f32 %v9493, %v9506
        %v9508 = vpop.f32.mrf.mxu0
        %v9509 = vadd.f32 %v9495, %v9508
        %9510 = vdwg.mxu0
        %9511 = vmatpush.bf16.msra.mxu0 %v9046
        %9512 = vmatpush.bf16.msra.mxu0 %v9043
        %9513 = vmatpush.bf16.msra.mxu0 %v9040
        %9514 = vmatpush.bf16.msra.mxu0 %v9037
        %9515 = vmatpush.bf16.msra.mxu0 %v9034
        %9516 = vmatpush.bf16.msra.mxu0 %v9031
        %9517 = vmatpush.bf16.msra.mxu0 %v9028
        %9518 = vmatpush.bf16.msra.mxu0 %v9025
        %9519 = vmatmul.bf16.gmra.mxu0 %v7455
        %v9520 = vpop.f32.mrf.mxu0
        %v9521 = vadd.f32 %v9507, %v9520
        %v9522 = vpop.f32.mrf.mxu0
        %v9523 = vadd.f32 %v9509, %v9522
        %9524 = vdwg.mxu0
        %9525 = vmatpush.bf16.msra.mxu0 %v9070
        %9526 = vmatpush.bf16.msra.mxu0 %v9067
        %9527 = vmatpush.bf16.msra.mxu0 %v9064
        %9528 = vmatpush.bf16.msra.mxu0 %v9061
        %9529 = vmatpush.bf16.msra.mxu0 %v9058
        %9530 = vmatpush.bf16.msra.mxu0 %v9055
        %9531 = vmatpush.bf16.msra.mxu0 %v9052
        %9532 = vmatpush.bf16.msra.mxu0 %v9049
        %9533 = vmatmul.bf16.gmra.mxu0 %v7456
        %v9534 = vpop.f32.mrf.mxu0
        %v9535 = vadd.f32 %v9521, %v9534
        %v9536 = vpop.f32.mrf.mxu0
        %v9537 = vadd.f32 %v9523, %v9536
        %9538 = vdwg.mxu0
        %9539 = vmatpush.bf16.msra.mxu0 %v9094
        %9540 = vmatpush.bf16.msra.mxu0 %v9091
        %9541 = vmatpush.bf16.msra.mxu0 %v9088
        %9542 = vmatpush.bf16.msra.mxu0 %v9085
        %9543 = vmatpush.bf16.msra.mxu0 %v9082
        %9544 = vmatpush.bf16.msra.mxu0 %v9079
        %9545 = vmatpush.bf16.msra.mxu0 %v9076
        %9546 = vmatpush.bf16.msra.mxu0 %v9073
        %9547 = vmatmul.bf16.gmra.mxu0 %v7457
        %v9548 = vpop.f32.mrf.mxu0
        %v9549 = vadd.f32 %v9535, %v9548
        %v9550 = vpop.f32.mrf.mxu0
        %v9551 = vadd.f32 %v9537, %v9550
        %9552 = vdwg.mxu0
        %9553 = vmatpush.bf16.msra.mxu0 %v8831
        %9554 = vmatpush.bf16.msra.mxu0 %v8828
        %9555 = vmatpush.bf16.msra.mxu0 %v8825
        %9556 = vmatpush.bf16.msra.mxu0 %v8822
        %9557 = vmatpush.bf16.msra.mxu0 %v8819
        %9558 = vmatpush.bf16.msra.mxu0 %v8816
        %9559 = vmatpush.bf16.msra.mxu0 %v8813
        %9560 = vmatpush.bf16.msra.mxu0 %v8810
        %9561 = vmatmul.bf16.gmra.mxu0 %v7446
        %v9562 = vpop.f32.mrf.mxu0
        %v9563 = vadd.f32 %v7844, %v9562
        %v9564 = vpop.f32.mrf.mxu0
        %v9565 = vadd.f32 %v7844, %v9564
        %9566 = vdwg.mxu0
        %9567 = vmatpush.bf16.msra.mxu0 %v8855
        %9568 = vmatpush.bf16.msra.mxu0 %v8852
        %9569 = vmatpush.bf16.msra.mxu0 %v8849
        %9570 = vmatpush.bf16.msra.mxu0 %v8846
        %9571 = vmatpush.bf16.msra.mxu0 %v8843
        %9572 = vmatpush.bf16.msra.mxu0 %v8840
        %9573 = vmatpush.bf16.msra.mxu0 %v8837
        %9574 = vmatpush.bf16.msra.mxu0 %v8834
        %9575 = vmatmul.bf16.gmra.mxu0 %v7447
        %v9576 = vpop.f32.mrf.mxu0
        %v9577 = vadd.f32 %v9563, %v9576
        %v9578 = vpop.f32.mrf.mxu0
        %v9579 = vadd.f32 %v9565, %v9578
        %9580 = vdwg.mxu0
        %9581 = vmatpush.bf16.msra.mxu0 %v8879
        %9582 = vmatpush.bf16.msra.mxu0 %v8876
        %9583 = vmatpush.bf16.msra.mxu0 %v8873
        %9584 = vmatpush.bf16.msra.mxu0 %v8870
        %9585 = vmatpush.bf16.msra.mxu0 %v8867
        %9586 = vmatpush.bf16.msra.mxu0 %v8864
        %9587 = vmatpush.bf16.msra.mxu0 %v8861
        %9588 = vmatpush.bf16.msra.mxu0 %v8858
        %9589 = vmatmul.bf16.gmra.mxu0 %v7448
        %v9590 = vpop.f32.mrf.mxu0
        %v9591 = vadd.f32 %v9577, %v9590
        %v9592 = vpop.f32.mrf.mxu0
        %v9593 = vadd.f32 %v9579, %v9592
        %9594 = vdwg.mxu0
        %9595 = vmatpush.bf16.msra.mxu0 %v8903
        %9596 = vmatpush.bf16.msra.mxu0 %v8900
        %9597 = vmatpush.bf16.msra.mxu0 %v8897
        %9598 = vmatpush.bf16.msra.mxu0 %v8894
        %9599 = vmatpush.bf16.msra.mxu0 %v8891
        %9600 = vmatpush.bf16.msra.mxu0 %v8888
        %9601 = vmatpush.bf16.msra.mxu0 %v8885
        %9602 = vmatpush.bf16.msra.mxu0 %v8882
        %9603 = vmatmul.bf16.gmra.mxu0 %v7449
        %v9604 = vpop.f32.mrf.mxu0
        %v9605 = vadd.f32 %v9591, %v9604
        %v9606 = vpop.f32.mrf.mxu0
        %v9607 = vadd.f32 %v9593, %v9606
        %9608 = vdwg.mxu0
        %9609 = vmatpush.bf16.msra.mxu0 %v8927
        %9610 = vmatpush.bf16.msra.mxu0 %v8924
        %9611 = vmatpush.bf16.msra.mxu0 %v8921
        %9612 = vmatpush.bf16.msra.mxu0 %v8918
        %9613 = vmatpush.bf16.msra.mxu0 %v8915
        %9614 = vmatpush.bf16.msra.mxu0 %v8912
        %9615 = vmatpush.bf16.msra.mxu0 %v8909
        %9616 = vmatpush.bf16.msra.mxu0 %v8906
        %9617 = vmatmul.bf16.gmra.mxu0 %v7450
        %v9618 = vpop.f32.mrf.mxu0
        %v9619 = vadd.f32 %v9605, %v9618
        %v9620 = vpop.f32.mrf.mxu0
        %v9621 = vadd.f32 %v9607, %v9620
        %9622 = vdwg.mxu0
        %9623 = vmatpush.bf16.msra.mxu0 %v8951
        %9624 = vmatpush.bf16.msra.mxu0 %v8948
        %9625 = vmatpush.bf16.msra.mxu0 %v8945
        %9626 = vmatpush.bf16.msra.mxu0 %v8942
        %9627 = vmatpush.bf16.msra.mxu0 %v8939
        %9628 = vmatpush.bf16.msra.mxu0 %v8936
        %9629 = vmatpush.bf16.msra.mxu0 %v8933
        %9630 = vmatpush.bf16.msra.mxu0 %v8930
        %9631 = vmatmul.bf16.gmra.mxu0 %v7451
        %v9632 = vpop.f32.mrf.mxu0
        %v9633 = vadd.f32 %v9619, %v9632
        %v9634 = vpop.f32.mrf.mxu0
        %v9635 = vadd.f32 %v9621, %v9634
        %9636 = vdwg.mxu0
        %9637 = vmatpush.bf16.msra.mxu0 %v8975
        %9638 = vmatpush.bf16.msra.mxu0 %v8972
        %9639 = vmatpush.bf16.msra.mxu0 %v8969
        %9640 = vmatpush.bf16.msra.mxu0 %v8966
        %9641 = vmatpush.bf16.msra.mxu0 %v8963
        %9642 = vmatpush.bf16.msra.mxu0 %v8960
        %9643 = vmatpush.bf16.msra.mxu0 %v8957
        %9644 = vmatpush.bf16.msra.mxu0 %v8954
        %9645 = vmatmul.bf16.gmra.mxu0 %v7452
        %v9646 = vpop.f32.mrf.mxu0
        %v9647 = vadd.f32 %v9633, %v9646
        %v9648 = vpop.f32.mrf.mxu0
        %v9649 = vadd.f32 %v9635, %v9648
        %9650 = vdwg.mxu0
        %9651 = vmatpush.bf16.msra.mxu0 %v8999
        %9652 = vmatpush.bf16.msra.mxu0 %v8996
        %9653 = vmatpush.bf16.msra.mxu0 %v8993
        %9654 = vmatpush.bf16.msra.mxu0 %v8990
        %9655 = vmatpush.bf16.msra.mxu0 %v8987
        %9656 = vmatpush.bf16.msra.mxu0 %v8984
        %9657 = vmatpush.bf16.msra.mxu0 %v8981
        %9658 = vmatpush.bf16.msra.mxu0 %v8978
        %9659 = vmatmul.bf16.gmra.mxu0 %v7453
        %v9660 = vpop.f32.mrf.mxu0
        %v9661 = vadd.f32 %v9647, %v9660
        %v9662 = vpop.f32.mrf.mxu0
        %v9663 = vadd.f32 %v9649, %v9662
        %9664 = vdwg.mxu0
        %9665 = vmatpush.bf16.msra.mxu0 %v9023
        %9666 = vmatpush.bf16.msra.mxu0 %v9020
        %9667 = vmatpush.bf16.msra.mxu0 %v9017
        %9668 = vmatpush.bf16.msra.mxu0 %v9014
        %9669 = vmatpush.bf16.msra.mxu0 %v9011
        %9670 = vmatpush.bf16.msra.mxu0 %v9008
        %9671 = vmatpush.bf16.msra.mxu0 %v9005
        %9672 = vmatpush.bf16.msra.mxu0 %v9002
        %9673 = vmatmul.bf16.gmra.mxu0 %v7454
        %v9674 = vpop.f32.mrf.mxu0
        %v9675 = vadd.f32 %v9661, %v9674
        %v9676 = vpop.f32.mrf.mxu0
        %v9677 = vadd.f32 %v9663, %v9676
        %9678 = vdwg.mxu0
        %9679 = vmatpush.bf16.msra.mxu0 %v9047
        %9680 = vmatpush.bf16.msra.mxu0 %v9044
        %9681 = vmatpush.bf16.msra.mxu0 %v9041
        %9682 = vmatpush.bf16.msra.mxu0 %v9038
        %9683 = vmatpush.bf16.msra.mxu0 %v9035
        %9684 = vmatpush.bf16.msra.mxu0 %v9032
        %9685 = vmatpush.bf16.msra.mxu0 %v9029
        %9686 = vmatpush.bf16.msra.mxu0 %v9026
        %9687 = vmatmul.bf16.gmra.mxu0 %v7455
        %v9688 = vpop.f32.mrf.mxu0
        %v9689 = vadd.f32 %v9675, %v9688
        %v9690 = vpop.f32.mrf.mxu0
        %v9691 = vadd.f32 %v9677, %v9690
        %9692 = vdwg.mxu0
        %9693 = vmatpush.bf16.msra.mxu0 %v9071
        %9694 = vmatpush.bf16.msra.mxu0 %v9068
        %9695 = vmatpush.bf16.msra.mxu0 %v9065
        %9696 = vmatpush.bf16.msra.mxu0 %v9062
        %9697 = vmatpush.bf16.msra.mxu0 %v9059
        %9698 = vmatpush.bf16.msra.mxu0 %v9056
        %9699 = vmatpush.bf16.msra.mxu0 %v9053
        %9700 = vmatpush.bf16.msra.mxu0 %v9050
        %9701 = vmatmul.bf16.gmra.mxu0 %v7456
        %v9702 = vpop.f32.mrf.mxu0
        %v9703 = vadd.f32 %v9689, %v9702
        %v9704 = vpop.f32.mrf.mxu0
        %v9705 = vadd.f32 %v9691, %v9704
        %9706 = vdwg.mxu0
        %9707 = vmatpush.bf16.msra.mxu0 %v9095
        %9708 = vmatpush.bf16.msra.mxu0 %v9092
        %9709 = vmatpush.bf16.msra.mxu0 %v9089
        %9710 = vmatpush.bf16.msra.mxu0 %v9086
        %9711 = vmatpush.bf16.msra.mxu0 %v9083
        %9712 = vmatpush.bf16.msra.mxu0 %v9080
        %9713 = vmatpush.bf16.msra.mxu0 %v9077
        %9714 = vmatpush.bf16.msra.mxu0 %v9074
        %9715 = vmatmul.bf16.gmra.mxu0 %v7457
        %v9716 = vpop.f32.mrf.mxu0
        %v9717 = vadd.f32 %v9703, %v9716
        %v9718 = vpop.f32.mrf.mxu0
        %v9719 = vadd.f32 %v9705, %v9718
        %9720 = vdwg.mxu0
        %9721 = vmatpush.bf16.msra.mxu0 %v8832
        %9722 = vmatpush.bf16.msra.mxu0 %v8829
        %9723 = vmatpush.bf16.msra.mxu0 %v8826
        %9724 = vmatpush.bf16.msra.mxu0 %v8823
        %9725 = vmatpush.bf16.msra.mxu0 %v8820
        %9726 = vmatpush.bf16.msra.mxu0 %v8817
        %9727 = vmatpush.bf16.msra.mxu0 %v8814
        %9728 = vmatpush.bf16.msra.mxu0 %v8811
        %9729 = vmatmul.bf16.gmra.mxu0 %v7446
        %v9730 = vpop.f32.mrf.mxu0
        %v9731 = vadd.f32 %v7845, %v9730
        %v9732 = vpop.f32.mrf.mxu0
        %v9733 = vadd.f32 %v7845, %v9732
        %9734 = vdwg.mxu0
        %9735 = vmatpush.bf16.msra.mxu0 %v8856
        %9736 = vmatpush.bf16.msra.mxu0 %v8853
        %9737 = vmatpush.bf16.msra.mxu0 %v8850
        %9738 = vmatpush.bf16.msra.mxu0 %v8847
        %9739 = vmatpush.bf16.msra.mxu0 %v8844
        %9740 = vmatpush.bf16.msra.mxu0 %v8841
        %9741 = vmatpush.bf16.msra.mxu0 %v8838
        %9742 = vmatpush.bf16.msra.mxu0 %v8835
        %9743 = vmatmul.bf16.gmra.mxu0 %v7447
        %v9744 = vpop.f32.mrf.mxu0
        %v9745 = vadd.f32 %v9731, %v9744
        %v9746 = vpop.f32.mrf.mxu0
        %v9747 = vadd.f32 %v9733, %v9746
        %9748 = vdwg.mxu0
        %9749 = vmatpush.bf16.msra.mxu0 %v8880
        %9750 = vmatpush.bf16.msra.mxu0 %v8877
        %9751 = vmatpush.bf16.msra.mxu0 %v8874
        %9752 = vmatpush.bf16.msra.mxu0 %v8871
        %9753 = vmatpush.bf16.msra.mxu0 %v8868
        %9754 = vmatpush.bf16.msra.mxu0 %v8865
        %9755 = vmatpush.bf16.msra.mxu0 %v8862
        %9756 = vmatpush.bf16.msra.mxu0 %v8859
        %9757 = vmatmul.bf16.gmra.mxu0 %v7448
        %v9758 = vpop.f32.mrf.mxu0
        %v9759 = vadd.f32 %v9745, %v9758
        %v9760 = vpop.f32.mrf.mxu0
        %v9761 = vadd.f32 %v9747, %v9760
        %9762 = vdwg.mxu0
        %9763 = vmatpush.bf16.msra.mxu0 %v8904
        %9764 = vmatpush.bf16.msra.mxu0 %v8901
        %9765 = vmatpush.bf16.msra.mxu0 %v8898
        %9766 = vmatpush.bf16.msra.mxu0 %v8895
        %9767 = vmatpush.bf16.msra.mxu0 %v8892
        %9768 = vmatpush.bf16.msra.mxu0 %v8889
        %9769 = vmatpush.bf16.msra.mxu0 %v8886
        %9770 = vmatpush.bf16.msra.mxu0 %v8883
        %9771 = vmatmul.bf16.gmra.mxu0 %v7449
        %v9772 = vpop.f32.mrf.mxu0
        %v9773 = vadd.f32 %v9759, %v9772
        %v9774 = vpop.f32.mrf.mxu0
        %v9775 = vadd.f32 %v9761, %v9774
        %9776 = vdwg.mxu0
        %9777 = vmatpush.bf16.msra.mxu0 %v8928
        %9778 = vmatpush.bf16.msra.mxu0 %v8925
        %9779 = vmatpush.bf16.msra.mxu0 %v8922
        %9780 = vmatpush.bf16.msra.mxu0 %v8919
        %9781 = vmatpush.bf16.msra.mxu0 %v8916
        %9782 = vmatpush.bf16.msra.mxu0 %v8913
        %9783 = vmatpush.bf16.msra.mxu0 %v8910
        %9784 = vmatpush.bf16.msra.mxu0 %v8907
        %9785 = vmatmul.bf16.gmra.mxu0 %v7450
        %v9786 = vpop.f32.mrf.mxu0
        %v9787 = vadd.f32 %v9773, %v9786
        %v9788 = vpop.f32.mrf.mxu0
        %v9789 = vadd.f32 %v9775, %v9788
        %9790 = vdwg.mxu0
        %9791 = vmatpush.bf16.msra.mxu0 %v8952
        %9792 = vmatpush.bf16.msra.mxu0 %v8949
        %9793 = vmatpush.bf16.msra.mxu0 %v8946
        %9794 = vmatpush.bf16.msra.mxu0 %v8943
        %9795 = vmatpush.bf16.msra.mxu0 %v8940
        %9796 = vmatpush.bf16.msra.mxu0 %v8937
        %9797 = vmatpush.bf16.msra.mxu0 %v8934
        %9798 = vmatpush.bf16.msra.mxu0 %v8931
        %9799 = vmatmul.bf16.gmra.mxu0 %v7451
        %v9800 = vpop.f32.mrf.mxu0
        %v9801 = vadd.f32 %v9787, %v9800
        %v9802 = vpop.f32.mrf.mxu0
        %v9803 = vadd.f32 %v9789, %v9802
        %9804 = vdwg.mxu0
        %9805 = vmatpush.bf16.msra.mxu0 %v8976
        %9806 = vmatpush.bf16.msra.mxu0 %v8973
        %9807 = vmatpush.bf16.msra.mxu0 %v8970
        %9808 = vmatpush.bf16.msra.mxu0 %v8967
        %9809 = vmatpush.bf16.msra.mxu0 %v8964
        %9810 = vmatpush.bf16.msra.mxu0 %v8961
        %9811 = vmatpush.bf16.msra.mxu0 %v8958
        %9812 = vmatpush.bf16.msra.mxu0 %v8955
        %9813 = vmatmul.bf16.gmra.mxu0 %v7452
        %v9814 = vpop.f32.mrf.mxu0
        %v9815 = vadd.f32 %v9801, %v9814
        %v9816 = vpop.f32.mrf.mxu0
        %v9817 = vadd.f32 %v9803, %v9816
        %9818 = vdwg.mxu0
        %9819 = vmatpush.bf16.msra.mxu0 %v9000
        %9820 = vmatpush.bf16.msra.mxu0 %v8997
        %9821 = vmatpush.bf16.msra.mxu0 %v8994
        %9822 = vmatpush.bf16.msra.mxu0 %v8991
        %9823 = vmatpush.bf16.msra.mxu0 %v8988
        %9824 = vmatpush.bf16.msra.mxu0 %v8985
        %9825 = vmatpush.bf16.msra.mxu0 %v8982
        %9826 = vmatpush.bf16.msra.mxu0 %v8979
        %9827 = vmatmul.bf16.gmra.mxu0 %v7453
        %v9828 = vpop.f32.mrf.mxu0
        %v9829 = vadd.f32 %v9815, %v9828
        %v9830 = vpop.f32.mrf.mxu0
        %v9831 = vadd.f32 %v9817, %v9830
        %9832 = vdwg.mxu0
        %9833 = vmatpush.bf16.msra.mxu0 %v9024
        %9834 = vmatpush.bf16.msra.mxu0 %v9021
        %9835 = vmatpush.bf16.msra.mxu0 %v9018
        %9836 = vmatpush.bf16.msra.mxu0 %v9015
        %9837 = vmatpush.bf16.msra.mxu0 %v9012
        %9838 = vmatpush.bf16.msra.mxu0 %v9009
        %9839 = vmatpush.bf16.msra.mxu0 %v9006
        %9840 = vmatpush.bf16.msra.mxu0 %v9003
        %9841 = vmatmul.bf16.gmra.mxu0 %v7454
        %v9842 = vpop.f32.mrf.mxu0
        %v9843 = vadd.f32 %v9829, %v9842
        %v9844 = vpop.f32.mrf.mxu0
        %v9845 = vadd.f32 %v9831, %v9844
        %9846 = vdwg.mxu0
        %9847 = vmatpush.bf16.msra.mxu0 %v9048
        %9848 = vmatpush.bf16.msra.mxu0 %v9045
        %9849 = vmatpush.bf16.msra.mxu0 %v9042
        %9850 = vmatpush.bf16.msra.mxu0 %v9039
        %9851 = vmatpush.bf16.msra.mxu0 %v9036
        %9852 = vmatpush.bf16.msra.mxu0 %v9033
        %9853 = vmatpush.bf16.msra.mxu0 %v9030
        %9854 = vmatpush.bf16.msra.mxu0 %v9027
        %9855 = vmatmul.bf16.gmra.mxu0 %v7455
        %v9856 = vpop.f32.mrf.mxu0
        %v9857 = vadd.f32 %v9843, %v9856
        %v9858 = vpop.f32.mrf.mxu0
        %v9859 = vadd.f32 %v9845, %v9858
        %9860 = vdwg.mxu0
        %9861 = vmatpush.bf16.msra.mxu0 %v9072
        %9862 = vmatpush.bf16.msra.mxu0 %v9069
        %9863 = vmatpush.bf16.msra.mxu0 %v9066
        %9864 = vmatpush.bf16.msra.mxu0 %v9063
        %9865 = vmatpush.bf16.msra.mxu0 %v9060
        %9866 = vmatpush.bf16.msra.mxu0 %v9057
        %9867 = vmatpush.bf16.msra.mxu0 %v9054
        %9868 = vmatpush.bf16.msra.mxu0 %v9051
        %9869 = vmatmul.bf16.gmra.mxu0 %v7456
        %v9870 = vpop.f32.mrf.mxu0
        %v9871 = vadd.f32 %v9857, %v9870
        %v9872 = vpop.f32.mrf.mxu0
        %v9873 = vadd.f32 %v9859, %v9872
        %9874 = vdwg.mxu0
        %9875 = vmatpush.bf16.msra.mxu0 %v9096
        %9876 = vmatpush.bf16.msra.mxu0 %v9093
        %9877 = vmatpush.bf16.msra.mxu0 %v9090
        %9878 = vmatpush.bf16.msra.mxu0 %v9087
        %9879 = vmatpush.bf16.msra.mxu0 %v9084
        %9880 = vmatpush.bf16.msra.mxu0 %v9081
        %9881 = vmatpush.bf16.msra.mxu0 %v9078
        %9882 = vmatpush.bf16.msra.mxu0 %v9075
        %9883 = vmatmul.bf16.gmra.mxu0 %v7457
        %v9884 = vpop.f32.mrf.mxu0
        %v9885 = vadd.f32 %v9871, %v9884
        %v9886 = vpop.f32.mrf.mxu0
        %v9887 = vadd.f32 %v9873, %v9886
        %9888 = vdwg.mxu0
        %v9889 = vadd.f32 %v5069, %v9549
        %v9890 = vadd.f32 %v5070, %v9717
        %v9891 = vadd.f32 %v5071, %v9885
        %v9892 = vadd.f32 %v5072, %v9551
        %v9893 = vadd.f32 %v5073, %v9719
        %v9894 = vadd.f32 %v5074, %v9887
        %9895 = vst [vmem:[%s352] sm:$0xff] %v9889
        %9896 = vst [vmem:[%s352 + $0x8] sm:$0xff] %v9890
        %9897 = vst [vmem:[%s352 + $0x10] sm:$0xff] %v9891
        %9898 = vst [vmem:[%s352 + $0x18] sm:$0xff] %v9892
        %9899 = vst [vmem:[%s352 + $0x20] sm:$0xff] %v9893
        %9900 = vst [vmem:[%s352 + $0x28] sm:$0xff] %v9894
        %s9901 = sand.u32 %s165, 1
        %s9902 = scalar_lea.sflag [#allocation4], %s9901
        %s9903 = sand.u32 %s165, 1
        %s9904 = smul.addr %s9903, 48
        %s9905 = scalar_lea.vmem [#allocation13], %s9904
        // Predicated region
        $region69: #{tpu_custom_call.1} parent=43 // pred_check
          %p9906 = pneg %p175
        $region70: #{tpu_custom_call.1} parent=43 // pred_check_branch
          %9908 = sbr.rel (%p9906) target = $region72
        $region71: #{tpu_custom_call.1} parent=43 // pred_region
          %9910 = vsyncadd %s9902, 0
          %s9911 = smul.addr %s26, 6
          %s9912 = smul.addr %s9911, 8
          %s9913 = scalar_lea.hbm %s6, %s9912
          %s9914 = sshll.u32 %s9905, 4
          %s9915 = int_to_ptr.vmem [resolvable:$true] %s9914
          %s9916 = sshll.u32 %s9913, 4
          %s9917 = int_to_ptr.hbm [resolvable:$true] %s9916
          %9922 = dma.vmem_to_hbm [thread:$0]  %s9915, 768, %s9917, %s9902, 384, 384, 24
        $region72: #{tpu_custom_call.1} parent=43 // pred_fallthru
          _
      $region44: #{tpu_custom_call.1} parent=5 // pred_fallthru
        _
      %p9923 = scmp.le.s32.totalorder 2, %s21
      // Predicated region
      $region73: #{tpu_custom_call.1} parent=5 // pred_check
        %p9924 = pneg %p9923
      $region74: #{tpu_custom_call.1} parent=5 // pred_check_branch
        %9926 = sbr.rel (%p9924) target = $region76
      $region75: #{tpu_custom_call.1} parent=5 // pred_region
        %s9927 = ssub.s32 %s21, 2
        // Predicated region
        $region77: #{tpu_custom_call.1} parent=75 // pred_check
          %p9928 = pneg %p181
        $region78: #{tpu_custom_call.1} parent=75 // pred_check_branch
          %9930 = sbr.rel (%p9928) target = $region80
        $region79: #{tpu_custom_call.1} parent=75 // pred_region
          %s9931 = sand.u32 %s166, 1
          %s9932 = scalar_lea.sflag [#allocation4], %s9931
          %s9933 = sand.u32 %s166, 1
          %s9934 = smul.addr %s9933, 48
          %s9935 = scalar_lea.vmem [#allocation13], %s9934
          %9937 = dma.done %s9932, 768
        $region80: #{tpu_custom_call.1} parent=75 // pred_fallthru
          _
      $region76: #{tpu_custom_call.1} parent=5 // pred_fallthru
        _
    $region6: #{tpu_custom_call.1} parent=1 // loop_footer
      %s25 = sadd.s32 1, %s21
    $region7: #{tpu_custom_call.1} parent=1 // loop_footer_branch
      %20 = sbr.rel target = $region3
    $region8: #{tpu_custom_call.1} parent=1 // loop_exit
      _
    %9938 = vsyncpa [#allocation3], 1
    %s9939 = scalar_lea.sflag [#allocation3], 1
    %9940 = vsyncpa %s9939, 1
    %9941 = vsyncpa [#allocation6], 1
    %9942 = vsyncpa [#allocation9], 1
    %9943 = vsyncpa [#allocation12], 1
    %9944 = vsyncpa [#allocation4], 1
    %s9945 = scalar_lea.sflag [#allocation4], 1
    %9946 = vsyncpa %s9945, 1

</llo_original>
